<compile_context>
chip_gen: v7x
topology: tpu7x:2x2x1
jax: 0.10.0
libtpu: 0.0.40
codegen_flags: <defaults>
</compile_context>

<pallas_src>
import functools
import math

import jax
import jax.numpy as jnp
from jax.experimental import pallas as pl
from jax.experimental.pallas import tpu as pltpu

_EPS = 1e-5                        # torch.nn.InstanceNorm2d default eps
_INV_SQRT2 = 1.0 / math.sqrt(2.0)

# bf16 matmul operands (f32 accumulation) -> native MXU rate on v6e/v7x and half
# the weight DMA / VMEM footprint.  Use jnp.float32 for exact torch-f32 parity.
_MXU_DTYPE = jnp.bfloat16

_N_LAYERS = 7      # fused layer chain length (see prepare_encoder_params)
_X3_LAYER = 3      # 0-based index of the layer whose output is Encoder's x3


# ----------------------------------------------------------------------------
# Fused Encoder kernel (one grid step == one batch element, channels-first)
# ----------------------------------------------------------------------------
def _layer_cf(x, w, b, *, norm, act):
    """Channels-first 1x1 conv: y = W @ x + b -> optional InstanceNorm -> GELU.

    x: (Cin, P) f32, w: (Cout, Cin) _MXU_DTYPE, b: (Cout, 1) f32. Returns f32.
    """
    y = jnp.dot(w, x.astype(w.dtype), preferred_element_type=jnp.float32)
    y = y + b                                            # (Cout, P)
    if norm:
        # InstanceNorm2d: per-(batch, channel) stats over spatial (biased var,
        # no affine).  Spatial is the lane axis -> cross-lane (XLU) reduce.
        mean = jnp.mean(y, axis=-1, keepdims=True)
        d = y - mean
        var = jnp.mean(d * d, axis=-1, keepdims=True)
        y = d * jax.lax.rsqrt(var + _EPS)
    if act:
        # Exact GELU (erf form), matching torch.nn.GELU() default.
        y = 0.5 * y * (1.0 + jax.lax.erf(y * _INV_SQRT2))
    return y


def _encoder_kernel(*refs):
    x_ref = refs[0]
    param_refs = refs[1:1 + 2 * _N_LAYERS]
    x3_ref, x5_ref = refs[1 + 2 * _N_LAYERS:]

    y = x_ref[0]                                         # (Cin, P) f32
    for li in range(_N_LAYERS):
        w = param_refs[2 * li][...]
        b = param_refs[2 * li + 1][...]
        last = li == _N_LAYERS - 1
        y = _layer_cf(y, w, b, norm=not last, act=not last)
        if li == _X3_LAYER:
            x3_ref[0] = y.astype(x3_ref.dtype)           # (64, P) lane-dense store
    x5_ref[0] = y.astype(x5_ref.dtype)                   # (out_channel, P)


# ----------------------------------------------------------------------------
# Parameter construction (PyTorch Conv2d default init) and layer folding
# ----------------------------------------------------------------------------
def _init_conv(key, cin, cout):
    kw, kb = jax.random.split(key)
    bound = 1.0 / math.sqrt(cin)                         # 1x1 conv fan_in = cin
    w = jax.random.uniform(kw, (cin, cout), jnp.float32, -bound, bound)
    b = jax.random.uniform(kb, (1, cout), jnp.float32, -bound, bound)
    return w, b


def _sas_params(key, cin, cout):
    k1, k3, k4, k5 = jax.random.split(key, 4)
    w1, b1 = _init_conv(k1, cin, cout)
    # sas.conv2 (depthwise 3x3) never affects the output (dead in forward),
    # so its parameters are not materialized.
    w3, b3 = _init_conv(k3, cin, cout)
    w4, b4 = _init_conv(k4, 2 * cout, cout // 2)
    w5, b5 = _init_conv(k5, cout // 2, cout)
    return {"w13": jnp.concatenate([w1, w3], axis=1),    # conv1 cols, then conv3
            "b13": jnp.concatenate([b1, b3], axis=1),
            "w4": w4, "b4": b4, "w5": w5, "b5": b5}


def _encoder_params(key, in_channel, out_channel):
    k1, k2, k3, k4, k5 = jax.random.split(key, 5)
    p = {}
    p["w_c1"], p["b_c1"] = _init_conv(k1, in_channel, in_channel)   # conv1
    p["sas2"] = _sas_params(k2, in_channel, 128)
    p["sas3"] = _sas_params(k3, 128, 64)
    p["sas4"] = _sas_params(k4, 64, 32)
    p["w_c5"], p["b_c5"] = _init_conv(k5, 32, out_channel)          # conv5
    return p


def prepare_encoder_params(params, mxu_dtype=_MXU_DTYPE):
    """Fold back-to-back linear layers and lay weights out channels-first.

    Returns [(w, b)] per fused layer: w (Cout, Cin) mxu_dtype, b (Cout, 1) f32.
    """
    sp2, sp3, sp4 = params["sas2"], params["sas3"], params["sas4"]

    # Encoder.conv1 (linear) folded into sas2's merged conv1/conv3.
    w13a = params["w_c1"] @ sp2["w13"]                   # (Cin, 256)
    b13a = params["b_c1"] @ sp2["w13"] + sp2["b13"]      # (1, 256)

    def fold45(sp):                                      # conv4 ∘ conv5 (both 1x1)
        return sp["w4"] @ sp["w5"], sp["b4"] @ sp["w5"] + sp["b5"]

    w45a, b45a = fold45(sp2)                             # (256, 128)
    w45b, b45b = fold45(sp3)                             # (128, 64)
    w45c, b45c = fold45(sp4)                             # (64, 32)

    chain = [
        (w13a, b13a),                      # L0: Cin -> 256, IN + GELU
        (w45a, b45a),                      # L1: 256 -> 128, IN + GELU
        (sp3["w13"], sp3["b13"]),          # L2: 128 -> 128, IN + GELU
        (w45b, b45b),                      # L3: 128 ->  64, IN + GELU  (== x3)
        (sp4["w13"], sp4["b13"]),          # L4:  64 ->  64, IN + GELU
        (w45c, b45c),                      # L5:  64 ->  32, IN + GELU
        (params["w_c5"], params["b_c5"]),  # L6:  32 -> out_channel, linear (== x5)
    ]
    assert len(chain) == _N_LAYERS
    return [(w.T.astype(mxu_dtype), b.T.astype(jnp.float32)) for w, b in chain]


# ----------------------------------------------------------------------------
# Forward pass: one fused pallas_call for the whole Encoder
# ----------------------------------------------------------------------------
def encoder_forward(layer_params, x_nchw, *, single_buffer_weights=True):
    """x_nchw: (B, Cin, H, W) float32 -> (x3, x5), both NCHW float32."""
    B, Cin, H, W = x_nchw.shape
    P = H * W
    x_bcp = x_nchw.reshape(B, Cin, P)                    # free reshape, no transpose

    c3 = layer_params[_X3_LAYER][0].shape[0]             # 64
    c5 = layer_params[-1][0].shape[0]                     # out_channel

    flat, param_bytes = [], 0
    for w, b in layer_params:
        flat += [w, b]
        param_bytes += w.size * w.dtype.itemsize + b.size * b.dtype.itemsize

    # Weight/bias blocks never change across the grid -> single buffer.
    w_kwargs = {}
    if single_buffer_weights and hasattr(pl, "Buffered"):
        w_kwargs["pipeline_mode"] = pl.Buffered(1)

    in_specs = [pl.BlockSpec((1, Cin, P), lambda i: (i, 0, 0))]
    for a in flat:
        in_specs.append(pl.BlockSpec(a.shape, lambda i: (0, 0), **w_kwargs))

    out_specs = (pl.BlockSpec((1, c3, P), lambda i: (i, 0, 0)),
                 pl.BlockSpec((1, c5, P), lambda i: (i, 0, 0)))
    out_shape = (jax.ShapeDtypeStruct((B, c3, P), jnp.float32),
                 jax.ShapeDtypeStruct((B, c5, P), jnp.float32))

    # VMEM budget: double-buffered I/O blocks + resident weights + live f32
    # activations of the widest adjacent layer pair, plus headroom.
    act_bytes = 4 * P * (Cin + 256 + 256)
    io_bytes = 2 * 4 * P * (Cin + c3 + c5)
    need = act_bytes + io_bytes + 2 * param_bytes + (4 << 20)
    try:
        cap = pltpu.get_tpu_info().vmem_capacity_bytes
    except Exception:
        cap = 64 << 20        # v7x physical VMEM; v5e/v6e have 128 MiB
    vmem_limit = int(min(max(need, 8 << 20), int(cap * 0.85)))
    # TODO(synk): for spatial sizes where `need` exceeds the VMEM cap this needs a
    # P-tiled two-pass InstanceNorm (sum/sumsq accumulators + finalize) instead of
    # full-P residency; not needed at these shapes.

    ldims = [(w.shape[1], w.shape[0]) for w, _ in layer_params]   # (Cin, Cout)
    cost = pl.CostEstimate(
        flops=2 * B * P * sum(ci * co for ci, co in ldims),
        transcendentals=B * P * sum(co for _, co in ldims[:-1]),
        bytes_accessed=(x_bcp.size * x_bcp.dtype.itemsize + param_bytes
                        + B * P * (c3 + c5) * 4),
    )

    x3, x5 = pl.pallas_call(
        _encoder_kernel,
        out_shape=out_shape,
        grid=(B,),
        in_specs=in_specs,
        out_specs=out_specs,
        compiler_params=pltpu.CompilerParams(
            dimension_semantics=("parallel",),
            vmem_limit_bytes=vmem_limit),
        cost_estimate=cost,
    )(x_bcp, *flat)

    # (B, C, P) -> NCHW: pure reshapes, no transpose / extra HBM pass.
    return x3.reshape(B, c3, H, W), x5.reshape(B, c5, H, W)


# ----------------------------------------------------------------------------
if __name__ == "__main__":
    key = jax.random.PRNGKey(0)
    k_param, k_x = jax.random.split(key)

    # Small shapes consistent with the module (internal sas widths 128/64/32 are
    # fixed).  H=W=16 -> P=256 so every output store is a full-width lane-dense vst.
    B, Cin, H, W = 2, 16, 16, 16
    out_channel = 32

    params = _encoder_params(k_param, in_channel=Cin, out_channel=out_channel)
    layer_params = prepare_encoder_params(params)
    x = jax.random.normal(k_x, (B, Cin, H, W), dtype=jnp.float32)

    fwd = jax.jit(functools.partial(encoder_forward, single_buffer_weights=True))
    try:
        x3, x5 = fwd(layer_params, x)
        jax.block_until_ready((x3, x5))
    except Exception:
        # Fallback: default (double-buffered) weight specs if Buffered(1) is rejected.
        fwd = jax.jit(functools.partial(encoder_forward, single_buffer_weights=False))
        x3, x5 = fwd(layer_params, x)
        jax.block_until_ready((x3, x5))

    assert x3.shape == (B, 64, H, W), x3.shape
    assert x5.shape == (B, out_channel, H, W), x5.shape
    assert jnp.all(jnp.isfinite(x3)) and jnp.all(jnp.isfinite(x5))

    print("KERNEL_OK")
</pallas_src>

<mosaic_0001>
module attributes {stable_mosaic.version = 11 : i64} {
  func.func @_encoder_kernel(%arg0: i32, %arg1: memref<1x16x256xf32, #tpu.memory_space<vmem>>, %arg2: memref<256x16xbf16, #tpu.memory_space<vmem>>, %arg3: memref<256x1xf32, #tpu.memory_space<vmem>>, %arg4: memref<128x256xbf16, #tpu.memory_space<vmem>>, %arg5: memref<128x1xf32, #tpu.memory_space<vmem>>, %arg6: memref<128x128xbf16, #tpu.memory_space<vmem>>, %arg7: memref<128x1xf32, #tpu.memory_space<vmem>>, %arg8: memref<64x128xbf16, #tpu.memory_space<vmem>>, %arg9: memref<64x1xf32, #tpu.memory_space<vmem>>, %arg10: memref<64x64xbf16, #tpu.memory_space<vmem>>, %arg11: memref<64x1xf32, #tpu.memory_space<vmem>>, %arg12: memref<32x64xbf16, #tpu.memory_space<vmem>>, %arg13: memref<32x1xf32, #tpu.memory_space<vmem>>, %arg14: memref<32x32xbf16, #tpu.memory_space<vmem>>, %arg15: memref<32x1xf32, #tpu.memory_space<vmem>>, %arg16: memref<1x64x256xf32, #tpu.memory_space<vmem>>, %arg17: memref<1x32x256xf32, #tpu.memory_space<vmem>>) attributes {dimension_semantics = [#tpu.dimension_semantics<parallel>], iteration_bounds = array<i64: 2>, scalar_prefetch = 0 : i64, scratch_operands = 0 : i64, tpu.core_type = #tpu.core_type<tc>, window_params = [{transform_indices = @transform_0, window_bounds = array<i64: 1, 16, 256>}, {pipeline_mode = #tpu.pipeline_mode<synchronous>, transform_indices = @transform_1, window_bounds = array<i64: 256, 16>}, {pipeline_mode = #tpu.pipeline_mode<synchronous>, transform_indices = @transform_2, window_bounds = array<i64: 256, 1>}, {pipeline_mode = #tpu.pipeline_mode<synchronous>, transform_indices = @transform_3, window_bounds = array<i64: 128, 256>}, {pipeline_mode = #tpu.pipeline_mode<synchronous>, transform_indices = @transform_4, window_bounds = array<i64: 128, 1>}, {pipeline_mode = #tpu.pipeline_mode<synchronous>, transform_indices = @transform_5, window_bounds = array<i64: 128, 128>}, {pipeline_mode = #tpu.pipeline_mode<synchronous>, transform_indices = @transform_6, window_bounds = array<i64: 128, 1>}, {pipeline_mode = #tpu.pipeline_mode<synchronous>, transform_indices = @transform_7, window_bounds = array<i64: 64, 128>}, {pipeline_mode = #tpu.pipeline_mode<synchronous>, transform_indices = @transform_8, window_bounds = array<i64: 64, 1>}, {pipeline_mode = #tpu.pipeline_mode<synchronous>, transform_indices = @transform_9, window_bounds = array<i64: 64, 64>}, {pipeline_mode = #tpu.pipeline_mode<synchronous>, transform_indices = @transform_10, window_bounds = array<i64: 64, 1>}, {pipeline_mode = #tpu.pipeline_mode<synchronous>, transform_indices = @transform_11, window_bounds = array<i64: 32, 64>}, {pipeline_mode = #tpu.pipeline_mode<synchronous>, transform_indices = @transform_12, window_bounds = array<i64: 32, 1>}, {pipeline_mode = #tpu.pipeline_mode<synchronous>, transform_indices = @transform_13, window_bounds = array<i64: 32, 32>}, {pipeline_mode = #tpu.pipeline_mode<synchronous>, transform_indices = @transform_14, window_bounds = array<i64: 32, 1>}, {transform_indices = @transform_15, window_bounds = array<i64: 1, 64, 256>}, {transform_indices = @transform_16, window_bounds = array<i64: 1, 32, 256>}]} {
    %c0 = arith.constant 0 : index
    %c0_0 = arith.constant 0 : index
    %c0_1 = arith.constant 0 : index
    %0 = vector.load %arg1[%c0, %c0_0, %c0_1] : memref<1x16x256xf32, #tpu.memory_space<vmem>>, vector<1x16x256xf32>
    %1 = vector.shape_cast %0 : vector<1x16x256xf32> to vector<16x256xf32>
    %c0_2 = arith.constant 0 : index
    %c0_3 = arith.constant 0 : index
    %2 = vector.load %arg2[%c0_2, %c0_3] : memref<256x16xbf16, #tpu.memory_space<vmem>>, vector<256x16xbf16>
    %c0_4 = arith.constant 0 : index
    %c0_5 = arith.constant 0 : index
    %3 = vector.load %arg3[%c0_4, %c0_5] : memref<256x1xf32, #tpu.memory_space<vmem>>, vector<256x1xf32>
    %4 = arith.truncf %1 : vector<16x256xf32> to vector<16x256xbf16>
    %cst = arith.constant dense<0.000000e+00> : vector<256x256xf32>
    %5 = tpu.matmul %2, %4, %cst {dimension_numbers = #tpu.dot_dimension_numbers<[1], [0], [0], [1], [0, 0, 1, 1], [], []>} : vector<256x16xbf16>, vector<16x256xbf16>, vector<256x256xf32> -> vector<256x256xf32>
    %6 = vector.broadcast %3 : vector<256x1xf32> to vector<256x256xf32>
    %7 = arith.addf %5, %6 : vector<256x256xf32>
    %cst_6 = arith.constant dense<0.000000e+00> : vector<256xf32>
    %8 = vector.multi_reduction <add>, %7, %cst_6 [1] : vector<256x256xf32> to vector<256xf32>
    %9 = vector.shape_cast %8 : vector<256xf32> to vector<256x1xf32>
    %cst_7 = arith.constant 2.560000e+02 : f32
    %10 = vector.broadcast %cst_7 : f32 to vector<256x1xf32>
    %11 = arith.divf %9, %10 : vector<256x1xf32>
    %12 = vector.broadcast %11 : vector<256x1xf32> to vector<256x256xf32>
    %13 = arith.subf %7, %12 : vector<256x256xf32>
    %14 = arith.mulf %13, %13 : vector<256x256xf32>
    %cst_8 = arith.constant dense<0.000000e+00> : vector<256xf32>
    %15 = vector.multi_reduction <add>, %14, %cst_8 [1] : vector<256x256xf32> to vector<256xf32>
    %16 = vector.shape_cast %15 : vector<256xf32> to vector<256x1xf32>
    %cst_9 = arith.constant 2.560000e+02 : f32
    %17 = vector.broadcast %cst_9 : f32 to vector<256x1xf32>
    %18 = arith.divf %16, %17 : vector<256x1xf32>
    %cst_10 = arith.constant 9.99999974E-6 : f32
    %19 = vector.broadcast %cst_10 : f32 to vector<256x1xf32>
    %20 = arith.addf %18, %19 : vector<256x1xf32>
    %21 = math.rsqrt %20 : vector<256x1xf32>
    %22 = vector.broadcast %21 : vector<256x1xf32> to vector<256x256xf32>
    %23 = arith.mulf %13, %22 : vector<256x256xf32>
    %cst_11 = arith.constant 5.000000e-01 : f32
    %24 = vector.broadcast %cst_11 : f32 to vector<256x256xf32>
    %25 = arith.mulf %24, %23 : vector<256x256xf32>
    %cst_12 = arith.constant 0.707106769 : f32
    %26 = vector.broadcast %cst_12 : f32 to vector<256x256xf32>
    %27 = arith.mulf %23, %26 : vector<256x256xf32>
    %28 = math.erf %27 : vector<256x256xf32>
    %cst_13 = arith.constant 1.000000e+00 : f32
    %29 = vector.broadcast %cst_13 : f32 to vector<256x256xf32>
    %30 = arith.addf %29, %28 : vector<256x256xf32>
    %31 = arith.mulf %25, %30 : vector<256x256xf32>
    %c0_14 = arith.constant 0 : index
    %c0_15 = arith.constant 0 : index
    %32 = vector.load %arg4[%c0_14, %c0_15] : memref<128x256xbf16, #tpu.memory_space<vmem>>, vector<128x256xbf16>
    %c0_16 = arith.constant 0 : index
    %c0_17 = arith.constant 0 : index
    %33 = vector.load %arg5[%c0_16, %c0_17] : memref<128x1xf32, #tpu.memory_space<vmem>>, vector<128x1xf32>
    %34 = arith.truncf %31 : vector<256x256xf32> to vector<256x256xbf16>
    %cst_18 = arith.constant dense<0.000000e+00> : vector<128x256xf32>
    %35 = tpu.matmul %32, %34, %cst_18 {dimension_numbers = #tpu.dot_dimension_numbers<[1], [0], [0], [1], [0, 0, 1, 1], [], []>} : vector<128x256xbf16>, vector<256x256xbf16>, vector<128x256xf32> -> vector<128x256xf32>
    %36 = vector.broadcast %33 : vector<128x1xf32> to vector<128x256xf32>
    %37 = arith.addf %35, %36 : vector<128x256xf32>
    %cst_19 = arith.constant dense<0.000000e+00> : vector<128xf32>
    %38 = vector.multi_reduction <add>, %37, %cst_19 [1] : vector<128x256xf32> to vector<128xf32>
    %39 = vector.shape_cast %38 : vector<128xf32> to vector<128x1xf32>
    %cst_20 = arith.constant 2.560000e+02 : f32
    %40 = vector.broadcast %cst_20 : f32 to vector<128x1xf32>
    %41 = arith.divf %39, %40 : vector<128x1xf32>
    %42 = vector.broadcast %41 : vector<128x1xf32> to vector<128x256xf32>
    %43 = arith.subf %37, %42 : vector<128x256xf32>
    %44 = arith.mulf %43, %43 : vector<128x256xf32>
    %cst_21 = arith.constant dense<0.000000e+00> : vector<128xf32>
    %45 = vector.multi_reduction <add>, %44, %cst_21 [1] : vector<128x256xf32> to vector<128xf32>
    %46 = vector.shape_cast %45 : vector<128xf32> to vector<128x1xf32>
    %cst_22 = arith.constant 2.560000e+02 : f32
    %47 = vector.broadcast %cst_22 : f32 to vector<128x1xf32>
    %48 = arith.divf %46, %47 : vector<128x1xf32>
    %cst_23 = arith.constant 9.99999974E-6 : f32
    %49 = vector.broadcast %cst_23 : f32 to vector<128x1xf32>
    %50 = arith.addf %48, %49 : vector<128x1xf32>
    %51 = math.rsqrt %50 : vector<128x1xf32>
    %52 = vector.broadcast %51 : vector<128x1xf32> to vector<128x256xf32>
    %53 = arith.mulf %43, %52 : vector<128x256xf32>
    %cst_24 = arith.constant 5.000000e-01 : f32
    %54 = vector.broadcast %cst_24 : f32 to vector<128x256xf32>
    %55 = arith.mulf %54, %53 : vector<128x256xf32>
    %cst_25 = arith.constant 0.707106769 : f32
    %56 = vector.broadcast %cst_25 : f32 to vector<128x256xf32>
    %57 = arith.mulf %53, %56 : vector<128x256xf32>
    %58 = math.erf %57 : vector<128x256xf32>
    %cst_26 = arith.constant 1.000000e+00 : f32
    %59 = vector.broadcast %cst_26 : f32 to vector<128x256xf32>
    %60 = arith.addf %59, %58 : vector<128x256xf32>
    %61 = arith.mulf %55, %60 : vector<128x256xf32>
    %c0_27 = arith.constant 0 : index
    %c0_28 = arith.constant 0 : index
    %62 = vector.load %arg6[%c0_27, %c0_28] : memref<128x128xbf16, #tpu.memory_space<vmem>>, vector<128x128xbf16>
    %c0_29 = arith.constant 0 : index
    %c0_30 = arith.constant 0 : index
    %63 = vector.load %arg7[%c0_29, %c0_30] : memref<128x1xf32, #tpu.memory_space<vmem>>, vector<128x1xf32>
    %64 = arith.truncf %61 : vector<128x256xf32> to vector<128x256xbf16>
    %cst_31 = arith.constant dense<0.000000e+00> : vector<128x256xf32>
    %65 = tpu.matmul %62, %64, %cst_31 {dimension_numbers = #tpu.dot_dimension_numbers<[1], [0], [0], [1], [0, 0, 1, 1], [], []>} : vector<128x128xbf16>, vector<128x256xbf16>, vector<128x256xf32> -> vector<128x256xf32>
    %66 = vector.broadcast %63 : vector<128x1xf32> to vector<128x256xf32>
    %67 = arith.addf %65, %66 : vector<128x256xf32>
    %cst_32 = arith.constant dense<0.000000e+00> : vector<128xf32>
    %68 = vector.multi_reduction <add>, %67, %cst_32 [1] : vector<128x256xf32> to vector<128xf32>
    %69 = vector.shape_cast %68 : vector<128xf32> to vector<128x1xf32>
    %cst_33 = arith.constant 2.560000e+02 : f32
    %70 = vector.broadcast %cst_33 : f32 to vector<128x1xf32>
    %71 = arith.divf %69, %70 : vector<128x1xf32>
    %72 = vector.broadcast %71 : vector<128x1xf32> to vector<128x256xf32>
    %73 = arith.subf %67, %72 : vector<128x256xf32>
    %74 = arith.mulf %73, %73 : vector<128x256xf32>
    %cst_34 = arith.constant dense<0.000000e+00> : vector<128xf32>
    %75 = vector.multi_reduction <add>, %74, %cst_34 [1] : vector<128x256xf32> to vector<128xf32>
    %76 = vector.shape_cast %75 : vector<128xf32> to vector<128x1xf32>
    %cst_35 = arith.constant 2.560000e+02 : f32
    %77 = vector.broadcast %cst_35 : f32 to vector<128x1xf32>
    %78 = arith.divf %76, %77 : vector<128x1xf32>
    %cst_36 = arith.constant 9.99999974E-6 : f32
    %79 = vector.broadcast %cst_36 : f32 to vector<128x1xf32>
    %80 = arith.addf %78, %79 : vector<128x1xf32>
    %81 = math.rsqrt %80 : vector<128x1xf32>
    %82 = vector.broadcast %81 : vector<128x1xf32> to vector<128x256xf32>
    %83 = arith.mulf %73, %82 : vector<128x256xf32>
    %cst_37 = arith.constant 5.000000e-01 : f32
    %84 = vector.broadcast %cst_37 : f32 to vector<128x256xf32>
    %85 = arith.mulf %84, %83 : vector<128x256xf32>
    %cst_38 = arith.constant 0.707106769 : f32
    %86 = vector.broadcast %cst_38 : f32 to vector<128x256xf32>
    %87 = arith.mulf %83, %86 : vector<128x256xf32>
    %88 = math.erf %87 : vector<128x256xf32>
    %cst_39 = arith.constant 1.000000e+00 : f32
    %89 = vector.broadcast %cst_39 : f32 to vector<128x256xf32>
    %90 = arith.addf %89, %88 : vector<128x256xf32>
    %91 = arith.mulf %85, %90 : vector<128x256xf32>
    %c0_40 = arith.constant 0 : index
    %c0_41 = arith.constant 0 : index
    %92 = vector.load %arg8[%c0_40, %c0_41] : memref<64x128xbf16, #tpu.memory_space<vmem>>, vector<64x128xbf16>
    %c0_42 = arith.constant 0 : index
    %c0_43 = arith.constant 0 : index
    %93 = vector.load %arg9[%c0_42, %c0_43] : memref<64x1xf32, #tpu.memory_space<vmem>>, vector<64x1xf32>
    %94 = arith.truncf %91 : vector<128x256xf32> to vector<128x256xbf16>
    %cst_44 = arith.constant dense<0.000000e+00> : vector<64x256xf32>
    %95 = tpu.matmul %92, %94, %cst_44 {dimension_numbers = #tpu.dot_dimension_numbers<[1], [0], [0], [1], [0, 0, 1, 1], [], []>} : vector<64x128xbf16>, vector<128x256xbf16>, vector<64x256xf32> -> vector<64x256xf32>
    %96 = vector.broadcast %93 : vector<64x1xf32> to vector<64x256xf32>
    %97 = arith.addf %95, %96 : vector<64x256xf32>
    %cst_45 = arith.constant dense<0.000000e+00> : vector<64xf32>
    %98 = vector.multi_reduction <add>, %97, %cst_45 [1] : vector<64x256xf32> to vector<64xf32>
    %99 = vector.shape_cast %98 : vector<64xf32> to vector<64x1xf32>
    %cst_46 = arith.constant 2.560000e+02 : f32
    %100 = vector.broadcast %cst_46 : f32 to vector<64x1xf32>
    %101 = arith.divf %99, %100 : vector<64x1xf32>
    %102 = vector.broadcast %101 : vector<64x1xf32> to vector<64x256xf32>
    %103 = arith.subf %97, %102 : vector<64x256xf32>
    %104 = arith.mulf %103, %103 : vector<64x256xf32>
    %cst_47 = arith.constant dense<0.000000e+00> : vector<64xf32>
    %105 = vector.multi_reduction <add>, %104, %cst_47 [1] : vector<64x256xf32> to vector<64xf32>
    %106 = vector.shape_cast %105 : vector<64xf32> to vector<64x1xf32>
    %cst_48 = arith.constant 2.560000e+02 : f32
    %107 = vector.broadcast %cst_48 : f32 to vector<64x1xf32>
    %108 = arith.divf %106, %107 : vector<64x1xf32>
    %cst_49 = arith.constant 9.99999974E-6 : f32
    %109 = vector.broadcast %cst_49 : f32 to vector<64x1xf32>
    %110 = arith.addf %108, %109 : vector<64x1xf32>
    %111 = math.rsqrt %110 : vector<64x1xf32>
    %112 = vector.broadcast %111 : vector<64x1xf32> to vector<64x256xf32>
    %113 = arith.mulf %103, %112 : vector<64x256xf32>
    %cst_50 = arith.constant 5.000000e-01 : f32
    %114 = vector.broadcast %cst_50 : f32 to vector<64x256xf32>
    %115 = arith.mulf %114, %113 : vector<64x256xf32>
    %cst_51 = arith.constant 0.707106769 : f32
    %116 = vector.broadcast %cst_51 : f32 to vector<64x256xf32>
    %117 = arith.mulf %113, %116 : vector<64x256xf32>
    %118 = math.erf %117 : vector<64x256xf32>
    %cst_52 = arith.constant 1.000000e+00 : f32
    %119 = vector.broadcast %cst_52 : f32 to vector<64x256xf32>
    %120 = arith.addf %119, %118 : vector<64x256xf32>
    %121 = arith.mulf %115, %120 : vector<64x256xf32>
    %c0_53 = arith.constant 0 : index
    %c0_54 = arith.constant 0 : index
    %c0_55 = arith.constant 0 : index
    %122 = vector.load %arg16[%c0_53, %c0_54, %c0_55] : memref<1x64x256xf32, #tpu.memory_space<vmem>>, vector<1x64x256xf32>
    %123 = vector.shape_cast %122 : vector<1x64x256xf32> to vector<64x256xf32>
    %124 = vector.shape_cast %121 : vector<64x256xf32> to vector<1x64x256xf32>
    tpu.vector_store %arg16[%c0_53, %c0_54, %c0_55], %124 {strides = array<i32>} : memref<1x64x256xf32, #tpu.memory_space<vmem>>, vector<1x64x256xf32>,
    %c0_56 = arith.constant 0 : index
    %c0_57 = arith.constant 0 : index
    %125 = vector.load %arg10[%c0_56, %c0_57] : memref<64x64xbf16, #tpu.memory_space<vmem>>, vector<64x64xbf16>
    %c0_58 = arith.constant 0 : index
    %c0_59 = arith.constant 0 : index
    %126 = vector.load %arg11[%c0_58, %c0_59] : memref<64x1xf32, #tpu.memory_space<vmem>>, vector<64x1xf32>
    %127 = arith.truncf %121 : vector<64x256xf32> to vector<64x256xbf16>
    %cst_60 = arith.constant dense<0.000000e+00> : vector<64x256xf32>
    %128 = tpu.matmul %125, %127, %cst_60 {dimension_numbers = #tpu.dot_dimension_numbers<[1], [0], [0], [1], [0, 0, 1, 1], [], []>} : vector<64x64xbf16>, vector<64x256xbf16>, vector<64x256xf32> -> vector<64x256xf32>
    %129 = vector.broadcast %126 : vector<64x1xf32> to vector<64x256xf32>
    %130 = arith.addf %128, %129 : vector<64x256xf32>
    %cst_61 = arith.constant dense<0.000000e+00> : vector<64xf32>
    %131 = vector.multi_reduction <add>, %130, %cst_61 [1] : vector<64x256xf32> to vector<64xf32>
    %132 = vector.shape_cast %131 : vector<64xf32> to vector<64x1xf32>
    %cst_62 = arith.constant 2.560000e+02 : f32
    %133 = vector.broadcast %cst_62 : f32 to vector<64x1xf32>
    %134 = arith.divf %132, %133 : vector<64x1xf32>
    %135 = vector.broadcast %134 : vector<64x1xf32> to vector<64x256xf32>
    %136 = arith.subf %130, %135 : vector<64x256xf32>
    %137 = arith.mulf %136, %136 : vector<64x256xf32>
    %cst_63 = arith.constant dense<0.000000e+00> : vector<64xf32>
    %138 = vector.multi_reduction <add>, %137, %cst_63 [1] : vector<64x256xf32> to vector<64xf32>
    %139 = vector.shape_cast %138 : vector<64xf32> to vector<64x1xf32>
    %cst_64 = arith.constant 2.560000e+02 : f32
    %140 = vector.broadcast %cst_64 : f32 to vector<64x1xf32>
    %141 = arith.divf %139, %140 : vector<64x1xf32>
    %cst_65 = arith.constant 9.99999974E-6 : f32
    %142 = vector.broadcast %cst_65 : f32 to vector<64x1xf32>
    %143 = arith.addf %141, %142 : vector<64x1xf32>
    %144 = math.rsqrt %143 : vector<64x1xf32>
    %145 = vector.broadcast %144 : vector<64x1xf32> to vector<64x256xf32>
    %146 = arith.mulf %136, %145 : vector<64x256xf32>
    %cst_66 = arith.constant 5.000000e-01 : f32
    %147 = vector.broadcast %cst_66 : f32 to vector<64x256xf32>
    %148 = arith.mulf %147, %146 : vector<64x256xf32>
    %cst_67 = arith.constant 0.707106769 : f32
    %149 = vector.broadcast %cst_67 : f32 to vector<64x256xf32>
    %150 = arith.mulf %146, %149 : vector<64x256xf32>
    %151 = math.erf %150 : vector<64x256xf32>
    %cst_68 = arith.constant 1.000000e+00 : f32
    %152 = vector.broadcast %cst_68 : f32 to vector<64x256xf32>
    %153 = arith.addf %152, %151 : vector<64x256xf32>
    %154 = arith.mulf %148, %153 : vector<64x256xf32>
    %c0_69 = arith.constant 0 : index
    %c0_70 = arith.constant 0 : index
    %155 = vector.load %arg12[%c0_69, %c0_70] : memref<32x64xbf16, #tpu.memory_space<vmem>>, vector<32x64xbf16>
    %c0_71 = arith.constant 0 : index
    %c0_72 = arith.constant 0 : index
    %156 = vector.load %arg13[%c0_71, %c0_72] : memref<32x1xf32, #tpu.memory_space<vmem>>, vector<32x1xf32>
    %157 = arith.truncf %154 : vector<64x256xf32> to vector<64x256xbf16>
    %cst_73 = arith.constant dense<0.000000e+00> : vector<32x256xf32>
    %158 = tpu.matmul %155, %157, %cst_73 {dimension_numbers = #tpu.dot_dimension_numbers<[1], [0], [0], [1], [0, 0, 1, 1], [], []>} : vector<32x64xbf16>, vector<64x256xbf16>, vector<32x256xf32> -> vector<32x256xf32>
    %159 = vector.broadcast %156 : vector<32x1xf32> to vector<32x256xf32>
    %160 = arith.addf %158, %159 : vector<32x256xf32>
    %cst_74 = arith.constant dense<0.000000e+00> : vector<32xf32>
    %161 = vector.multi_reduction <add>, %160, %cst_74 [1] : vector<32x256xf32> to vector<32xf32>
    %162 = vector.shape_cast %161 : vector<32xf32> to vector<32x1xf32>
    %cst_75 = arith.constant 2.560000e+02 : f32
    %163 = vector.broadcast %cst_75 : f32 to vector<32x1xf32>
    %164 = arith.divf %162, %163 : vector<32x1xf32>
    %165 = vector.broadcast %164 : vector<32x1xf32> to vector<32x256xf32>
    %166 = arith.subf %160, %165 : vector<32x256xf32>
    %167 = arith.mulf %166, %166 : vector<32x256xf32>
    %cst_76 = arith.constant dense<0.000000e+00> : vector<32xf32>
    %168 = vector.multi_reduction <add>, %167, %cst_76 [1] : vector<32x256xf32> to vector<32xf32>
    %169 = vector.shape_cast %168 : vector<32xf32> to vector<32x1xf32>
    %cst_77 = arith.constant 2.560000e+02 : f32
    %170 = vector.broadcast %cst_77 : f32 to vector<32x1xf32>
    %171 = arith.divf %169, %170 : vector<32x1xf32>
    %cst_78 = arith.constant 9.99999974E-6 : f32
    %172 = vector.broadcast %cst_78 : f32 to vector<32x1xf32>
    %173 = arith.addf %171, %172 : vector<32x1xf32>
    %174 = math.rsqrt %173 : vector<32x1xf32>
    %175 = vector.broadcast %174 : vector<32x1xf32> to vector<32x256xf32>
    %176 = arith.mulf %166, %175 : vector<32x256xf32>
    %cst_79 = arith.constant 5.000000e-01 : f32
    %177 = vector.broadcast %cst_79 : f32 to vector<32x256xf32>
    %178 = arith.mulf %177, %176 : vector<32x256xf32>
    %cst_80 = arith.constant 0.707106769 : f32
    %179 = vector.broadcast %cst_80 : f32 to vector<32x256xf32>
    %180 = arith.mulf %176, %179 : vector<32x256xf32>
    %181 = math.erf %180 : vector<32x256xf32>
    %cst_81 = arith.constant 1.000000e+00 : f32
    %182 = vector.broadcast %cst_81 : f32 to vector<32x256xf32>
    %183 = arith.addf %182, %181 : vector<32x256xf32>
    %184 = arith.mulf %178, %183 : vector<32x256xf32>
    %c0_82 = arith.constant 0 : index
    %c0_83 = arith.constant 0 : index
    %185 = vector.load %arg14[%c0_82, %c0_83] : memref<32x32xbf16, #tpu.memory_space<vmem>>, vector<32x32xbf16>
    %c0_84 = arith.constant 0 : index
    %c0_85 = arith.constant 0 : index
    %186 = vector.load %arg15[%c0_84, %c0_85] : memref<32x1xf32, #tpu.memory_space<vmem>>, vector<32x1xf32>
    %187 = arith.truncf %184 : vector<32x256xf32> to vector<32x256xbf16>
    %cst_86 = arith.constant dense<0.000000e+00> : vector<32x256xf32>
    %188 = tpu.matmul %185, %187, %cst_86 {dimension_numbers = #tpu.dot_dimension_numbers<[1], [0], [0], [1], [0, 0, 1, 1], [], []>} : vector<32x32xbf16>, vector<32x256xbf16>, vector<32x256xf32> -> vector<32x256xf32>
    %189 = vector.broadcast %186 : vector<32x1xf32> to vector<32x256xf32>
    %190 = arith.addf %188, %189 : vector<32x256xf32>
    %c0_87 = arith.constant 0 : index
    %c0_88 = arith.constant 0 : index
    %c0_89 = arith.constant 0 : index
    %191 = vector.load %arg17[%c0_87, %c0_88, %c0_89] : memref<1x32x256xf32, #tpu.memory_space<vmem>>, vector<1x32x256xf32>
    %192 = vector.shape_cast %191 : vector<1x32x256xf32> to vector<32x256xf32>
    %193 = vector.shape_cast %190 : vector<32x256xf32> to vector<1x32x256xf32>
    tpu.vector_store %arg17[%c0_87, %c0_88, %c0_89], %193 {strides = array<i32>} : memref<1x32x256xf32, #tpu.memory_space<vmem>>, vector<1x32x256xf32>,
    return
  }
  func.func @transform_0(%arg0: i32) -> (i32, i32, i32) {
    %c0_i32 = arith.constant 0 : i32
    %c0_i32_0 = arith.constant 0 : i32
    %c0_i32_1 = arith.constant 0 : i32
    return %arg0, %c0_i32, %c0_i32_0 : i32, i32, i32
  }
  func.func @transform_1(%arg0: i32) -> (i32, i32) {
    %c0_i32 = arith.constant 0 : i32
    %c0_i32_0 = arith.constant 0 : i32
    %c0_i32_1 = arith.constant 0 : i32
    return %c0_i32, %c0_i32_0 : i32, i32
  }
  func.func @transform_2(%arg0: i32) -> (i32, i32) {
    %c0_i32 = arith.constant 0 : i32
    %c0_i32_0 = arith.constant 0 : i32
    %c0_i32_1 = arith.constant 0 : i32
    return %c0_i32, %c0_i32_0 : i32, i32
  }
  func.func @transform_3(%arg0: i32) -> (i32, i32) {
    %c0_i32 = arith.constant 0 : i32
    %c0_i32_0 = arith.constant 0 : i32
    %c0_i32_1 = arith.constant 0 : i32
    return %c0_i32, %c0_i32_0 : i32, i32
  }
  func.func @transform_4(%arg0: i32) -> (i32, i32) {
    %c0_i32 = arith.constant 0 : i32
    %c0_i32_0 = arith.constant 0 : i32
    %c0_i32_1 = arith.constant 0 : i32
    return %c0_i32, %c0_i32_0 : i32, i32
  }
  func.func @transform_5(%arg0: i32) -> (i32, i32) {
    %c0_i32 = arith.constant 0 : i32
    %c0_i32_0 = arith.constant 0 : i32
    %c0_i32_1 = arith.constant 0 : i32
    return %c0_i32, %c0_i32_0 : i32, i32
  }
  func.func @transform_6(%arg0: i32) -> (i32, i32) {
    %c0_i32 = arith.constant 0 : i32
    %c0_i32_0 = arith.constant 0 : i32
    %c0_i32_1 = arith.constant 0 : i32
    return %c0_i32, %c0_i32_0 : i32, i32
  }
  func.func @transform_7(%arg0: i32) -> (i32, i32) {
    %c0_i32 = arith.constant 0 : i32
    %c0_i32_0 = arith.constant 0 : i32
    %c0_i32_1 = arith.constant 0 : i32
    return %c0_i32, %c0_i32_0 : i32, i32
  }
  func.func @transform_8(%arg0: i32) -> (i32, i32) {
    %c0_i32 = arith.constant 0 : i32
    %c0_i32_0 = arith.constant 0 : i32
    %c0_i32_1 = arith.constant 0 : i32
    return %c0_i32, %c0_i32_0 : i32, i32
  }
  func.func @transform_9(%arg0: i32) -> (i32, i32) {
    %c0_i32 = arith.constant 0 : i32
    %c0_i32_0 = arith.constant 0 : i32
    %c0_i32_1 = arith.constant 0 : i32
    return %c0_i32, %c0_i32_0 : i32, i32
  }
  func.func @transform_10(%arg0: i32) -> (i32, i32) {
    %c0_i32 = arith.constant 0 : i32
    %c0_i32_0 = arith.constant 0 : i32
    %c0_i32_1 = arith.constant 0 : i32
    return %c0_i32, %c0_i32_0 : i32, i32
  }
  func.func @transform_11(%arg0: i32) -> (i32, i32) {
    %c0_i32 = arith.constant 0 : i32
    %c0_i32_0 = arith.constant 0 : i32
    %c0_i32_1 = arith.constant 0 : i32
    return %c0_i32, %c0_i32_0 : i32, i32
  }
  func.func @transform_12(%arg0: i32) -> (i32, i32) {
    %c0_i32 = arith.constant 0 : i32
    %c0_i32_0 = arith.constant 0 : i32
    %c0_i32_1 = arith.constant 0 : i32
    return %c0_i32, %c0_i32_0 : i32, i32
  }
  func.func @transform_13(%arg0: i32) -> (i32, i32) {
    %c0_i32 = arith.constant 0 : i32
    %c0_i32_0 = arith.constant 0 : i32
    %c0_i32_1 = arith.constant 0 : i32
    return %c0_i32, %c0_i32_0 : i32, i32
  }
  func.func @transform_14(%arg0: i32) -> (i32, i32) {
    %c0_i32 = arith.constant 0 : i32
    %c0_i32_0 = arith.constant 0 : i32
    %c0_i32_1 = arith.constant 0 : i32
    return %c0_i32, %c0_i32_0 : i32, i32
  }
  func.func @transform_15(%arg0: i32) -> (i32, i32, i32) {
    %c0_i32 = arith.constant 0 : i32
    %c0_i32_0 = arith.constant 0 : i32
    %c0_i32_1 = arith.constant 0 : i32
    return %arg0, %c0_i32, %c0_i32_0 : i32, i32, i32
  }
  func.func @transform_16(%arg0: i32) -> (i32, i32, i32) {
    %c0_i32 = arith.constant 0 : i32
    %c0_i32_0 = arith.constant 0 : i32
    %c0_i32_1 = arith.constant 0 : i32
    return %arg0, %c0_i32, %c0_i32_0 : i32, i32, i32
  }
}

module attributes {stable_mosaic.version = 11 : i64} {
  func.func @_encoder_kernel(%arg0: i32, %arg1: memref<1x16x256xf32, #tpu.memory_space<vmem>>, %arg2: memref<256x16xbf16, #tpu.memory_space<vmem>>, %arg3: memref<256x1xf32, #tpu.memory_space<vmem>>, %arg4: memref<128x256xbf16, #tpu.memory_space<vmem>>, %arg5: memref<128x1xf32, #tpu.memory_space<vmem>>, %arg6: memref<128x128xbf16, #tpu.memory_space<vmem>>, %arg7: memref<128x1xf32, #tpu.memory_space<vmem>>, %arg8: memref<64x128xbf16, #tpu.memory_space<vmem>>, %arg9: memref<64x1xf32, #tpu.memory_space<vmem>>, %arg10: memref<64x64xbf16, #tpu.memory_space<vmem>>, %arg11: memref<64x1xf32, #tpu.memory_space<vmem>>, %arg12: memref<32x64xbf16, #tpu.memory_space<vmem>>, %arg13: memref<32x1xf32, #tpu.memory_space<vmem>>, %arg14: memref<32x32xbf16, #tpu.memory_space<vmem>>, %arg15: memref<32x1xf32, #tpu.memory_space<vmem>>, %arg16: memref<1x64x256xf32, #tpu.memory_space<vmem>>, %arg17: memref<1x32x256xf32, #tpu.memory_space<vmem>>) attributes {dimension_semantics = [#tpu.dimension_semantics<parallel>], iteration_bounds = array<i64: 2>, scalar_prefetch = 0 : i64, scratch_operands = 0 : i64, tpu.core_type = #tpu.core_type<tc>, window_params = [{transform_indices = @transform_0, window_bounds = array<i64: 1, 16, 256>}, {pipeline_mode = #tpu.pipeline_mode<synchronous>, transform_indices = @transform_1, window_bounds = array<i64: 256, 16>}, {pipeline_mode = #tpu.pipeline_mode<synchronous>, transform_indices = @transform_2, window_bounds = array<i64: 256, 1>}, {pipeline_mode = #tpu.pipeline_mode<synchronous>, transform_indices = @transform_3, window_bounds = array<i64: 128, 256>}, {pipeline_mode = #tpu.pipeline_mode<synchronous>, transform_indices = @transform_4, window_bounds = array<i64: 128, 1>}, {pipeline_mode = #tpu.pipeline_mode<synchronous>, transform_indices = @transform_5, window_bounds = array<i64: 128, 128>}, {pipeline_mode = #tpu.pipeline_mode<synchronous>, transform_indices = @transform_6, window_bounds = array<i64: 128, 1>}, {pipeline_mode = #tpu.pipeline_mode<synchronous>, transform_indices = @transform_7, window_bounds = array<i64: 64, 128>}, {pipeline_mode = #tpu.pipeline_mode<synchronous>, transform_indices = @transform_8, window_bounds = array<i64: 64, 1>}, {pipeline_mode = #tpu.pipeline_mode<synchronous>, transform_indices = @transform_9, window_bounds = array<i64: 64, 64>}, {pipeline_mode = #tpu.pipeline_mode<synchronous>, transform_indices = @transform_10, window_bounds = array<i64: 64, 1>}, {pipeline_mode = #tpu.pipeline_mode<synchronous>, transform_indices = @transform_11, window_bounds = array<i64: 32, 64>}, {pipeline_mode = #tpu.pipeline_mode<synchronous>, transform_indices = @transform_12, window_bounds = array<i64: 32, 1>}, {pipeline_mode = #tpu.pipeline_mode<synchronous>, transform_indices = @transform_13, window_bounds = array<i64: 32, 32>}, {pipeline_mode = #tpu.pipeline_mode<synchronous>, transform_indices = @transform_14, window_bounds = array<i64: 32, 1>}, {transform_indices = @transform_15, window_bounds = array<i64: 1, 64, 256>}, {transform_indices = @transform_16, window_bounds = array<i64: 1, 32, 256>}]} {
    %c0 = arith.constant 0 : index
    %c0_0 = arith.constant 0 : index
    %c0_1 = arith.constant 0 : index
    %0 = vector.load %arg1[%c0, %c0_0, %c0_1] : memref<1x16x256xf32, #tpu.memory_space<vmem>>, vector<1x16x256xf32>
    %1 = vector.shape_cast %0 : vector<1x16x256xf32> to vector<16x256xf32>
    %c0_2 = arith.constant 0 : index
    %c0_3 = arith.constant 0 : index
    %2 = vector.load %arg2[%c0_2, %c0_3] : memref<256x16xbf16, #tpu.memory_space<vmem>>, vector<256x16xbf16>
    %c0_4 = arith.constant 0 : index
    %c0_5 = arith.constant 0 : index
    %3 = vector.load %arg3[%c0_4, %c0_5] : memref<256x1xf32, #tpu.memory_space<vmem>>, vector<256x1xf32>
    %4 = arith.truncf %1 : vector<16x256xf32> to vector<16x256xbf16>
    %cst = arith.constant dense<0.000000e+00> : vector<256x256xf32>
    %5 = tpu.matmul %2, %4, %cst {dimension_numbers = #tpu.dot_dimension_numbers<[1], [0], [0], [1], [0, 0, 1, 1], [], []>} : vector<256x16xbf16>, vector<16x256xbf16>, vector<256x256xf32> -> vector<256x256xf32>
    %6 = vector.broadcast %3 : vector<256x1xf32> to vector<256x256xf32>
    %7 = arith.addf %5, %6 : vector<256x256xf32>
    %cst_6 = arith.constant dense<0.000000e+00> : vector<256xf32>
    %8 = vector.multi_reduction <add>, %7, %cst_6 [1] : vector<256x256xf32> to vector<256xf32>
    %9 = vector.shape_cast %8 : vector<256xf32> to vector<256x1xf32>
    %cst_7 = arith.constant 2.560000e+02 : f32
    %10 = vector.broadcast %cst_7 : f32 to vector<256x1xf32>
    %11 = arith.divf %9, %10 : vector<256x1xf32>
    %12 = vector.broadcast %11 : vector<256x1xf32> to vector<256x256xf32>
    %13 = arith.subf %7, %12 : vector<256x256xf32>
    %14 = arith.mulf %13, %13 : vector<256x256xf32>
    %cst_8 = arith.constant dense<0.000000e+00> : vector<256xf32>
    %15 = vector.multi_reduction <add>, %14, %cst_8 [1] : vector<256x256xf32> to vector<256xf32>
    %16 = vector.shape_cast %15 : vector<256xf32> to vector<256x1xf32>
    %cst_9 = arith.constant 2.560000e+02 : f32
    %17 = vector.broadcast %cst_9 : f32 to vector<256x1xf32>
    %18 = arith.divf %16, %17 : vector<256x1xf32>
    %cst_10 = arith.constant 9.99999974E-6 : f32
    %19 = vector.broadcast %cst_10 : f32 to vector<256x1xf32>
    %20 = arith.addf %18, %19 : vector<256x1xf32>
    %21 = math.rsqrt %20 : vector<256x1xf32>
    %22 = vector.broadcast %21 : vector<256x1xf32> to vector<256x256xf32>
    %23 = arith.mulf %13, %22 : vector<256x256xf32>
    %cst_11 = arith.constant 5.000000e-01 : f32
    %24 = vector.broadcast %cst_11 : f32 to vector<256x256xf32>
    %25 = arith.mulf %24, %23 : vector<256x256xf32>
    %cst_12 = arith.constant 0.707106769 : f32
    %26 = vector.broadcast %cst_12 : f32 to vector<256x256xf32>
    %27 = arith.mulf %23, %26 : vector<256x256xf32>
    %28 = math.erf %27 : vector<256x256xf32>
    %cst_13 = arith.constant 1.000000e+00 : f32
    %29 = vector.broadcast %cst_13 : f32 to vector<256x256xf32>
    %30 = arith.addf %29, %28 : vector<256x256xf32>
    %31 = arith.mulf %25, %30 : vector<256x256xf32>
    %c0_14 = arith.constant 0 : index
    %c0_15 = arith.constant 0 : index
    %32 = vector.load %arg4[%c0_14, %c0_15] : memref<128x256xbf16, #tpu.memory_space<vmem>>, vector<128x256xbf16>
    %c0_16 = arith.constant 0 : index
    %c0_17 = arith.constant 0 : index
    %33 = vector.load %arg5[%c0_16, %c0_17] : memref<128x1xf32, #tpu.memory_space<vmem>>, vector<128x1xf32>
    %34 = arith.truncf %31 : vector<256x256xf32> to vector<256x256xbf16>
    %cst_18 = arith.constant dense<0.000000e+00> : vector<128x256xf32>
    %35 = tpu.matmul %32, %34, %cst_18 {dimension_numbers = #tpu.dot_dimension_numbers<[1], [0], [0], [1], [0, 0, 1, 1], [], []>} : vector<128x256xbf16>, vector<256x256xbf16>, vector<128x256xf32> -> vector<128x256xf32>
    %36 = vector.broadcast %33 : vector<128x1xf32> to vector<128x256xf32>
    %37 = arith.addf %35, %36 : vector<128x256xf32>
    %cst_19 = arith.constant dense<0.000000e+00> : vector<128xf32>
    %38 = vector.multi_reduction <add>, %37, %cst_19 [1] : vector<128x256xf32> to vector<128xf32>
    %39 = vector.shape_cast %38 : vector<128xf32> to vector<128x1xf32>
    %cst_20 = arith.constant 2.560000e+02 : f32
    %40 = vector.broadcast %cst_20 : f32 to vector<128x1xf32>
    %41 = arith.divf %39, %40 : vector<128x1xf32>
    %42 = vector.broadcast %41 : vector<128x1xf32> to vector<128x256xf32>
    %43 = arith.subf %37, %42 : vector<128x256xf32>
    %44 = arith.mulf %43, %43 : vector<128x256xf32>
    %cst_21 = arith.constant dense<0.000000e+00> : vector<128xf32>
    %45 = vector.multi_reduction <add>, %44, %cst_21 [1] : vector<128x256xf32> to vector<128xf32>
    %46 = vector.shape_cast %45 : vector<128xf32> to vector<128x1xf32>
    %cst_22 = arith.constant 2.560000e+02 : f32
    %47 = vector.broadcast %cst_22 : f32 to vector<128x1xf32>
    %48 = arith.divf %46, %47 : vector<128x1xf32>
    %cst_23 = arith.constant 9.99999974E-6 : f32
    %49 = vector.broadcast %cst_23 : f32 to vector<128x1xf32>
    %50 = arith.addf %48, %49 : vector<128x1xf32>
    %51 = math.rsqrt %50 : vector<128x1xf32>
    %52 = vector.broadcast %51 : vector<128x1xf32> to vector<128x256xf32>
    %53 = arith.mulf %43, %52 : vector<128x256xf32>
    %cst_24 = arith.constant 5.000000e-01 : f32
    %54 = vector.broadcast %cst_24 : f32 to vector<128x256xf32>
    %55 = arith.mulf %54, %53 : vector<128x256xf32>
    %cst_25 = arith.constant 0.707106769 : f32
    %56 = vector.broadcast %cst_25 : f32 to vector<128x256xf32>
    %57 = arith.mulf %53, %56 : vector<128x256xf32>
    %58 = math.erf %57 : vector<128x256xf32>
    %cst_26 = arith.constant 1.000000e+00 : f32
    %59 = vector.broadcast %cst_26 : f32 to vector<128x256xf32>
    %60 = arith.addf %59, %58 : vector<128x256xf32>
    %61 = arith.mulf %55, %60 : vector<128x256xf32>
    %c0_27 = arith.constant 0 : index
    %c0_28 = arith.constant 0 : index
    %62 = vector.load %arg6[%c0_27, %c0_28] : memref<128x128xbf16, #tpu.memory_space<vmem>>, vector<128x128xbf16>
    %c0_29 = arith.constant 0 : index
    %c0_30 = arith.constant 0 : index
    %63 = vector.load %arg7[%c0_29, %c0_30] : memref<128x1xf32, #tpu.memory_space<vmem>>, vector<128x1xf32>
    %64 = arith.truncf %61 : vector<128x256xf32> to vector<128x256xbf16>
    %cst_31 = arith.constant dense<0.000000e+00> : vector<128x256xf32>
    %65 = tpu.matmul %62, %64, %cst_31 {dimension_numbers = #tpu.dot_dimension_numbers<[1], [0], [0], [1], [0, 0, 1, 1], [], []>} : vector<128x128xbf16>, vector<128x256xbf16>, vector<128x256xf32> -> vector<128x256xf32>
    %66 = vector.broadcast %63 : vector<128x1xf32> to vector<128x256xf32>
    %67 = arith.addf %65, %66 : vector<128x256xf32>
    %cst_32 = arith.constant dense<0.000000e+00> : vector<128xf32>
    %68 = vector.multi_reduction <add>, %67, %cst_32 [1] : vector<128x256xf32> to vector<128xf32>
    %69 = vector.shape_cast %68 : vector<128xf32> to vector<128x1xf32>
    %cst_33 = arith.constant 2.560000e+02 : f32
    %70 = vector.broadcast %cst_33 : f32 to vector<128x1xf32>
    %71 = arith.divf %69, %70 : vector<128x1xf32>
    %72 = vector.broadcast %71 : vector<128x1xf32> to vector<128x256xf32>
    %73 = arith.subf %67, %72 : vector<128x256xf32>
    %74 = arith.mulf %73, %73 : vector<128x256xf32>
    %cst_34 = arith.constant dense<0.000000e+00> : vector<128xf32>
    %75 = vector.multi_reduction <add>, %74, %cst_34 [1] : vector<128x256xf32> to vector<128xf32>
    %76 = vector.shape_cast %75 : vector<128xf32> to vector<128x1xf32>
    %cst_35 = arith.constant 2.560000e+02 : f32
    %77 = vector.broadcast %cst_35 : f32 to vector<128x1xf32>
    %78 = arith.divf %76, %77 : vector<128x1xf32>
    %cst_36 = arith.constant 9.99999974E-6 : f32
    %79 = vector.broadcast %cst_36 : f32 to vector<128x1xf32>
    %80 = arith.addf %78, %79 : vector<128x1xf32>
    %81 = math.rsqrt %80 : vector<128x1xf32>
    %82 = vector.broadcast %81 : vector<128x1xf32> to vector<128x256xf32>
    %83 = arith.mulf %73, %82 : vector<128x256xf32>
    %cst_37 = arith.constant 5.000000e-01 : f32
    %84 = vector.broadcast %cst_37 : f32 to vector<128x256xf32>
    %85 = arith.mulf %84, %83 : vector<128x256xf32>
    %cst_38 = arith.constant 0.707106769 : f32
    %86 = vector.broadcast %cst_38 : f32 to vector<128x256xf32>
    %87 = arith.mulf %83, %86 : vector<128x256xf32>
    %88 = math.erf %87 : vector<128x256xf32>
    %cst_39 = arith.constant 1.000000e+00 : f32
    %89 = vector.broadcast %cst_39 : f32 to vector<128x256xf32>
    %90 = arith.addf %89, %88 : vector<128x256xf32>
    %91 = arith.mulf %85, %90 : vector<128x256xf32>
    %c0_40 = arith.constant 0 : index
    %c0_41 = arith.constant 0 : index
    %92 = vector.load %arg8[%c0_40, %c0_41] : memref<64x128xbf16, #tpu.memory_space<vmem>>, vector<64x128xbf16>
    %c0_42 = arith.constant 0 : index
    %c0_43 = arith.constant 0 : index
    %93 = vector.load %arg9[%c0_42, %c0_43] : memref<64x1xf32, #tpu.memory_space<vmem>>, vector<64x1xf32>
    %94 = arith.truncf %91 : vector<128x256xf32> to vector<128x256xbf16>
    %cst_44 = arith.constant dense<0.000000e+00> : vector<64x256xf32>
    %95 = tpu.matmul %92, %94, %cst_44 {dimension_numbers = #tpu.dot_dimension_numbers<[1], [0], [0], [1], [0, 0, 1, 1], [], []>} : vector<64x128xbf16>, vector<128x256xbf16>, vector<64x256xf32> -> vector<64x256xf32>
    %96 = vector.broadcast %93 : vector<64x1xf32> to vector<64x256xf32>
    %97 = arith.addf %95, %96 : vector<64x256xf32>
    %cst_45 = arith.constant dense<0.000000e+00> : vector<64xf32>
    %98 = vector.multi_reduction <add>, %97, %cst_45 [1] : vector<64x256xf32> to vector<64xf32>
    %99 = vector.shape_cast %98 : vector<64xf32> to vector<64x1xf32>
    %cst_46 = arith.constant 2.560000e+02 : f32
    %100 = vector.broadcast %cst_46 : f32 to vector<64x1xf32>
    %101 = arith.divf %99, %100 : vector<64x1xf32>
    %102 = vector.broadcast %101 : vector<64x1xf32> to vector<64x256xf32>
    %103 = arith.subf %97, %102 : vector<64x256xf32>
    %104 = arith.mulf %103, %103 : vector<64x256xf32>
    %cst_47 = arith.constant dense<0.000000e+00> : vector<64xf32>
    %105 = vector.multi_reduction <add>, %104, %cst_47 [1] : vector<64x256xf32> to vector<64xf32>
    %106 = vector.shape_cast %105 : vector<64xf32> to vector<64x1xf32>
    %cst_48 = arith.constant 2.560000e+02 : f32
    %107 = vector.broadcast %cst_48 : f32 to vector<64x1xf32>
    %108 = arith.divf %106, %107 : vector<64x1xf32>
    %cst_49 = arith.constant 9.99999974E-6 : f32
    %109 = vector.broadcast %cst_49 : f32 to vector<64x1xf32>
    %110 = arith.addf %108, %109 : vector<64x1xf32>
    %111 = math.rsqrt %110 : vector<64x1xf32>
    %112 = vector.broadcast %111 : vector<64x1xf32> to vector<64x256xf32>
    %113 = arith.mulf %103, %112 : vector<64x256xf32>
    %cst_50 = arith.constant 5.000000e-01 : f32
    %114 = vector.broadcast %cst_50 : f32 to vector<64x256xf32>
    %115 = arith.mulf %114, %113 : vector<64x256xf32>
    %cst_51 = arith.constant 0.707106769 : f32
    %116 = vector.broadcast %cst_51 : f32 to vector<64x256xf32>
    %117 = arith.mulf %113, %116 : vector<64x256xf32>
    %118 = math.erf %117 : vector<64x256xf32>
    %cst_52 = arith.constant 1.000000e+00 : f32
    %119 = vector.broadcast %cst_52 : f32 to vector<64x256xf32>
    %120 = arith.addf %119, %118 : vector<64x256xf32>
    %121 = arith.mulf %115, %120 : vector<64x256xf32>
    %c0_53 = arith.constant 0 : index
    %c0_54 = arith.constant 0 : index
    %c0_55 = arith.constant 0 : index
    %122 = vector.load %arg16[%c0_53, %c0_54, %c0_55] : memref<1x64x256xf32, #tpu.memory_space<vmem>>, vector<1x64x256xf32>
    %123 = vector.shape_cast %122 : vector<1x64x256xf32> to vector<64x256xf32>
    %124 = vector.shape_cast %121 : vector<64x256xf32> to vector<1x64x256xf32>
    tpu.vector_store %arg16[%c0_53, %c0_54, %c0_55], %124 {strides = array<i32>} : memref<1x64x256xf32, #tpu.memory_space<vmem>>, vector<1x64x256xf32>,
    %c0_56 = arith.constant 0 : index
    %c0_57 = arith.constant 0 : index
    %125 = vector.load %arg10[%c0_56, %c0_57] : memref<64x64xbf16, #tpu.memory_space<vmem>>, vector<64x64xbf16>
    %c0_58 = arith.constant 0 : index
    %c0_59 = arith.constant 0 : index
    %126 = vector.load %arg11[%c0_58, %c0_59] : memref<64x1xf32, #tpu.memory_space<vmem>>, vector<64x1xf32>
    %127 = arith.truncf %121 : vector<64x256xf32> to vector<64x256xbf16>
    %cst_60 = arith.constant dense<0.000000e+00> : vector<64x256xf32>
    %128 = tpu.matmul %125, %127, %cst_60 {dimension_numbers = #tpu.dot_dimension_numbers<[1], [0], [0], [1], [0, 0, 1, 1], [], []>} : vector<64x64xbf16>, vector<64x256xbf16>, vector<64x256xf32> -> vector<64x256xf32>
    %129 = vector.broadcast %126 : vector<64x1xf32> to vector<64x256xf32>
    %130 = arith.addf %128, %129 : vector<64x256xf32>
    %cst_61 = arith.constant dense<0.000000e+00> : vector<64xf32>
    %131 = vector.multi_reduction <add>, %130, %cst_61 [1] : vector<64x256xf32> to vector<64xf32>
    %132 = vector.shape_cast %131 : vector<64xf32> to vector<64x1xf32>
    %cst_62 = arith.constant 2.560000e+02 : f32
    %133 = vector.broadcast %cst_62 : f32 to vector<64x1xf32>
    %134 = arith.divf %132, %133 : vector<64x1xf32>
    %135 = vector.broadcast %134 : vector<64x1xf32> to vector<64x256xf32>
    %136 = arith.subf %130, %135 : vector<64x256xf32>
    %137 = arith.mulf %136, %136 : vector<64x256xf32>
    %cst_63 = arith.constant dense<0.000000e+00> : vector<64xf32>
    %138 = vector.multi_reduction <add>, %137, %cst_63 [1] : vector<64x256xf32> to vector<64xf32>
    %139 = vector.shape_cast %138 : vector<64xf32> to vector<64x1xf32>
    %cst_64 = arith.constant 2.560000e+02 : f32
    %140 = vector.broadcast %cst_64 : f32 to vector<64x1xf32>
    %141 = arith.divf %139, %140 : vector<64x1xf32>
    %cst_65 = arith.constant 9.99999974E-6 : f32
    %142 = vector.broadcast %cst_65 : f32 to vector<64x1xf32>
    %143 = arith.addf %141, %142 : vector<64x1xf32>
    %144 = math.rsqrt %143 : vector<64x1xf32>
    %145 = vector.broadcast %144 : vector<64x1xf32> to vector<64x256xf32>
    %146 = arith.mulf %136, %145 : vector<64x256xf32>
    %cst_66 = arith.constant 5.000000e-01 : f32
    %147 = vector.broadcast %cst_66 : f32 to vector<64x256xf32>
    %148 = arith.mulf %147, %146 : vector<64x256xf32>
    %cst_67 = arith.constant 0.707106769 : f32
    %149 = vector.broadcast %cst_67 : f32 to vector<64x256xf32>
    %150 = arith.mulf %146, %149 : vector<64x256xf32>
    %151 = math.erf %150 : vector<64x256xf32>
    %cst_68 = arith.constant 1.000000e+00 : f32
    %152 = vector.broadcast %cst_68 : f32 to vector<64x256xf32>
    %153 = arith.addf %152, %151 : vector<64x256xf32>
    %154 = arith.mulf %148, %153 : vector<64x256xf32>
    %c0_69 = arith.constant 0 : index
    %c0_70 = arith.constant 0 : index
    %155 = vector.load %arg12[%c0_69, %c0_70] : memref<32x64xbf16, #tpu.memory_space<vmem>>, vector<32x64xbf16>
    %c0_71 = arith.constant 0 : index
    %c0_72 = arith.constant 0 : index
    %156 = vector.load %arg13[%c0_71, %c0_72] : memref<32x1xf32, #tpu.memory_space<vmem>>, vector<32x1xf32>
    %157 = arith.truncf %154 : vector<64x256xf32> to vector<64x256xbf16>
    %cst_73 = arith.constant dense<0.000000e+00> : vector<32x256xf32>
    %158 = tpu.matmul %155, %157, %cst_73 {dimension_numbers = #tpu.dot_dimension_numbers<[1], [0], [0], [1], [0, 0, 1, 1], [], []>} : vector<32x64xbf16>, vector<64x256xbf16>, vector<32x256xf32> -> vector<32x256xf32>
    %159 = vector.broadcast %156 : vector<32x1xf32> to vector<32x256xf32>
    %160 = arith.addf %158, %159 : vector<32x256xf32>
    %cst_74 = arith.constant dense<0.000000e+00> : vector<32xf32>
    %161 = vector.multi_reduction <add>, %160, %cst_74 [1] : vector<32x256xf32> to vector<32xf32>
    %162 = vector.shape_cast %161 : vector<32xf32> to vector<32x1xf32>
    %cst_75 = arith.constant 2.560000e+02 : f32
    %163 = vector.broadcast %cst_75 : f32 to vector<32x1xf32>
    %164 = arith.divf %162, %163 : vector<32x1xf32>
    %165 = vector.broadcast %164 : vector<32x1xf32> to vector<32x256xf32>
    %166 = arith.subf %160, %165 : vector<32x256xf32>
    %167 = arith.mulf %166, %166 : vector<32x256xf32>
    %cst_76 = arith.constant dense<0.000000e+00> : vector<32xf32>
    %168 = vector.multi_reduction <add>, %167, %cst_76 [1] : vector<32x256xf32> to vector<32xf32>
    %169 = vector.shape_cast %168 : vector<32xf32> to vector<32x1xf32>
    %cst_77 = arith.constant 2.560000e+02 : f32
    %170 = vector.broadcast %cst_77 : f32 to vector<32x1xf32>
    %171 = arith.divf %169, %170 : vector<32x1xf32>
    %cst_78 = arith.constant 9.99999974E-6 : f32
    %172 = vector.broadcast %cst_78 : f32 to vector<32x1xf32>
    %173 = arith.addf %171, %172 : vector<32x1xf32>
    %174 = math.rsqrt %173 : vector<32x1xf32>
    %175 = vector.broadcast %174 : vector<32x1xf32> to vector<32x256xf32>
    %176 = arith.mulf %166, %175 : vector<32x256xf32>
    %cst_79 = arith.constant 5.000000e-01 : f32
    %177 = vector.broadcast %cst_79 : f32 to vector<32x256xf32>
    %178 = arith.mulf %177, %176 : vector<32x256xf32>
    %cst_80 = arith.constant 0.707106769 : f32
    %179 = vector.broadcast %cst_80 : f32 to vector<32x256xf32>
    %180 = arith.mulf %176, %179 : vector<32x256xf32>
    %181 = math.erf %180 : vector<32x256xf32>
    %cst_81 = arith.constant 1.000000e+00 : f32
    %182 = vector.broadcast %cst_81 : f32 to vector<32x256xf32>
    %183 = arith.addf %182, %181 : vector<32x256xf32>
    %184 = arith.mulf %178, %183 : vector<32x256xf32>
    %c0_82 = arith.constant 0 : index
    %c0_83 = arith.constant 0 : index
    %185 = vector.load %arg14[%c0_82, %c0_83] : memref<32x32xbf16, #tpu.memory_space<vmem>>, vector<32x32xbf16>
    %c0_84 = arith.constant 0 : index
    %c0_85 = arith.constant 0 : index
    %186 = vector.load %arg15[%c0_84, %c0_85] : memref<32x1xf32, #tpu.memory_space<vmem>>, vector<32x1xf32>
    %187 = arith.truncf %184 : vector<32x256xf32> to vector<32x256xbf16>
    %cst_86 = arith.constant dense<0.000000e+00> : vector<32x256xf32>
    %188 = tpu.matmul %185, %187, %cst_86 {dimension_numbers = #tpu.dot_dimension_numbers<[1], [0], [0], [1], [0, 0, 1, 1], [], []>} : vector<32x32xbf16>, vector<32x256xbf16>, vector<32x256xf32> -> vector<32x256xf32>
    %189 = vector.broadcast %186 : vector<32x1xf32> to vector<32x256xf32>
    %190 = arith.addf %188, %189 : vector<32x256xf32>
    %c0_87 = arith.constant 0 : index
    %c0_88 = arith.constant 0 : index
    %c0_89 = arith.constant 0 : index
    %191 = vector.load %arg17[%c0_87, %c0_88, %c0_89] : memref<1x32x256xf32, #tpu.memory_space<vmem>>, vector<1x32x256xf32>
    %192 = vector.shape_cast %191 : vector<1x32x256xf32> to vector<32x256xf32>
    %193 = vector.shape_cast %190 : vector<32x256xf32> to vector<1x32x256xf32>
    tpu.vector_store %arg17[%c0_87, %c0_88, %c0_89], %193 {strides = array<i32>} : memref<1x32x256xf32, #tpu.memory_space<vmem>>, vector<1x32x256xf32>,
    return
  }
  func.func @transform_0(%arg0: i32) -> (i32, i32, i32) {
    %c0_i32 = arith.constant 0 : i32
    %c0_i32_0 = arith.constant 0 : i32
    %c0_i32_1 = arith.constant 0 : i32
    return %arg0, %c0_i32, %c0_i32_0 : i32, i32, i32
  }
  func.func @transform_1(%arg0: i32) -> (i32, i32) {
    %c0_i32 = arith.constant 0 : i32
    %c0_i32_0 = arith.constant 0 : i32
    %c0_i32_1 = arith.constant 0 : i32
    return %c0_i32, %c0_i32_0 : i32, i32
  }
  func.func @transform_2(%arg0: i32) -> (i32, i32) {
    %c0_i32 = arith.constant 0 : i32
    %c0_i32_0 = arith.constant 0 : i32
    %c0_i32_1 = arith.constant 0 : i32
    return %c0_i32, %c0_i32_0 : i32, i32
  }
  func.func @transform_3(%arg0: i32) -> (i32, i32) {
    %c0_i32 = arith.constant 0 : i32
    %c0_i32_0 = arith.constant 0 : i32
    %c0_i32_1 = arith.constant 0 : i32
    return %c0_i32, %c0_i32_0 : i32, i32
  }
  func.func @transform_4(%arg0: i32) -> (i32, i32) {
    %c0_i32 = arith.constant 0 : i32
    %c0_i32_0 = arith.constant 0 : i32
    %c0_i32_1 = arith.constant 0 : i32
    return %c0_i32, %c0_i32_0 : i32, i32
  }
  func.func @transform_5(%arg0: i32) -> (i32, i32) {
    %c0_i32 = arith.constant 0 : i32
    %c0_i32_0 = arith.constant 0 : i32
    %c0_i32_1 = arith.constant 0 : i32
    return %c0_i32, %c0_i32_0 : i32, i32
  }
  func.func @transform_6(%arg0: i32) -> (i32, i32) {
    %c0_i32 = arith.constant 0 : i32
    %c0_i32_0 = arith.constant 0 : i32
    %c0_i32_1 = arith.constant 0 : i32
    return %c0_i32, %c0_i32_0 : i32, i32
  }
  func.func @transform_7(%arg0: i32) -> (i32, i32) {
    %c0_i32 = arith.constant 0 : i32
    %c0_i32_0 = arith.constant 0 : i32
    %c0_i32_1 = arith.constant 0 : i32
    return %c0_i32, %c0_i32_0 : i32, i32
  }
  func.func @transform_8(%arg0: i32) -> (i32, i32) {
    %c0_i32 = arith.constant 0 : i32
    %c0_i32_0 = arith.constant 0 : i32
    %c0_i32_1 = arith.constant 0 : i32
    return %c0_i32, %c0_i32_0 : i32, i32
  }
  func.func @transform_9(%arg0: i32) -> (i32, i32) {
    %c0_i32 = arith.constant 0 : i32
    %c0_i32_0 = arith.constant 0 : i32
    %c0_i32_1 = arith.constant 0 : i32
    return %c0_i32, %c0_i32_0 : i32, i32
  }
  func.func @transform_10(%arg0: i32) -> (i32, i32) {
    %c0_i32 = arith.constant 0 : i32
    %c0_i32_0 = arith.constant 0 : i32
    %c0_i32_1 = arith.constant 0 : i32
    return %c0_i32, %c0_i32_0 : i32, i32
  }
  func.func @transform_11(%arg0: i32) -> (i32, i32) {
    %c0_i32 = arith.constant 0 : i32
    %c0_i32_0 = arith.constant 0 : i32
    %c0_i32_1 = arith.constant 0 : i32
    return %c0_i32, %c0_i32_0 : i32, i32
  }
  func.func @transform_12(%arg0: i32) -> (i32, i32) {
    %c0_i32 = arith.constant 0 : i32
    %c0_i32_0 = arith.constant 0 : i32
    %c0_i32_1 = arith.constant 0 : i32
    return %c0_i32, %c0_i32_0 : i32, i32
  }
  func.func @transform_13(%arg0: i32) -> (i32, i32) {
    %c0_i32 = arith.constant 0 : i32
    %c0_i32_0 = arith.constant 0 : i32
    %c0_i32_1 = arith.constant 0 : i32
    return %c0_i32, %c0_i32_0 : i32, i32
  }
  func.func @transform_14(%arg0: i32) -> (i32, i32) {
    %c0_i32 = arith.constant 0 : i32
    %c0_i32_0 = arith.constant 0 : i32
    %c0_i32_1 = arith.constant 0 : i32
    return %c0_i32, %c0_i32_0 : i32, i32
  }
  func.func @transform_15(%arg0: i32) -> (i32, i32, i32) {
    %c0_i32 = arith.constant 0 : i32
    %c0_i32_0 = arith.constant 0 : i32
    %c0_i32_1 = arith.constant 0 : i32
    return %arg0, %c0_i32, %c0_i32_0 : i32, i32, i32
  }
  func.func @transform_16(%arg0: i32) -> (i32, i32, i32) {
    %c0_i32 = arith.constant 0 : i32
    %c0_i32_0 = arith.constant 0 : i32
    %c0_i32_1 = arith.constant 0 : i32
    return %arg0, %c0_i32, %c0_i32_0 : i32, i32, i32
  }
}

</mosaic_0001>

<llo_original>
// kernel: encoder_forward.1
$region0: #{encoder_forward.1}
  #allocation0 [shape = 'u32[]', space=smem, size = 0x4, offset = 0x4, fixed_abs, tag = 'smem constant byte address 0x4 - core index']
  #allocation1 [shape = 'u32[144,128]{1,0:T(1,128)}', space=vmem, size = 0x12000, scoped, tag = 'internal scratch']
  %s0 = inlined_call_operand.vmem [shape: f32[2,16,256], index: 0, kind: input, shape index: {}]
  %s1 = inlined_call_operand.vmem [shape: bf16[256,16], index: 1, kind: input, shape index: {}]
  %s2 = inlined_call_operand.vmem [shape: f32[256,1], index: 2, kind: input, shape index: {}]
  %s3 = inlined_call_operand.vmem [shape: bf16[128,256], index: 3, kind: input, shape index: {}]
  %s4 = inlined_call_operand.vmem [shape: f32[128,1], index: 4, kind: input, shape index: {}]
  %s5 = inlined_call_operand.vmem [shape: bf16[128,128], index: 5, kind: input, shape index: {}]
  %s6 = inlined_call_operand.vmem [shape: f32[128,1], index: 6, kind: input, shape index: {}]
  %s7 = inlined_call_operand.vmem [shape: bf16[64,128], index: 7, kind: input, shape index: {}]
  %s8 = inlined_call_operand.vmem [shape: f32[64,1], index: 8, kind: input, shape index: {}]
  %s9 = inlined_call_operand.vmem [shape: bf16[64,64], index: 9, kind: input, shape index: {}]
  %s10 = inlined_call_operand.vmem [shape: f32[64,1], index: 10, kind: input, shape index: {}]
  %s11 = inlined_call_operand.vmem [shape: bf16[32,64], index: 11, kind: input, shape index: {}]
  %s12 = inlined_call_operand.vmem [shape: f32[32,1], index: 12, kind: input, shape index: {}]
  %s13 = inlined_call_operand.vmem [shape: bf16[32,32], index: 13, kind: input, shape index: {}]
  %s14 = inlined_call_operand.vmem [shape: f32[32,1], index: 14, kind: input, shape index: {}]
  %s15 = inlined_call_operand.vmem [shape: f32[2,64,256], index: 15, kind: output, shape index: {0}]
  %s16 = inlined_call_operand.vmem [shape: f32[2,32,256], index: 16, kind: output, shape index: {1}]
  %17 = xla_tuple %s15, %s16
  %s18 = sld [smem:[#allocation0]]
  $region101: #{encoder_forward.1} parent=0
    _
  %s20 = ssub.s32 1, %s18
  %s21 = scalar_select 0, %s20, %s18
  loop: start=0, step=1, limit=4
  $region2: #{encoder_forward.1} parent=0 // loop_pre_header
    _
  $region3: #{encoder_forward.1} parent=0 // loop_header
    %s23 = sphi 0, %s27
    %p24 = scmp.ge.s32.totalorder %s23, 4
    %s33 = sphi 0, %s35
    %s36 = sphi 0, %s33
    %s37 = sphi 0, %s36
    %s53 = sphi 0, %s37
    %s57 = sphi 0, %s57
    %s59 = sphi 0, %s57
    %s60 = sphi 0, %s59
    %s74 = sphi 0, %s60
    %s78 = sphi 0, %s78
    %s80 = sphi 0, %s78
    %s81 = sphi 0, %s80
    %s95 = sphi 0, %s81
    %s99 = sphi 0, %s99
    %s101 = sphi 0, %s99
    %s102 = sphi 0, %s101
    %s116 = sphi 0, %s102
    %s120 = sphi 0, %s120
    %s122 = sphi 0, %s120
    %s123 = sphi 0, %s122
    %s137 = sphi 0, %s123
    %s141 = sphi 0, %s141
    %s143 = sphi 0, %s141
    %s144 = sphi 0, %s143
    %s158 = sphi 0, %s144
    %s162 = sphi 0, %s162
    %s164 = sphi 0, %s162
    %s165 = sphi 0, %s164
    %s179 = sphi 0, %s165
    %s183 = sphi 0, %s183
    %s185 = sphi 0, %s183
    %s186 = sphi 0, %s185
    %s200 = sphi 0, %s186
    %s204 = sphi 0, %s204
    %s206 = sphi 0, %s204
    %s207 = sphi 0, %s206
    %s221 = sphi 0, %s207
    %s225 = sphi 0, %s225
    %s227 = sphi 0, %s225
    %s228 = sphi 0, %s227
    %s242 = sphi 0, %s228
    %s246 = sphi 0, %s246
    %s248 = sphi 0, %s246
    %s249 = sphi 0, %s248
    %s263 = sphi 0, %s249
    %s267 = sphi 0, %s267
    %s269 = sphi 0, %s267
    %s270 = sphi 0, %s269
    %s284 = sphi 0, %s270
    %s288 = sphi 0, %s288
    %s290 = sphi 0, %s288
    %s291 = sphi 0, %s290
    %s305 = sphi 0, %s291
    %s309 = sphi 0, %s309
    %s311 = sphi 0, %s309
    %s312 = sphi 0, %s311
    %s326 = sphi 0, %s312
    %s330 = sphi 0, %s330
    %s332 = sphi 0, %s330
    %s333 = sphi 0, %s332
    %s347 = sphi 0, %s333
    %s353 = sphi 0, %s355
    %s356 = sphi 0, %s353
    %s357 = sphi 0, %s356
    %s373 = sphi 0, %s357
    %s379 = sphi 0, %s381
    %s382 = sphi 0, %s379
    %s383 = sphi 0, %s382
    %s399 = sphi 0, %s383
  $region4: #{encoder_forward.1} parent=0 // loop_header_branch
    %26 = sbr.rel (%p24) target = $region8
  $region5: #{encoder_forward.1} parent=0 // loop_body
    %s28 = ssub.s32 %s23, 1
    %s29 = ssub.s32 %s23, 2
    %s30 = sadd.s32 %s23, 1
    %s31 = ssub.s32 %s23, %s30
    %p32 = scmp.eq.s32.totalorder %s31, 0
    %s34 = sadd.s32 %s33, 1
    %s35 = scalar_select %p32, %s33, %s34
    %p38 = pneg %p32
    %p39 = scmp.eq.s32.totalorder %s23, 1
    %p40 = por %p38, %p39
    %p41 = scmp.ne.s32.totalorder %s33, %s36
    %p42 = scmp.eq.s32.totalorder %s23, 0
    %p43 = por %p41, %p42
    %p44 = scmp.ne.s32.totalorder %s33, %s36
    %p45 = scmp.eq.s32.totalorder %s28, 1
    %p46 = por %p44, %p45
    %p47 = scmp.ne.s32.totalorder %s36, %s37
    %p48 = scmp.eq.s32.totalorder %s28, 0
    %p49 = por %p47, %p48
    %p50 = scmp.ne.s32.totalorder %s36, %s37
    %p51 = scmp.eq.s32.totalorder %s29, 1
    %p52 = por %p50, %p51
    %p54 = scmp.ne.s32.totalorder %s37, %s53
    %p55 = scmp.eq.s32.totalorder %s29, 0
    %p56 = por %p54, %p55
    %s58 = sadd.s32 %s57, 1
    %p61 = scmp.eq.s32.totalorder %s23, 1
    %p62 = scmp.ne.s32.totalorder %s57, %s59
    %p63 = scmp.eq.s32.totalorder %s23, 0
    %p64 = por %p62, %p63
    %p65 = scmp.ne.s32.totalorder %s57, %s59
    %p66 = scmp.eq.s32.totalorder %s28, 1
    %p67 = por %p65, %p66
    %p68 = scmp.ne.s32.totalorder %s59, %s60
    %p69 = scmp.eq.s32.totalorder %s28, 0
    %p70 = por %p68, %p69
    %p71 = scmp.ne.s32.totalorder %s59, %s60
    %p72 = scmp.eq.s32.totalorder %s29, 1
    %p73 = por %p71, %p72
    %p75 = scmp.ne.s32.totalorder %s60, %s74
    %p76 = scmp.eq.s32.totalorder %s29, 0
    %p77 = por %p75, %p76
    %s79 = sadd.s32 %s78, 1
    %p82 = scmp.eq.s32.totalorder %s23, 1
    %p83 = scmp.ne.s32.totalorder %s78, %s80
    %p84 = scmp.eq.s32.totalorder %s23, 0
    %p85 = por %p83, %p84
    %p86 = scmp.ne.s32.totalorder %s78, %s80
    %p87 = scmp.eq.s32.totalorder %s28, 1
    %p88 = por %p86, %p87
    %p89 = scmp.ne.s32.totalorder %s80, %s81
    %p90 = scmp.eq.s32.totalorder %s28, 0
    %p91 = por %p89, %p90
    %p92 = scmp.ne.s32.totalorder %s80, %s81
    %p93 = scmp.eq.s32.totalorder %s29, 1
    %p94 = por %p92, %p93
    %p96 = scmp.ne.s32.totalorder %s81, %s95
    %p97 = scmp.eq.s32.totalorder %s29, 0
    %p98 = por %p96, %p97
    %s100 = sadd.s32 %s99, 1
    %p103 = scmp.eq.s32.totalorder %s23, 1
    %p104 = scmp.ne.s32.totalorder %s99, %s101
    %p105 = scmp.eq.s32.totalorder %s23, 0
    %p106 = por %p104, %p105
    %p107 = scmp.ne.s32.totalorder %s99, %s101
    %p108 = scmp.eq.s32.totalorder %s28, 1
    %p109 = por %p107, %p108
    %p110 = scmp.ne.s32.totalorder %s101, %s102
    %p111 = scmp.eq.s32.totalorder %s28, 0
    %p112 = por %p110, %p111
    %p113 = scmp.ne.s32.totalorder %s101, %s102
    %p114 = scmp.eq.s32.totalorder %s29, 1
    %p115 = por %p113, %p114
    %p117 = scmp.ne.s32.totalorder %s102, %s116
    %p118 = scmp.eq.s32.totalorder %s29, 0
    %p119 = por %p117, %p118
    %s121 = sadd.s32 %s120, 1
    %p124 = scmp.eq.s32.totalorder %s23, 1
    %p125 = scmp.ne.s32.totalorder %s120, %s122
    %p126 = scmp.eq.s32.totalorder %s23, 0
    %p127 = por %p125, %p126
    %p128 = scmp.ne.s32.totalorder %s120, %s122
    %p129 = scmp.eq.s32.totalorder %s28, 1
    %p130 = por %p128, %p129
    %p131 = scmp.ne.s32.totalorder %s122, %s123
    %p132 = scmp.eq.s32.totalorder %s28, 0
    %p133 = por %p131, %p132
    %p134 = scmp.ne.s32.totalorder %s122, %s123
    %p135 = scmp.eq.s32.totalorder %s29, 1
    %p136 = por %p134, %p135
    %p138 = scmp.ne.s32.totalorder %s123, %s137
    %p139 = scmp.eq.s32.totalorder %s29, 0
    %p140 = por %p138, %p139
    %s142 = sadd.s32 %s141, 1
    %p145 = scmp.eq.s32.totalorder %s23, 1
    %p146 = scmp.ne.s32.totalorder %s141, %s143
    %p147 = scmp.eq.s32.totalorder %s23, 0
    %p148 = por %p146, %p147
    %p149 = scmp.ne.s32.totalorder %s141, %s143
    %p150 = scmp.eq.s32.totalorder %s28, 1
    %p151 = por %p149, %p150
    %p152 = scmp.ne.s32.totalorder %s143, %s144
    %p153 = scmp.eq.s32.totalorder %s28, 0
    %p154 = por %p152, %p153
    %p155 = scmp.ne.s32.totalorder %s143, %s144
    %p156 = scmp.eq.s32.totalorder %s29, 1
    %p157 = por %p155, %p156
    %p159 = scmp.ne.s32.totalorder %s144, %s158
    %p160 = scmp.eq.s32.totalorder %s29, 0
    %p161 = por %p159, %p160
    %s163 = sadd.s32 %s162, 1
    %p166 = scmp.eq.s32.totalorder %s23, 1
    %p167 = scmp.ne.s32.totalorder %s162, %s164
    %p168 = scmp.eq.s32.totalorder %s23, 0
    %p169 = por %p167, %p168
    %p170 = scmp.ne.s32.totalorder %s162, %s164
    %p171 = scmp.eq.s32.totalorder %s28, 1
    %p172 = por %p170, %p171
    %p173 = scmp.ne.s32.totalorder %s164, %s165
    %p174 = scmp.eq.s32.totalorder %s28, 0
    %p175 = por %p173, %p174
    %p176 = scmp.ne.s32.totalorder %s164, %s165
    %p177 = scmp.eq.s32.totalorder %s29, 1
    %p178 = por %p176, %p177
    %p180 = scmp.ne.s32.totalorder %s165, %s179
    %p181 = scmp.eq.s32.totalorder %s29, 0
    %p182 = por %p180, %p181
    %s184 = sadd.s32 %s183, 1
    %p187 = scmp.eq.s32.totalorder %s23, 1
    %p188 = scmp.ne.s32.totalorder %s183, %s185
    %p189 = scmp.eq.s32.totalorder %s23, 0
    %p190 = por %p188, %p189
    %p191 = scmp.ne.s32.totalorder %s183, %s185
    %p192 = scmp.eq.s32.totalorder %s28, 1
    %p193 = por %p191, %p192
    %p194 = scmp.ne.s32.totalorder %s185, %s186
    %p195 = scmp.eq.s32.totalorder %s28, 0
    %p196 = por %p194, %p195
    %p197 = scmp.ne.s32.totalorder %s185, %s186
    %p198 = scmp.eq.s32.totalorder %s29, 1
    %p199 = por %p197, %p198
    %p201 = scmp.ne.s32.totalorder %s186, %s200
    %p202 = scmp.eq.s32.totalorder %s29, 0
    %p203 = por %p201, %p202
    %s205 = sadd.s32 %s204, 1
    %p208 = scmp.eq.s32.totalorder %s23, 1
    %p209 = scmp.ne.s32.totalorder %s204, %s206
    %p210 = scmp.eq.s32.totalorder %s23, 0
    %p211 = por %p209, %p210
    %p212 = scmp.ne.s32.totalorder %s204, %s206
    %p213 = scmp.eq.s32.totalorder %s28, 1
    %p214 = por %p212, %p213
    %p215 = scmp.ne.s32.totalorder %s206, %s207
    %p216 = scmp.eq.s32.totalorder %s28, 0
    %p217 = por %p215, %p216
    %p218 = scmp.ne.s32.totalorder %s206, %s207
    %p219 = scmp.eq.s32.totalorder %s29, 1
    %p220 = por %p218, %p219
    %p222 = scmp.ne.s32.totalorder %s207, %s221
    %p223 = scmp.eq.s32.totalorder %s29, 0
    %p224 = por %p222, %p223
    %s226 = sadd.s32 %s225, 1
    %p229 = scmp.eq.s32.totalorder %s23, 1
    %p230 = scmp.ne.s32.totalorder %s225, %s227
    %p231 = scmp.eq.s32.totalorder %s23, 0
    %p232 = por %p230, %p231
    %p233 = scmp.ne.s32.totalorder %s225, %s227
    %p234 = scmp.eq.s32.totalorder %s28, 1
    %p235 = por %p233, %p234
    %p236 = scmp.ne.s32.totalorder %s227, %s228
    %p237 = scmp.eq.s32.totalorder %s28, 0
    %p238 = por %p236, %p237
    %p239 = scmp.ne.s32.totalorder %s227, %s228
    %p240 = scmp.eq.s32.totalorder %s29, 1
    %p241 = por %p239, %p240
    %p243 = scmp.ne.s32.totalorder %s228, %s242
    %p244 = scmp.eq.s32.totalorder %s29, 0
    %p245 = por %p243, %p244
    %s247 = sadd.s32 %s246, 1
    %p250 = scmp.eq.s32.totalorder %s23, 1
    %p251 = scmp.ne.s32.totalorder %s246, %s248
    %p252 = scmp.eq.s32.totalorder %s23, 0
    %p253 = por %p251, %p252
    %p254 = scmp.ne.s32.totalorder %s246, %s248
    %p255 = scmp.eq.s32.totalorder %s28, 1
    %p256 = por %p254, %p255
    %p257 = scmp.ne.s32.totalorder %s248, %s249
    %p258 = scmp.eq.s32.totalorder %s28, 0
    %p259 = por %p257, %p258
    %p260 = scmp.ne.s32.totalorder %s248, %s249
    %p261 = scmp.eq.s32.totalorder %s29, 1
    %p262 = por %p260, %p261
    %p264 = scmp.ne.s32.totalorder %s249, %s263
    %p265 = scmp.eq.s32.totalorder %s29, 0
    %p266 = por %p264, %p265
    %s268 = sadd.s32 %s267, 1
    %p271 = scmp.eq.s32.totalorder %s23, 1
    %p272 = scmp.ne.s32.totalorder %s267, %s269
    %p273 = scmp.eq.s32.totalorder %s23, 0
    %p274 = por %p272, %p273
    %p275 = scmp.ne.s32.totalorder %s267, %s269
    %p276 = scmp.eq.s32.totalorder %s28, 1
    %p277 = por %p275, %p276
    %p278 = scmp.ne.s32.totalorder %s269, %s270
    %p279 = scmp.eq.s32.totalorder %s28, 0
    %p280 = por %p278, %p279
    %p281 = scmp.ne.s32.totalorder %s269, %s270
    %p282 = scmp.eq.s32.totalorder %s29, 1
    %p283 = por %p281, %p282
    %p285 = scmp.ne.s32.totalorder %s270, %s284
    %p286 = scmp.eq.s32.totalorder %s29, 0
    %p287 = por %p285, %p286
    %s289 = sadd.s32 %s288, 1
    %p292 = scmp.eq.s32.totalorder %s23, 1
    %p293 = scmp.ne.s32.totalorder %s288, %s290
    %p294 = scmp.eq.s32.totalorder %s23, 0
    %p295 = por %p293, %p294
    %p296 = scmp.ne.s32.totalorder %s288, %s290
    %p297 = scmp.eq.s32.totalorder %s28, 1
    %p298 = por %p296, %p297
    %p299 = scmp.ne.s32.totalorder %s290, %s291
    %p300 = scmp.eq.s32.totalorder %s28, 0
    %p301 = por %p299, %p300
    %p302 = scmp.ne.s32.totalorder %s290, %s291
    %p303 = scmp.eq.s32.totalorder %s29, 1
    %p304 = por %p302, %p303
    %p306 = scmp.ne.s32.totalorder %s291, %s305
    %p307 = scmp.eq.s32.totalorder %s29, 0
    %p308 = por %p306, %p307
    %s310 = sadd.s32 %s309, 1
    %p313 = scmp.eq.s32.totalorder %s23, 1
    %p314 = scmp.ne.s32.totalorder %s309, %s311
    %p315 = scmp.eq.s32.totalorder %s23, 0
    %p316 = por %p314, %p315
    %p317 = scmp.ne.s32.totalorder %s309, %s311
    %p318 = scmp.eq.s32.totalorder %s28, 1
    %p319 = por %p317, %p318
    %p320 = scmp.ne.s32.totalorder %s311, %s312
    %p321 = scmp.eq.s32.totalorder %s28, 0
    %p322 = por %p320, %p321
    %p323 = scmp.ne.s32.totalorder %s311, %s312
    %p324 = scmp.eq.s32.totalorder %s29, 1
    %p325 = por %p323, %p324
    %p327 = scmp.ne.s32.totalorder %s312, %s326
    %p328 = scmp.eq.s32.totalorder %s29, 0
    %p329 = por %p327, %p328
    %s331 = sadd.s32 %s330, 1
    %p334 = scmp.eq.s32.totalorder %s23, 1
    %p335 = scmp.ne.s32.totalorder %s330, %s332
    %p336 = scmp.eq.s32.totalorder %s23, 0
    %p337 = por %p335, %p336
    %p338 = scmp.ne.s32.totalorder %s330, %s332
    %p339 = scmp.eq.s32.totalorder %s28, 1
    %p340 = por %p338, %p339
    %p341 = scmp.ne.s32.totalorder %s332, %s333
    %p342 = scmp.eq.s32.totalorder %s28, 0
    %p343 = por %p341, %p342
    %p344 = scmp.ne.s32.totalorder %s332, %s333
    %p345 = scmp.eq.s32.totalorder %s29, 1
    %p346 = por %p344, %p345
    %p348 = scmp.ne.s32.totalorder %s333, %s347
    %p349 = scmp.eq.s32.totalorder %s29, 0
    %p350 = por %p348, %p349
    %s351 = ssub.s32 %s23, %s30
    %p352 = scmp.eq.s32.totalorder %s351, 0
    %s354 = sadd.s32 %s353, 1
    %s355 = scalar_select %p352, %s353, %s354
    %p358 = pneg %p352
    %p359 = scmp.eq.s32.totalorder %s23, 1
    %p360 = por %p358, %p359
    %p361 = scmp.ne.s32.totalorder %s353, %s356
    %p362 = scmp.eq.s32.totalorder %s23, 0
    %p363 = por %p361, %p362
    %p364 = scmp.ne.s32.totalorder %s353, %s356
    %p365 = scmp.eq.s32.totalorder %s28, 1
    %p366 = por %p364, %p365
    %p367 = scmp.ne.s32.totalorder %s356, %s357
    %p368 = scmp.eq.s32.totalorder %s28, 0
    %p369 = por %p367, %p368
    %p370 = scmp.ne.s32.totalorder %s356, %s357
    %p371 = scmp.eq.s32.totalorder %s29, 1
    %p372 = por %p370, %p371
    %p374 = scmp.ne.s32.totalorder %s357, %s373
    %p375 = scmp.eq.s32.totalorder %s29, 0
    %p376 = por %p374, %p375
    %s377 = ssub.s32 %s23, %s30
    %p378 = scmp.eq.s32.totalorder %s377, 0
    %s380 = sadd.s32 %s379, 1
    %s381 = scalar_select %p378, %s379, %s380
    %p384 = pneg %p378
    %p385 = scmp.eq.s32.totalorder %s23, 1
    %p386 = por %p384, %p385
    %p387 = scmp.ne.s32.totalorder %s379, %s382
    %p388 = scmp.eq.s32.totalorder %s23, 0
    %p389 = por %p387, %p388
    %p390 = scmp.ne.s32.totalorder %s379, %s382
    %p391 = scmp.eq.s32.totalorder %s28, 1
    %p392 = por %p390, %p391
    %p393 = scmp.ne.s32.totalorder %s382, %s383
    %p394 = scmp.eq.s32.totalorder %s28, 0
    %p395 = por %p393, %p394
    %p396 = scmp.ne.s32.totalorder %s382, %s383
    %p397 = scmp.eq.s32.totalorder %s29, 1
    %p398 = por %p396, %p397
    %p400 = scmp.ne.s32.totalorder %s383, %s399
    %p401 = scmp.eq.s32.totalorder %s29, 0
    %p402 = por %p400, %p401
    %p403 = scmp.le.s32.totalorder 1, %s23
    %p404 = scmp.lt.s32.totalorder %s23, 3
    %p405 = pnand %p403, %p404
    %p406 = pneg %p405
    // Predicated region
    $region9: #{encoder_forward.1} parent=5 // pred_check
      _
    $region10: #{encoder_forward.1} parent=5 // pred_check_branch
      %408 = sbr.rel (%p405) target = $region12
    $region11: #{encoder_forward.1} parent=5 // pred_region
      %s409 = ssub.s32 %s23, 1
      // Predicated region
      $region13: #{encoder_forward.1} parent=11 // pred_check
        %p410 = pneg %p70
      $region14: #{encoder_forward.1} parent=11 // pred_check_branch
        %412 = sbr.rel (%p410) target = $region16
      $region15: #{encoder_forward.1} parent=11 // pred_region
        _
      $region16: #{encoder_forward.1} parent=11 // pred_fallthru
        _
      // Predicated region
      $region17: #{encoder_forward.1} parent=11 // pred_check
        %p413 = pneg %p91
      $region18: #{encoder_forward.1} parent=11 // pred_check_branch
        %415 = sbr.rel (%p413) target = $region20
      $region19: #{encoder_forward.1} parent=11 // pred_region
        _
      $region20: #{encoder_forward.1} parent=11 // pred_fallthru
        _
      // Predicated region
      $region21: #{encoder_forward.1} parent=11 // pred_check
        %p416 = pneg %p112
      $region22: #{encoder_forward.1} parent=11 // pred_check_branch
        %418 = sbr.rel (%p416) target = $region24
      $region23: #{encoder_forward.1} parent=11 // pred_region
        _
      $region24: #{encoder_forward.1} parent=11 // pred_fallthru
        _
      // Predicated region
      $region25: #{encoder_forward.1} parent=11 // pred_check
        %p419 = pneg %p133
      $region26: #{encoder_forward.1} parent=11 // pred_check_branch
        %421 = sbr.rel (%p419) target = $region28
      $region27: #{encoder_forward.1} parent=11 // pred_region
        _
      $region28: #{encoder_forward.1} parent=11 // pred_fallthru
        _
      // Predicated region
      $region29: #{encoder_forward.1} parent=11 // pred_check
        %p422 = pneg %p154
      $region30: #{encoder_forward.1} parent=11 // pred_check_branch
        %424 = sbr.rel (%p422) target = $region32
      $region31: #{encoder_forward.1} parent=11 // pred_region
        _
      $region32: #{encoder_forward.1} parent=11 // pred_fallthru
        _
      // Predicated region
      $region33: #{encoder_forward.1} parent=11 // pred_check
        %p425 = pneg %p175
      $region34: #{encoder_forward.1} parent=11 // pred_check_branch
        %427 = sbr.rel (%p425) target = $region36
      $region35: #{encoder_forward.1} parent=11 // pred_region
        _
      $region36: #{encoder_forward.1} parent=11 // pred_fallthru
        _
      // Predicated region
      $region37: #{encoder_forward.1} parent=11 // pred_check
        %p428 = pneg %p196
      $region38: #{encoder_forward.1} parent=11 // pred_check_branch
        %430 = sbr.rel (%p428) target = $region40
      $region39: #{encoder_forward.1} parent=11 // pred_region
        _
      $region40: #{encoder_forward.1} parent=11 // pred_fallthru
        _
      // Predicated region
      $region41: #{encoder_forward.1} parent=11 // pred_check
        %p431 = pneg %p217
      $region42: #{encoder_forward.1} parent=11 // pred_check_branch
        %433 = sbr.rel (%p431) target = $region44
      $region43: #{encoder_forward.1} parent=11 // pred_region
        _
      $region44: #{encoder_forward.1} parent=11 // pred_fallthru
        _
      // Predicated region
      $region45: #{encoder_forward.1} parent=11 // pred_check
        %p434 = pneg %p238
      $region46: #{encoder_forward.1} parent=11 // pred_check_branch
        %436 = sbr.rel (%p434) target = $region48
      $region47: #{encoder_forward.1} parent=11 // pred_region
        _
      $region48: #{encoder_forward.1} parent=11 // pred_fallthru
        _
      // Predicated region
      $region49: #{encoder_forward.1} parent=11 // pred_check
        %p437 = pneg %p259
      $region50: #{encoder_forward.1} parent=11 // pred_check_branch
        %439 = sbr.rel (%p437) target = $region52
      $region51: #{encoder_forward.1} parent=11 // pred_region
        _
      $region52: #{encoder_forward.1} parent=11 // pred_fallthru
        _
      // Predicated region
      $region53: #{encoder_forward.1} parent=11 // pred_check
        %p440 = pneg %p280
      $region54: #{encoder_forward.1} parent=11 // pred_check_branch
        %442 = sbr.rel (%p440) target = $region56
      $region55: #{encoder_forward.1} parent=11 // pred_region
        _
      $region56: #{encoder_forward.1} parent=11 // pred_fallthru
        _
      // Predicated region
      $region57: #{encoder_forward.1} parent=11 // pred_check
        %p443 = pneg %p301
      $region58: #{encoder_forward.1} parent=11 // pred_check_branch
        %445 = sbr.rel (%p443) target = $region60
      $region59: #{encoder_forward.1} parent=11 // pred_region
        _
      $region60: #{encoder_forward.1} parent=11 // pred_fallthru
        _
      // Predicated region
      $region61: #{encoder_forward.1} parent=11 // pred_check
        %p446 = pneg %p322
      $region62: #{encoder_forward.1} parent=11 // pred_check_branch
        %448 = sbr.rel (%p446) target = $region64
      $region63: #{encoder_forward.1} parent=11 // pred_region
        _
      $region64: #{encoder_forward.1} parent=11 // pred_fallthru
        _
      // Predicated region
      $region65: #{encoder_forward.1} parent=11 // pred_check
        %p449 = pneg %p343
      $region66: #{encoder_forward.1} parent=11 // pred_check_branch
        %451 = sbr.rel (%p449) target = $region68
      $region67: #{encoder_forward.1} parent=11 // pred_region
        _
      $region68: #{encoder_forward.1} parent=11 // pred_fallthru
        _
    $region12: #{encoder_forward.1} parent=5 // pred_fallthru
      _
    %p452 = scmp.lt.s32.totalorder %s23, 2
    // Predicated region
    $region69: #{encoder_forward.1} parent=5 // pred_check
      %p453 = pneg %p452
    $region70: #{encoder_forward.1} parent=5 // pred_check_branch
      %455 = sbr.rel (%p453) target = $region72
    $region71: #{encoder_forward.1} parent=5 // pred_region
      // Predicated region
      $region73: #{encoder_forward.1} parent=71 // pred_check
        %p456 = pneg %p43
      $region74: #{encoder_forward.1} parent=71 // pred_check_branch
        %458 = sbr.rel (%p456) target = $region76
      $region75: #{encoder_forward.1} parent=71 // pred_region
        %p459 = scmp.lt.s32.totalorder %s23, 1
        %s460 = scalar_select %p459, %s23, 1
        %s461 = smul.addr %s460, 4
        %s462 = smul.addr %s461, 8
        %s463 = scalar_lea.vmem %s0, %s462
      $region76: #{encoder_forward.1} parent=71 // pred_fallthru
        _
    $region72: #{encoder_forward.1} parent=5 // pred_fallthru
      _
    %p464 = scmp.le.s32.totalorder 1, %s23
    %p465 = scmp.lt.s32.totalorder %s23, 3
    %p466 = pnand %p464, %p465
    %p467 = pneg %p466
    // Predicated region
    $region77: #{encoder_forward.1} parent=5 // pred_check
      _
    $region78: #{encoder_forward.1} parent=5 // pred_check_branch
      %469 = sbr.rel (%p466) target = $region80
    $region79: #{encoder_forward.1} parent=5 // pred_region
      %s470 = ssub.s32 %s23, 1
      %p471 = scmp.lt.s32.totalorder %s28, 1
      %s472 = scalar_select %p471, %s28, 1
      %s473 = smul.addr %s472, 4
      %s474 = smul.addr %s473, 8
      %s475 = scalar_lea.vmem %s0, %s474
      %p476 = pneg %p49
      %p477 = pneg %p46
      %p478 = pneg %p70
      %p479 = pneg %p67
      %p480 = pneg %p91
      %p481 = pneg %p88
      %p482 = pneg %p112
      %p483 = pneg %p109
      %p484 = pneg %p133
      %p485 = pneg %p130
      %p486 = pneg %p154
      %p487 = pneg %p151
      %p488 = pneg %p175
      %p489 = pneg %p172
      %p490 = pneg %p196
      %p491 = pneg %p193
      %p492 = pneg %p217
      %p493 = pneg %p214
      %p494 = pneg %p238
      %p495 = pneg %p235
      %p496 = pneg %p259
      %p497 = pneg %p256
      %p498 = pneg %p280
      %p499 = pneg %p277
      %p500 = pneg %p301
      %p501 = pneg %p298
      %p502 = pneg %p322
      %p503 = pneg %p319
      %p504 = pneg %p343
      %p505 = pneg %p340
      %p506 = pneg %p369
      %p507 = pneg %p366
      %p508 = scmp.lt.s32.totalorder %s28, 1
      %s509 = scalar_select %p508, %s28, 1
      %s510 = smul.addr %s509, 16
      %s511 = smul.addr %s510, 8
      %s512 = scalar_lea.vmem %s15, %s511
      %p513 = pneg %p395
      %p514 = pneg %p392
      %p515 = scmp.lt.s32.totalorder %s28, 1
      %s516 = scalar_select %p515, %s28, 1
      %s517 = smul.addr %s516, 8
      %s518 = smul.addr %s517, 8
      %s519 = scalar_lea.vmem %s16, %s518
      %p520 = scmp.lt.s32.totalorder %s28, 1
      %s521 = scalar_select %p520, %s28, 1
      %s522 = smul.addr %s521, 4
      %s523 = smul.addr %s522, 8
      %s524 = scalar_lea.vmem %s0, %s523
      %p525 = scmp.lt.s32.totalorder %s28, 1
      %s526 = scalar_select %p525, %s28, 1
      %s527 = smul.addr %s526, 16
      %s528 = smul.addr %s527, 8
      %s529 = scalar_lea.vmem %s15, %s528
      %p530 = scmp.lt.s32.totalorder %s28, 1
      %s531 = scalar_select %p530, %s28, 1
      %s532 = smul.addr %s531, 8
      %s533 = smul.addr %s532, 8
      %s534 = scalar_lea.vmem %s16, %s533
      %v536 = vld [vmem:[%s524] sm:$0xff]
      %v537 = vld [vmem:[%s524 + $0x8] sm:$0xff]
      %v538 = vld [vmem:[%s524 + $0x10] sm:$0xff]
      %v539 = vld [vmem:[%s524 + $0x18] sm:$0xff]
      %v540 = vld [vmem:[%s1] sm:$0xf]
      %v541 = vld [vmem:[%s1 + $0x4] sm:$0xf]
      %v542 = vld [vmem:[%s1 + $0x8] sm:$0xf]
      %v543 = vld [vmem:[%s1 + $0xc] sm:$0xf]
      %v544 = vld [vmem:[%s1 + $0x10] sm:$0xf]
      %v545 = vld [vmem:[%s1 + $0x14] sm:$0xf]
      %v546 = vld [vmem:[%s1 + $0x18] sm:$0xf]
      %v547 = vld [vmem:[%s1 + $0x1c] sm:$0xf]
      %v548 = vld [vmem:[%s1 + $0x20] sm:$0xf]
      %v549 = vld [vmem:[%s1 + $0x24] sm:$0xf]
      %v550 = vld [vmem:[%s1 + $0x28] sm:$0xf]
      %v551 = vld [vmem:[%s1 + $0x2c] sm:$0xf]
      %v552 = vld [vmem:[%s1 + $0x30] sm:$0xf]
      %v553 = vld [vmem:[%s1 + $0x34] sm:$0xf]
      %v554 = vld [vmem:[%s1 + $0x38] sm:$0xf]
      %v555 = vld [vmem:[%s1 + $0x3c] sm:$0xf]
      %v556 = vld [vmem:[%s1 + $0x40] sm:$0xf]
      %v557 = vld [vmem:[%s1 + $0x44] sm:$0xf]
      %v558 = vld [vmem:[%s1 + $0x48] sm:$0xf]
      %v559 = vld [vmem:[%s1 + $0x4c] sm:$0xf]
      %v560 = vld [vmem:[%s1 + $0x50] sm:$0xf]
      %v561 = vld [vmem:[%s1 + $0x54] sm:$0xf]
      %v562 = vld [vmem:[%s1 + $0x58] sm:$0xf]
      %v563 = vld [vmem:[%s1 + $0x5c] sm:$0xf]
      %v564 = vld [vmem:[%s1 + $0x60] sm:$0xf]
      %v565 = vld [vmem:[%s1 + $0x64] sm:$0xf]
      %v566 = vld [vmem:[%s1 + $0x68] sm:$0xf]
      %v567 = vld [vmem:[%s1 + $0x6c] sm:$0xf]
      %v568 = vld [vmem:[%s1 + $0x70] sm:$0xf]
      %v569 = vld [vmem:[%s1 + $0x74] sm:$0xf]
      %v570 = vld [vmem:[%s1 + $0x78] sm:$0xf]
      %v571 = vld [vmem:[%s1 + $0x7c] sm:$0xf]
      %v572 = vld [vmem:[%s2] sm:$0xff]
      %v573 = vld [vmem:[%s2 + $0x8] sm:$0xff]
      %v574 = vld [vmem:[%s2 + $0x10] sm:$0xff]
      %v575 = vld [vmem:[%s2 + $0x18] sm:$0xff]
      %v576 = vld [vmem:[%s2 + $0x20] sm:$0xff]
      %v577 = vld [vmem:[%s2 + $0x28] sm:$0xff]
      %v578 = vld [vmem:[%s2 + $0x30] sm:$0xff]
      %v579 = vld [vmem:[%s2 + $0x38] sm:$0xff]
      %v580 = vld [vmem:[%s2 + $0x40] sm:$0xff]
      %v581 = vld [vmem:[%s2 + $0x48] sm:$0xff]
      %v582 = vld [vmem:[%s2 + $0x50] sm:$0xff]
      %v583 = vld [vmem:[%s2 + $0x58] sm:$0xff]
      %v584 = vld [vmem:[%s2 + $0x60] sm:$0xff]
      %v585 = vld [vmem:[%s2 + $0x68] sm:$0xff]
      %v586 = vld [vmem:[%s2 + $0x70] sm:$0xff]
      %v587 = vld [vmem:[%s2 + $0x78] sm:$0xff]
      %v588 = vld [vmem:[%s2 + $0x80] sm:$0xff]
      %v589 = vld [vmem:[%s2 + $0x88] sm:$0xff]
      %v590 = vld [vmem:[%s2 + $0x90] sm:$0xff]
      %v591 = vld [vmem:[%s2 + $0x98] sm:$0xff]
      %v592 = vld [vmem:[%s2 + $0xa0] sm:$0xff]
      %v593 = vld [vmem:[%s2 + $0xa8] sm:$0xff]
      %v594 = vld [vmem:[%s2 + $0xb0] sm:$0xff]
      %v595 = vld [vmem:[%s2 + $0xb8] sm:$0xff]
      %v596 = vld [vmem:[%s2 + $0xc0] sm:$0xff]
      %v597 = vld [vmem:[%s2 + $0xc8] sm:$0xff]
      %v598 = vld [vmem:[%s2 + $0xd0] sm:$0xff]
      %v599 = vld [vmem:[%s2 + $0xd8] sm:$0xff]
      %v600 = vld [vmem:[%s2 + $0xe0] sm:$0xff]
      %v601 = vld [vmem:[%s2 + $0xe8] sm:$0xff]
      %v602 = vld [vmem:[%s2 + $0xf0] sm:$0xff]
      %v603 = vld [vmem:[%s2 + $0xf8] sm:$0xff]
      %v604 = vpack.c.bf16 %v538, %v536
      %v605 = vpack.c.bf16 %v539, %v537
      %607 = vset.pattern.permute.xlu0 0
      %608 = vperm.xlu0 %607, %v572
      %v609 = vpop.permute.xlu0 %608
      %612 = vset.pattern.permute.xlu0 0
      %613 = vperm.xlu0 %612, %v573
      %v614 = vpop.permute.xlu0 %613
      %617 = vset.pattern.permute.xlu0 0
      %618 = vperm.xlu0 %617, %v574
      %v619 = vpop.permute.xlu0 %618
      %622 = vset.pattern.permute.xlu0 0
      %623 = vperm.xlu0 %622, %v575
      %v624 = vpop.permute.xlu0 %623
      %627 = vset.pattern.permute.xlu0 0
      %628 = vperm.xlu0 %627, %v576
      %v629 = vpop.permute.xlu0 %628
      %632 = vset.pattern.permute.xlu0 0
      %633 = vperm.xlu0 %632, %v577
      %v634 = vpop.permute.xlu0 %633
      %637 = vset.pattern.permute.xlu0 0
      %638 = vperm.xlu0 %637, %v578
      %v639 = vpop.permute.xlu0 %638
      %642 = vset.pattern.permute.xlu0 0
      %643 = vperm.xlu0 %642, %v579
      %v644 = vpop.permute.xlu0 %643
      %647 = vset.pattern.permute.xlu0 0
      %648 = vperm.xlu0 %647, %v580
      %v649 = vpop.permute.xlu0 %648
      %652 = vset.pattern.permute.xlu0 0
      %653 = vperm.xlu0 %652, %v581
      %v654 = vpop.permute.xlu0 %653
      %657 = vset.pattern.permute.xlu0 0
      %658 = vperm.xlu0 %657, %v582
      %v659 = vpop.permute.xlu0 %658
      %662 = vset.pattern.permute.xlu0 0
      %663 = vperm.xlu0 %662, %v583
      %v664 = vpop.permute.xlu0 %663
      %667 = vset.pattern.permute.xlu0 0
      %668 = vperm.xlu0 %667, %v584
      %v669 = vpop.permute.xlu0 %668
      %672 = vset.pattern.permute.xlu0 0
      %673 = vperm.xlu0 %672, %v585
      %v674 = vpop.permute.xlu0 %673
      %677 = vset.pattern.permute.xlu0 0
      %678 = vperm.xlu0 %677, %v586
      %v679 = vpop.permute.xlu0 %678
      %682 = vset.pattern.permute.xlu0 0
      %683 = vperm.xlu0 %682, %v587
      %v684 = vpop.permute.xlu0 %683
      %687 = vset.pattern.permute.xlu0 0
      %688 = vperm.xlu0 %687, %v588
      %v689 = vpop.permute.xlu0 %688
      %692 = vset.pattern.permute.xlu0 0
      %693 = vperm.xlu0 %692, %v589
      %v694 = vpop.permute.xlu0 %693
      %697 = vset.pattern.permute.xlu0 0
      %698 = vperm.xlu0 %697, %v590
      %v699 = vpop.permute.xlu0 %698
      %702 = vset.pattern.permute.xlu0 0
      %703 = vperm.xlu0 %702, %v591
      %v704 = vpop.permute.xlu0 %703
      %707 = vset.pattern.permute.xlu0 0
      %708 = vperm.xlu0 %707, %v592
      %v709 = vpop.permute.xlu0 %708
      %712 = vset.pattern.permute.xlu0 0
      %713 = vperm.xlu0 %712, %v593
      %v714 = vpop.permute.xlu0 %713
      %717 = vset.pattern.permute.xlu0 0
      %718 = vperm.xlu0 %717, %v594
      %v719 = vpop.permute.xlu0 %718
      %722 = vset.pattern.permute.xlu0 0
      %723 = vperm.xlu0 %722, %v595
      %v724 = vpop.permute.xlu0 %723
      %727 = vset.pattern.permute.xlu0 0
      %728 = vperm.xlu0 %727, %v596
      %v729 = vpop.permute.xlu0 %728
      %732 = vset.pattern.permute.xlu0 0
      %733 = vperm.xlu0 %732, %v597
      %v734 = vpop.permute.xlu0 %733
      %737 = vset.pattern.permute.xlu0 0
      %738 = vperm.xlu0 %737, %v598
      %v739 = vpop.permute.xlu0 %738
      %742 = vset.pattern.permute.xlu0 0
      %743 = vperm.xlu0 %742, %v599
      %v744 = vpop.permute.xlu0 %743
      %747 = vset.pattern.permute.xlu0 0
      %748 = vperm.xlu0 %747, %v600
      %v749 = vpop.permute.xlu0 %748
      %752 = vset.pattern.permute.xlu0 0
      %753 = vperm.xlu0 %752, %v601
      %v754 = vpop.permute.xlu0 %753
      %757 = vset.pattern.permute.xlu0 0
      %758 = vperm.xlu0 %757, %v602
      %v759 = vpop.permute.xlu0 %758
      %762 = vset.pattern.permute.xlu0 0
      %763 = vperm.xlu0 %762, %v603
      %v764 = vpop.permute.xlu0 %763
      %v798 = vunpack.c.l.b16 %v540
      %v799 = vunpack.c.l.b16 %v541
      %v800 = vunpack.c.l.b16 %v542
      %v801 = vunpack.c.l.b16 %v543
      %v802 = vunpack.c.l.b16 %v544
      %v803 = vunpack.c.l.b16 %v545
      %v804 = vunpack.c.l.b16 %v546
      %v805 = vunpack.c.l.b16 %v547
      %v806 = vunpack.c.l.b16 %v548
      %v807 = vunpack.c.l.b16 %v549
      %v808 = vunpack.c.l.b16 %v550
      %v809 = vunpack.c.l.b16 %v551
      %v810 = vunpack.c.l.b16 %v552
      %v811 = vunpack.c.l.b16 %v553
      %v812 = vunpack.c.l.b16 %v554
      %v813 = vunpack.c.l.b16 %v555
      %v814 = vunpack.c.l.b16 %v556
      %v815 = vunpack.c.l.b16 %v557
      %v816 = vunpack.c.l.b16 %v558
      %v817 = vunpack.c.l.b16 %v559
      %v818 = vunpack.c.l.b16 %v560
      %v819 = vunpack.c.l.b16 %v561
      %v820 = vunpack.c.l.b16 %v562
      %v821 = vunpack.c.l.b16 %v563
      %v822 = vunpack.c.l.b16 %v564
      %v823 = vunpack.c.l.b16 %v565
      %v824 = vunpack.c.l.b16 %v566
      %v825 = vunpack.c.l.b16 %v567
      %v826 = vunpack.c.l.b16 %v568
      %v827 = vunpack.c.l.b16 %v569
      %v828 = vunpack.c.l.b16 %v570
      %v829 = vunpack.c.l.b16 %v571
      %v830 = vpack.c.b16 %v799, %v798
      %v831 = vpack.c.b16 %v801, %v800
      %v832 = vpack.c.b16 %v803, %v802
      %v833 = vpack.c.b16 %v805, %v804
      %v834 = vpack.c.b16 %v807, %v806
      %v835 = vpack.c.b16 %v809, %v808
      %v836 = vpack.c.b16 %v811, %v810
      %v837 = vpack.c.b16 %v813, %v812
      %v838 = vpack.c.b16 %v815, %v814
      %v839 = vpack.c.b16 %v817, %v816
      %v840 = vpack.c.b16 %v819, %v818
      %v841 = vpack.c.b16 %v821, %v820
      %v842 = vpack.c.b16 %v823, %v822
      %v843 = vpack.c.b16 %v825, %v824
      %v844 = vpack.c.b16 %v827, %v826
      %v845 = vpack.c.b16 %v829, %v828
      %vm846 = vcmask 130048
      %v848 = vsel %vm846, %v830, 0
      %v851 = vsel %vm846, %v831, 0
      %v854 = vsel %vm846, %v832, 0
      %v857 = vsel %vm846, %v833, 0
      %v860 = vsel %vm846, %v834, 0
      %v863 = vsel %vm846, %v835, 0
      %v866 = vsel %vm846, %v836, 0
      %v869 = vsel %vm846, %v837, 0
      %v872 = vsel %vm846, %v838, 0
      %v875 = vsel %vm846, %v839, 0
      %v878 = vsel %vm846, %v840, 0
      %v881 = vsel %vm846, %v841, 0
      %v884 = vsel %vm846, %v842, 0
      %v887 = vsel %vm846, %v843, 0
      %v890 = vsel %vm846, %v844, 0
      %v893 = vsel %vm846, %v845, 0
      %895 = vmatprep.subr.bf16.mxu0 %v605
      %896 = vmatpush1.bf16.msra.mxu0 %v604
      %897 = vmatprep.subr.bf16.mxu0 0
      %898 = vmatpush1.bf16.msra.mxu0 0
      %899 = vmatprep.subr.bf16.mxu0 0
      %900 = vmatpush1.bf16.msra.mxu0 0
      %901 = vmatprep.subr.bf16.mxu0 0
      %902 = vmatpush1.bf16.msra.mxu0 0
      %903 = vmatprep.subr.bf16.mxu0 0
      %904 = vmatpush1.bf16.msra.mxu0 0
      %905 = vmatprep.subr.bf16.mxu0 0
      %906 = vmatpush1.bf16.msra.mxu0 0
      %907 = vmatprep.subr.bf16.mxu0 0
      %908 = vmatpush1.bf16.msra.mxu0 0
      %909 = vmatprep.subr.bf16.mxu0 0
      %910 = vmatpush1.bf16.msra.mxu0 0
      %911 = vmatprep.subr.bf16.mxu0 0
      %912 = vmatpush1.bf16.msra.mxu0 0
      %913 = vmatprep.subr.bf16.mxu0 0
      %914 = vmatpush1.bf16.msra.mxu0 0
      %915 = vmatprep.subr.bf16.mxu0 0
      %916 = vmatpush1.bf16.msra.mxu0 0
      %917 = vmatprep.subr.bf16.mxu0 0
      %918 = vmatpush1.bf16.msra.mxu0 0
      %919 = vmatprep.subr.bf16.mxu0 0
      %920 = vmatpush1.bf16.msra.mxu0 0
      %921 = vmatprep.subr.bf16.mxu0 0
      %922 = vmatpush1.bf16.msra.mxu0 0
      %923 = vmatprep.subr.bf16.mxu0 0
      %924 = vmatpush1.bf16.msra.mxu0 0
      %925 = vmatprep.subr.bf16.mxu0 0
      %926 = vmatpush1.bf16.msra.mxu0 0
      %927 = vmatprep.mubr.bf16.mxu0 0
      %928 = vmatmul.mubr.bf16.gmra.mrb[0].mxu0 %v848
      %v929 = vpop.f32.mrb[0].mxu0
      %v930 = vadd.f32 %v609, %v929
      %v931 = vpop.f32.mrb[0].mxu0
      %v932 = vadd.f32 %v609, %v931
      %v933 = vpop.f32.mrb[0].mxu0
      %v934 = vadd.f32 %v614, %v933
      %v935 = vpop.f32.mrb[0].mxu0
      %v936 = vadd.f32 %v614, %v935
      %937 = vmatprep.mubr.bf16.mxu0 0
      %938 = vmatmul.mubr.bf16.gmra.mrb[0].mxu0 %v851
      %v939 = vpop.f32.mrb[0].mxu0
      %v940 = vadd.f32 %v619, %v939
      %v941 = vpop.f32.mrb[0].mxu0
      %v942 = vadd.f32 %v619, %v941
      %v943 = vpop.f32.mrb[0].mxu0
      %v944 = vadd.f32 %v624, %v943
      %v945 = vpop.f32.mrb[0].mxu0
      %v946 = vadd.f32 %v624, %v945
      %947 = vmatprep.mubr.bf16.mxu0 0
      %948 = vmatmul.mubr.bf16.gmra.mrb[0].mxu0 %v854
      %v949 = vpop.f32.mrb[0].mxu0
      %v950 = vadd.f32 %v629, %v949
      %v951 = vpop.f32.mrb[0].mxu0
      %v952 = vadd.f32 %v629, %v951
      %v953 = vpop.f32.mrb[0].mxu0
      %v954 = vadd.f32 %v634, %v953
      %v955 = vpop.f32.mrb[0].mxu0
      %v956 = vadd.f32 %v634, %v955
      %957 = vmatprep.mubr.bf16.mxu0 0
      %958 = vmatmul.mubr.bf16.gmra.mrb[0].mxu0 %v857
      %v959 = vpop.f32.mrb[0].mxu0
      %v960 = vadd.f32 %v639, %v959
      %v961 = vpop.f32.mrb[0].mxu0
      %v962 = vadd.f32 %v639, %v961
      %v963 = vpop.f32.mrb[0].mxu0
      %v964 = vadd.f32 %v644, %v963
      %v965 = vpop.f32.mrb[0].mxu0
      %v966 = vadd.f32 %v644, %v965
      %967 = vmatprep.mubr.bf16.mxu0 0
      %968 = vmatmul.mubr.bf16.gmra.mrb[0].mxu0 %v860
      %v969 = vpop.f32.mrb[0].mxu0
      %v970 = vadd.f32 %v649, %v969
      %v971 = vpop.f32.mrb[0].mxu0
      %v972 = vadd.f32 %v649, %v971
      %v973 = vpop.f32.mrb[0].mxu0
      %v974 = vadd.f32 %v654, %v973
      %v975 = vpop.f32.mrb[0].mxu0
      %v976 = vadd.f32 %v654, %v975
      %977 = vmatprep.mubr.bf16.mxu0 0
      %978 = vmatmul.mubr.bf16.gmra.mrb[0].mxu0 %v863
      %v979 = vpop.f32.mrb[0].mxu0
      %v980 = vadd.f32 %v659, %v979
      %v981 = vpop.f32.mrb[0].mxu0
      %v982 = vadd.f32 %v659, %v981
      %v983 = vpop.f32.mrb[0].mxu0
      %v984 = vadd.f32 %v664, %v983
      %v985 = vpop.f32.mrb[0].mxu0
      %v986 = vadd.f32 %v664, %v985
      %987 = vmatprep.mubr.bf16.mxu0 0
      %988 = vmatmul.mubr.bf16.gmra.mrb[0].mxu0 %v866
      %v989 = vpop.f32.mrb[0].mxu0
      %v990 = vadd.f32 %v669, %v989
      %v991 = vpop.f32.mrb[0].mxu0
      %v992 = vadd.f32 %v669, %v991
      %v993 = vpop.f32.mrb[0].mxu0
      %v994 = vadd.f32 %v674, %v993
      %v995 = vpop.f32.mrb[0].mxu0
      %v996 = vadd.f32 %v674, %v995
      %997 = vmatprep.mubr.bf16.mxu0 0
      %998 = vmatmul.mubr.bf16.gmra.mrb[0].mxu0 %v869
      %v999 = vpop.f32.mrb[0].mxu0
      %v1000 = vadd.f32 %v679, %v999
      %v1001 = vpop.f32.mrb[0].mxu0
      %v1002 = vadd.f32 %v679, %v1001
      %v1003 = vpop.f32.mrb[0].mxu0
      %v1004 = vadd.f32 %v684, %v1003
      %v1005 = vpop.f32.mrb[0].mxu0
      %v1006 = vadd.f32 %v684, %v1005
      %1007 = vmatprep.mubr.bf16.mxu0 0
      %1008 = vmatmul.mubr.bf16.gmra.mrb[0].mxu0 %v872
      %v1009 = vpop.f32.mrb[0].mxu0
      %v1010 = vadd.f32 %v689, %v1009
      %v1011 = vpop.f32.mrb[0].mxu0
      %v1012 = vadd.f32 %v689, %v1011
      %v1013 = vpop.f32.mrb[0].mxu0
      %v1014 = vadd.f32 %v694, %v1013
      %v1015 = vpop.f32.mrb[0].mxu0
      %v1016 = vadd.f32 %v694, %v1015
      %1017 = vmatprep.mubr.bf16.mxu0 0
      %1018 = vmatmul.mubr.bf16.gmra.mrb[0].mxu0 %v875
      %v1019 = vpop.f32.mrb[0].mxu0
      %v1020 = vadd.f32 %v699, %v1019
      %v1021 = vpop.f32.mrb[0].mxu0
      %v1022 = vadd.f32 %v699, %v1021
      %v1023 = vpop.f32.mrb[0].mxu0
      %v1024 = vadd.f32 %v704, %v1023
      %v1025 = vpop.f32.mrb[0].mxu0
      %v1026 = vadd.f32 %v704, %v1025
      %1027 = vmatprep.mubr.bf16.mxu0 0
      %1028 = vmatmul.mubr.bf16.gmra.mrb[0].mxu0 %v878
      %v1029 = vpop.f32.mrb[0].mxu0
      %v1030 = vadd.f32 %v709, %v1029
      %v1031 = vpop.f32.mrb[0].mxu0
      %v1032 = vadd.f32 %v709, %v1031
      %v1033 = vpop.f32.mrb[0].mxu0
      %v1034 = vadd.f32 %v714, %v1033
      %v1035 = vpop.f32.mrb[0].mxu0
      %v1036 = vadd.f32 %v714, %v1035
      %1037 = vmatprep.mubr.bf16.mxu0 0
      %1038 = vmatmul.mubr.bf16.gmra.mrb[0].mxu0 %v881
      %v1039 = vpop.f32.mrb[0].mxu0
      %v1040 = vadd.f32 %v719, %v1039
      %v1041 = vpop.f32.mrb[0].mxu0
      %v1042 = vadd.f32 %v719, %v1041
      %v1043 = vpop.f32.mrb[0].mxu0
      %v1044 = vadd.f32 %v724, %v1043
      %v1045 = vpop.f32.mrb[0].mxu0
      %v1046 = vadd.f32 %v724, %v1045
      %1047 = vmatprep.mubr.bf16.mxu0 0
      %1048 = vmatmul.mubr.bf16.gmra.mrb[0].mxu0 %v884
      %v1049 = vpop.f32.mrb[0].mxu0
      %v1050 = vadd.f32 %v729, %v1049
      %v1051 = vpop.f32.mrb[0].mxu0
      %v1052 = vadd.f32 %v729, %v1051
      %v1053 = vpop.f32.mrb[0].mxu0
      %v1054 = vadd.f32 %v734, %v1053
      %v1055 = vpop.f32.mrb[0].mxu0
      %v1056 = vadd.f32 %v734, %v1055
      %1057 = vmatprep.mubr.bf16.mxu0 0
      %1058 = vmatmul.mubr.bf16.gmra.mrb[0].mxu0 %v887
      %v1059 = vpop.f32.mrb[0].mxu0
      %v1060 = vadd.f32 %v739, %v1059
      %v1061 = vpop.f32.mrb[0].mxu0
      %v1062 = vadd.f32 %v739, %v1061
      %v1063 = vpop.f32.mrb[0].mxu0
      %v1064 = vadd.f32 %v744, %v1063
      %v1065 = vpop.f32.mrb[0].mxu0
      %v1066 = vadd.f32 %v744, %v1065
      %1067 = vmatprep.mubr.bf16.mxu0 0
      %1068 = vmatmul.mubr.bf16.gmra.mrb[0].mxu0 %v890
      %v1069 = vpop.f32.mrb[0].mxu0
      %v1070 = vadd.f32 %v749, %v1069
      %v1071 = vpop.f32.mrb[0].mxu0
      %v1072 = vadd.f32 %v749, %v1071
      %v1073 = vpop.f32.mrb[0].mxu0
      %v1074 = vadd.f32 %v754, %v1073
      %v1075 = vpop.f32.mrb[0].mxu0
      %v1076 = vadd.f32 %v754, %v1075
      %1077 = vmatprep.mubr.bf16.mxu0 0
      %1078 = vmatmul.mubr.bf16.gmra.mrb[0].mxu0 %v893
      %v1079 = vpop.f32.mrb[0].mxu0
      %v1080 = vadd.f32 %v759, %v1079
      %v1081 = vpop.f32.mrb[0].mxu0
      %v1082 = vadd.f32 %v759, %v1081
      %v1083 = vpop.f32.mrb[0].mxu0
      %v1084 = vadd.f32 %v764, %v1083
      %v1085 = vpop.f32.mrb[0].mxu0
      %v1086 = vadd.f32 %v764, %v1085
      %1087 = vdwg.mxu0
      %v1088 = vadd.f32 %v930, %v932
      %1089 = vadd.xlane.f32.xlu0 %v1088
      %v1090 = vpop.xlane.xlu0 %1089
      %v1091 = vadd.f32 %v934, %v936
      %1092 = vadd.xlane.f32.xlu0 %v1091
      %v1093 = vpop.xlane.xlu0 %1092
      %v1094 = vadd.f32 %v940, %v942
      %1095 = vadd.xlane.f32.xlu0 %v1094
      %v1096 = vpop.xlane.xlu0 %1095
      %v1097 = vadd.f32 %v944, %v946
      %1098 = vadd.xlane.f32.xlu0 %v1097
      %v1099 = vpop.xlane.xlu0 %1098
      %v1100 = vadd.f32 %v950, %v952
      %1101 = vadd.xlane.f32.xlu0 %v1100
      %v1102 = vpop.xlane.xlu0 %1101
      %v1103 = vadd.f32 %v954, %v956
      %1104 = vadd.xlane.f32.xlu0 %v1103
      %v1105 = vpop.xlane.xlu0 %1104
      %v1106 = vadd.f32 %v960, %v962
      %1107 = vadd.xlane.f32.xlu0 %v1106
      %v1108 = vpop.xlane.xlu0 %1107
      %v1109 = vadd.f32 %v964, %v966
      %1110 = vadd.xlane.f32.xlu0 %v1109
      %v1111 = vpop.xlane.xlu0 %1110
      %v1112 = vadd.f32 %v970, %v972
      %1113 = vadd.xlane.f32.xlu0 %v1112
      %v1114 = vpop.xlane.xlu0 %1113
      %v1115 = vadd.f32 %v974, %v976
      %1116 = vadd.xlane.f32.xlu0 %v1115
      %v1117 = vpop.xlane.xlu0 %1116
      %v1118 = vadd.f32 %v980, %v982
      %1119 = vadd.xlane.f32.xlu0 %v1118
      %v1120 = vpop.xlane.xlu0 %1119
      %v1121 = vadd.f32 %v984, %v986
      %1122 = vadd.xlane.f32.xlu0 %v1121
      %v1123 = vpop.xlane.xlu0 %1122
      %v1124 = vadd.f32 %v990, %v992
      %1125 = vadd.xlane.f32.xlu0 %v1124
      %v1126 = vpop.xlane.xlu0 %1125
      %v1127 = vadd.f32 %v994, %v996
      %1128 = vadd.xlane.f32.xlu0 %v1127
      %v1129 = vpop.xlane.xlu0 %1128
      %v1130 = vadd.f32 %v1000, %v1002
      %1131 = vadd.xlane.f32.xlu0 %v1130
      %v1132 = vpop.xlane.xlu0 %1131
      %v1133 = vadd.f32 %v1004, %v1006
      %1134 = vadd.xlane.f32.xlu0 %v1133
      %v1135 = vpop.xlane.xlu0 %1134
      %v1136 = vadd.f32 %v1010, %v1012
      %1137 = vadd.xlane.f32.xlu0 %v1136
      %v1138 = vpop.xlane.xlu0 %1137
      %v1139 = vadd.f32 %v1014, %v1016
      %1140 = vadd.xlane.f32.xlu0 %v1139
      %v1141 = vpop.xlane.xlu0 %1140
      %v1142 = vadd.f32 %v1020, %v1022
      %1143 = vadd.xlane.f32.xlu0 %v1142
      %v1144 = vpop.xlane.xlu0 %1143
      %v1145 = vadd.f32 %v1024, %v1026
      %1146 = vadd.xlane.f32.xlu0 %v1145
      %v1147 = vpop.xlane.xlu0 %1146
      %v1148 = vadd.f32 %v1030, %v1032
      %1149 = vadd.xlane.f32.xlu0 %v1148
      %v1150 = vpop.xlane.xlu0 %1149
      %v1151 = vadd.f32 %v1034, %v1036
      %1152 = vadd.xlane.f32.xlu0 %v1151
      %v1153 = vpop.xlane.xlu0 %1152
      %v1154 = vadd.f32 %v1040, %v1042
      %1155 = vadd.xlane.f32.xlu0 %v1154
      %v1156 = vpop.xlane.xlu0 %1155
      %v1157 = vadd.f32 %v1044, %v1046
      %1158 = vadd.xlane.f32.xlu0 %v1157
      %v1159 = vpop.xlane.xlu0 %1158
      %v1160 = vadd.f32 %v1050, %v1052
      %1161 = vadd.xlane.f32.xlu0 %v1160
      %v1162 = vpop.xlane.xlu0 %1161
      %v1163 = vadd.f32 %v1054, %v1056
      %1164 = vadd.xlane.f32.xlu0 %v1163
      %v1165 = vpop.xlane.xlu0 %1164
      %v1166 = vadd.f32 %v1060, %v1062
      %1167 = vadd.xlane.f32.xlu0 %v1166
      %v1168 = vpop.xlane.xlu0 %1167
      %v1169 = vadd.f32 %v1064, %v1066
      %1170 = vadd.xlane.f32.xlu0 %v1169
      %v1171 = vpop.xlane.xlu0 %1170
      %v1172 = vadd.f32 %v1070, %v1072
      %1173 = vadd.xlane.f32.xlu0 %v1172
      %v1174 = vpop.xlane.xlu0 %1173
      %v1175 = vadd.f32 %v1074, %v1076
      %1176 = vadd.xlane.f32.xlu0 %v1175
      %v1177 = vpop.xlane.xlu0 %1176
      %v1178 = vadd.f32 %v1080, %v1082
      %1179 = vadd.xlane.f32.xlu0 %v1178
      %v1180 = vpop.xlane.xlu0 %1179
      %v1181 = vadd.f32 %v1084, %v1086
      %1182 = vadd.xlane.f32.xlu0 %v1181
      %v1183 = vpop.xlane.xlu0 %1182
      %v1184 = vrcp.pop 256.0
      %v1185 = vmul.f32 %v1090, %v1184
      %v1186 = vmul.f32 %v1093, %v1184
      %v1187 = vmul.f32 %v1096, %v1184
      %v1188 = vmul.f32 %v1099, %v1184
      %v1189 = vmul.f32 %v1102, %v1184
      %v1190 = vmul.f32 %v1105, %v1184
      %v1191 = vmul.f32 %v1108, %v1184
      %v1192 = vmul.f32 %v1111, %v1184
      %v1193 = vmul.f32 %v1114, %v1184
      %v1194 = vmul.f32 %v1117, %v1184
      %v1195 = vmul.f32 %v1120, %v1184
      %v1196 = vmul.f32 %v1123, %v1184
      %v1197 = vmul.f32 %v1126, %v1184
      %v1198 = vmul.f32 %v1129, %v1184
      %v1199 = vmul.f32 %v1132, %v1184
      %v1200 = vmul.f32 %v1135, %v1184
      %v1201 = vmul.f32 %v1138, %v1184
      %v1202 = vmul.f32 %v1141, %v1184
      %v1203 = vmul.f32 %v1144, %v1184
      %v1204 = vmul.f32 %v1147, %v1184
      %v1205 = vmul.f32 %v1150, %v1184
      %v1206 = vmul.f32 %v1153, %v1184
      %v1207 = vmul.f32 %v1156, %v1184
      %v1208 = vmul.f32 %v1159, %v1184
      %v1209 = vmul.f32 %v1162, %v1184
      %v1210 = vmul.f32 %v1165, %v1184
      %v1211 = vmul.f32 %v1168, %v1184
      %v1212 = vmul.f32 %v1171, %v1184
      %v1213 = vmul.f32 %v1174, %v1184
      %v1214 = vmul.f32 %v1177, %v1184
      %v1215 = vmul.f32 %v1180, %v1184
      %v1216 = vmul.f32 %v1183, %v1184
      %v1217 = vsub.f32 %v930, %v1185
      %v1218 = vsub.f32 %v932, %v1185
      %v1219 = vsub.f32 %v934, %v1186
      %v1220 = vsub.f32 %v936, %v1186
      %v1221 = vsub.f32 %v940, %v1187
      %v1222 = vsub.f32 %v942, %v1187
      %v1223 = vsub.f32 %v944, %v1188
      %v1224 = vsub.f32 %v946, %v1188
      %v1225 = vsub.f32 %v950, %v1189
      %v1226 = vsub.f32 %v952, %v1189
      %v1227 = vsub.f32 %v954, %v1190
      %v1228 = vsub.f32 %v956, %v1190
      %v1229 = vsub.f32 %v960, %v1191
      %v1230 = vsub.f32 %v962, %v1191
      %v1231 = vsub.f32 %v964, %v1192
      %v1232 = vsub.f32 %v966, %v1192
      %v1233 = vsub.f32 %v970, %v1193
      %v1234 = vsub.f32 %v972, %v1193
      %v1235 = vsub.f32 %v974, %v1194
      %v1236 = vsub.f32 %v976, %v1194
      %v1237 = vsub.f32 %v980, %v1195
      %v1238 = vsub.f32 %v982, %v1195
      %v1239 = vsub.f32 %v984, %v1196
      %v1240 = vsub.f32 %v986, %v1196
      %v1241 = vsub.f32 %v990, %v1197
      %v1242 = vsub.f32 %v992, %v1197
      %v1243 = vsub.f32 %v994, %v1198
      %v1244 = vsub.f32 %v996, %v1198
      %v1245 = vsub.f32 %v1000, %v1199
      %v1246 = vsub.f32 %v1002, %v1199
      %v1247 = vsub.f32 %v1004, %v1200
      %v1248 = vsub.f32 %v1006, %v1200
      %v1249 = vsub.f32 %v1010, %v1201
      %v1250 = vsub.f32 %v1012, %v1201
      %v1251 = vsub.f32 %v1014, %v1202
      %v1252 = vsub.f32 %v1016, %v1202
      %v1253 = vsub.f32 %v1020, %v1203
      %v1254 = vsub.f32 %v1022, %v1203
      %v1255 = vsub.f32 %v1024, %v1204
      %v1256 = vsub.f32 %v1026, %v1204
      %v1257 = vsub.f32 %v1030, %v1205
      %v1258 = vsub.f32 %v1032, %v1205
      %v1259 = vsub.f32 %v1034, %v1206
      %v1260 = vsub.f32 %v1036, %v1206
      %v1261 = vsub.f32 %v1040, %v1207
      %v1262 = vsub.f32 %v1042, %v1207
      %v1263 = vsub.f32 %v1044, %v1208
      %v1264 = vsub.f32 %v1046, %v1208
      %v1265 = vsub.f32 %v1050, %v1209
      %v1266 = vsub.f32 %v1052, %v1209
      %v1267 = vsub.f32 %v1054, %v1210
      %v1268 = vsub.f32 %v1056, %v1210
      %v1269 = vsub.f32 %v1060, %v1211
      %v1270 = vsub.f32 %v1062, %v1211
      %v1271 = vsub.f32 %v1064, %v1212
      %v1272 = vsub.f32 %v1066, %v1212
      %v1273 = vsub.f32 %v1070, %v1213
      %v1274 = vsub.f32 %v1072, %v1213
      %v1275 = vsub.f32 %v1074, %v1214
      %v1276 = vsub.f32 %v1076, %v1214
      %v1277 = vsub.f32 %v1080, %v1215
      %v1278 = vsub.f32 %v1082, %v1215
      %v1279 = vsub.f32 %v1084, %v1216
      %v1280 = vsub.f32 %v1086, %v1216
      %v1281 = vmul.f32 %v1217, %v1217
      %v1282 = vmul.f32 %v1218, %v1218
      %v1283 = vmul.f32 %v1219, %v1219
      %v1284 = vmul.f32 %v1220, %v1220
      %v1285 = vmul.f32 %v1221, %v1221
      %v1286 = vmul.f32 %v1222, %v1222
      %v1287 = vmul.f32 %v1223, %v1223
      %v1288 = vmul.f32 %v1224, %v1224
      %v1289 = vmul.f32 %v1225, %v1225
      %v1290 = vmul.f32 %v1226, %v1226
      %v1291 = vmul.f32 %v1227, %v1227
      %v1292 = vmul.f32 %v1228, %v1228
      %v1293 = vmul.f32 %v1229, %v1229
      %v1294 = vmul.f32 %v1230, %v1230
      %v1295 = vmul.f32 %v1231, %v1231
      %v1296 = vmul.f32 %v1232, %v1232
      %v1297 = vmul.f32 %v1233, %v1233
      %v1298 = vmul.f32 %v1234, %v1234
      %v1299 = vmul.f32 %v1235, %v1235
      %v1300 = vmul.f32 %v1236, %v1236
      %v1301 = vmul.f32 %v1237, %v1237
      %v1302 = vmul.f32 %v1238, %v1238
      %v1303 = vmul.f32 %v1239, %v1239
      %v1304 = vmul.f32 %v1240, %v1240
      %v1305 = vmul.f32 %v1241, %v1241
      %v1306 = vmul.f32 %v1242, %v1242
      %v1307 = vmul.f32 %v1243, %v1243
      %v1308 = vmul.f32 %v1244, %v1244
      %v1309 = vmul.f32 %v1245, %v1245
      %v1310 = vmul.f32 %v1246, %v1246
      %v1311 = vmul.f32 %v1247, %v1247
      %v1312 = vmul.f32 %v1248, %v1248
      %v1313 = vmul.f32 %v1249, %v1249
      %v1314 = vmul.f32 %v1250, %v1250
      %v1315 = vmul.f32 %v1251, %v1251
      %v1316 = vmul.f32 %v1252, %v1252
      %v1317 = vmul.f32 %v1253, %v1253
      %v1318 = vmul.f32 %v1254, %v1254
      %v1319 = vmul.f32 %v1255, %v1255
      %v1320 = vmul.f32 %v1256, %v1256
      %v1321 = vmul.f32 %v1257, %v1257
      %v1322 = vmul.f32 %v1258, %v1258
      %v1323 = vmul.f32 %v1259, %v1259
      %v1324 = vmul.f32 %v1260, %v1260
      %v1325 = vmul.f32 %v1261, %v1261
      %v1326 = vmul.f32 %v1262, %v1262
      %v1327 = vmul.f32 %v1263, %v1263
      %v1328 = vmul.f32 %v1264, %v1264
      %v1329 = vmul.f32 %v1265, %v1265
      %v1330 = vmul.f32 %v1266, %v1266
      %v1331 = vmul.f32 %v1267, %v1267
      %v1332 = vmul.f32 %v1268, %v1268
      %v1333 = vmul.f32 %v1269, %v1269
      %v1334 = vmul.f32 %v1270, %v1270
      %v1335 = vmul.f32 %v1271, %v1271
      %v1336 = vmul.f32 %v1272, %v1272
      %v1337 = vmul.f32 %v1273, %v1273
      %v1338 = vmul.f32 %v1274, %v1274
      %v1339 = vmul.f32 %v1275, %v1275
      %v1340 = vmul.f32 %v1276, %v1276
      %v1341 = vmul.f32 %v1277, %v1277
      %v1342 = vmul.f32 %v1278, %v1278
      %v1343 = vmul.f32 %v1279, %v1279
      %v1344 = vmul.f32 %v1280, %v1280
      %v1345 = vadd.f32 %v1281, %v1282
      %1346 = vadd.xlane.f32.xlu0 %v1345
      %v1347 = vpop.xlane.xlu0 %1346
      %v1348 = vadd.f32 %v1283, %v1284
      %1349 = vadd.xlane.f32.xlu0 %v1348
      %v1350 = vpop.xlane.xlu0 %1349
      %v1351 = vadd.f32 %v1285, %v1286
      %1352 = vadd.xlane.f32.xlu0 %v1351
      %v1353 = vpop.xlane.xlu0 %1352
      %v1354 = vadd.f32 %v1287, %v1288
      %1355 = vadd.xlane.f32.xlu0 %v1354
      %v1356 = vpop.xlane.xlu0 %1355
      %v1357 = vadd.f32 %v1289, %v1290
      %1358 = vadd.xlane.f32.xlu0 %v1357
      %v1359 = vpop.xlane.xlu0 %1358
      %v1360 = vadd.f32 %v1291, %v1292
      %1361 = vadd.xlane.f32.xlu0 %v1360
      %v1362 = vpop.xlane.xlu0 %1361
      %v1363 = vadd.f32 %v1293, %v1294
      %1364 = vadd.xlane.f32.xlu0 %v1363
      %v1365 = vpop.xlane.xlu0 %1364
      %v1366 = vadd.f32 %v1295, %v1296
      %1367 = vadd.xlane.f32.xlu0 %v1366
      %v1368 = vpop.xlane.xlu0 %1367
      %v1369 = vadd.f32 %v1297, %v1298
      %1370 = vadd.xlane.f32.xlu0 %v1369
      %v1371 = vpop.xlane.xlu0 %1370
      %v1372 = vadd.f32 %v1299, %v1300
      %1373 = vadd.xlane.f32.xlu0 %v1372
      %v1374 = vpop.xlane.xlu0 %1373
      %v1375 = vadd.f32 %v1301, %v1302
      %1376 = vadd.xlane.f32.xlu0 %v1375
      %v1377 = vpop.xlane.xlu0 %1376
      %v1378 = vadd.f32 %v1303, %v1304
      %1379 = vadd.xlane.f32.xlu0 %v1378
      %v1380 = vpop.xlane.xlu0 %1379
      %v1381 = vadd.f32 %v1305, %v1306
      %1382 = vadd.xlane.f32.xlu0 %v1381
      %v1383 = vpop.xlane.xlu0 %1382
      %v1384 = vadd.f32 %v1307, %v1308
      %1385 = vadd.xlane.f32.xlu0 %v1384
      %v1386 = vpop.xlane.xlu0 %1385
      %v1387 = vadd.f32 %v1309, %v1310
      %1388 = vadd.xlane.f32.xlu0 %v1387
      %v1389 = vpop.xlane.xlu0 %1388
      %v1390 = vadd.f32 %v1311, %v1312
      %1391 = vadd.xlane.f32.xlu0 %v1390
      %v1392 = vpop.xlane.xlu0 %1391
      %v1393 = vadd.f32 %v1313, %v1314
      %1394 = vadd.xlane.f32.xlu0 %v1393
      %v1395 = vpop.xlane.xlu0 %1394
      %v1396 = vadd.f32 %v1315, %v1316
      %1397 = vadd.xlane.f32.xlu0 %v1396
      %v1398 = vpop.xlane.xlu0 %1397
      %v1399 = vadd.f32 %v1317, %v1318
      %1400 = vadd.xlane.f32.xlu0 %v1399
      %v1401 = vpop.xlane.xlu0 %1400
      %v1402 = vadd.f32 %v1319, %v1320
      %1403 = vadd.xlane.f32.xlu0 %v1402
      %v1404 = vpop.xlane.xlu0 %1403
      %v1405 = vadd.f32 %v1321, %v1322
      %1406 = vadd.xlane.f32.xlu0 %v1405
      %v1407 = vpop.xlane.xlu0 %1406
      %v1408 = vadd.f32 %v1323, %v1324
      %1409 = vadd.xlane.f32.xlu0 %v1408
      %v1410 = vpop.xlane.xlu0 %1409
      %v1411 = vadd.f32 %v1325, %v1326
      %1412 = vadd.xlane.f32.xlu0 %v1411
      %v1413 = vpop.xlane.xlu0 %1412
      %v1414 = vadd.f32 %v1327, %v1328
      %1415 = vadd.xlane.f32.xlu0 %v1414
      %v1416 = vpop.xlane.xlu0 %1415
      %v1417 = vadd.f32 %v1329, %v1330
      %1418 = vadd.xlane.f32.xlu0 %v1417
      %v1419 = vpop.xlane.xlu0 %1418
      %v1420 = vadd.f32 %v1331, %v1332
      %1421 = vadd.xlane.f32.xlu0 %v1420
      %v1422 = vpop.xlane.xlu0 %1421
      %v1423 = vadd.f32 %v1333, %v1334
      %1424 = vadd.xlane.f32.xlu0 %v1423
      %v1425 = vpop.xlane.xlu0 %1424
      %v1426 = vadd.f32 %v1335, %v1336
      %1427 = vadd.xlane.f32.xlu0 %v1426
      %v1428 = vpop.xlane.xlu0 %1427
      %v1429 = vadd.f32 %v1337, %v1338
      %1430 = vadd.xlane.f32.xlu0 %v1429
      %v1431 = vpop.xlane.xlu0 %1430
      %v1432 = vadd.f32 %v1339, %v1340
      %1433 = vadd.xlane.f32.xlu0 %v1432
      %v1434 = vpop.xlane.xlu0 %1433
      %v1435 = vadd.f32 %v1341, %v1342
      %1436 = vadd.xlane.f32.xlu0 %v1435
      %v1437 = vpop.xlane.xlu0 %1436
      %v1438 = vadd.f32 %v1343, %v1344
      %1439 = vadd.xlane.f32.xlu0 %v1438
      %v1440 = vpop.xlane.xlu0 %1439
      %v1441 = vmul.f32 %v1347, %v1184
      %v1442 = vmul.f32 %v1350, %v1184
      %v1443 = vmul.f32 %v1353, %v1184
      %v1444 = vmul.f32 %v1356, %v1184
      %v1445 = vmul.f32 %v1359, %v1184
      %v1446 = vmul.f32 %v1362, %v1184
      %v1447 = vmul.f32 %v1365, %v1184
      %v1448 = vmul.f32 %v1368, %v1184
      %v1449 = vmul.f32 %v1371, %v1184
      %v1450 = vmul.f32 %v1374, %v1184
      %v1451 = vmul.f32 %v1377, %v1184
      %v1452 = vmul.f32 %v1380, %v1184
      %v1453 = vmul.f32 %v1383, %v1184
      %v1454 = vmul.f32 %v1386, %v1184
      %v1455 = vmul.f32 %v1389, %v1184
      %v1456 = vmul.f32 %v1392, %v1184
      %v1457 = vmul.f32 %v1395, %v1184
      %v1458 = vmul.f32 %v1398, %v1184
      %v1459 = vmul.f32 %v1401, %v1184
      %v1460 = vmul.f32 %v1404, %v1184
      %v1461 = vmul.f32 %v1407, %v1184
      %v1462 = vmul.f32 %v1410, %v1184
      %v1463 = vmul.f32 %v1413, %v1184
      %v1464 = vmul.f32 %v1416, %v1184
      %v1465 = vmul.f32 %v1419, %v1184
      %v1466 = vmul.f32 %v1422, %v1184
      %v1467 = vmul.f32 %v1425, %v1184
      %v1468 = vmul.f32 %v1428, %v1184
      %v1469 = vmul.f32 %v1431, %v1184
      %v1470 = vmul.f32 %v1434, %v1184
      %v1471 = vmul.f32 %v1437, %v1184
      %v1472 = vmul.f32 %v1440, %v1184
      %v1473 = vadd.f32 %v1441, 1e-05
      %v1474 = vadd.f32 %v1442, 1e-05
      %v1475 = vadd.f32 %v1443, 1e-05
      %v1476 = vadd.f32 %v1444, 1e-05
      %v1477 = vadd.f32 %v1445, 1e-05
      %v1478 = vadd.f32 %v1446, 1e-05
      %v1479 = vadd.f32 %v1447, 1e-05
      %v1480 = vadd.f32 %v1448, 1e-05
      %v1481 = vadd.f32 %v1449, 1e-05
      %v1482 = vadd.f32 %v1450, 1e-05
      %v1483 = vadd.f32 %v1451, 1e-05
      %v1484 = vadd.f32 %v1452, 1e-05
      %v1485 = vadd.f32 %v1453, 1e-05
      %v1486 = vadd.f32 %v1454, 1e-05
      %v1487 = vadd.f32 %v1455, 1e-05
      %v1488 = vadd.f32 %v1456, 1e-05
      %v1489 = vadd.f32 %v1457, 1e-05
      %v1490 = vadd.f32 %v1458, 1e-05
      %v1491 = vadd.f32 %v1459, 1e-05
      %v1492 = vadd.f32 %v1460, 1e-05
      %v1493 = vadd.f32 %v1461, 1e-05
      %v1494 = vadd.f32 %v1462, 1e-05
      %v1495 = vadd.f32 %v1463, 1e-05
      %v1496 = vadd.f32 %v1464, 1e-05
      %v1497 = vadd.f32 %v1465, 1e-05
      %v1498 = vadd.f32 %v1466, 1e-05
      %v1499 = vadd.f32 %v1467, 1e-05
      %v1500 = vadd.f32 %v1468, 1e-05
      %v1501 = vadd.f32 %v1469, 1e-05
      %v1502 = vadd.f32 %v1470, 1e-05
      %v1503 = vadd.f32 %v1471, 1e-05
      %v1504 = vadd.f32 %v1472, 1e-05
      %v1505 = vrsqrt.pop %v1473
      %v1506 = vrsqrt.pop %v1474
      %v1507 = vrsqrt.pop %v1475
      %v1508 = vrsqrt.pop %v1476
      %v1509 = vrsqrt.pop %v1477
      %v1510 = vrsqrt.pop %v1478
      %v1511 = vrsqrt.pop %v1479
      %v1512 = vrsqrt.pop %v1480
      %v1513 = vrsqrt.pop %v1481
      %v1514 = vrsqrt.pop %v1482
      %v1515 = vrsqrt.pop %v1483
      %v1516 = vrsqrt.pop %v1484
      %v1517 = vrsqrt.pop %v1485
      %v1518 = vrsqrt.pop %v1486
      %v1519 = vrsqrt.pop %v1487
      %v1520 = vrsqrt.pop %v1488
      %v1521 = vrsqrt.pop %v1489
      %v1522 = vrsqrt.pop %v1490
      %v1523 = vrsqrt.pop %v1491
      %v1524 = vrsqrt.pop %v1492
      %v1525 = vrsqrt.pop %v1493
      %v1526 = vrsqrt.pop %v1494
      %v1527 = vrsqrt.pop %v1495
      %v1528 = vrsqrt.pop %v1496
      %v1529 = vrsqrt.pop %v1497
      %v1530 = vrsqrt.pop %v1498
      %v1531 = vrsqrt.pop %v1499
      %v1532 = vrsqrt.pop %v1500
      %v1533 = vrsqrt.pop %v1501
      %v1534 = vrsqrt.pop %v1502
      %v1535 = vrsqrt.pop %v1503
      %v1536 = vrsqrt.pop %v1504
      %v1537 = vmul.f32 %v1217, %v1505
      %v1538 = vmul.f32 %v1218, %v1505
      %v1539 = vmul.f32 %v1219, %v1506
      %v1540 = vmul.f32 %v1220, %v1506
      %v1541 = vmul.f32 %v1221, %v1507
      %v1542 = vmul.f32 %v1222, %v1507
      %v1543 = vmul.f32 %v1223, %v1508
      %v1544 = vmul.f32 %v1224, %v1508
      %v1545 = vmul.f32 %v1225, %v1509
      %v1546 = vmul.f32 %v1226, %v1509
      %v1547 = vmul.f32 %v1227, %v1510
      %v1548 = vmul.f32 %v1228, %v1510
      %v1549 = vmul.f32 %v1229, %v1511
      %v1550 = vmul.f32 %v1230, %v1511
      %v1551 = vmul.f32 %v1231, %v1512
      %v1552 = vmul.f32 %v1232, %v1512
      %v1553 = vmul.f32 %v1233, %v1513
      %v1554 = vmul.f32 %v1234, %v1513
      %v1555 = vmul.f32 %v1235, %v1514
      %v1556 = vmul.f32 %v1236, %v1514
      %v1557 = vmul.f32 %v1237, %v1515
      %v1558 = vmul.f32 %v1238, %v1515
      %v1559 = vmul.f32 %v1239, %v1516
      %v1560 = vmul.f32 %v1240, %v1516
      %v1561 = vmul.f32 %v1241, %v1517
      %v1562 = vmul.f32 %v1242, %v1517
      %v1563 = vmul.f32 %v1243, %v1518
      %v1564 = vmul.f32 %v1244, %v1518
      %v1565 = vmul.f32 %v1245, %v1519
      %v1566 = vmul.f32 %v1246, %v1519
      %v1567 = vmul.f32 %v1247, %v1520
      %v1568 = vmul.f32 %v1248, %v1520
      %v1569 = vmul.f32 %v1249, %v1521
      %v1570 = vmul.f32 %v1250, %v1521
      %v1571 = vmul.f32 %v1251, %v1522
      %v1572 = vmul.f32 %v1252, %v1522
      %v1573 = vmul.f32 %v1253, %v1523
      %v1574 = vmul.f32 %v1254, %v1523
      %v1575 = vmul.f32 %v1255, %v1524
      %v1576 = vmul.f32 %v1256, %v1524
      %v1577 = vmul.f32 %v1257, %v1525
      %v1578 = vmul.f32 %v1258, %v1525
      %v1579 = vmul.f32 %v1259, %v1526
      %v1580 = vmul.f32 %v1260, %v1526
      %v1581 = vmul.f32 %v1261, %v1527
      %v1582 = vmul.f32 %v1262, %v1527
      %v1583 = vmul.f32 %v1263, %v1528
      %v1584 = vmul.f32 %v1264, %v1528
      %v1585 = vmul.f32 %v1265, %v1529
      %v1586 = vmul.f32 %v1266, %v1529
      %v1587 = vmul.f32 %v1267, %v1530
      %v1588 = vmul.f32 %v1268, %v1530
      %v1589 = vmul.f32 %v1269, %v1531
      %v1590 = vmul.f32 %v1270, %v1531
      %v1591 = vmul.f32 %v1271, %v1532
      %v1592 = vmul.f32 %v1272, %v1532
      %v1593 = vmul.f32 %v1273, %v1533
      %v1594 = vmul.f32 %v1274, %v1533
      %v1595 = vmul.f32 %v1275, %v1534
      %v1596 = vmul.f32 %v1276, %v1534
      %v1597 = vmul.f32 %v1277, %v1535
      %v1598 = vmul.f32 %v1278, %v1535
      %v1599 = vmul.f32 %v1279, %v1536
      %v1600 = vmul.f32 %v1280, %v1536
      %v1601 = vmul.f32 %v1537, 0.5
      %v1602 = vmul.f32 %v1538, 0.5
      %v1603 = vmul.f32 %v1539, 0.5
      %v1604 = vmul.f32 %v1540, 0.5
      %v1605 = vmul.f32 %v1541, 0.5
      %v1606 = vmul.f32 %v1542, 0.5
      %v1607 = vmul.f32 %v1543, 0.5
      %v1608 = vmul.f32 %v1544, 0.5
      %v1609 = vmul.f32 %v1545, 0.5
      %v1610 = vmul.f32 %v1546, 0.5
      %v1611 = vmul.f32 %v1547, 0.5
      %v1612 = vmul.f32 %v1548, 0.5
      %v1613 = vmul.f32 %v1549, 0.5
      %v1614 = vmul.f32 %v1550, 0.5
      %v1615 = vmul.f32 %v1551, 0.5
      %v1616 = vmul.f32 %v1552, 0.5
      %v1617 = vmul.f32 %v1553, 0.5
      %v1618 = vmul.f32 %v1554, 0.5
      %v1619 = vmul.f32 %v1555, 0.5
      %v1620 = vmul.f32 %v1556, 0.5
      %v1621 = vmul.f32 %v1557, 0.5
      %v1622 = vmul.f32 %v1558, 0.5
      %v1623 = vmul.f32 %v1559, 0.5
      %v1624 = vmul.f32 %v1560, 0.5
      %v1625 = vmul.f32 %v1561, 0.5
      %v1626 = vmul.f32 %v1562, 0.5
      %v1627 = vmul.f32 %v1563, 0.5
      %v1628 = vmul.f32 %v1564, 0.5
      %v1629 = vmul.f32 %v1565, 0.5
      %v1630 = vmul.f32 %v1566, 0.5
      %v1631 = vmul.f32 %v1567, 0.5
      %v1632 = vmul.f32 %v1568, 0.5
      %v1633 = vmul.f32 %v1569, 0.5
      %v1634 = vmul.f32 %v1570, 0.5
      %v1635 = vmul.f32 %v1571, 0.5
      %v1636 = vmul.f32 %v1572, 0.5
      %v1637 = vmul.f32 %v1573, 0.5
      %v1638 = vmul.f32 %v1574, 0.5
      %v1639 = vmul.f32 %v1575, 0.5
      %v1640 = vmul.f32 %v1576, 0.5
      %v1641 = vmul.f32 %v1577, 0.5
      %v1642 = vmul.f32 %v1578, 0.5
      %v1643 = vmul.f32 %v1579, 0.5
      %v1644 = vmul.f32 %v1580, 0.5
      %v1645 = vmul.f32 %v1581, 0.5
      %v1646 = vmul.f32 %v1582, 0.5
      %v1647 = vmul.f32 %v1583, 0.5
      %v1648 = vmul.f32 %v1584, 0.5
      %v1649 = vmul.f32 %v1585, 0.5
      %v1650 = vmul.f32 %v1586, 0.5
      %v1651 = vmul.f32 %v1587, 0.5
      %v1652 = vmul.f32 %v1588, 0.5
      %v1653 = vmul.f32 %v1589, 0.5
      %v1654 = vmul.f32 %v1590, 0.5
      %v1655 = vmul.f32 %v1591, 0.5
      %v1656 = vmul.f32 %v1592, 0.5
      %v1657 = vmul.f32 %v1593, 0.5
      %v1658 = vmul.f32 %v1594, 0.5
      %v1659 = vmul.f32 %v1595, 0.5
      %v1660 = vmul.f32 %v1596, 0.5
      %v1661 = vmul.f32 %v1597, 0.5
      %v1662 = vmul.f32 %v1598, 0.5
      %v1663 = vmul.f32 %v1599, 0.5
      %v1664 = vmul.f32 %v1600, 0.5
      %v1665 = vmul.f32 %v1537, 0.70710677
      %v1666 = vmul.f32 %v1538, 0.70710677
      %v1667 = vmul.f32 %v1539, 0.70710677
      %v1668 = vmul.f32 %v1540, 0.70710677
      %v1669 = vmul.f32 %v1541, 0.70710677
      %v1670 = vmul.f32 %v1542, 0.70710677
      %v1671 = vmul.f32 %v1543, 0.70710677
      %v1672 = vmul.f32 %v1544, 0.70710677
      %v1673 = vmul.f32 %v1545, 0.70710677
      %v1674 = vmul.f32 %v1546, 0.70710677
      %v1675 = vmul.f32 %v1547, 0.70710677
      %v1676 = vmul.f32 %v1548, 0.70710677
      %v1677 = vmul.f32 %v1549, 0.70710677
      %v1678 = vmul.f32 %v1550, 0.70710677
      %v1679 = vmul.f32 %v1551, 0.70710677
      %v1680 = vmul.f32 %v1552, 0.70710677
      %v1681 = vmul.f32 %v1553, 0.70710677
      %v1682 = vmul.f32 %v1554, 0.70710677
      %v1683 = vmul.f32 %v1555, 0.70710677
      %v1684 = vmul.f32 %v1556, 0.70710677
      %v1685 = vmul.f32 %v1557, 0.70710677
      %v1686 = vmul.f32 %v1558, 0.70710677
      %v1687 = vmul.f32 %v1559, 0.70710677
      %v1688 = vmul.f32 %v1560, 0.70710677
      %v1689 = vmul.f32 %v1561, 0.70710677
      %v1690 = vmul.f32 %v1562, 0.70710677
      %v1691 = vmul.f32 %v1563, 0.70710677
      %v1692 = vmul.f32 %v1564, 0.70710677
      %v1693 = vmul.f32 %v1565, 0.70710677
      %v1694 = vmul.f32 %v1566, 0.70710677
      %v1695 = vmul.f32 %v1567, 0.70710677
      %v1696 = vmul.f32 %v1568, 0.70710677
      %v1697 = vmul.f32 %v1569, 0.70710677
      %v1698 = vmul.f32 %v1570, 0.70710677
      %v1699 = vmul.f32 %v1571, 0.70710677
      %v1700 = vmul.f32 %v1572, 0.70710677
      %v1701 = vmul.f32 %v1573, 0.70710677
      %v1702 = vmul.f32 %v1574, 0.70710677
      %v1703 = vmul.f32 %v1575, 0.70710677
      %v1704 = vmul.f32 %v1576, 0.70710677
      %v1705 = vmul.f32 %v1577, 0.70710677
      %v1706 = vmul.f32 %v1578, 0.70710677
      %v1707 = vmul.f32 %v1579, 0.70710677
      %v1708 = vmul.f32 %v1580, 0.70710677
      %v1709 = vmul.f32 %v1581, 0.70710677
      %v1710 = vmul.f32 %v1582, 0.70710677
      %v1711 = vmul.f32 %v1583, 0.70710677
      %v1712 = vmul.f32 %v1584, 0.70710677
      %v1713 = vmul.f32 %v1585, 0.70710677
      %v1714 = vmul.f32 %v1586, 0.70710677
      %v1715 = vmul.f32 %v1587, 0.70710677
      %v1716 = vmul.f32 %v1588, 0.70710677
      %v1717 = vmul.f32 %v1589, 0.70710677
      %v1718 = vmul.f32 %v1590, 0.70710677
      %v1719 = vmul.f32 %v1591, 0.70710677
      %v1720 = vmul.f32 %v1592, 0.70710677
      %v1721 = vmul.f32 %v1593, 0.70710677
      %v1722 = vmul.f32 %v1594, 0.70710677
      %v1723 = vmul.f32 %v1595, 0.70710677
      %v1724 = vmul.f32 %v1596, 0.70710677
      %v1725 = vmul.f32 %v1597, 0.70710677
      %v1726 = vmul.f32 %v1598, 0.70710677
      %v1727 = vmul.f32 %v1599, 0.70710677
      %v1728 = vmul.f32 %v1600, 0.70710677
      %v1729 = verf.f32.pop %v1665
      %v1730 = verf.f32.pop %v1666
      %v1731 = verf.f32.pop %v1667
      %v1732 = verf.f32.pop %v1668
      %v1733 = verf.f32.pop %v1669
      %v1734 = verf.f32.pop %v1670
      %v1735 = verf.f32.pop %v1671
      %v1736 = verf.f32.pop %v1672
      %v1737 = verf.f32.pop %v1673
      %v1738 = verf.f32.pop %v1674
      %v1739 = verf.f32.pop %v1675
      %v1740 = verf.f32.pop %v1676
      %v1741 = verf.f32.pop %v1677
      %v1742 = verf.f32.pop %v1678
      %v1743 = verf.f32.pop %v1679
      %v1744 = verf.f32.pop %v1680
      %v1745 = verf.f32.pop %v1681
      %v1746 = verf.f32.pop %v1682
      %v1747 = verf.f32.pop %v1683
      %v1748 = verf.f32.pop %v1684
      %v1749 = verf.f32.pop %v1685
      %v1750 = verf.f32.pop %v1686
      %v1751 = verf.f32.pop %v1687
      %v1752 = verf.f32.pop %v1688
      %v1753 = verf.f32.pop %v1689
      %v1754 = verf.f32.pop %v1690
      %v1755 = verf.f32.pop %v1691
      %v1756 = verf.f32.pop %v1692
      %v1757 = verf.f32.pop %v1693
      %v1758 = verf.f32.pop %v1694
      %v1759 = verf.f32.pop %v1695
      %v1760 = verf.f32.pop %v1696
      %v1761 = verf.f32.pop %v1697
      %v1762 = verf.f32.pop %v1698
      %v1763 = verf.f32.pop %v1699
      %v1764 = verf.f32.pop %v1700
      %v1765 = verf.f32.pop %v1701
      %v1766 = verf.f32.pop %v1702
      %v1767 = verf.f32.pop %v1703
      %v1768 = verf.f32.pop %v1704
      %v1769 = verf.f32.pop %v1705
      %v1770 = verf.f32.pop %v1706
      %v1771 = verf.f32.pop %v1707
      %v1772 = verf.f32.pop %v1708
      %v1773 = verf.f32.pop %v1709
      %v1774 = verf.f32.pop %v1710
      %v1775 = verf.f32.pop %v1711
      %v1776 = verf.f32.pop %v1712
      %v1777 = verf.f32.pop %v1713
      %v1778 = verf.f32.pop %v1714
      %v1779 = verf.f32.pop %v1715
      %v1780 = verf.f32.pop %v1716
      %v1781 = verf.f32.pop %v1717
      %v1782 = verf.f32.pop %v1718
      %v1783 = verf.f32.pop %v1719
      %v1784 = verf.f32.pop %v1720
      %v1785 = verf.f32.pop %v1721
      %v1786 = verf.f32.pop %v1722
      %v1787 = verf.f32.pop %v1723
      %v1788 = verf.f32.pop %v1724
      %v1789 = verf.f32.pop %v1725
      %v1790 = verf.f32.pop %v1726
      %v1791 = verf.f32.pop %v1727
      %v1792 = verf.f32.pop %v1728
      %v1793 = vadd.f32 %v1729, 1.0
      %v1794 = vadd.f32 %v1730, 1.0
      %v1795 = vadd.f32 %v1731, 1.0
      %v1796 = vadd.f32 %v1732, 1.0
      %v1797 = vadd.f32 %v1733, 1.0
      %v1798 = vadd.f32 %v1734, 1.0
      %v1799 = vadd.f32 %v1735, 1.0
      %v1800 = vadd.f32 %v1736, 1.0
      %v1801 = vadd.f32 %v1737, 1.0
      %v1802 = vadd.f32 %v1738, 1.0
      %v1803 = vadd.f32 %v1739, 1.0
      %v1804 = vadd.f32 %v1740, 1.0
      %v1805 = vadd.f32 %v1741, 1.0
      %v1806 = vadd.f32 %v1742, 1.0
      %v1807 = vadd.f32 %v1743, 1.0
      %v1808 = vadd.f32 %v1744, 1.0
      %v1809 = vadd.f32 %v1745, 1.0
      %v1810 = vadd.f32 %v1746, 1.0
      %v1811 = vadd.f32 %v1747, 1.0
      %v1812 = vadd.f32 %v1748, 1.0
      %v1813 = vadd.f32 %v1749, 1.0
      %v1814 = vadd.f32 %v1750, 1.0
      %v1815 = vadd.f32 %v1751, 1.0
      %v1816 = vadd.f32 %v1752, 1.0
      %v1817 = vadd.f32 %v1753, 1.0
      %v1818 = vadd.f32 %v1754, 1.0
      %v1819 = vadd.f32 %v1755, 1.0
      %v1820 = vadd.f32 %v1756, 1.0
      %v1821 = vadd.f32 %v1757, 1.0
      %v1822 = vadd.f32 %v1758, 1.0
      %v1823 = vadd.f32 %v1759, 1.0
      %v1824 = vadd.f32 %v1760, 1.0
      %v1825 = vadd.f32 %v1761, 1.0
      %v1826 = vadd.f32 %v1762, 1.0
      %v1827 = vadd.f32 %v1763, 1.0
      %v1828 = vadd.f32 %v1764, 1.0
      %v1829 = vadd.f32 %v1765, 1.0
      %v1830 = vadd.f32 %v1766, 1.0
      %v1831 = vadd.f32 %v1767, 1.0
      %v1832 = vadd.f32 %v1768, 1.0
      %v1833 = vadd.f32 %v1769, 1.0
      %v1834 = vadd.f32 %v1770, 1.0
      %v1835 = vadd.f32 %v1771, 1.0
      %v1836 = vadd.f32 %v1772, 1.0
      %v1837 = vadd.f32 %v1773, 1.0
      %v1838 = vadd.f32 %v1774, 1.0
      %v1839 = vadd.f32 %v1775, 1.0
      %v1840 = vadd.f32 %v1776, 1.0
      %v1841 = vadd.f32 %v1777, 1.0
      %v1842 = vadd.f32 %v1778, 1.0
      %v1843 = vadd.f32 %v1779, 1.0
      %v1844 = vadd.f32 %v1780, 1.0
      %v1845 = vadd.f32 %v1781, 1.0
      %v1846 = vadd.f32 %v1782, 1.0
      %v1847 = vadd.f32 %v1783, 1.0
      %v1848 = vadd.f32 %v1784, 1.0
      %v1849 = vadd.f32 %v1785, 1.0
      %v1850 = vadd.f32 %v1786, 1.0
      %v1851 = vadd.f32 %v1787, 1.0
      %v1852 = vadd.f32 %v1788, 1.0
      %v1853 = vadd.f32 %v1789, 1.0
      %v1854 = vadd.f32 %v1790, 1.0
      %v1855 = vadd.f32 %v1791, 1.0
      %v1856 = vadd.f32 %v1792, 1.0
      %v1857 = vmul.f32 %v1601, %v1793
      %v1858 = vmul.f32 %v1602, %v1794
      %v1859 = vmul.f32 %v1603, %v1795
      %v1860 = vmul.f32 %v1604, %v1796
      %v1861 = vmul.f32 %v1605, %v1797
      %v1862 = vmul.f32 %v1606, %v1798
      %v1863 = vmul.f32 %v1607, %v1799
      %v1864 = vmul.f32 %v1608, %v1800
      %v1865 = vmul.f32 %v1609, %v1801
      %v1866 = vmul.f32 %v1610, %v1802
      %v1867 = vmul.f32 %v1611, %v1803
      %v1868 = vmul.f32 %v1612, %v1804
      %v1869 = vmul.f32 %v1613, %v1805
      %v1870 = vmul.f32 %v1614, %v1806
      %v1871 = vmul.f32 %v1615, %v1807
      %v1872 = vmul.f32 %v1616, %v1808
      %v1873 = vmul.f32 %v1617, %v1809
      %v1874 = vmul.f32 %v1618, %v1810
      %v1875 = vmul.f32 %v1619, %v1811
      %v1876 = vmul.f32 %v1620, %v1812
      %v1877 = vmul.f32 %v1621, %v1813
      %v1878 = vmul.f32 %v1622, %v1814
      %v1879 = vmul.f32 %v1623, %v1815
      %v1880 = vmul.f32 %v1624, %v1816
      %v1881 = vmul.f32 %v1625, %v1817
      %v1882 = vmul.f32 %v1626, %v1818
      %v1883 = vmul.f32 %v1627, %v1819
      %v1884 = vmul.f32 %v1628, %v1820
      %v1885 = vmul.f32 %v1629, %v1821
      %v1886 = vmul.f32 %v1630, %v1822
      %v1887 = vmul.f32 %v1631, %v1823
      %v1888 = vmul.f32 %v1632, %v1824
      %v1889 = vmul.f32 %v1633, %v1825
      %v1890 = vmul.f32 %v1634, %v1826
      %v1891 = vmul.f32 %v1635, %v1827
      %v1892 = vmul.f32 %v1636, %v1828
      %v1893 = vmul.f32 %v1637, %v1829
      %v1894 = vmul.f32 %v1638, %v1830
      %v1895 = vmul.f32 %v1639, %v1831
      %v1896 = vmul.f32 %v1640, %v1832
      %v1897 = vmul.f32 %v1641, %v1833
      %v1898 = vmul.f32 %v1642, %v1834
      %v1899 = vmul.f32 %v1643, %v1835
      %v1900 = vmul.f32 %v1644, %v1836
      %v1901 = vmul.f32 %v1645, %v1837
      %v1902 = vmul.f32 %v1646, %v1838
      %v1903 = vmul.f32 %v1647, %v1839
      %v1904 = vmul.f32 %v1648, %v1840
      %v1905 = vmul.f32 %v1649, %v1841
      %v1906 = vmul.f32 %v1650, %v1842
      %v1907 = vmul.f32 %v1651, %v1843
      %v1908 = vmul.f32 %v1652, %v1844
      %v1909 = vmul.f32 %v1653, %v1845
      %v1910 = vmul.f32 %v1654, %v1846
      %v1911 = vmul.f32 %v1655, %v1847
      %v1912 = vmul.f32 %v1656, %v1848
      %v1913 = vmul.f32 %v1657, %v1849
      %v1914 = vmul.f32 %v1658, %v1850
      %v1915 = vmul.f32 %v1659, %v1851
      %v1916 = vmul.f32 %v1660, %v1852
      %v1917 = vmul.f32 %v1661, %v1853
      %v1918 = vmul.f32 %v1662, %v1854
      %v1919 = vmul.f32 %v1663, %v1855
      %v1920 = vmul.f32 %v1664, %v1856
      %v1921 = vld [vmem:[%s3] sm:$0xff]
      %v1922 = vld [vmem:[%s3 + $0x8] sm:$0xff]
      %v1923 = vld [vmem:[%s3 + $0x10] sm:$0xff]
      %v1924 = vld [vmem:[%s3 + $0x18] sm:$0xff]
      %v1925 = vld [vmem:[%s3 + $0x20] sm:$0xff]
      %v1926 = vld [vmem:[%s3 + $0x28] sm:$0xff]
      %v1927 = vld [vmem:[%s3 + $0x30] sm:$0xff]
      %v1928 = vld [vmem:[%s3 + $0x38] sm:$0xff]
      %v1929 = vld [vmem:[%s3 + $0x40] sm:$0xff]
      %v1930 = vld [vmem:[%s3 + $0x48] sm:$0xff]
      %v1931 = vld [vmem:[%s3 + $0x50] sm:$0xff]
      %v1932 = vld [vmem:[%s3 + $0x58] sm:$0xff]
      %v1933 = vld [vmem:[%s3 + $0x60] sm:$0xff]
      %v1934 = vld [vmem:[%s3 + $0x68] sm:$0xff]
      %v1935 = vld [vmem:[%s3 + $0x70] sm:$0xff]
      %v1936 = vld [vmem:[%s3 + $0x78] sm:$0xff]
      %v1937 = vld [vmem:[%s4] sm:$0xff]
      %v1938 = vld [vmem:[%s4 + $0x8] sm:$0xff]
      %v1939 = vld [vmem:[%s4 + $0x10] sm:$0xff]
      %v1940 = vld [vmem:[%s4 + $0x18] sm:$0xff]
      %v1941 = vld [vmem:[%s4 + $0x20] sm:$0xff]
      %v1942 = vld [vmem:[%s4 + $0x28] sm:$0xff]
      %v1943 = vld [vmem:[%s4 + $0x30] sm:$0xff]
      %v1944 = vld [vmem:[%s4 + $0x38] sm:$0xff]
      %v1945 = vld [vmem:[%s4 + $0x40] sm:$0xff]
      %v1946 = vld [vmem:[%s4 + $0x48] sm:$0xff]
      %v1947 = vld [vmem:[%s4 + $0x50] sm:$0xff]
      %v1948 = vld [vmem:[%s4 + $0x58] sm:$0xff]
      %v1949 = vld [vmem:[%s4 + $0x60] sm:$0xff]
      %v1950 = vld [vmem:[%s4 + $0x68] sm:$0xff]
      %v1951 = vld [vmem:[%s4 + $0x70] sm:$0xff]
      %v1952 = vld [vmem:[%s4 + $0x78] sm:$0xff]
      %v1953 = vpack.c.bf16 %v1859, %v1857
      %v1954 = vpack.c.bf16 %v1860, %v1858
      %v1955 = vpack.c.bf16 %v1863, %v1861
      %v1956 = vpack.c.bf16 %v1864, %v1862
      %v1957 = vpack.c.bf16 %v1867, %v1865
      %v1958 = vpack.c.bf16 %v1868, %v1866
      %v1959 = vpack.c.bf16 %v1871, %v1869
      %v1960 = vpack.c.bf16 %v1872, %v1870
      %v1961 = vpack.c.bf16 %v1875, %v1873
      %v1962 = vpack.c.bf16 %v1876, %v1874
      %v1963 = vpack.c.bf16 %v1879, %v1877
      %v1964 = vpack.c.bf16 %v1880, %v1878
      %v1965 = vpack.c.bf16 %v1883, %v1881
      %v1966 = vpack.c.bf16 %v1884, %v1882
      %v1967 = vpack.c.bf16 %v1887, %v1885
      %v1968 = vpack.c.bf16 %v1888, %v1886
      %v1969 = vpack.c.bf16 %v1891, %v1889
      %v1970 = vpack.c.bf16 %v1892, %v1890
      %v1971 = vpack.c.bf16 %v1895, %v1893
      %v1972 = vpack.c.bf16 %v1896, %v1894
      %v1973 = vpack.c.bf16 %v1899, %v1897
      %v1974 = vpack.c.bf16 %v1900, %v1898
      %v1975 = vpack.c.bf16 %v1903, %v1901
      %v1976 = vpack.c.bf16 %v1904, %v1902
      %v1977 = vpack.c.bf16 %v1907, %v1905
      %v1978 = vpack.c.bf16 %v1908, %v1906
      %v1979 = vpack.c.bf16 %v1911, %v1909
      %v1980 = vpack.c.bf16 %v1912, %v1910
      %v1981 = vpack.c.bf16 %v1915, %v1913
      %v1982 = vpack.c.bf16 %v1916, %v1914
      %v1983 = vpack.c.bf16 %v1919, %v1917
      %v1984 = vpack.c.bf16 %v1920, %v1918
      %1986 = vset.pattern.permute.xlu0 0
      %1987 = vperm.xlu0 %1986, %v1937
      %v1988 = vpop.permute.xlu0 %1987
      %1991 = vset.pattern.permute.xlu0 0
      %1992 = vperm.xlu0 %1991, %v1938
      %v1993 = vpop.permute.xlu0 %1992
      %1996 = vset.pattern.permute.xlu0 0
      %1997 = vperm.xlu0 %1996, %v1939
      %v1998 = vpop.permute.xlu0 %1997
      %2001 = vset.pattern.permute.xlu0 0
      %2002 = vperm.xlu0 %2001, %v1940
      %v2003 = vpop.permute.xlu0 %2002
      %2006 = vset.pattern.permute.xlu0 0
      %2007 = vperm.xlu0 %2006, %v1941
      %v2008 = vpop.permute.xlu0 %2007
      %2011 = vset.pattern.permute.xlu0 0
      %2012 = vperm.xlu0 %2011, %v1942
      %v2013 = vpop.permute.xlu0 %2012
      %2016 = vset.pattern.permute.xlu0 0
      %2017 = vperm.xlu0 %2016, %v1943
      %v2018 = vpop.permute.xlu0 %2017
      %2021 = vset.pattern.permute.xlu0 0
      %2022 = vperm.xlu0 %2021, %v1944
      %v2023 = vpop.permute.xlu0 %2022
      %2026 = vset.pattern.permute.xlu0 0
      %2027 = vperm.xlu0 %2026, %v1945
      %v2028 = vpop.permute.xlu0 %2027
      %2031 = vset.pattern.permute.xlu0 0
      %2032 = vperm.xlu0 %2031, %v1946
      %v2033 = vpop.permute.xlu0 %2032
      %2036 = vset.pattern.permute.xlu0 0
      %2037 = vperm.xlu0 %2036, %v1947
      %v2038 = vpop.permute.xlu0 %2037
      %2041 = vset.pattern.permute.xlu0 0
      %2042 = vperm.xlu0 %2041, %v1948
      %v2043 = vpop.permute.xlu0 %2042
      %2046 = vset.pattern.permute.xlu0 0
      %2047 = vperm.xlu0 %2046, %v1949
      %v2048 = vpop.permute.xlu0 %2047
      %2051 = vset.pattern.permute.xlu0 0
      %2052 = vperm.xlu0 %2051, %v1950
      %v2053 = vpop.permute.xlu0 %2052
      %2056 = vset.pattern.permute.xlu0 0
      %2057 = vperm.xlu0 %2056, %v1951
      %v2058 = vpop.permute.xlu0 %2057
      %2061 = vset.pattern.permute.xlu0 0
      %2062 = vperm.xlu0 %2061, %v1952
      %v2063 = vpop.permute.xlu0 %2062
      %v2081 = vunpack.c.l.b16 %v1921
      %v2082 = vunpack.c.h.b16 %v1921
      %v2083 = vunpack.c.l.b16 %v1922
      %v2084 = vunpack.c.h.b16 %v1922
      %v2085 = vunpack.c.l.b16 %v1923
      %v2086 = vunpack.c.h.b16 %v1923
      %v2087 = vunpack.c.l.b16 %v1924
      %v2088 = vunpack.c.h.b16 %v1924
      %v2089 = vunpack.c.l.b16 %v1925
      %v2090 = vunpack.c.h.b16 %v1925
      %v2091 = vunpack.c.l.b16 %v1926
      %v2092 = vunpack.c.h.b16 %v1926
      %v2093 = vunpack.c.l.b16 %v1927
      %v2094 = vunpack.c.h.b16 %v1927
      %v2095 = vunpack.c.l.b16 %v1928
      %v2096 = vunpack.c.h.b16 %v1928
      %v2097 = vunpack.c.l.b16 %v1929
      %v2098 = vunpack.c.h.b16 %v1929
      %v2099 = vunpack.c.l.b16 %v1930
      %v2100 = vunpack.c.h.b16 %v1930
      %v2101 = vunpack.c.l.b16 %v1931
      %v2102 = vunpack.c.h.b16 %v1931
      %v2103 = vunpack.c.l.b16 %v1932
      %v2104 = vunpack.c.h.b16 %v1932
      %v2105 = vunpack.c.l.b16 %v1933
      %v2106 = vunpack.c.h.b16 %v1933
      %v2107 = vunpack.c.l.b16 %v1934
      %v2108 = vunpack.c.h.b16 %v1934
      %v2109 = vunpack.c.l.b16 %v1935
      %v2110 = vunpack.c.h.b16 %v1935
      %v2111 = vunpack.c.l.b16 %v1936
      %v2112 = vunpack.c.h.b16 %v1936
      %v2113 = vpack.c.b16 %v2083, %v2081
      %v2114 = vpack.c.b16 %v2084, %v2082
      %v2115 = vpack.c.b16 %v2087, %v2085
      %v2116 = vpack.c.b16 %v2088, %v2086
      %v2117 = vpack.c.b16 %v2091, %v2089
      %v2118 = vpack.c.b16 %v2092, %v2090
      %v2119 = vpack.c.b16 %v2095, %v2093
      %v2120 = vpack.c.b16 %v2096, %v2094
      %v2121 = vpack.c.b16 %v2099, %v2097
      %v2122 = vpack.c.b16 %v2100, %v2098
      %v2123 = vpack.c.b16 %v2103, %v2101
      %v2124 = vpack.c.b16 %v2104, %v2102
      %v2125 = vpack.c.b16 %v2107, %v2105
      %v2126 = vpack.c.b16 %v2108, %v2106
      %v2127 = vpack.c.b16 %v2111, %v2109
      %v2128 = vpack.c.b16 %v2112, %v2110
      %2145 = vmatprep.subr.bf16.mxu0 %v1954
      %2146 = vmatpush1.bf16.msra.mxu0 %v1953
      %2147 = vmatprep.subr.bf16.mxu0 %v1956
      %2148 = vmatpush1.bf16.msra.mxu0 %v1955
      %2149 = vmatprep.subr.bf16.mxu0 %v1958
      %2150 = vmatpush1.bf16.msra.mxu0 %v1957
      %2151 = vmatprep.subr.bf16.mxu0 %v1960
      %2152 = vmatpush1.bf16.msra.mxu0 %v1959
      %2153 = vmatprep.subr.bf16.mxu0 %v1962
      %2154 = vmatpush1.bf16.msra.mxu0 %v1961
      %2155 = vmatprep.subr.bf16.mxu0 %v1964
      %2156 = vmatpush1.bf16.msra.mxu0 %v1963
      %2157 = vmatprep.subr.bf16.mxu0 %v1966
      %2158 = vmatpush1.bf16.msra.mxu0 %v1965
      %2159 = vmatprep.subr.bf16.mxu0 %v1968
      %2160 = vmatpush1.bf16.msra.mxu0 %v1967
      %2161 = vmatprep.subr.bf16.mxu0 %v1970
      %2162 = vmatpush1.bf16.msra.mxu0 %v1969
      %2163 = vmatprep.subr.bf16.mxu0 %v1972
      %2164 = vmatpush1.bf16.msra.mxu0 %v1971
      %2165 = vmatprep.subr.bf16.mxu0 %v1974
      %2166 = vmatpush1.bf16.msra.mxu0 %v1973
      %2167 = vmatprep.subr.bf16.mxu0 %v1976
      %2168 = vmatpush1.bf16.msra.mxu0 %v1975
      %2169 = vmatprep.subr.bf16.mxu0 %v1978
      %2170 = vmatpush1.bf16.msra.mxu0 %v1977
      %2171 = vmatprep.subr.bf16.mxu0 %v1980
      %2172 = vmatpush1.bf16.msra.mxu0 %v1979
      %2173 = vmatprep.subr.bf16.mxu0 %v1982
      %2174 = vmatpush1.bf16.msra.mxu0 %v1981
      %2175 = vmatprep.subr.bf16.mxu0 %v1984
      %2176 = vmatpush1.bf16.msra.mxu0 %v1983
      %2177 = vmatprep.mubr.bf16.mxu0 %v2114
      %2178 = vmatmul.mubr.bf16.gmra.mrb[0].mxu0 %v2113
      %v2179 = vpop.f32.mrb[0].mxu0
      %v2180 = vadd.f32 %v1988, %v2179
      %v2181 = vpop.f32.mrb[0].mxu0
      %v2182 = vadd.f32 %v1988, %v2181
      %v2183 = vpop.f32.mrb[0].mxu0
      %v2184 = vadd.f32 %v1993, %v2183
      %v2185 = vpop.f32.mrb[0].mxu0
      %v2186 = vadd.f32 %v1993, %v2185
      %2187 = vmatprep.mubr.bf16.mxu0 %v2116
      %2188 = vmatmul.mubr.bf16.gmra.mrb[0].mxu0 %v2115
      %v2189 = vpop.f32.mrb[0].mxu0
      %v2190 = vadd.f32 %v1998, %v2189
      %v2191 = vpop.f32.mrb[0].mxu0
      %v2192 = vadd.f32 %v1998, %v2191
      %v2193 = vpop.f32.mrb[0].mxu0
      %v2194 = vadd.f32 %v2003, %v2193
      %v2195 = vpop.f32.mrb[0].mxu0
      %v2196 = vadd.f32 %v2003, %v2195
      %2197 = vmatprep.mubr.bf16.mxu0 %v2118
      %2198 = vmatmul.mubr.bf16.gmra.mrb[0].mxu0 %v2117
      %v2199 = vpop.f32.mrb[0].mxu0
      %v2200 = vadd.f32 %v2008, %v2199
      %v2201 = vpop.f32.mrb[0].mxu0
      %v2202 = vadd.f32 %v2008, %v2201
      %v2203 = vpop.f32.mrb[0].mxu0
      %v2204 = vadd.f32 %v2013, %v2203
      %v2205 = vpop.f32.mrb[0].mxu0
      %v2206 = vadd.f32 %v2013, %v2205
      %2207 = vmatprep.mubr.bf16.mxu0 %v2120
      %2208 = vmatmul.mubr.bf16.gmra.mrb[0].mxu0 %v2119
      %v2209 = vpop.f32.mrb[0].mxu0
      %v2210 = vadd.f32 %v2018, %v2209
      %v2211 = vpop.f32.mrb[0].mxu0
      %v2212 = vadd.f32 %v2018, %v2211
      %v2213 = vpop.f32.mrb[0].mxu0
      %v2214 = vadd.f32 %v2023, %v2213
      %v2215 = vpop.f32.mrb[0].mxu0
      %v2216 = vadd.f32 %v2023, %v2215
      %2217 = vmatprep.mubr.bf16.mxu0 %v2122
      %2218 = vmatmul.mubr.bf16.gmra.mrb[0].mxu0 %v2121
      %v2219 = vpop.f32.mrb[0].mxu0
      %v2220 = vadd.f32 %v2028, %v2219
      %v2221 = vpop.f32.mrb[0].mxu0
      %v2222 = vadd.f32 %v2028, %v2221
      %v2223 = vpop.f32.mrb[0].mxu0
      %v2224 = vadd.f32 %v2033, %v2223
      %v2225 = vpop.f32.mrb[0].mxu0
      %v2226 = vadd.f32 %v2033, %v2225
      %2227 = vmatprep.mubr.bf16.mxu0 %v2124
      %2228 = vmatmul.mubr.bf16.gmra.mrb[0].mxu0 %v2123
      %v2229 = vpop.f32.mrb[0].mxu0
      %v2230 = vadd.f32 %v2038, %v2229
      %v2231 = vpop.f32.mrb[0].mxu0
      %v2232 = vadd.f32 %v2038, %v2231
      %v2233 = vpop.f32.mrb[0].mxu0
      %v2234 = vadd.f32 %v2043, %v2233
      %v2235 = vpop.f32.mrb[0].mxu0
      %v2236 = vadd.f32 %v2043, %v2235
      %2237 = vmatprep.mubr.bf16.mxu0 %v2126
      %2238 = vmatmul.mubr.bf16.gmra.mrb[0].mxu0 %v2125
      %v2239 = vpop.f32.mrb[0].mxu0
      %v2240 = vadd.f32 %v2048, %v2239
      %v2241 = vpop.f32.mrb[0].mxu0
      %v2242 = vadd.f32 %v2048, %v2241
      %v2243 = vpop.f32.mrb[0].mxu0
      %v2244 = vadd.f32 %v2053, %v2243
      %v2245 = vpop.f32.mrb[0].mxu0
      %v2246 = vadd.f32 %v2053, %v2245
      %2247 = vmatprep.mubr.bf16.mxu0 %v2128
      %2248 = vmatmul.mubr.bf16.gmra.mrb[0].mxu0 %v2127
      %v2249 = vpop.f32.mrb[0].mxu0
      %v2250 = vadd.f32 %v2058, %v2249
      %v2251 = vpop.f32.mrb[0].mxu0
      %v2252 = vadd.f32 %v2058, %v2251
      %v2253 = vpop.f32.mrb[0].mxu0
      %v2254 = vadd.f32 %v2063, %v2253
      %v2255 = vpop.f32.mrb[0].mxu0
      %v2256 = vadd.f32 %v2063, %v2255
      %2257 = vdwg.mxu0
      %v2258 = vadd.f32 %v2180, %v2182
      %2259 = vadd.xlane.f32.xlu0 %v2258
      %v2260 = vpop.xlane.xlu0 %2259
      %v2261 = vadd.f32 %v2184, %v2186
      %2262 = vadd.xlane.f32.xlu0 %v2261
      %v2263 = vpop.xlane.xlu0 %2262
      %v2264 = vadd.f32 %v2190, %v2192
      %2265 = vadd.xlane.f32.xlu0 %v2264
      %v2266 = vpop.xlane.xlu0 %2265
      %v2267 = vadd.f32 %v2194, %v2196
      %2268 = vadd.xlane.f32.xlu0 %v2267
      %v2269 = vpop.xlane.xlu0 %2268
      %v2270 = vadd.f32 %v2200, %v2202
      %2271 = vadd.xlane.f32.xlu0 %v2270
      %v2272 = vpop.xlane.xlu0 %2271
      %v2273 = vadd.f32 %v2204, %v2206
      %2274 = vadd.xlane.f32.xlu0 %v2273
      %v2275 = vpop.xlane.xlu0 %2274
      %v2276 = vadd.f32 %v2210, %v2212
      %2277 = vadd.xlane.f32.xlu0 %v2276
      %v2278 = vpop.xlane.xlu0 %2277
      %v2279 = vadd.f32 %v2214, %v2216
      %2280 = vadd.xlane.f32.xlu0 %v2279
      %v2281 = vpop.xlane.xlu0 %2280
      %v2282 = vadd.f32 %v2220, %v2222
      %2283 = vadd.xlane.f32.xlu0 %v2282
      %v2284 = vpop.xlane.xlu0 %2283
      %v2285 = vadd.f32 %v2224, %v2226
      %2286 = vadd.xlane.f32.xlu0 %v2285
      %v2287 = vpop.xlane.xlu0 %2286
      %v2288 = vadd.f32 %v2230, %v2232
      %2289 = vadd.xlane.f32.xlu0 %v2288
      %v2290 = vpop.xlane.xlu0 %2289
      %v2291 = vadd.f32 %v2234, %v2236
      %2292 = vadd.xlane.f32.xlu0 %v2291
      %v2293 = vpop.xlane.xlu0 %2292
      %v2294 = vadd.f32 %v2240, %v2242
      %2295 = vadd.xlane.f32.xlu0 %v2294
      %v2296 = vpop.xlane.xlu0 %2295
      %v2297 = vadd.f32 %v2244, %v2246
      %2298 = vadd.xlane.f32.xlu0 %v2297
      %v2299 = vpop.xlane.xlu0 %2298
      %v2300 = vadd.f32 %v2250, %v2252
      %2301 = vadd.xlane.f32.xlu0 %v2300
      %v2302 = vpop.xlane.xlu0 %2301
      %v2303 = vadd.f32 %v2254, %v2256
      %2304 = vadd.xlane.f32.xlu0 %v2303
      %v2305 = vpop.xlane.xlu0 %2304
      %v2306 = vmul.f32 %v2260, %v1184
      %v2307 = vmul.f32 %v2263, %v1184
      %v2308 = vmul.f32 %v2266, %v1184
      %v2309 = vmul.f32 %v2269, %v1184
      %v2310 = vmul.f32 %v2272, %v1184
      %v2311 = vmul.f32 %v2275, %v1184
      %v2312 = vmul.f32 %v2278, %v1184
      %v2313 = vmul.f32 %v2281, %v1184
      %v2314 = vmul.f32 %v2284, %v1184
      %v2315 = vmul.f32 %v2287, %v1184
      %v2316 = vmul.f32 %v2290, %v1184
      %v2317 = vmul.f32 %v2293, %v1184
      %v2318 = vmul.f32 %v2296, %v1184
      %v2319 = vmul.f32 %v2299, %v1184
      %v2320 = vmul.f32 %v2302, %v1184
      %v2321 = vmul.f32 %v2305, %v1184
      %v2322 = vsub.f32 %v2180, %v2306
      %v2323 = vsub.f32 %v2182, %v2306
      %v2324 = vsub.f32 %v2184, %v2307
      %v2325 = vsub.f32 %v2186, %v2307
      %v2326 = vsub.f32 %v2190, %v2308
      %v2327 = vsub.f32 %v2192, %v2308
      %v2328 = vsub.f32 %v2194, %v2309
      %v2329 = vsub.f32 %v2196, %v2309
      %v2330 = vsub.f32 %v2200, %v2310
      %v2331 = vsub.f32 %v2202, %v2310
      %v2332 = vsub.f32 %v2204, %v2311
      %v2333 = vsub.f32 %v2206, %v2311
      %v2334 = vsub.f32 %v2210, %v2312
      %v2335 = vsub.f32 %v2212, %v2312
      %v2336 = vsub.f32 %v2214, %v2313
      %v2337 = vsub.f32 %v2216, %v2313
      %v2338 = vsub.f32 %v2220, %v2314
      %v2339 = vsub.f32 %v2222, %v2314
      %v2340 = vsub.f32 %v2224, %v2315
      %v2341 = vsub.f32 %v2226, %v2315
      %v2342 = vsub.f32 %v2230, %v2316
      %v2343 = vsub.f32 %v2232, %v2316
      %v2344 = vsub.f32 %v2234, %v2317
      %v2345 = vsub.f32 %v2236, %v2317
      %v2346 = vsub.f32 %v2240, %v2318
      %v2347 = vsub.f32 %v2242, %v2318
      %v2348 = vsub.f32 %v2244, %v2319
      %v2349 = vsub.f32 %v2246, %v2319
      %v2350 = vsub.f32 %v2250, %v2320
      %v2351 = vsub.f32 %v2252, %v2320
      %v2352 = vsub.f32 %v2254, %v2321
      %v2353 = vsub.f32 %v2256, %v2321
      %v2354 = vmul.f32 %v2322, %v2322
      %v2355 = vmul.f32 %v2323, %v2323
      %v2356 = vmul.f32 %v2324, %v2324
      %v2357 = vmul.f32 %v2325, %v2325
      %v2358 = vmul.f32 %v2326, %v2326
      %v2359 = vmul.f32 %v2327, %v2327
      %v2360 = vmul.f32 %v2328, %v2328
      %v2361 = vmul.f32 %v2329, %v2329
      %v2362 = vmul.f32 %v2330, %v2330
      %v2363 = vmul.f32 %v2331, %v2331
      %v2364 = vmul.f32 %v2332, %v2332
      %v2365 = vmul.f32 %v2333, %v2333
      %v2366 = vmul.f32 %v2334, %v2334
      %v2367 = vmul.f32 %v2335, %v2335
      %v2368 = vmul.f32 %v2336, %v2336
      %v2369 = vmul.f32 %v2337, %v2337
      %v2370 = vmul.f32 %v2338, %v2338
      %v2371 = vmul.f32 %v2339, %v2339
      %v2372 = vmul.f32 %v2340, %v2340
      %v2373 = vmul.f32 %v2341, %v2341
      %v2374 = vmul.f32 %v2342, %v2342
      %v2375 = vmul.f32 %v2343, %v2343
      %v2376 = vmul.f32 %v2344, %v2344
      %v2377 = vmul.f32 %v2345, %v2345
      %v2378 = vmul.f32 %v2346, %v2346
      %v2379 = vmul.f32 %v2347, %v2347
      %v2380 = vmul.f32 %v2348, %v2348
      %v2381 = vmul.f32 %v2349, %v2349
      %v2382 = vmul.f32 %v2350, %v2350
      %v2383 = vmul.f32 %v2351, %v2351
      %v2384 = vmul.f32 %v2352, %v2352
      %v2385 = vmul.f32 %v2353, %v2353
      %v2386 = vadd.f32 %v2354, %v2355
      %2387 = vadd.xlane.f32.xlu0 %v2386
      %v2388 = vpop.xlane.xlu0 %2387
      %v2389 = vadd.f32 %v2356, %v2357
      %2390 = vadd.xlane.f32.xlu0 %v2389
      %v2391 = vpop.xlane.xlu0 %2390
      %v2392 = vadd.f32 %v2358, %v2359
      %2393 = vadd.xlane.f32.xlu0 %v2392
      %v2394 = vpop.xlane.xlu0 %2393
      %v2395 = vadd.f32 %v2360, %v2361
      %2396 = vadd.xlane.f32.xlu0 %v2395
      %v2397 = vpop.xlane.xlu0 %2396
      %v2398 = vadd.f32 %v2362, %v2363
      %2399 = vadd.xlane.f32.xlu0 %v2398
      %v2400 = vpop.xlane.xlu0 %2399
      %v2401 = vadd.f32 %v2364, %v2365
      %2402 = vadd.xlane.f32.xlu0 %v2401
      %v2403 = vpop.xlane.xlu0 %2402
      %v2404 = vadd.f32 %v2366, %v2367
      %2405 = vadd.xlane.f32.xlu0 %v2404
      %v2406 = vpop.xlane.xlu0 %2405
      %v2407 = vadd.f32 %v2368, %v2369
      %2408 = vadd.xlane.f32.xlu0 %v2407
      %v2409 = vpop.xlane.xlu0 %2408
      %v2410 = vadd.f32 %v2370, %v2371
      %2411 = vadd.xlane.f32.xlu0 %v2410
      %v2412 = vpop.xlane.xlu0 %2411
      %v2413 = vadd.f32 %v2372, %v2373
      %2414 = vadd.xlane.f32.xlu0 %v2413
      %v2415 = vpop.xlane.xlu0 %2414
      %v2416 = vadd.f32 %v2374, %v2375
      %2417 = vadd.xlane.f32.xlu0 %v2416
      %v2418 = vpop.xlane.xlu0 %2417
      %v2419 = vadd.f32 %v2376, %v2377
      %2420 = vadd.xlane.f32.xlu0 %v2419
      %v2421 = vpop.xlane.xlu0 %2420
      %v2422 = vadd.f32 %v2378, %v2379
      %2423 = vadd.xlane.f32.xlu0 %v2422
      %v2424 = vpop.xlane.xlu0 %2423
      %v2425 = vadd.f32 %v2380, %v2381
      %2426 = vadd.xlane.f32.xlu0 %v2425
      %v2427 = vpop.xlane.xlu0 %2426
      %v2428 = vadd.f32 %v2382, %v2383
      %2429 = vadd.xlane.f32.xlu0 %v2428
      %v2430 = vpop.xlane.xlu0 %2429
      %v2431 = vadd.f32 %v2384, %v2385
      %2432 = vadd.xlane.f32.xlu0 %v2431
      %v2433 = vpop.xlane.xlu0 %2432
      %v2434 = vmul.f32 %v2388, %v1184
      %v2435 = vmul.f32 %v2391, %v1184
      %v2436 = vmul.f32 %v2394, %v1184
      %v2437 = vmul.f32 %v2397, %v1184
      %v2438 = vmul.f32 %v2400, %v1184
      %v2439 = vmul.f32 %v2403, %v1184
      %v2440 = vmul.f32 %v2406, %v1184
      %v2441 = vmul.f32 %v2409, %v1184
      %v2442 = vmul.f32 %v2412, %v1184
      %v2443 = vmul.f32 %v2415, %v1184
      %v2444 = vmul.f32 %v2418, %v1184
      %v2445 = vmul.f32 %v2421, %v1184
      %v2446 = vmul.f32 %v2424, %v1184
      %v2447 = vmul.f32 %v2427, %v1184
      %v2448 = vmul.f32 %v2430, %v1184
      %v2449 = vmul.f32 %v2433, %v1184
      %v2450 = vadd.f32 %v2434, 1e-05
      %v2451 = vadd.f32 %v2435, 1e-05
      %v2452 = vadd.f32 %v2436, 1e-05
      %v2453 = vadd.f32 %v2437, 1e-05
      %v2454 = vadd.f32 %v2438, 1e-05
      %v2455 = vadd.f32 %v2439, 1e-05
      %v2456 = vadd.f32 %v2440, 1e-05
      %v2457 = vadd.f32 %v2441, 1e-05
      %v2458 = vadd.f32 %v2442, 1e-05
      %v2459 = vadd.f32 %v2443, 1e-05
      %v2460 = vadd.f32 %v2444, 1e-05
      %v2461 = vadd.f32 %v2445, 1e-05
      %v2462 = vadd.f32 %v2446, 1e-05
      %v2463 = vadd.f32 %v2447, 1e-05
      %v2464 = vadd.f32 %v2448, 1e-05
      %v2465 = vadd.f32 %v2449, 1e-05
      %v2466 = vrsqrt.pop %v2450
      %v2467 = vrsqrt.pop %v2451
      %v2468 = vrsqrt.pop %v2452
      %v2469 = vrsqrt.pop %v2453
      %v2470 = vrsqrt.pop %v2454
      %v2471 = vrsqrt.pop %v2455
      %v2472 = vrsqrt.pop %v2456
      %v2473 = vrsqrt.pop %v2457
      %v2474 = vrsqrt.pop %v2458
      %v2475 = vrsqrt.pop %v2459
      %v2476 = vrsqrt.pop %v2460
      %v2477 = vrsqrt.pop %v2461
      %v2478 = vrsqrt.pop %v2462
      %v2479 = vrsqrt.pop %v2463
      %v2480 = vrsqrt.pop %v2464
      %v2481 = vrsqrt.pop %v2465
      %v2482 = vmul.f32 %v2322, %v2466
      %v2483 = vmul.f32 %v2323, %v2466
      %v2484 = vmul.f32 %v2324, %v2467
      %v2485 = vmul.f32 %v2325, %v2467
      %v2486 = vmul.f32 %v2326, %v2468
      %v2487 = vmul.f32 %v2327, %v2468
      %v2488 = vmul.f32 %v2328, %v2469
      %v2489 = vmul.f32 %v2329, %v2469
      %v2490 = vmul.f32 %v2330, %v2470
      %v2491 = vmul.f32 %v2331, %v2470
      %v2492 = vmul.f32 %v2332, %v2471
      %v2493 = vmul.f32 %v2333, %v2471
      %v2494 = vmul.f32 %v2334, %v2472
      %v2495 = vmul.f32 %v2335, %v2472
      %v2496 = vmul.f32 %v2336, %v2473
      %v2497 = vmul.f32 %v2337, %v2473
      %v2498 = vmul.f32 %v2338, %v2474
      %v2499 = vmul.f32 %v2339, %v2474
      %v2500 = vmul.f32 %v2340, %v2475
      %v2501 = vmul.f32 %v2341, %v2475
      %v2502 = vmul.f32 %v2342, %v2476
      %v2503 = vmul.f32 %v2343, %v2476
      %v2504 = vmul.f32 %v2344, %v2477
      %v2505 = vmul.f32 %v2345, %v2477
      %v2506 = vmul.f32 %v2346, %v2478
      %v2507 = vmul.f32 %v2347, %v2478
      %v2508 = vmul.f32 %v2348, %v2479
      %v2509 = vmul.f32 %v2349, %v2479
      %v2510 = vmul.f32 %v2350, %v2480
      %v2511 = vmul.f32 %v2351, %v2480
      %v2512 = vmul.f32 %v2352, %v2481
      %v2513 = vmul.f32 %v2353, %v2481
      %v2514 = vmul.f32 %v2482, 0.5
      %v2515 = vmul.f32 %v2483, 0.5
      %v2516 = vmul.f32 %v2484, 0.5
      %v2517 = vmul.f32 %v2485, 0.5
      %v2518 = vmul.f32 %v2486, 0.5
      %v2519 = vmul.f32 %v2487, 0.5
      %v2520 = vmul.f32 %v2488, 0.5
      %v2521 = vmul.f32 %v2489, 0.5
      %v2522 = vmul.f32 %v2490, 0.5
      %v2523 = vmul.f32 %v2491, 0.5
      %v2524 = vmul.f32 %v2492, 0.5
      %v2525 = vmul.f32 %v2493, 0.5
      %v2526 = vmul.f32 %v2494, 0.5
      %v2527 = vmul.f32 %v2495, 0.5
      %v2528 = vmul.f32 %v2496, 0.5
      %v2529 = vmul.f32 %v2497, 0.5
      %v2530 = vmul.f32 %v2498, 0.5
      %v2531 = vmul.f32 %v2499, 0.5
      %v2532 = vmul.f32 %v2500, 0.5
      %v2533 = vmul.f32 %v2501, 0.5
      %v2534 = vmul.f32 %v2502, 0.5
      %v2535 = vmul.f32 %v2503, 0.5
      %v2536 = vmul.f32 %v2504, 0.5
      %v2537 = vmul.f32 %v2505, 0.5
      %v2538 = vmul.f32 %v2506, 0.5
      %v2539 = vmul.f32 %v2507, 0.5
      %v2540 = vmul.f32 %v2508, 0.5
      %v2541 = vmul.f32 %v2509, 0.5
      %v2542 = vmul.f32 %v2510, 0.5
      %v2543 = vmul.f32 %v2511, 0.5
      %v2544 = vmul.f32 %v2512, 0.5
      %v2545 = vmul.f32 %v2513, 0.5
      %v2546 = vmul.f32 %v2482, 0.70710677
      %v2547 = vmul.f32 %v2483, 0.70710677
      %v2548 = vmul.f32 %v2484, 0.70710677
      %v2549 = vmul.f32 %v2485, 0.70710677
      %v2550 = vmul.f32 %v2486, 0.70710677
      %v2551 = vmul.f32 %v2487, 0.70710677
      %v2552 = vmul.f32 %v2488, 0.70710677
      %v2553 = vmul.f32 %v2489, 0.70710677
      %v2554 = vmul.f32 %v2490, 0.70710677
      %v2555 = vmul.f32 %v2491, 0.70710677
      %v2556 = vmul.f32 %v2492, 0.70710677
      %v2557 = vmul.f32 %v2493, 0.70710677
      %v2558 = vmul.f32 %v2494, 0.70710677
      %v2559 = vmul.f32 %v2495, 0.70710677
      %v2560 = vmul.f32 %v2496, 0.70710677
      %v2561 = vmul.f32 %v2497, 0.70710677
      %v2562 = vmul.f32 %v2498, 0.70710677
      %v2563 = vmul.f32 %v2499, 0.70710677
      %v2564 = vmul.f32 %v2500, 0.70710677
      %v2565 = vmul.f32 %v2501, 0.70710677
      %v2566 = vmul.f32 %v2502, 0.70710677
      %v2567 = vmul.f32 %v2503, 0.70710677
      %v2568 = vmul.f32 %v2504, 0.70710677
      %v2569 = vmul.f32 %v2505, 0.70710677
      %v2570 = vmul.f32 %v2506, 0.70710677
      %v2571 = vmul.f32 %v2507, 0.70710677
      %v2572 = vmul.f32 %v2508, 0.70710677
      %v2573 = vmul.f32 %v2509, 0.70710677
      %v2574 = vmul.f32 %v2510, 0.70710677
      %v2575 = vmul.f32 %v2511, 0.70710677
      %v2576 = vmul.f32 %v2512, 0.70710677
      %v2577 = vmul.f32 %v2513, 0.70710677
      %v2578 = verf.f32.pop %v2546
      %v2579 = verf.f32.pop %v2547
      %v2580 = verf.f32.pop %v2548
      %v2581 = verf.f32.pop %v2549
      %v2582 = verf.f32.pop %v2550
      %v2583 = verf.f32.pop %v2551
      %v2584 = verf.f32.pop %v2552
      %v2585 = verf.f32.pop %v2553
      %v2586 = verf.f32.pop %v2554
      %v2587 = verf.f32.pop %v2555
      %v2588 = verf.f32.pop %v2556
      %v2589 = verf.f32.pop %v2557
      %v2590 = verf.f32.pop %v2558
      %v2591 = verf.f32.pop %v2559
      %v2592 = verf.f32.pop %v2560
      %v2593 = verf.f32.pop %v2561
      %v2594 = verf.f32.pop %v2562
      %v2595 = verf.f32.pop %v2563
      %v2596 = verf.f32.pop %v2564
      %v2597 = verf.f32.pop %v2565
      %v2598 = verf.f32.pop %v2566
      %v2599 = verf.f32.pop %v2567
      %v2600 = verf.f32.pop %v2568
      %v2601 = verf.f32.pop %v2569
      %v2602 = verf.f32.pop %v2570
      %v2603 = verf.f32.pop %v2571
      %v2604 = verf.f32.pop %v2572
      %v2605 = verf.f32.pop %v2573
      %v2606 = verf.f32.pop %v2574
      %v2607 = verf.f32.pop %v2575
      %v2608 = verf.f32.pop %v2576
      %v2609 = verf.f32.pop %v2577
      %v2610 = vadd.f32 %v2578, 1.0
      %v2611 = vadd.f32 %v2579, 1.0
      %v2612 = vadd.f32 %v2580, 1.0
      %v2613 = vadd.f32 %v2581, 1.0
      %v2614 = vadd.f32 %v2582, 1.0
      %v2615 = vadd.f32 %v2583, 1.0
      %v2616 = vadd.f32 %v2584, 1.0
      %v2617 = vadd.f32 %v2585, 1.0
      %v2618 = vadd.f32 %v2586, 1.0
      %v2619 = vadd.f32 %v2587, 1.0
      %v2620 = vadd.f32 %v2588, 1.0
      %v2621 = vadd.f32 %v2589, 1.0
      %v2622 = vadd.f32 %v2590, 1.0
      %v2623 = vadd.f32 %v2591, 1.0
      %v2624 = vadd.f32 %v2592, 1.0
      %v2625 = vadd.f32 %v2593, 1.0
      %v2626 = vadd.f32 %v2594, 1.0
      %v2627 = vadd.f32 %v2595, 1.0
      %v2628 = vadd.f32 %v2596, 1.0
      %v2629 = vadd.f32 %v2597, 1.0
      %v2630 = vadd.f32 %v2598, 1.0
      %v2631 = vadd.f32 %v2599, 1.0
      %v2632 = vadd.f32 %v2600, 1.0
      %v2633 = vadd.f32 %v2601, 1.0
      %v2634 = vadd.f32 %v2602, 1.0
      %v2635 = vadd.f32 %v2603, 1.0
      %v2636 = vadd.f32 %v2604, 1.0
      %v2637 = vadd.f32 %v2605, 1.0
      %v2638 = vadd.f32 %v2606, 1.0
      %v2639 = vadd.f32 %v2607, 1.0
      %v2640 = vadd.f32 %v2608, 1.0
      %v2641 = vadd.f32 %v2609, 1.0
      %v2642 = vmul.f32 %v2514, %v2610
      %v2643 = vmul.f32 %v2515, %v2611
      %v2644 = vmul.f32 %v2516, %v2612
      %v2645 = vmul.f32 %v2517, %v2613
      %v2646 = vmul.f32 %v2518, %v2614
      %v2647 = vmul.f32 %v2519, %v2615
      %v2648 = vmul.f32 %v2520, %v2616
      %v2649 = vmul.f32 %v2521, %v2617
      %v2650 = vmul.f32 %v2522, %v2618
      %v2651 = vmul.f32 %v2523, %v2619
      %v2652 = vmul.f32 %v2524, %v2620
      %v2653 = vmul.f32 %v2525, %v2621
      %v2654 = vmul.f32 %v2526, %v2622
      %v2655 = vmul.f32 %v2527, %v2623
      %v2656 = vmul.f32 %v2528, %v2624
      %v2657 = vmul.f32 %v2529, %v2625
      %v2658 = vmul.f32 %v2530, %v2626
      %v2659 = vmul.f32 %v2531, %v2627
      %v2660 = vmul.f32 %v2532, %v2628
      %v2661 = vmul.f32 %v2533, %v2629
      %v2662 = vmul.f32 %v2534, %v2630
      %v2663 = vmul.f32 %v2535, %v2631
      %v2664 = vmul.f32 %v2536, %v2632
      %v2665 = vmul.f32 %v2537, %v2633
      %v2666 = vmul.f32 %v2538, %v2634
      %v2667 = vmul.f32 %v2539, %v2635
      %v2668 = vmul.f32 %v2540, %v2636
      %v2669 = vmul.f32 %v2541, %v2637
      %v2670 = vmul.f32 %v2542, %v2638
      %v2671 = vmul.f32 %v2543, %v2639
      %v2672 = vmul.f32 %v2544, %v2640
      %v2673 = vmul.f32 %v2545, %v2641
      %v2674 = vld [vmem:[%s5] sm:$0xf]
      %v2675 = vld [vmem:[%s5 + $0x4] sm:$0xf]
      %v2676 = vld [vmem:[%s5 + $0x8] sm:$0xf]
      %v2677 = vld [vmem:[%s5 + $0xc] sm:$0xf]
      %v2678 = vld [vmem:[%s5 + $0x10] sm:$0xf]
      %v2679 = vld [vmem:[%s5 + $0x14] sm:$0xf]
      %v2680 = vld [vmem:[%s5 + $0x18] sm:$0xf]
      %v2681 = vld [vmem:[%s5 + $0x1c] sm:$0xf]
      %v2682 = vld [vmem:[%s5 + $0x20] sm:$0xf]
      %v2683 = vld [vmem:[%s5 + $0x24] sm:$0xf]
      %v2684 = vld [vmem:[%s5 + $0x28] sm:$0xf]
      %v2685 = vld [vmem:[%s5 + $0x2c] sm:$0xf]
      %v2686 = vld [vmem:[%s5 + $0x30] sm:$0xf]
      %v2687 = vld [vmem:[%s5 + $0x34] sm:$0xf]
      %v2688 = vld [vmem:[%s5 + $0x38] sm:$0xf]
      %v2689 = vld [vmem:[%s5 + $0x3c] sm:$0xf]
      %v2690 = vld [vmem:[%s6] sm:$0xff]
      %v2691 = vld [vmem:[%s6 + $0x8] sm:$0xff]
      %v2692 = vld [vmem:[%s6 + $0x10] sm:$0xff]
      %v2693 = vld [vmem:[%s6 + $0x18] sm:$0xff]
      %v2694 = vld [vmem:[%s6 + $0x20] sm:$0xff]
      %v2695 = vld [vmem:[%s6 + $0x28] sm:$0xff]
      %v2696 = vld [vmem:[%s6 + $0x30] sm:$0xff]
      %v2697 = vld [vmem:[%s6 + $0x38] sm:$0xff]
      %v2698 = vld [vmem:[%s6 + $0x40] sm:$0xff]
      %v2699 = vld [vmem:[%s6 + $0x48] sm:$0xff]
      %v2700 = vld [vmem:[%s6 + $0x50] sm:$0xff]
      %v2701 = vld [vmem:[%s6 + $0x58] sm:$0xff]
      %v2702 = vld [vmem:[%s6 + $0x60] sm:$0xff]
      %v2703 = vld [vmem:[%s6 + $0x68] sm:$0xff]
      %v2704 = vld [vmem:[%s6 + $0x70] sm:$0xff]
      %v2705 = vld [vmem:[%s6 + $0x78] sm:$0xff]
      %v2706 = vpack.c.bf16 %v2644, %v2642
      %v2707 = vpack.c.bf16 %v2645, %v2643
      %v2708 = vpack.c.bf16 %v2648, %v2646
      %v2709 = vpack.c.bf16 %v2649, %v2647
      %v2710 = vpack.c.bf16 %v2652, %v2650
      %v2711 = vpack.c.bf16 %v2653, %v2651
      %v2712 = vpack.c.bf16 %v2656, %v2654
      %v2713 = vpack.c.bf16 %v2657, %v2655
      %v2714 = vpack.c.bf16 %v2660, %v2658
      %v2715 = vpack.c.bf16 %v2661, %v2659
      %v2716 = vpack.c.bf16 %v2664, %v2662
      %v2717 = vpack.c.bf16 %v2665, %v2663
      %v2718 = vpack.c.bf16 %v2668, %v2666
      %v2719 = vpack.c.bf16 %v2669, %v2667
      %v2720 = vpack.c.bf16 %v2672, %v2670
      %v2721 = vpack.c.bf16 %v2673, %v2671
      %2723 = vset.pattern.permute.xlu0 0
      %2724 = vperm.xlu0 %2723, %v2690
      %v2725 = vpop.permute.xlu0 %2724
      %2728 = vset.pattern.permute.xlu0 0
      %2729 = vperm.xlu0 %2728, %v2691
      %v2730 = vpop.permute.xlu0 %2729
      %2733 = vset.pattern.permute.xlu0 0
      %2734 = vperm.xlu0 %2733, %v2692
      %v2735 = vpop.permute.xlu0 %2734
      %2738 = vset.pattern.permute.xlu0 0
      %2739 = vperm.xlu0 %2738, %v2693
      %v2740 = vpop.permute.xlu0 %2739
      %2743 = vset.pattern.permute.xlu0 0
      %2744 = vperm.xlu0 %2743, %v2694
      %v2745 = vpop.permute.xlu0 %2744
      %2748 = vset.pattern.permute.xlu0 0
      %2749 = vperm.xlu0 %2748, %v2695
      %v2750 = vpop.permute.xlu0 %2749
      %2753 = vset.pattern.permute.xlu0 0
      %2754 = vperm.xlu0 %2753, %v2696
      %v2755 = vpop.permute.xlu0 %2754
      %2758 = vset.pattern.permute.xlu0 0
      %2759 = vperm.xlu0 %2758, %v2697
      %v2760 = vpop.permute.xlu0 %2759
      %2763 = vset.pattern.permute.xlu0 0
      %2764 = vperm.xlu0 %2763, %v2698
      %v2765 = vpop.permute.xlu0 %2764
      %2768 = vset.pattern.permute.xlu0 0
      %2769 = vperm.xlu0 %2768, %v2699
      %v2770 = vpop.permute.xlu0 %2769
      %2773 = vset.pattern.permute.xlu0 0
      %2774 = vperm.xlu0 %2773, %v2700
      %v2775 = vpop.permute.xlu0 %2774
      %2778 = vset.pattern.permute.xlu0 0
      %2779 = vperm.xlu0 %2778, %v2701
      %v2780 = vpop.permute.xlu0 %2779
      %2783 = vset.pattern.permute.xlu0 0
      %2784 = vperm.xlu0 %2783, %v2702
      %v2785 = vpop.permute.xlu0 %2784
      %2788 = vset.pattern.permute.xlu0 0
      %2789 = vperm.xlu0 %2788, %v2703
      %v2790 = vpop.permute.xlu0 %2789
      %2793 = vset.pattern.permute.xlu0 0
      %2794 = vperm.xlu0 %2793, %v2704
      %v2795 = vpop.permute.xlu0 %2794
      %2798 = vset.pattern.permute.xlu0 0
      %2799 = vperm.xlu0 %2798, %v2705
      %v2800 = vpop.permute.xlu0 %2799
      %v2818 = vunpack.c.l.b16 %v2674
      %v2819 = vunpack.c.l.b16 %v2675
      %v2820 = vunpack.c.l.b16 %v2676
      %v2821 = vunpack.c.l.b16 %v2677
      %v2822 = vunpack.c.l.b16 %v2678
      %v2823 = vunpack.c.l.b16 %v2679
      %v2824 = vunpack.c.l.b16 %v2680
      %v2825 = vunpack.c.l.b16 %v2681
      %v2826 = vunpack.c.l.b16 %v2682
      %v2827 = vunpack.c.l.b16 %v2683
      %v2828 = vunpack.c.l.b16 %v2684
      %v2829 = vunpack.c.l.b16 %v2685
      %v2830 = vunpack.c.l.b16 %v2686
      %v2831 = vunpack.c.l.b16 %v2687
      %v2832 = vunpack.c.l.b16 %v2688
      %v2833 = vunpack.c.l.b16 %v2689
      %v2834 = vpack.c.b16 %v2819, %v2818
      %v2835 = vpack.c.b16 %v2821, %v2820
      %v2836 = vpack.c.b16 %v2823, %v2822
      %v2837 = vpack.c.b16 %v2825, %v2824
      %v2838 = vpack.c.b16 %v2827, %v2826
      %v2839 = vpack.c.b16 %v2829, %v2828
      %v2840 = vpack.c.b16 %v2831, %v2830
      %v2841 = vpack.c.b16 %v2833, %v2832
      %2850 = vmatprep.subr.bf16.mxu0 %v2707
      %2851 = vmatpush1.bf16.msra.mxu0 %v2706
      %2852 = vmatprep.subr.bf16.mxu0 %v2709
      %2853 = vmatpush1.bf16.msra.mxu0 %v2708
      %2854 = vmatprep.subr.bf16.mxu0 %v2711
      %2855 = vmatpush1.bf16.msra.mxu0 %v2710
      %2856 = vmatprep.subr.bf16.mxu0 %v2713
      %2857 = vmatpush1.bf16.msra.mxu0 %v2712
      %2858 = vmatprep.subr.bf16.mxu0 %v2715
      %2859 = vmatpush1.bf16.msra.mxu0 %v2714
      %2860 = vmatprep.subr.bf16.mxu0 %v2717
      %2861 = vmatpush1.bf16.msra.mxu0 %v2716
      %2862 = vmatprep.subr.bf16.mxu0 %v2719
      %2863 = vmatpush1.bf16.msra.mxu0 %v2718
      %2864 = vmatprep.subr.bf16.mxu0 %v2721
      %2865 = vmatpush1.bf16.msra.mxu0 %v2720
      %2866 = vmatprep.subr.bf16.mxu0 0
      %2867 = vmatpush1.bf16.msra.mxu0 0
      %2868 = vmatprep.subr.bf16.mxu0 0
      %2869 = vmatpush1.bf16.msra.mxu0 0
      %2870 = vmatprep.subr.bf16.mxu0 0
      %2871 = vmatpush1.bf16.msra.mxu0 0
      %2872 = vmatprep.subr.bf16.mxu0 0
      %2873 = vmatpush1.bf16.msra.mxu0 0
      %2874 = vmatprep.subr.bf16.mxu0 0
      %2875 = vmatpush1.bf16.msra.mxu0 0
      %2876 = vmatprep.subr.bf16.mxu0 0
      %2877 = vmatpush1.bf16.msra.mxu0 0
      %2878 = vmatprep.subr.bf16.mxu0 0
      %2879 = vmatpush1.bf16.msra.mxu0 0
      %2880 = vmatprep.subr.bf16.mxu0 0
      %2881 = vmatpush1.bf16.msra.mxu0 0
      %2882 = vmatprep.mubr.bf16.mxu0 0
      %2883 = vmatmul.mubr.bf16.gmra.mrb[0].mxu0 %v2834
      %v2884 = vpop.f32.mrb[0].mxu0
      %v2885 = vadd.f32 %v2725, %v2884
      %v2886 = vpop.f32.mrb[0].mxu0
      %v2887 = vadd.f32 %v2725, %v2886
      %v2888 = vpop.f32.mrb[0].mxu0
      %v2889 = vadd.f32 %v2730, %v2888
      %v2890 = vpop.f32.mrb[0].mxu0
      %v2891 = vadd.f32 %v2730, %v2890
      %2892 = vmatprep.mubr.bf16.mxu0 0
      %2893 = vmatmul.mubr.bf16.gmra.mrb[0].mxu0 %v2835
      %v2894 = vpop.f32.mrb[0].mxu0
      %v2895 = vadd.f32 %v2735, %v2894
      %v2896 = vpop.f32.mrb[0].mxu0
      %v2897 = vadd.f32 %v2735, %v2896
      %v2898 = vpop.f32.mrb[0].mxu0
      %v2899 = vadd.f32 %v2740, %v2898
      %v2900 = vpop.f32.mrb[0].mxu0
      %v2901 = vadd.f32 %v2740, %v2900
      %2902 = vmatprep.mubr.bf16.mxu0 0
      %2903 = vmatmul.mubr.bf16.gmra.mrb[0].mxu0 %v2836
      %v2904 = vpop.f32.mrb[0].mxu0
      %v2905 = vadd.f32 %v2745, %v2904
      %v2906 = vpop.f32.mrb[0].mxu0
      %v2907 = vadd.f32 %v2745, %v2906
      %v2908 = vpop.f32.mrb[0].mxu0
      %v2909 = vadd.f32 %v2750, %v2908
      %v2910 = vpop.f32.mrb[0].mxu0
      %v2911 = vadd.f32 %v2750, %v2910
      %2912 = vmatprep.mubr.bf16.mxu0 0
      %2913 = vmatmul.mubr.bf16.gmra.mrb[0].mxu0 %v2837
      %v2914 = vpop.f32.mrb[0].mxu0
      %v2915 = vadd.f32 %v2755, %v2914
      %v2916 = vpop.f32.mrb[0].mxu0
      %v2917 = vadd.f32 %v2755, %v2916
      %v2918 = vpop.f32.mrb[0].mxu0
      %v2919 = vadd.f32 %v2760, %v2918
      %v2920 = vpop.f32.mrb[0].mxu0
      %v2921 = vadd.f32 %v2760, %v2920
      %2922 = vmatprep.mubr.bf16.mxu0 0
      %2923 = vmatmul.mubr.bf16.gmra.mrb[0].mxu0 %v2838
      %v2924 = vpop.f32.mrb[0].mxu0
      %v2925 = vadd.f32 %v2765, %v2924
      %v2926 = vpop.f32.mrb[0].mxu0
      %v2927 = vadd.f32 %v2765, %v2926
      %v2928 = vpop.f32.mrb[0].mxu0
      %v2929 = vadd.f32 %v2770, %v2928
      %v2930 = vpop.f32.mrb[0].mxu0
      %v2931 = vadd.f32 %v2770, %v2930
      %2932 = vmatprep.mubr.bf16.mxu0 0
      %2933 = vmatmul.mubr.bf16.gmra.mrb[0].mxu0 %v2839
      %v2934 = vpop.f32.mrb[0].mxu0
      %v2935 = vadd.f32 %v2775, %v2934
      %v2936 = vpop.f32.mrb[0].mxu0
      %v2937 = vadd.f32 %v2775, %v2936
      %v2938 = vpop.f32.mrb[0].mxu0
      %v2939 = vadd.f32 %v2780, %v2938
      %v2940 = vpop.f32.mrb[0].mxu0
      %v2941 = vadd.f32 %v2780, %v2940
      %2942 = vmatprep.mubr.bf16.mxu0 0
      %2943 = vmatmul.mubr.bf16.gmra.mrb[0].mxu0 %v2840
      %v2944 = vpop.f32.mrb[0].mxu0
      %v2945 = vadd.f32 %v2785, %v2944
      %v2946 = vpop.f32.mrb[0].mxu0
      %v2947 = vadd.f32 %v2785, %v2946
      %v2948 = vpop.f32.mrb[0].mxu0
      %v2949 = vadd.f32 %v2790, %v2948
      %v2950 = vpop.f32.mrb[0].mxu0
      %v2951 = vadd.f32 %v2790, %v2950
      %2952 = vmatprep.mubr.bf16.mxu0 0
      %2953 = vmatmul.mubr.bf16.gmra.mrb[0].mxu0 %v2841
      %v2954 = vpop.f32.mrb[0].mxu0
      %v2955 = vadd.f32 %v2795, %v2954
      %v2956 = vpop.f32.mrb[0].mxu0
      %v2957 = vadd.f32 %v2795, %v2956
      %v2958 = vpop.f32.mrb[0].mxu0
      %v2959 = vadd.f32 %v2800, %v2958
      %v2960 = vpop.f32.mrb[0].mxu0
      %v2961 = vadd.f32 %v2800, %v2960
      %2962 = vdwg.mxu0
      %v2963 = vadd.f32 %v2885, %v2887
      %2964 = vadd.xlane.f32.xlu0 %v2963
      %v2965 = vpop.xlane.xlu0 %2964
      %v2966 = vadd.f32 %v2889, %v2891
      %2967 = vadd.xlane.f32.xlu0 %v2966
      %v2968 = vpop.xlane.xlu0 %2967
      %v2969 = vadd.f32 %v2895, %v2897
      %2970 = vadd.xlane.f32.xlu0 %v2969
      %v2971 = vpop.xlane.xlu0 %2970
      %v2972 = vadd.f32 %v2899, %v2901
      %2973 = vadd.xlane.f32.xlu0 %v2972
      %v2974 = vpop.xlane.xlu0 %2973
      %v2975 = vadd.f32 %v2905, %v2907
      %2976 = vadd.xlane.f32.xlu0 %v2975
      %v2977 = vpop.xlane.xlu0 %2976
      %v2978 = vadd.f32 %v2909, %v2911
      %2979 = vadd.xlane.f32.xlu0 %v2978
      %v2980 = vpop.xlane.xlu0 %2979
      %v2981 = vadd.f32 %v2915, %v2917
      %2982 = vadd.xlane.f32.xlu0 %v2981
      %v2983 = vpop.xlane.xlu0 %2982
      %v2984 = vadd.f32 %v2919, %v2921
      %2985 = vadd.xlane.f32.xlu0 %v2984
      %v2986 = vpop.xlane.xlu0 %2985
      %v2987 = vadd.f32 %v2925, %v2927
      %2988 = vadd.xlane.f32.xlu0 %v2987
      %v2989 = vpop.xlane.xlu0 %2988
      %v2990 = vadd.f32 %v2929, %v2931
      %2991 = vadd.xlane.f32.xlu0 %v2990
      %v2992 = vpop.xlane.xlu0 %2991
      %v2993 = vadd.f32 %v2935, %v2937
      %2994 = vadd.xlane.f32.xlu0 %v2993
      %v2995 = vpop.xlane.xlu0 %2994
      %v2996 = vadd.f32 %v2939, %v2941
      %2997 = vadd.xlane.f32.xlu0 %v2996
      %v2998 = vpop.xlane.xlu0 %2997
      %v2999 = vadd.f32 %v2945, %v2947
      %3000 = vadd.xlane.f32.xlu0 %v2999
      %v3001 = vpop.xlane.xlu0 %3000
      %v3002 = vadd.f32 %v2949, %v2951
      %3003 = vadd.xlane.f32.xlu0 %v3002
      %v3004 = vpop.xlane.xlu0 %3003
      %v3005 = vadd.f32 %v2955, %v2957
      %3006 = vadd.xlane.f32.xlu0 %v3005
      %v3007 = vpop.xlane.xlu0 %3006
      %v3008 = vadd.f32 %v2959, %v2961
      %3009 = vadd.xlane.f32.xlu0 %v3008
      %v3010 = vpop.xlane.xlu0 %3009
      %v3011 = vmul.f32 %v2965, %v1184
      %v3012 = vmul.f32 %v2968, %v1184
      %v3013 = vmul.f32 %v2971, %v1184
      %v3014 = vmul.f32 %v2974, %v1184
      %v3015 = vmul.f32 %v2977, %v1184
      %v3016 = vmul.f32 %v2980, %v1184
      %v3017 = vmul.f32 %v2983, %v1184
      %v3018 = vmul.f32 %v2986, %v1184
      %v3019 = vmul.f32 %v2989, %v1184
      %v3020 = vmul.f32 %v2992, %v1184
      %v3021 = vmul.f32 %v2995, %v1184
      %v3022 = vmul.f32 %v2998, %v1184
      %v3023 = vmul.f32 %v3001, %v1184
      %v3024 = vmul.f32 %v3004, %v1184
      %v3025 = vmul.f32 %v3007, %v1184
      %v3026 = vmul.f32 %v3010, %v1184
      %v3027 = vsub.f32 %v2885, %v3011
      %v3028 = vsub.f32 %v2887, %v3011
      %v3029 = vsub.f32 %v2889, %v3012
      %v3030 = vsub.f32 %v2891, %v3012
      %v3031 = vsub.f32 %v2895, %v3013
      %v3032 = vsub.f32 %v2897, %v3013
      %v3033 = vsub.f32 %v2899, %v3014
      %v3034 = vsub.f32 %v2901, %v3014
      %v3035 = vsub.f32 %v2905, %v3015
      %v3036 = vsub.f32 %v2907, %v3015
      %v3037 = vsub.f32 %v2909, %v3016
      %v3038 = vsub.f32 %v2911, %v3016
      %v3039 = vsub.f32 %v2915, %v3017
      %v3040 = vsub.f32 %v2917, %v3017
      %v3041 = vsub.f32 %v2919, %v3018
      %v3042 = vsub.f32 %v2921, %v3018
      %v3043 = vsub.f32 %v2925, %v3019
      %v3044 = vsub.f32 %v2927, %v3019
      %v3045 = vsub.f32 %v2929, %v3020
      %v3046 = vsub.f32 %v2931, %v3020
      %v3047 = vsub.f32 %v2935, %v3021
      %v3048 = vsub.f32 %v2937, %v3021
      %v3049 = vsub.f32 %v2939, %v3022
      %v3050 = vsub.f32 %v2941, %v3022
      %v3051 = vsub.f32 %v2945, %v3023
      %v3052 = vsub.f32 %v2947, %v3023
      %v3053 = vsub.f32 %v2949, %v3024
      %v3054 = vsub.f32 %v2951, %v3024
      %v3055 = vsub.f32 %v2955, %v3025
      %v3056 = vsub.f32 %v2957, %v3025
      %v3057 = vsub.f32 %v2959, %v3026
      %v3058 = vsub.f32 %v2961, %v3026
      %v3059 = vmul.f32 %v3027, %v3027
      %v3060 = vmul.f32 %v3028, %v3028
      %v3061 = vmul.f32 %v3029, %v3029
      %v3062 = vmul.f32 %v3030, %v3030
      %v3063 = vmul.f32 %v3031, %v3031
      %v3064 = vmul.f32 %v3032, %v3032
      %v3065 = vmul.f32 %v3033, %v3033
      %v3066 = vmul.f32 %v3034, %v3034
      %v3067 = vmul.f32 %v3035, %v3035
      %v3068 = vmul.f32 %v3036, %v3036
      %v3069 = vmul.f32 %v3037, %v3037
      %v3070 = vmul.f32 %v3038, %v3038
      %v3071 = vmul.f32 %v3039, %v3039
      %v3072 = vmul.f32 %v3040, %v3040
      %v3073 = vmul.f32 %v3041, %v3041
      %v3074 = vmul.f32 %v3042, %v3042
      %v3075 = vmul.f32 %v3043, %v3043
      %v3076 = vmul.f32 %v3044, %v3044
      %v3077 = vmul.f32 %v3045, %v3045
      %v3078 = vmul.f32 %v3046, %v3046
      %v3079 = vmul.f32 %v3047, %v3047
      %v3080 = vmul.f32 %v3048, %v3048
      %v3081 = vmul.f32 %v3049, %v3049
      %v3082 = vmul.f32 %v3050, %v3050
      %v3083 = vmul.f32 %v3051, %v3051
      %v3084 = vmul.f32 %v3052, %v3052
      %v3085 = vmul.f32 %v3053, %v3053
      %v3086 = vmul.f32 %v3054, %v3054
      %v3087 = vmul.f32 %v3055, %v3055
      %v3088 = vmul.f32 %v3056, %v3056
      %v3089 = vmul.f32 %v3057, %v3057
      %v3090 = vmul.f32 %v3058, %v3058
      %v3091 = vadd.f32 %v3059, %v3060
      %3092 = vadd.xlane.f32.xlu0 %v3091
      %v3093 = vpop.xlane.xlu0 %3092
      %v3094 = vadd.f32 %v3061, %v3062
      %3095 = vadd.xlane.f32.xlu0 %v3094
      %v3096 = vpop.xlane.xlu0 %3095
      %v3097 = vadd.f32 %v3063, %v3064
      %3098 = vadd.xlane.f32.xlu0 %v3097
      %v3099 = vpop.xlane.xlu0 %3098
      %v3100 = vadd.f32 %v3065, %v3066
      %3101 = vadd.xlane.f32.xlu0 %v3100
      %v3102 = vpop.xlane.xlu0 %3101
      %v3103 = vadd.f32 %v3067, %v3068
      %3104 = vadd.xlane.f32.xlu0 %v3103
      %v3105 = vpop.xlane.xlu0 %3104
      %v3106 = vadd.f32 %v3069, %v3070
      %3107 = vadd.xlane.f32.xlu0 %v3106
      %v3108 = vpop.xlane.xlu0 %3107
      %v3109 = vadd.f32 %v3071, %v3072
      %3110 = vadd.xlane.f32.xlu0 %v3109
      %v3111 = vpop.xlane.xlu0 %3110
      %v3112 = vadd.f32 %v3073, %v3074
      %3113 = vadd.xlane.f32.xlu0 %v3112
      %v3114 = vpop.xlane.xlu0 %3113
      %v3115 = vadd.f32 %v3075, %v3076
      %3116 = vadd.xlane.f32.xlu0 %v3115
      %v3117 = vpop.xlane.xlu0 %3116
      %v3118 = vadd.f32 %v3077, %v3078
      %3119 = vadd.xlane.f32.xlu0 %v3118
      %v3120 = vpop.xlane.xlu0 %3119
      %v3121 = vadd.f32 %v3079, %v3080
      %3122 = vadd.xlane.f32.xlu0 %v3121
      %v3123 = vpop.xlane.xlu0 %3122
      %v3124 = vadd.f32 %v3081, %v3082
      %3125 = vadd.xlane.f32.xlu0 %v3124
      %v3126 = vpop.xlane.xlu0 %3125
      %v3127 = vadd.f32 %v3083, %v3084
      %3128 = vadd.xlane.f32.xlu0 %v3127
      %v3129 = vpop.xlane.xlu0 %3128
      %v3130 = vadd.f32 %v3085, %v3086
      %3131 = vadd.xlane.f32.xlu0 %v3130
      %v3132 = vpop.xlane.xlu0 %3131
      %v3133 = vadd.f32 %v3087, %v3088
      %3134 = vadd.xlane.f32.xlu0 %v3133
      %v3135 = vpop.xlane.xlu0 %3134
      %v3136 = vadd.f32 %v3089, %v3090
      %3137 = vadd.xlane.f32.xlu0 %v3136
      %v3138 = vpop.xlane.xlu0 %3137
      %v3139 = vmul.f32 %v3093, %v1184
      %v3140 = vmul.f32 %v3096, %v1184
      %v3141 = vmul.f32 %v3099, %v1184
      %v3142 = vmul.f32 %v3102, %v1184
      %v3143 = vmul.f32 %v3105, %v1184
      %v3144 = vmul.f32 %v3108, %v1184
      %v3145 = vmul.f32 %v3111, %v1184
      %v3146 = vmul.f32 %v3114, %v1184
      %v3147 = vmul.f32 %v3117, %v1184
      %v3148 = vmul.f32 %v3120, %v1184
      %v3149 = vmul.f32 %v3123, %v1184
      %v3150 = vmul.f32 %v3126, %v1184
      %v3151 = vmul.f32 %v3129, %v1184
      %v3152 = vmul.f32 %v3132, %v1184
      %v3153 = vmul.f32 %v3135, %v1184
      %v3154 = vmul.f32 %v3138, %v1184
      %v3155 = vadd.f32 %v3139, 1e-05
      %v3156 = vadd.f32 %v3140, 1e-05
      %v3157 = vadd.f32 %v3141, 1e-05
      %v3158 = vadd.f32 %v3142, 1e-05
      %v3159 = vadd.f32 %v3143, 1e-05
      %v3160 = vadd.f32 %v3144, 1e-05
      %v3161 = vadd.f32 %v3145, 1e-05
      %v3162 = vadd.f32 %v3146, 1e-05
      %v3163 = vadd.f32 %v3147, 1e-05
      %v3164 = vadd.f32 %v3148, 1e-05
      %v3165 = vadd.f32 %v3149, 1e-05
      %v3166 = vadd.f32 %v3150, 1e-05
      %v3167 = vadd.f32 %v3151, 1e-05
      %v3168 = vadd.f32 %v3152, 1e-05
      %v3169 = vadd.f32 %v3153, 1e-05
      %v3170 = vadd.f32 %v3154, 1e-05
      %v3171 = vrsqrt.pop %v3155
      %v3172 = vrsqrt.pop %v3156
      %v3173 = vrsqrt.pop %v3157
      %v3174 = vrsqrt.pop %v3158
      %v3175 = vrsqrt.pop %v3159
      %v3176 = vrsqrt.pop %v3160
      %v3177 = vrsqrt.pop %v3161
      %v3178 = vrsqrt.pop %v3162
      %v3179 = vrsqrt.pop %v3163
      %v3180 = vrsqrt.pop %v3164
      %v3181 = vrsqrt.pop %v3165
      %v3182 = vrsqrt.pop %v3166
      %v3183 = vrsqrt.pop %v3167
      %v3184 = vrsqrt.pop %v3168
      %v3185 = vrsqrt.pop %v3169
      %v3186 = vrsqrt.pop %v3170
      %v3187 = vmul.f32 %v3027, %v3171
      %v3188 = vmul.f32 %v3028, %v3171
      %v3189 = vmul.f32 %v3029, %v3172
      %v3190 = vmul.f32 %v3030, %v3172
      %v3191 = vmul.f32 %v3031, %v3173
      %v3192 = vmul.f32 %v3032, %v3173
      %v3193 = vmul.f32 %v3033, %v3174
      %v3194 = vmul.f32 %v3034, %v3174
      %v3195 = vmul.f32 %v3035, %v3175
      %v3196 = vmul.f32 %v3036, %v3175
      %v3197 = vmul.f32 %v3037, %v3176
      %v3198 = vmul.f32 %v3038, %v3176
      %v3199 = vmul.f32 %v3039, %v3177
      %v3200 = vmul.f32 %v3040, %v3177
      %v3201 = vmul.f32 %v3041, %v3178
      %v3202 = vmul.f32 %v3042, %v3178
      %v3203 = vmul.f32 %v3043, %v3179
      %v3204 = vmul.f32 %v3044, %v3179
      %v3205 = vmul.f32 %v3045, %v3180
      %v3206 = vmul.f32 %v3046, %v3180
      %v3207 = vmul.f32 %v3047, %v3181
      %v3208 = vmul.f32 %v3048, %v3181
      %v3209 = vmul.f32 %v3049, %v3182
      %v3210 = vmul.f32 %v3050, %v3182
      %v3211 = vmul.f32 %v3051, %v3183
      %v3212 = vmul.f32 %v3052, %v3183
      %v3213 = vmul.f32 %v3053, %v3184
      %v3214 = vmul.f32 %v3054, %v3184
      %v3215 = vmul.f32 %v3055, %v3185
      %v3216 = vmul.f32 %v3056, %v3185
      %v3217 = vmul.f32 %v3057, %v3186
      %v3218 = vmul.f32 %v3058, %v3186
      %v3219 = vmul.f32 %v3187, 0.5
      %v3220 = vmul.f32 %v3188, 0.5
      %v3221 = vmul.f32 %v3189, 0.5
      %v3222 = vmul.f32 %v3190, 0.5
      %v3223 = vmul.f32 %v3191, 0.5
      %v3224 = vmul.f32 %v3192, 0.5
      %v3225 = vmul.f32 %v3193, 0.5
      %v3226 = vmul.f32 %v3194, 0.5
      %v3227 = vmul.f32 %v3195, 0.5
      %v3228 = vmul.f32 %v3196, 0.5
      %v3229 = vmul.f32 %v3197, 0.5
      %v3230 = vmul.f32 %v3198, 0.5
      %v3231 = vmul.f32 %v3199, 0.5
      %v3232 = vmul.f32 %v3200, 0.5
      %v3233 = vmul.f32 %v3201, 0.5
      %v3234 = vmul.f32 %v3202, 0.5
      %v3235 = vmul.f32 %v3203, 0.5
      %v3236 = vmul.f32 %v3204, 0.5
      %v3237 = vmul.f32 %v3205, 0.5
      %v3238 = vmul.f32 %v3206, 0.5
      %v3239 = vmul.f32 %v3207, 0.5
      %v3240 = vmul.f32 %v3208, 0.5
      %v3241 = vmul.f32 %v3209, 0.5
      %v3242 = vmul.f32 %v3210, 0.5
      %v3243 = vmul.f32 %v3211, 0.5
      %v3244 = vmul.f32 %v3212, 0.5
      %v3245 = vmul.f32 %v3213, 0.5
      %v3246 = vmul.f32 %v3214, 0.5
      %v3247 = vmul.f32 %v3215, 0.5
      %v3248 = vmul.f32 %v3216, 0.5
      %v3249 = vmul.f32 %v3217, 0.5
      %v3250 = vmul.f32 %v3218, 0.5
      %v3251 = vmul.f32 %v3187, 0.70710677
      %v3252 = vmul.f32 %v3188, 0.70710677
      %v3253 = vmul.f32 %v3189, 0.70710677
      %v3254 = vmul.f32 %v3190, 0.70710677
      %v3255 = vmul.f32 %v3191, 0.70710677
      %v3256 = vmul.f32 %v3192, 0.70710677
      %v3257 = vmul.f32 %v3193, 0.70710677
      %v3258 = vmul.f32 %v3194, 0.70710677
      %v3259 = vmul.f32 %v3195, 0.70710677
      %v3260 = vmul.f32 %v3196, 0.70710677
      %v3261 = vmul.f32 %v3197, 0.70710677
      %v3262 = vmul.f32 %v3198, 0.70710677
      %v3263 = vmul.f32 %v3199, 0.70710677
      %v3264 = vmul.f32 %v3200, 0.70710677
      %v3265 = vmul.f32 %v3201, 0.70710677
      %v3266 = vmul.f32 %v3202, 0.70710677
      %v3267 = vmul.f32 %v3203, 0.70710677
      %v3268 = vmul.f32 %v3204, 0.70710677
      %v3269 = vmul.f32 %v3205, 0.70710677
      %v3270 = vmul.f32 %v3206, 0.70710677
      %v3271 = vmul.f32 %v3207, 0.70710677
      %v3272 = vmul.f32 %v3208, 0.70710677
      %v3273 = vmul.f32 %v3209, 0.70710677
      %v3274 = vmul.f32 %v3210, 0.70710677
      %v3275 = vmul.f32 %v3211, 0.70710677
      %v3276 = vmul.f32 %v3212, 0.70710677
      %v3277 = vmul.f32 %v3213, 0.70710677
      %v3278 = vmul.f32 %v3214, 0.70710677
      %v3279 = vmul.f32 %v3215, 0.70710677
      %v3280 = vmul.f32 %v3216, 0.70710677
      %v3281 = vmul.f32 %v3217, 0.70710677
      %v3282 = vmul.f32 %v3218, 0.70710677
      %v3283 = verf.f32.pop %v3251
      %v3284 = verf.f32.pop %v3252
      %v3285 = verf.f32.pop %v3253
      %v3286 = verf.f32.pop %v3254
      %v3287 = verf.f32.pop %v3255
      %v3288 = verf.f32.pop %v3256
      %v3289 = verf.f32.pop %v3257
      %v3290 = verf.f32.pop %v3258
      %v3291 = verf.f32.pop %v3259
      %v3292 = verf.f32.pop %v3260
      %v3293 = verf.f32.pop %v3261
      %v3294 = verf.f32.pop %v3262
      %v3295 = verf.f32.pop %v3263
      %v3296 = verf.f32.pop %v3264
      %v3297 = verf.f32.pop %v3265
      %v3298 = verf.f32.pop %v3266
      %v3299 = verf.f32.pop %v3267
      %v3300 = verf.f32.pop %v3268
      %v3301 = verf.f32.pop %v3269
      %v3302 = verf.f32.pop %v3270
      %v3303 = verf.f32.pop %v3271
      %v3304 = verf.f32.pop %v3272
      %v3305 = verf.f32.pop %v3273
      %v3306 = verf.f32.pop %v3274
      %v3307 = verf.f32.pop %v3275
      %v3308 = verf.f32.pop %v3276
      %v3309 = verf.f32.pop %v3277
      %v3310 = verf.f32.pop %v3278
      %v3311 = verf.f32.pop %v3279
      %v3312 = verf.f32.pop %v3280
      %v3313 = verf.f32.pop %v3281
      %v3314 = verf.f32.pop %v3282
      %v3315 = vadd.f32 %v3283, 1.0
      %v3316 = vadd.f32 %v3284, 1.0
      %v3317 = vadd.f32 %v3285, 1.0
      %v3318 = vadd.f32 %v3286, 1.0
      %v3319 = vadd.f32 %v3287, 1.0
      %v3320 = vadd.f32 %v3288, 1.0
      %v3321 = vadd.f32 %v3289, 1.0
      %v3322 = vadd.f32 %v3290, 1.0
      %v3323 = vadd.f32 %v3291, 1.0
      %v3324 = vadd.f32 %v3292, 1.0
      %v3325 = vadd.f32 %v3293, 1.0
      %v3326 = vadd.f32 %v3294, 1.0
      %v3327 = vadd.f32 %v3295, 1.0
      %v3328 = vadd.f32 %v3296, 1.0
      %v3329 = vadd.f32 %v3297, 1.0
      %v3330 = vadd.f32 %v3298, 1.0
      %v3331 = vadd.f32 %v3299, 1.0
      %v3332 = vadd.f32 %v3300, 1.0
      %v3333 = vadd.f32 %v3301, 1.0
      %v3334 = vadd.f32 %v3302, 1.0
      %v3335 = vadd.f32 %v3303, 1.0
      %v3336 = vadd.f32 %v3304, 1.0
      %v3337 = vadd.f32 %v3305, 1.0
      %v3338 = vadd.f32 %v3306, 1.0
      %v3339 = vadd.f32 %v3307, 1.0
      %v3340 = vadd.f32 %v3308, 1.0
      %v3341 = vadd.f32 %v3309, 1.0
      %v3342 = vadd.f32 %v3310, 1.0
      %v3343 = vadd.f32 %v3311, 1.0
      %v3344 = vadd.f32 %v3312, 1.0
      %v3345 = vadd.f32 %v3313, 1.0
      %v3346 = vadd.f32 %v3314, 1.0
      %v3347 = vmul.f32 %v3219, %v3315
      %v3348 = vmul.f32 %v3220, %v3316
      %v3349 = vmul.f32 %v3221, %v3317
      %v3350 = vmul.f32 %v3222, %v3318
      %v3351 = vmul.f32 %v3223, %v3319
      %v3352 = vmul.f32 %v3224, %v3320
      %v3353 = vmul.f32 %v3225, %v3321
      %v3354 = vmul.f32 %v3226, %v3322
      %v3355 = vmul.f32 %v3227, %v3323
      %v3356 = vmul.f32 %v3228, %v3324
      %v3357 = vmul.f32 %v3229, %v3325
      %v3358 = vmul.f32 %v3230, %v3326
      %v3359 = vmul.f32 %v3231, %v3327
      %v3360 = vmul.f32 %v3232, %v3328
      %v3361 = vmul.f32 %v3233, %v3329
      %v3362 = vmul.f32 %v3234, %v3330
      %v3363 = vmul.f32 %v3235, %v3331
      %v3364 = vmul.f32 %v3236, %v3332
      %v3365 = vmul.f32 %v3237, %v3333
      %v3366 = vmul.f32 %v3238, %v3334
      %v3367 = vmul.f32 %v3239, %v3335
      %v3368 = vmul.f32 %v3240, %v3336
      %v3369 = vmul.f32 %v3241, %v3337
      %v3370 = vmul.f32 %v3242, %v3338
      %v3371 = vmul.f32 %v3243, %v3339
      %v3372 = vmul.f32 %v3244, %v3340
      %v3373 = vmul.f32 %v3245, %v3341
      %v3374 = vmul.f32 %v3246, %v3342
      %v3375 = vmul.f32 %v3247, %v3343
      %v3376 = vmul.f32 %v3248, %v3344
      %v3377 = vmul.f32 %v3249, %v3345
      %v3378 = vmul.f32 %v3250, %v3346
      %v3379 = vld [vmem:[%s7] sm:$0xf]
      %v3380 = vld [vmem:[%s7 + $0x4] sm:$0xf]
      %v3381 = vld [vmem:[%s7 + $0x8] sm:$0xf]
      %v3382 = vld [vmem:[%s7 + $0xc] sm:$0xf]
      %v3383 = vld [vmem:[%s7 + $0x10] sm:$0xf]
      %v3384 = vld [vmem:[%s7 + $0x14] sm:$0xf]
      %v3385 = vld [vmem:[%s7 + $0x18] sm:$0xf]
      %v3386 = vld [vmem:[%s7 + $0x1c] sm:$0xf]
      %v3387 = vld [vmem:[%s8] sm:$0xff]
      %v3388 = vld [vmem:[%s8 + $0x8] sm:$0xff]
      %v3389 = vld [vmem:[%s8 + $0x10] sm:$0xff]
      %v3390 = vld [vmem:[%s8 + $0x18] sm:$0xff]
      %v3391 = vld [vmem:[%s8 + $0x20] sm:$0xff]
      %v3392 = vld [vmem:[%s8 + $0x28] sm:$0xff]
      %v3393 = vld [vmem:[%s8 + $0x30] sm:$0xff]
      %v3394 = vld [vmem:[%s8 + $0x38] sm:$0xff]
      %v3395 = vpack.c.bf16 %v3349, %v3347
      %v3396 = vpack.c.bf16 %v3350, %v3348
      %v3397 = vpack.c.bf16 %v3353, %v3351
      %v3398 = vpack.c.bf16 %v3354, %v3352
      %v3399 = vpack.c.bf16 %v3357, %v3355
      %v3400 = vpack.c.bf16 %v3358, %v3356
      %v3401 = vpack.c.bf16 %v3361, %v3359
      %v3402 = vpack.c.bf16 %v3362, %v3360
      %v3403 = vpack.c.bf16 %v3365, %v3363
      %v3404 = vpack.c.bf16 %v3366, %v3364
      %v3405 = vpack.c.bf16 %v3369, %v3367
      %v3406 = vpack.c.bf16 %v3370, %v3368
      %v3407 = vpack.c.bf16 %v3373, %v3371
      %v3408 = vpack.c.bf16 %v3374, %v3372
      %v3409 = vpack.c.bf16 %v3377, %v3375
      %v3410 = vpack.c.bf16 %v3378, %v3376
      %3412 = vset.pattern.permute.xlu0 0
      %3413 = vperm.xlu0 %3412, %v3387
      %v3414 = vpop.permute.xlu0 %3413
      %3417 = vset.pattern.permute.xlu0 0
      %3418 = vperm.xlu0 %3417, %v3388
      %v3419 = vpop.permute.xlu0 %3418
      %3422 = vset.pattern.permute.xlu0 0
      %3423 = vperm.xlu0 %3422, %v3389
      %v3424 = vpop.permute.xlu0 %3423
      %3427 = vset.pattern.permute.xlu0 0
      %3428 = vperm.xlu0 %3427, %v3390
      %v3429 = vpop.permute.xlu0 %3428
      %3432 = vset.pattern.permute.xlu0 0
      %3433 = vperm.xlu0 %3432, %v3391
      %v3434 = vpop.permute.xlu0 %3433
      %3437 = vset.pattern.permute.xlu0 0
      %3438 = vperm.xlu0 %3437, %v3392
      %v3439 = vpop.permute.xlu0 %3438
      %3442 = vset.pattern.permute.xlu0 0
      %3443 = vperm.xlu0 %3442, %v3393
      %v3444 = vpop.permute.xlu0 %3443
      %3447 = vset.pattern.permute.xlu0 0
      %3448 = vperm.xlu0 %3447, %v3394
      %v3449 = vpop.permute.xlu0 %3448
      %v3459 = vunpack.c.l.b16 %v3379
      %v3460 = vunpack.c.l.b16 %v3380
      %v3461 = vunpack.c.l.b16 %v3381
      %v3462 = vunpack.c.l.b16 %v3382
      %v3463 = vunpack.c.l.b16 %v3383
      %v3464 = vunpack.c.l.b16 %v3384
      %v3465 = vunpack.c.l.b16 %v3385
      %v3466 = vunpack.c.l.b16 %v3386
      %v3467 = vpack.c.b16 %v3460, %v3459
      %v3468 = vpack.c.b16 %v3462, %v3461
      %v3469 = vpack.c.b16 %v3464, %v3463
      %v3470 = vpack.c.b16 %v3466, %v3465
      %3475 = vmatprep.subr.bf16.mxu0 %v3396
      %3476 = vmatpush1.bf16.msra.mxu0 %v3395
      %3477 = vmatprep.subr.bf16.mxu0 %v3398
      %3478 = vmatpush1.bf16.msra.mxu0 %v3397
      %3479 = vmatprep.subr.bf16.mxu0 %v3400
      %3480 = vmatpush1.bf16.msra.mxu0 %v3399
      %3481 = vmatprep.subr.bf16.mxu0 %v3402
      %3482 = vmatpush1.bf16.msra.mxu0 %v3401
      %3483 = vmatprep.subr.bf16.mxu0 %v3404
      %3484 = vmatpush1.bf16.msra.mxu0 %v3403
      %3485 = vmatprep.subr.bf16.mxu0 %v3406
      %3486 = vmatpush1.bf16.msra.mxu0 %v3405
      %3487 = vmatprep.subr.bf16.mxu0 %v3408
      %3488 = vmatpush1.bf16.msra.mxu0 %v3407
      %3489 = vmatprep.subr.bf16.mxu0 %v3410
      %3490 = vmatpush1.bf16.msra.mxu0 %v3409
      %3491 = vmatprep.subr.bf16.mxu0 0
      %3492 = vmatpush1.bf16.msra.mxu0 0
      %3493 = vmatprep.subr.bf16.mxu0 0
      %3494 = vmatpush1.bf16.msra.mxu0 0
      %3495 = vmatprep.subr.bf16.mxu0 0
      %3496 = vmatpush1.bf16.msra.mxu0 0
      %3497 = vmatprep.subr.bf16.mxu0 0
      %3498 = vmatpush1.bf16.msra.mxu0 0
      %3499 = vmatprep.subr.bf16.mxu0 0
      %3500 = vmatpush1.bf16.msra.mxu0 0
      %3501 = vmatprep.subr.bf16.mxu0 0
      %3502 = vmatpush1.bf16.msra.mxu0 0
      %3503 = vmatprep.subr.bf16.mxu0 0
      %3504 = vmatpush1.bf16.msra.mxu0 0
      %3505 = vmatprep.subr.bf16.mxu0 0
      %3506 = vmatpush1.bf16.msra.mxu0 0
      %3507 = vmatprep.mubr.bf16.mxu0 0
      %3508 = vmatmul.mubr.bf16.gmra.mrb[0].mxu0 %v3467
      %v3509 = vpop.f32.mrb[0].mxu0
      %v3510 = vadd.f32 %v3414, %v3509
      %v3511 = vpop.f32.mrb[0].mxu0
      %v3512 = vadd.f32 %v3414, %v3511
      %v3513 = vpop.f32.mrb[0].mxu0
      %v3514 = vadd.f32 %v3419, %v3513
      %v3515 = vpop.f32.mrb[0].mxu0
      %v3516 = vadd.f32 %v3419, %v3515
      %3517 = vmatprep.mubr.bf16.mxu0 0
      %3518 = vmatmul.mubr.bf16.gmra.mrb[0].mxu0 %v3468
      %v3519 = vpop.f32.mrb[0].mxu0
      %v3520 = vadd.f32 %v3424, %v3519
      %v3521 = vpop.f32.mrb[0].mxu0
      %v3522 = vadd.f32 %v3424, %v3521
      %v3523 = vpop.f32.mrb[0].mxu0
      %v3524 = vadd.f32 %v3429, %v3523
      %v3525 = vpop.f32.mrb[0].mxu0
      %v3526 = vadd.f32 %v3429, %v3525
      %3527 = vmatprep.mubr.bf16.mxu0 0
      %3528 = vmatmul.mubr.bf16.gmra.mrb[0].mxu0 %v3469
      %v3529 = vpop.f32.mrb[0].mxu0
      %v3530 = vadd.f32 %v3434, %v3529
      %v3531 = vpop.f32.mrb[0].mxu0
      %v3532 = vadd.f32 %v3434, %v3531
      %v3533 = vpop.f32.mrb[0].mxu0
      %v3534 = vadd.f32 %v3439, %v3533
      %v3535 = vpop.f32.mrb[0].mxu0
      %v3536 = vadd.f32 %v3439, %v3535
      %3537 = vmatprep.mubr.bf16.mxu0 0
      %3538 = vmatmul.mubr.bf16.gmra.mrb[0].mxu0 %v3470
      %v3539 = vpop.f32.mrb[0].mxu0
      %v3540 = vadd.f32 %v3444, %v3539
      %v3541 = vpop.f32.mrb[0].mxu0
      %v3542 = vadd.f32 %v3444, %v3541
      %v3543 = vpop.f32.mrb[0].mxu0
      %v3544 = vadd.f32 %v3449, %v3543
      %v3545 = vpop.f32.mrb[0].mxu0
      %v3546 = vadd.f32 %v3449, %v3545
      %3547 = vdwg.mxu0
      %v3548 = vadd.f32 %v3510, %v3512
      %3549 = vadd.xlane.f32.xlu0 %v3548
      %v3550 = vpop.xlane.xlu0 %3549
      %v3551 = vadd.f32 %v3514, %v3516
      %3552 = vadd.xlane.f32.xlu0 %v3551
      %v3553 = vpop.xlane.xlu0 %3552
      %v3554 = vadd.f32 %v3520, %v3522
      %3555 = vadd.xlane.f32.xlu0 %v3554
      %v3556 = vpop.xlane.xlu0 %3555
      %v3557 = vadd.f32 %v3524, %v3526
      %3558 = vadd.xlane.f32.xlu0 %v3557
      %v3559 = vpop.xlane.xlu0 %3558
      %v3560 = vadd.f32 %v3530, %v3532
      %3561 = vadd.xlane.f32.xlu0 %v3560
      %v3562 = vpop.xlane.xlu0 %3561
      %v3563 = vadd.f32 %v3534, %v3536
      %3564 = vadd.xlane.f32.xlu0 %v3563
      %v3565 = vpop.xlane.xlu0 %3564
      %v3566 = vadd.f32 %v3540, %v3542
      %3567 = vadd.xlane.f32.xlu0 %v3566
      %v3568 = vpop.xlane.xlu0 %3567
      %v3569 = vadd.f32 %v3544, %v3546
      %3570 = vadd.xlane.f32.xlu0 %v3569
      %v3571 = vpop.xlane.xlu0 %3570
      %v3572 = vmul.f32 %v3550, %v1184
      %v3573 = vmul.f32 %v3553, %v1184
      %v3574 = vmul.f32 %v3556, %v1184
      %v3575 = vmul.f32 %v3559, %v1184
      %v3576 = vmul.f32 %v3562, %v1184
      %v3577 = vmul.f32 %v3565, %v1184
      %v3578 = vmul.f32 %v3568, %v1184
      %v3579 = vmul.f32 %v3571, %v1184
      %v3580 = vsub.f32 %v3510, %v3572
      %v3581 = vsub.f32 %v3512, %v3572
      %v3582 = vsub.f32 %v3514, %v3573
      %v3583 = vsub.f32 %v3516, %v3573
      %v3584 = vsub.f32 %v3520, %v3574
      %v3585 = vsub.f32 %v3522, %v3574
      %v3586 = vsub.f32 %v3524, %v3575
      %v3587 = vsub.f32 %v3526, %v3575
      %v3588 = vsub.f32 %v3530, %v3576
      %v3589 = vsub.f32 %v3532, %v3576
      %v3590 = vsub.f32 %v3534, %v3577
      %v3591 = vsub.f32 %v3536, %v3577
      %v3592 = vsub.f32 %v3540, %v3578
      %v3593 = vsub.f32 %v3542, %v3578
      %v3594 = vsub.f32 %v3544, %v3579
      %v3595 = vsub.f32 %v3546, %v3579
      %v3596 = vmul.f32 %v3580, %v3580
      %v3597 = vmul.f32 %v3581, %v3581
      %v3598 = vmul.f32 %v3582, %v3582
      %v3599 = vmul.f32 %v3583, %v3583
      %v3600 = vmul.f32 %v3584, %v3584
      %v3601 = vmul.f32 %v3585, %v3585
      %v3602 = vmul.f32 %v3586, %v3586
      %v3603 = vmul.f32 %v3587, %v3587
      %v3604 = vmul.f32 %v3588, %v3588
      %v3605 = vmul.f32 %v3589, %v3589
      %v3606 = vmul.f32 %v3590, %v3590
      %v3607 = vmul.f32 %v3591, %v3591
      %v3608 = vmul.f32 %v3592, %v3592
      %v3609 = vmul.f32 %v3593, %v3593
      %v3610 = vmul.f32 %v3594, %v3594
      %v3611 = vmul.f32 %v3595, %v3595
      %v3612 = vadd.f32 %v3596, %v3597
      %3613 = vadd.xlane.f32.xlu0 %v3612
      %v3614 = vpop.xlane.xlu0 %3613
      %v3615 = vadd.f32 %v3598, %v3599
      %3616 = vadd.xlane.f32.xlu0 %v3615
      %v3617 = vpop.xlane.xlu0 %3616
      %v3618 = vadd.f32 %v3600, %v3601
      %3619 = vadd.xlane.f32.xlu0 %v3618
      %v3620 = vpop.xlane.xlu0 %3619
      %v3621 = vadd.f32 %v3602, %v3603
      %3622 = vadd.xlane.f32.xlu0 %v3621
      %v3623 = vpop.xlane.xlu0 %3622
      %v3624 = vadd.f32 %v3604, %v3605
      %3625 = vadd.xlane.f32.xlu0 %v3624
      %v3626 = vpop.xlane.xlu0 %3625
      %v3627 = vadd.f32 %v3606, %v3607
      %3628 = vadd.xlane.f32.xlu0 %v3627
      %v3629 = vpop.xlane.xlu0 %3628
      %v3630 = vadd.f32 %v3608, %v3609
      %3631 = vadd.xlane.f32.xlu0 %v3630
      %v3632 = vpop.xlane.xlu0 %3631
      %v3633 = vadd.f32 %v3610, %v3611
      %3634 = vadd.xlane.f32.xlu0 %v3633
      %v3635 = vpop.xlane.xlu0 %3634
      %v3636 = vmul.f32 %v3614, %v1184
      %v3637 = vmul.f32 %v3617, %v1184
      %v3638 = vmul.f32 %v3620, %v1184
      %v3639 = vmul.f32 %v3623, %v1184
      %v3640 = vmul.f32 %v3626, %v1184
      %v3641 = vmul.f32 %v3629, %v1184
      %v3642 = vmul.f32 %v3632, %v1184
      %v3643 = vmul.f32 %v3635, %v1184
      %v3644 = vadd.f32 %v3636, 1e-05
      %v3645 = vadd.f32 %v3637, 1e-05
      %v3646 = vadd.f32 %v3638, 1e-05
      %v3647 = vadd.f32 %v3639, 1e-05
      %v3648 = vadd.f32 %v3640, 1e-05
      %v3649 = vadd.f32 %v3641, 1e-05
      %v3650 = vadd.f32 %v3642, 1e-05
      %v3651 = vadd.f32 %v3643, 1e-05
      %v3652 = vrsqrt.pop %v3644
      %v3653 = vrsqrt.pop %v3645
      %v3654 = vrsqrt.pop %v3646
      %v3655 = vrsqrt.pop %v3647
      %v3656 = vrsqrt.pop %v3648
      %v3657 = vrsqrt.pop %v3649
      %v3658 = vrsqrt.pop %v3650
      %v3659 = vrsqrt.pop %v3651
      %v3660 = vmul.f32 %v3580, %v3652
      %v3661 = vmul.f32 %v3581, %v3652
      %v3662 = vmul.f32 %v3582, %v3653
      %v3663 = vmul.f32 %v3583, %v3653
      %v3664 = vmul.f32 %v3584, %v3654
      %v3665 = vmul.f32 %v3585, %v3654
      %v3666 = vmul.f32 %v3586, %v3655
      %v3667 = vmul.f32 %v3587, %v3655
      %v3668 = vmul.f32 %v3588, %v3656
      %v3669 = vmul.f32 %v3589, %v3656
      %v3670 = vmul.f32 %v3590, %v3657
      %v3671 = vmul.f32 %v3591, %v3657
      %v3672 = vmul.f32 %v3592, %v3658
      %v3673 = vmul.f32 %v3593, %v3658
      %v3674 = vmul.f32 %v3594, %v3659
      %v3675 = vmul.f32 %v3595, %v3659
      %v3676 = vmul.f32 %v3660, 0.5
      %v3677 = vmul.f32 %v3661, 0.5
      %v3678 = vmul.f32 %v3662, 0.5
      %v3679 = vmul.f32 %v3663, 0.5
      %v3680 = vmul.f32 %v3664, 0.5
      %v3681 = vmul.f32 %v3665, 0.5
      %v3682 = vmul.f32 %v3666, 0.5
      %v3683 = vmul.f32 %v3667, 0.5
      %v3684 = vmul.f32 %v3668, 0.5
      %v3685 = vmul.f32 %v3669, 0.5
      %v3686 = vmul.f32 %v3670, 0.5
      %v3687 = vmul.f32 %v3671, 0.5
      %v3688 = vmul.f32 %v3672, 0.5
      %v3689 = vmul.f32 %v3673, 0.5
      %v3690 = vmul.f32 %v3674, 0.5
      %v3691 = vmul.f32 %v3675, 0.5
      %v3692 = vmul.f32 %v3660, 0.70710677
      %v3693 = vmul.f32 %v3661, 0.70710677
      %v3694 = vmul.f32 %v3662, 0.70710677
      %v3695 = vmul.f32 %v3663, 0.70710677
      %v3696 = vmul.f32 %v3664, 0.70710677
      %v3697 = vmul.f32 %v3665, 0.70710677
      %v3698 = vmul.f32 %v3666, 0.70710677
      %v3699 = vmul.f32 %v3667, 0.70710677
      %v3700 = vmul.f32 %v3668, 0.70710677
      %v3701 = vmul.f32 %v3669, 0.70710677
      %v3702 = vmul.f32 %v3670, 0.70710677
      %v3703 = vmul.f32 %v3671, 0.70710677
      %v3704 = vmul.f32 %v3672, 0.70710677
      %v3705 = vmul.f32 %v3673, 0.70710677
      %v3706 = vmul.f32 %v3674, 0.70710677
      %v3707 = vmul.f32 %v3675, 0.70710677
      %v3708 = verf.f32.pop %v3692
      %v3709 = verf.f32.pop %v3693
      %v3710 = verf.f32.pop %v3694
      %v3711 = verf.f32.pop %v3695
      %v3712 = verf.f32.pop %v3696
      %v3713 = verf.f32.pop %v3697
      %v3714 = verf.f32.pop %v3698
      %v3715 = verf.f32.pop %v3699
      %v3716 = verf.f32.pop %v3700
      %v3717 = verf.f32.pop %v3701
      %v3718 = verf.f32.pop %v3702
      %v3719 = verf.f32.pop %v3703
      %v3720 = verf.f32.pop %v3704
      %v3721 = verf.f32.pop %v3705
      %v3722 = verf.f32.pop %v3706
      %v3723 = verf.f32.pop %v3707
      %v3724 = vadd.f32 %v3708, 1.0
      %v3725 = vadd.f32 %v3709, 1.0
      %v3726 = vadd.f32 %v3710, 1.0
      %v3727 = vadd.f32 %v3711, 1.0
      %v3728 = vadd.f32 %v3712, 1.0
      %v3729 = vadd.f32 %v3713, 1.0
      %v3730 = vadd.f32 %v3714, 1.0
      %v3731 = vadd.f32 %v3715, 1.0
      %v3732 = vadd.f32 %v3716, 1.0
      %v3733 = vadd.f32 %v3717, 1.0
      %v3734 = vadd.f32 %v3718, 1.0
      %v3735 = vadd.f32 %v3719, 1.0
      %v3736 = vadd.f32 %v3720, 1.0
      %v3737 = vadd.f32 %v3721, 1.0
      %v3738 = vadd.f32 %v3722, 1.0
      %v3739 = vadd.f32 %v3723, 1.0
      %v3740 = vmul.f32 %v3676, %v3724
      %v3741 = vmul.f32 %v3677, %v3725
      %v3742 = vmul.f32 %v3678, %v3726
      %v3743 = vmul.f32 %v3679, %v3727
      %v3744 = vmul.f32 %v3680, %v3728
      %v3745 = vmul.f32 %v3681, %v3729
      %v3746 = vmul.f32 %v3682, %v3730
      %v3747 = vmul.f32 %v3683, %v3731
      %v3748 = vmul.f32 %v3684, %v3732
      %v3749 = vmul.f32 %v3685, %v3733
      %v3750 = vmul.f32 %v3686, %v3734
      %v3751 = vmul.f32 %v3687, %v3735
      %v3752 = vmul.f32 %v3688, %v3736
      %v3753 = vmul.f32 %v3689, %v3737
      %v3754 = vmul.f32 %v3690, %v3738
      %v3755 = vmul.f32 %v3691, %v3739
      %3756 = vst [vmem:[%s529] sm:$0xff] %v3740
      %3757 = vst [vmem:[%s529 + $0x8] sm:$0xff] %v3741
      %3758 = vst [vmem:[%s529 + $0x10] sm:$0xff] %v3742
      %3759 = vst [vmem:[%s529 + $0x18] sm:$0xff] %v3743
      %3760 = vst [vmem:[%s529 + $0x20] sm:$0xff] %v3744
      %3761 = vst [vmem:[%s529 + $0x28] sm:$0xff] %v3745
      %3762 = vst [vmem:[%s529 + $0x30] sm:$0xff] %v3746
      %3763 = vst [vmem:[%s529 + $0x38] sm:$0xff] %v3747
      %3764 = vst [vmem:[%s529 + $0x40] sm:$0xff] %v3748
      %3765 = vst [vmem:[%s529 + $0x48] sm:$0xff] %v3749
      %3766 = vst [vmem:[%s529 + $0x50] sm:$0xff] %v3750
      %3767 = vst [vmem:[%s529 + $0x58] sm:$0xff] %v3751
      %3768 = vst [vmem:[%s529 + $0x60] sm:$0xff] %v3752
      %3769 = vst [vmem:[%s529 + $0x68] sm:$0xff] %v3753
      %3770 = vst [vmem:[%s529 + $0x70] sm:$0xff] %v3754
      %3771 = vst [vmem:[%s529 + $0x78] sm:$0xff] %v3755
      %v3772 = vld [vmem:[%s9] sm:$0xf]
      %v3773 = vld [vmem:[%s9 + $0x4] sm:$0xf]
      %v3774 = vld [vmem:[%s9 + $0x8] sm:$0xf]
      %v3775 = vld [vmem:[%s9 + $0xc] sm:$0xf]
      %v3776 = vld [vmem:[%s9 + $0x10] sm:$0xf]
      %v3777 = vld [vmem:[%s9 + $0x14] sm:$0xf]
      %v3778 = vld [vmem:[%s9 + $0x18] sm:$0xf]
      %v3779 = vld [vmem:[%s9 + $0x1c] sm:$0xf]
      %v3780 = vld [vmem:[%s10] sm:$0xff]
      %v3781 = vld [vmem:[%s10 + $0x8] sm:$0xff]
      %v3782 = vld [vmem:[%s10 + $0x10] sm:$0xff]
      %v3783 = vld [vmem:[%s10 + $0x18] sm:$0xff]
      %v3784 = vld [vmem:[%s10 + $0x20] sm:$0xff]
      %v3785 = vld [vmem:[%s10 + $0x28] sm:$0xff]
      %v3786 = vld [vmem:[%s10 + $0x30] sm:$0xff]
      %v3787 = vld [vmem:[%s10 + $0x38] sm:$0xff]
      %v3788 = vpack.c.bf16 %v3742, %v3740
      %v3789 = vpack.c.bf16 %v3743, %v3741
      %v3790 = vpack.c.bf16 %v3746, %v3744
      %v3791 = vpack.c.bf16 %v3747, %v3745
      %v3792 = vpack.c.bf16 %v3750, %v3748
      %v3793 = vpack.c.bf16 %v3751, %v3749
      %v3794 = vpack.c.bf16 %v3754, %v3752
      %v3795 = vpack.c.bf16 %v3755, %v3753
      %3797 = vset.pattern.permute.xlu0 0
      %3798 = vperm.xlu0 %3797, %v3780
      %v3799 = vpop.permute.xlu0 %3798
      %3802 = vset.pattern.permute.xlu0 0
      %3803 = vperm.xlu0 %3802, %v3781
      %v3804 = vpop.permute.xlu0 %3803
      %3807 = vset.pattern.permute.xlu0 0
      %3808 = vperm.xlu0 %3807, %v3782
      %v3809 = vpop.permute.xlu0 %3808
      %3812 = vset.pattern.permute.xlu0 0
      %3813 = vperm.xlu0 %3812, %v3783
      %v3814 = vpop.permute.xlu0 %3813
      %3817 = vset.pattern.permute.xlu0 0
      %3818 = vperm.xlu0 %3817, %v3784
      %v3819 = vpop.permute.xlu0 %3818
      %3822 = vset.pattern.permute.xlu0 0
      %3823 = vperm.xlu0 %3822, %v3785
      %v3824 = vpop.permute.xlu0 %3823
      %3827 = vset.pattern.permute.xlu0 0
      %3828 = vperm.xlu0 %3827, %v3786
      %v3829 = vpop.permute.xlu0 %3828
      %3832 = vset.pattern.permute.xlu0 0
      %3833 = vperm.xlu0 %3832, %v3787
      %v3834 = vpop.permute.xlu0 %3833
      %v3844 = vunpack.c.l.b16 %v3772
      %v3845 = vunpack.c.l.b16 %v3773
      %v3846 = vunpack.c.l.b16 %v3774
      %v3847 = vunpack.c.l.b16 %v3775
      %v3848 = vunpack.c.l.b16 %v3776
      %v3849 = vunpack.c.l.b16 %v3777
      %v3850 = vunpack.c.l.b16 %v3778
      %v3851 = vunpack.c.l.b16 %v3779
      %v3852 = vpack.c.b16 %v3845, %v3844
      %v3853 = vpack.c.b16 %v3847, %v3846
      %v3854 = vpack.c.b16 %v3849, %v3848
      %v3855 = vpack.c.b16 %v3851, %v3850
      %vm3856 = vcmask 523264
      %v3858 = vsel %vm3856, %v3852, 0
      %v3861 = vsel %vm3856, %v3853, 0
      %v3864 = vsel %vm3856, %v3854, 0
      %v3867 = vsel %vm3856, %v3855, 0
      %3869 = vmatprep.subr.bf16.mxu0 %v3789
      %3870 = vmatpush1.bf16.msra.mxu0 %v3788
      %3871 = vmatprep.subr.bf16.mxu0 %v3791
      %3872 = vmatpush1.bf16.msra.mxu0 %v3790
      %3873 = vmatprep.subr.bf16.mxu0 %v3793
      %3874 = vmatpush1.bf16.msra.mxu0 %v3792
      %3875 = vmatprep.subr.bf16.mxu0 %v3795
      %3876 = vmatpush1.bf16.msra.mxu0 %v3794
      %3877 = vmatprep.subr.bf16.mxu0 0
      %3878 = vmatpush1.bf16.msra.mxu0 0
      %3879 = vmatprep.subr.bf16.mxu0 0
      %3880 = vmatpush1.bf16.msra.mxu0 0
      %3881 = vmatprep.subr.bf16.mxu0 0
      %3882 = vmatpush1.bf16.msra.mxu0 0
      %3883 = vmatprep.subr.bf16.mxu0 0
      %3884 = vmatpush1.bf16.msra.mxu0 0
      %3885 = vmatprep.subr.bf16.mxu0 0
      %3886 = vmatpush1.bf16.msra.mxu0 0
      %3887 = vmatprep.subr.bf16.mxu0 0
      %3888 = vmatpush1.bf16.msra.mxu0 0
      %3889 = vmatprep.subr.bf16.mxu0 0
      %3890 = vmatpush1.bf16.msra.mxu0 0
      %3891 = vmatprep.subr.bf16.mxu0 0
      %3892 = vmatpush1.bf16.msra.mxu0 0
      %3893 = vmatprep.subr.bf16.mxu0 0
      %3894 = vmatpush1.bf16.msra.mxu0 0
      %3895 = vmatprep.subr.bf16.mxu0 0
      %3896 = vmatpush1.bf16.msra.mxu0 0
      %3897 = vmatprep.subr.bf16.mxu0 0
      %3898 = vmatpush1.bf16.msra.mxu0 0
      %3899 = vmatprep.subr.bf16.mxu0 0
      %3900 = vmatpush1.bf16.msra.mxu0 0
      %3901 = vmatprep.mubr.bf16.mxu0 0
      %3902 = vmatmul.mubr.bf16.gmra.mrb[0].mxu0 %v3858
      %v3903 = vpop.f32.mrb[0].mxu0
      %v3904 = vadd.f32 %v3799, %v3903
      %v3905 = vpop.f32.mrb[0].mxu0
      %v3906 = vadd.f32 %v3799, %v3905
      %v3907 = vpop.f32.mrb[0].mxu0
      %v3908 = vadd.f32 %v3804, %v3907
      %v3909 = vpop.f32.mrb[0].mxu0
      %v3910 = vadd.f32 %v3804, %v3909
      %3911 = vmatprep.mubr.bf16.mxu0 0
      %3912 = vmatmul.mubr.bf16.gmra.mrb[0].mxu0 %v3861
      %v3913 = vpop.f32.mrb[0].mxu0
      %v3914 = vadd.f32 %v3809, %v3913
      %v3915 = vpop.f32.mrb[0].mxu0
      %v3916 = vadd.f32 %v3809, %v3915
      %v3917 = vpop.f32.mrb[0].mxu0
      %v3918 = vadd.f32 %v3814, %v3917
      %v3919 = vpop.f32.mrb[0].mxu0
      %v3920 = vadd.f32 %v3814, %v3919
      %3921 = vmatprep.mubr.bf16.mxu0 0
      %3922 = vmatmul.mubr.bf16.gmra.mrb[0].mxu0 %v3864
      %v3923 = vpop.f32.mrb[0].mxu0
      %v3924 = vadd.f32 %v3819, %v3923
      %v3925 = vpop.f32.mrb[0].mxu0
      %v3926 = vadd.f32 %v3819, %v3925
      %v3927 = vpop.f32.mrb[0].mxu0
      %v3928 = vadd.f32 %v3824, %v3927
      %v3929 = vpop.f32.mrb[0].mxu0
      %v3930 = vadd.f32 %v3824, %v3929
      %3931 = vmatprep.mubr.bf16.mxu0 0
      %3932 = vmatmul.mubr.bf16.gmra.mrb[0].mxu0 %v3867
      %v3933 = vpop.f32.mrb[0].mxu0
      %v3934 = vadd.f32 %v3829, %v3933
      %v3935 = vpop.f32.mrb[0].mxu0
      %v3936 = vadd.f32 %v3829, %v3935
      %v3937 = vpop.f32.mrb[0].mxu0
      %v3938 = vadd.f32 %v3834, %v3937
      %v3939 = vpop.f32.mrb[0].mxu0
      %v3940 = vadd.f32 %v3834, %v3939
      %3941 = vdwg.mxu0
      %v3942 = vadd.f32 %v3904, %v3906
      %3943 = vadd.xlane.f32.xlu0 %v3942
      %v3944 = vpop.xlane.xlu0 %3943
      %v3945 = vadd.f32 %v3908, %v3910
      %3946 = vadd.xlane.f32.xlu0 %v3945
      %v3947 = vpop.xlane.xlu0 %3946
      %v3948 = vadd.f32 %v3914, %v3916
      %3949 = vadd.xlane.f32.xlu0 %v3948
      %v3950 = vpop.xlane.xlu0 %3949
      %v3951 = vadd.f32 %v3918, %v3920
      %3952 = vadd.xlane.f32.xlu0 %v3951
      %v3953 = vpop.xlane.xlu0 %3952
      %v3954 = vadd.f32 %v3924, %v3926
      %3955 = vadd.xlane.f32.xlu0 %v3954
      %v3956 = vpop.xlane.xlu0 %3955
      %v3957 = vadd.f32 %v3928, %v3930
      %3958 = vadd.xlane.f32.xlu0 %v3957
      %v3959 = vpop.xlane.xlu0 %3958
      %v3960 = vadd.f32 %v3934, %v3936
      %3961 = vadd.xlane.f32.xlu0 %v3960
      %v3962 = vpop.xlane.xlu0 %3961
      %v3963 = vadd.f32 %v3938, %v3940
      %3964 = vadd.xlane.f32.xlu0 %v3963
      %v3965 = vpop.xlane.xlu0 %3964
      %v3966 = vmul.f32 %v3944, %v1184
      %v3967 = vmul.f32 %v3947, %v1184
      %v3968 = vmul.f32 %v3950, %v1184
      %v3969 = vmul.f32 %v3953, %v1184
      %v3970 = vmul.f32 %v3956, %v1184
      %v3971 = vmul.f32 %v3959, %v1184
      %v3972 = vmul.f32 %v3962, %v1184
      %v3973 = vmul.f32 %v3965, %v1184
      %v3974 = vsub.f32 %v3904, %v3966
      %v3975 = vsub.f32 %v3906, %v3966
      %v3976 = vsub.f32 %v3908, %v3967
      %v3977 = vsub.f32 %v3910, %v3967
      %v3978 = vsub.f32 %v3914, %v3968
      %v3979 = vsub.f32 %v3916, %v3968
      %v3980 = vsub.f32 %v3918, %v3969
      %v3981 = vsub.f32 %v3920, %v3969
      %v3982 = vsub.f32 %v3924, %v3970
      %v3983 = vsub.f32 %v3926, %v3970
      %v3984 = vsub.f32 %v3928, %v3971
      %v3985 = vsub.f32 %v3930, %v3971
      %v3986 = vsub.f32 %v3934, %v3972
      %v3987 = vsub.f32 %v3936, %v3972
      %v3988 = vsub.f32 %v3938, %v3973
      %v3989 = vsub.f32 %v3940, %v3973
      %v3990 = vmul.f32 %v3974, %v3974
      %v3991 = vmul.f32 %v3975, %v3975
      %v3992 = vmul.f32 %v3976, %v3976
      %v3993 = vmul.f32 %v3977, %v3977
      %v3994 = vmul.f32 %v3978, %v3978
      %v3995 = vmul.f32 %v3979, %v3979
      %v3996 = vmul.f32 %v3980, %v3980
      %v3997 = vmul.f32 %v3981, %v3981
      %v3998 = vmul.f32 %v3982, %v3982
      %v3999 = vmul.f32 %v3983, %v3983
      %v4000 = vmul.f32 %v3984, %v3984
      %v4001 = vmul.f32 %v3985, %v3985
      %v4002 = vmul.f32 %v3986, %v3986
      %v4003 = vmul.f32 %v3987, %v3987
      %v4004 = vmul.f32 %v3988, %v3988
      %v4005 = vmul.f32 %v3989, %v3989
      %v4006 = vadd.f32 %v3990, %v3991
      %4007 = vadd.xlane.f32.xlu0 %v4006
      %v4008 = vpop.xlane.xlu0 %4007
      %v4009 = vadd.f32 %v3992, %v3993
      %4010 = vadd.xlane.f32.xlu0 %v4009
      %v4011 = vpop.xlane.xlu0 %4010
      %v4012 = vadd.f32 %v3994, %v3995
      %4013 = vadd.xlane.f32.xlu0 %v4012
      %v4014 = vpop.xlane.xlu0 %4013
      %v4015 = vadd.f32 %v3996, %v3997
      %4016 = vadd.xlane.f32.xlu0 %v4015
      %v4017 = vpop.xlane.xlu0 %4016
      %v4018 = vadd.f32 %v3998, %v3999
      %4019 = vadd.xlane.f32.xlu0 %v4018
      %v4020 = vpop.xlane.xlu0 %4019
      %v4021 = vadd.f32 %v4000, %v4001
      %4022 = vadd.xlane.f32.xlu0 %v4021
      %v4023 = vpop.xlane.xlu0 %4022
      %v4024 = vadd.f32 %v4002, %v4003
      %4025 = vadd.xlane.f32.xlu0 %v4024
      %v4026 = vpop.xlane.xlu0 %4025
      %v4027 = vadd.f32 %v4004, %v4005
      %4028 = vadd.xlane.f32.xlu0 %v4027
      %v4029 = vpop.xlane.xlu0 %4028
      %v4030 = vmul.f32 %v4008, %v1184
      %v4031 = vmul.f32 %v4011, %v1184
      %v4032 = vmul.f32 %v4014, %v1184
      %v4033 = vmul.f32 %v4017, %v1184
      %v4034 = vmul.f32 %v4020, %v1184
      %v4035 = vmul.f32 %v4023, %v1184
      %v4036 = vmul.f32 %v4026, %v1184
      %v4037 = vmul.f32 %v4029, %v1184
      %v4038 = vadd.f32 %v4030, 1e-05
      %v4039 = vadd.f32 %v4031, 1e-05
      %v4040 = vadd.f32 %v4032, 1e-05
      %v4041 = vadd.f32 %v4033, 1e-05
      %v4042 = vadd.f32 %v4034, 1e-05
      %v4043 = vadd.f32 %v4035, 1e-05
      %v4044 = vadd.f32 %v4036, 1e-05
      %v4045 = vadd.f32 %v4037, 1e-05
      %v4046 = vrsqrt.pop %v4038
      %v4047 = vrsqrt.pop %v4039
      %v4048 = vrsqrt.pop %v4040
      %v4049 = vrsqrt.pop %v4041
      %v4050 = vrsqrt.pop %v4042
      %v4051 = vrsqrt.pop %v4043
      %v4052 = vrsqrt.pop %v4044
      %v4053 = vrsqrt.pop %v4045
      %v4054 = vmul.f32 %v3974, %v4046
      %v4055 = vmul.f32 %v3975, %v4046
      %v4056 = vmul.f32 %v3976, %v4047
      %v4057 = vmul.f32 %v3977, %v4047
      %v4058 = vmul.f32 %v3978, %v4048
      %v4059 = vmul.f32 %v3979, %v4048
      %v4060 = vmul.f32 %v3980, %v4049
      %v4061 = vmul.f32 %v3981, %v4049
      %v4062 = vmul.f32 %v3982, %v4050
      %v4063 = vmul.f32 %v3983, %v4050
      %v4064 = vmul.f32 %v3984, %v4051
      %v4065 = vmul.f32 %v3985, %v4051
      %v4066 = vmul.f32 %v3986, %v4052
      %v4067 = vmul.f32 %v3987, %v4052
      %v4068 = vmul.f32 %v3988, %v4053
      %v4069 = vmul.f32 %v3989, %v4053
      %v4070 = vmul.f32 %v4054, 0.5
      %v4071 = vmul.f32 %v4055, 0.5
      %v4072 = vmul.f32 %v4056, 0.5
      %v4073 = vmul.f32 %v4057, 0.5
      %v4074 = vmul.f32 %v4058, 0.5
      %v4075 = vmul.f32 %v4059, 0.5
      %v4076 = vmul.f32 %v4060, 0.5
      %v4077 = vmul.f32 %v4061, 0.5
      %v4078 = vmul.f32 %v4062, 0.5
      %v4079 = vmul.f32 %v4063, 0.5
      %v4080 = vmul.f32 %v4064, 0.5
      %v4081 = vmul.f32 %v4065, 0.5
      %v4082 = vmul.f32 %v4066, 0.5
      %v4083 = vmul.f32 %v4067, 0.5
      %v4084 = vmul.f32 %v4068, 0.5
      %v4085 = vmul.f32 %v4069, 0.5
      %v4086 = vmul.f32 %v4054, 0.70710677
      %v4087 = vmul.f32 %v4055, 0.70710677
      %v4088 = vmul.f32 %v4056, 0.70710677
      %v4089 = vmul.f32 %v4057, 0.70710677
      %v4090 = vmul.f32 %v4058, 0.70710677
      %v4091 = vmul.f32 %v4059, 0.70710677
      %v4092 = vmul.f32 %v4060, 0.70710677
      %v4093 = vmul.f32 %v4061, 0.70710677
      %v4094 = vmul.f32 %v4062, 0.70710677
      %v4095 = vmul.f32 %v4063, 0.70710677
      %v4096 = vmul.f32 %v4064, 0.70710677
      %v4097 = vmul.f32 %v4065, 0.70710677
      %v4098 = vmul.f32 %v4066, 0.70710677
      %v4099 = vmul.f32 %v4067, 0.70710677
      %v4100 = vmul.f32 %v4068, 0.70710677
      %v4101 = vmul.f32 %v4069, 0.70710677
      %v4102 = verf.f32.pop %v4086
      %v4103 = verf.f32.pop %v4087
      %v4104 = verf.f32.pop %v4088
      %v4105 = verf.f32.pop %v4089
      %v4106 = verf.f32.pop %v4090
      %v4107 = verf.f32.pop %v4091
      %v4108 = verf.f32.pop %v4092
      %v4109 = verf.f32.pop %v4093
      %v4110 = verf.f32.pop %v4094
      %v4111 = verf.f32.pop %v4095
      %v4112 = verf.f32.pop %v4096
      %v4113 = verf.f32.pop %v4097
      %v4114 = verf.f32.pop %v4098
      %v4115 = verf.f32.pop %v4099
      %v4116 = verf.f32.pop %v4100
      %v4117 = verf.f32.pop %v4101
      %v4118 = vadd.f32 %v4102, 1.0
      %v4119 = vadd.f32 %v4103, 1.0
      %v4120 = vadd.f32 %v4104, 1.0
      %v4121 = vadd.f32 %v4105, 1.0
      %v4122 = vadd.f32 %v4106, 1.0
      %v4123 = vadd.f32 %v4107, 1.0
      %v4124 = vadd.f32 %v4108, 1.0
      %v4125 = vadd.f32 %v4109, 1.0
      %v4126 = vadd.f32 %v4110, 1.0
      %v4127 = vadd.f32 %v4111, 1.0
      %v4128 = vadd.f32 %v4112, 1.0
      %v4129 = vadd.f32 %v4113, 1.0
      %v4130 = vadd.f32 %v4114, 1.0
      %v4131 = vadd.f32 %v4115, 1.0
      %v4132 = vadd.f32 %v4116, 1.0
      %v4133 = vadd.f32 %v4117, 1.0
      %v4134 = vmul.f32 %v4070, %v4118
      %v4135 = vmul.f32 %v4071, %v4119
      %v4136 = vmul.f32 %v4072, %v4120
      %v4137 = vmul.f32 %v4073, %v4121
      %v4138 = vmul.f32 %v4074, %v4122
      %v4139 = vmul.f32 %v4075, %v4123
      %v4140 = vmul.f32 %v4076, %v4124
      %v4141 = vmul.f32 %v4077, %v4125
      %v4142 = vmul.f32 %v4078, %v4126
      %v4143 = vmul.f32 %v4079, %v4127
      %v4144 = vmul.f32 %v4080, %v4128
      %v4145 = vmul.f32 %v4081, %v4129
      %v4146 = vmul.f32 %v4082, %v4130
      %v4147 = vmul.f32 %v4083, %v4131
      %v4148 = vmul.f32 %v4084, %v4132
      %v4149 = vmul.f32 %v4085, %v4133
      %v4150 = vld [vmem:[%s11] sm:$0xf]
      %v4151 = vld [vmem:[%s11 + $0x4] sm:$0xf]
      %v4152 = vld [vmem:[%s11 + $0x8] sm:$0xf]
      %v4153 = vld [vmem:[%s11 + $0xc] sm:$0xf]
      %v4154 = vld [vmem:[%s12] sm:$0xff]
      %v4155 = vld [vmem:[%s12 + $0x8] sm:$0xff]
      %v4156 = vld [vmem:[%s12 + $0x10] sm:$0xff]
      %v4157 = vld [vmem:[%s12 + $0x18] sm:$0xff]
      %v4158 = vpack.c.bf16 %v4136, %v4134
      %v4159 = vpack.c.bf16 %v4137, %v4135
      %v4160 = vpack.c.bf16 %v4140, %v4138
      %v4161 = vpack.c.bf16 %v4141, %v4139
      %v4162 = vpack.c.bf16 %v4144, %v4142
      %v4163 = vpack.c.bf16 %v4145, %v4143
      %v4164 = vpack.c.bf16 %v4148, %v4146
      %v4165 = vpack.c.bf16 %v4149, %v4147
      %4167 = vset.pattern.permute.xlu0 0
      %4168 = vperm.xlu0 %4167, %v4154
      %v4169 = vpop.permute.xlu0 %4168
      %4172 = vset.pattern.permute.xlu0 0
      %4173 = vperm.xlu0 %4172, %v4155
      %v4174 = vpop.permute.xlu0 %4173
      %4177 = vset.pattern.permute.xlu0 0
      %4178 = vperm.xlu0 %4177, %v4156
      %v4179 = vpop.permute.xlu0 %4178
      %4182 = vset.pattern.permute.xlu0 0
      %4183 = vperm.xlu0 %4182, %v4157
      %v4184 = vpop.permute.xlu0 %4183
      %v4190 = vunpack.c.l.b16 %v4150
      %v4191 = vunpack.c.l.b16 %v4151
      %v4192 = vunpack.c.l.b16 %v4152
      %v4193 = vunpack.c.l.b16 %v4153
      %v4194 = vpack.c.b16 %v4191, %v4190
      %v4195 = vpack.c.b16 %v4193, %v4192
      %v4197 = vsel %vm3856, %v4194, 0
      %v4200 = vsel %vm3856, %v4195, 0
      %4202 = vmatprep.subr.bf16.mxu0 %v4159
      %4203 = vmatpush1.bf16.msra.mxu0 %v4158
      %4204 = vmatprep.subr.bf16.mxu0 %v4161
      %4205 = vmatpush1.bf16.msra.mxu0 %v4160
      %4206 = vmatprep.subr.bf16.mxu0 %v4163
      %4207 = vmatpush1.bf16.msra.mxu0 %v4162
      %4208 = vmatprep.subr.bf16.mxu0 %v4165
      %4209 = vmatpush1.bf16.msra.mxu0 %v4164
      %4210 = vmatprep.subr.bf16.mxu0 0
      %4211 = vmatpush1.bf16.msra.mxu0 0
      %4212 = vmatprep.subr.bf16.mxu0 0
      %4213 = vmatpush1.bf16.msra.mxu0 0
      %4214 = vmatprep.subr.bf16.mxu0 0
      %4215 = vmatpush1.bf16.msra.mxu0 0
      %4216 = vmatprep.subr.bf16.mxu0 0
      %4217 = vmatpush1.bf16.msra.mxu0 0
      %4218 = vmatprep.subr.bf16.mxu0 0
      %4219 = vmatpush1.bf16.msra.mxu0 0
      %4220 = vmatprep.subr.bf16.mxu0 0
      %4221 = vmatpush1.bf16.msra.mxu0 0
      %4222 = vmatprep.subr.bf16.mxu0 0
      %4223 = vmatpush1.bf16.msra.mxu0 0
      %4224 = vmatprep.subr.bf16.mxu0 0
      %4225 = vmatpush1.bf16.msra.mxu0 0
      %4226 = vmatprep.subr.bf16.mxu0 0
      %4227 = vmatpush1.bf16.msra.mxu0 0
      %4228 = vmatprep.subr.bf16.mxu0 0
      %4229 = vmatpush1.bf16.msra.mxu0 0
      %4230 = vmatprep.subr.bf16.mxu0 0
      %4231 = vmatpush1.bf16.msra.mxu0 0
      %4232 = vmatprep.subr.bf16.mxu0 0
      %4233 = vmatpush1.bf16.msra.mxu0 0
      %4234 = vmatprep.mubr.bf16.mxu0 0
      %4235 = vmatmul.mubr.bf16.gmra.mrb[0].mxu0 %v4197
      %v4236 = vpop.f32.mrb[0].mxu0
      %v4237 = vadd.f32 %v4169, %v4236
      %v4238 = vpop.f32.mrb[0].mxu0
      %v4239 = vadd.f32 %v4169, %v4238
      %v4240 = vpop.f32.mrb[0].mxu0
      %v4241 = vadd.f32 %v4174, %v4240
      %v4242 = vpop.f32.mrb[0].mxu0
      %v4243 = vadd.f32 %v4174, %v4242
      %4244 = vmatprep.mubr.bf16.mxu0 0
      %4245 = vmatmul.mubr.bf16.gmra.mrb[0].mxu0 %v4200
      %v4246 = vpop.f32.mrb[0].mxu0
      %v4247 = vadd.f32 %v4179, %v4246
      %v4248 = vpop.f32.mrb[0].mxu0
      %v4249 = vadd.f32 %v4179, %v4248
      %v4250 = vpop.f32.mrb[0].mxu0
      %v4251 = vadd.f32 %v4184, %v4250
      %v4252 = vpop.f32.mrb[0].mxu0
      %v4253 = vadd.f32 %v4184, %v4252
      %4254 = vdwg.mxu0
      %v4255 = vadd.f32 %v4237, %v4239
      %4256 = vadd.xlane.f32.xlu0 %v4255
      %v4257 = vpop.xlane.xlu0 %4256
      %v4258 = vadd.f32 %v4241, %v4243
      %4259 = vadd.xlane.f32.xlu0 %v4258
      %v4260 = vpop.xlane.xlu0 %4259
      %v4261 = vadd.f32 %v4247, %v4249
      %4262 = vadd.xlane.f32.xlu0 %v4261
      %v4263 = vpop.xlane.xlu0 %4262
      %v4264 = vadd.f32 %v4251, %v4253
      %4265 = vadd.xlane.f32.xlu0 %v4264
      %v4266 = vpop.xlane.xlu0 %4265
      %v4267 = vmul.f32 %v4257, %v1184
      %v4268 = vmul.f32 %v4260, %v1184
      %v4269 = vmul.f32 %v4263, %v1184
      %v4270 = vmul.f32 %v4266, %v1184
      %v4271 = vsub.f32 %v4237, %v4267
      %v4272 = vsub.f32 %v4239, %v4267
      %v4273 = vsub.f32 %v4241, %v4268
      %v4274 = vsub.f32 %v4243, %v4268
      %v4275 = vsub.f32 %v4247, %v4269
      %v4276 = vsub.f32 %v4249, %v4269
      %v4277 = vsub.f32 %v4251, %v4270
      %v4278 = vsub.f32 %v4253, %v4270
      %v4279 = vmul.f32 %v4271, %v4271
      %v4280 = vmul.f32 %v4272, %v4272
      %v4281 = vmul.f32 %v4273, %v4273
      %v4282 = vmul.f32 %v4274, %v4274
      %v4283 = vmul.f32 %v4275, %v4275
      %v4284 = vmul.f32 %v4276, %v4276
      %v4285 = vmul.f32 %v4277, %v4277
      %v4286 = vmul.f32 %v4278, %v4278
      %v4287 = vadd.f32 %v4279, %v4280
      %4288 = vadd.xlane.f32.xlu0 %v4287
      %v4289 = vpop.xlane.xlu0 %4288
      %v4290 = vadd.f32 %v4281, %v4282
      %4291 = vadd.xlane.f32.xlu0 %v4290
      %v4292 = vpop.xlane.xlu0 %4291
      %v4293 = vadd.f32 %v4283, %v4284
      %4294 = vadd.xlane.f32.xlu0 %v4293
      %v4295 = vpop.xlane.xlu0 %4294
      %v4296 = vadd.f32 %v4285, %v4286
      %4297 = vadd.xlane.f32.xlu0 %v4296
      %v4298 = vpop.xlane.xlu0 %4297
      %v4299 = vmul.f32 %v4289, %v1184
      %v4300 = vmul.f32 %v4292, %v1184
      %v4301 = vmul.f32 %v4295, %v1184
      %v4302 = vmul.f32 %v4298, %v1184
      %v4303 = vadd.f32 %v4299, 1e-05
      %v4304 = vadd.f32 %v4300, 1e-05
      %v4305 = vadd.f32 %v4301, 1e-05
      %v4306 = vadd.f32 %v4302, 1e-05
      %v4307 = vrsqrt.pop %v4303
      %v4308 = vrsqrt.pop %v4304
      %v4309 = vrsqrt.pop %v4305
      %v4310 = vrsqrt.pop %v4306
      %v4311 = vmul.f32 %v4271, %v4307
      %v4312 = vmul.f32 %v4272, %v4307
      %v4313 = vmul.f32 %v4273, %v4308
      %v4314 = vmul.f32 %v4274, %v4308
      %v4315 = vmul.f32 %v4275, %v4309
      %v4316 = vmul.f32 %v4276, %v4309
      %v4317 = vmul.f32 %v4277, %v4310
      %v4318 = vmul.f32 %v4278, %v4310
      %v4319 = vmul.f32 %v4311, 0.5
      %v4320 = vmul.f32 %v4312, 0.5
      %v4321 = vmul.f32 %v4313, 0.5
      %v4322 = vmul.f32 %v4314, 0.5
      %v4323 = vmul.f32 %v4315, 0.5
      %v4324 = vmul.f32 %v4316, 0.5
      %v4325 = vmul.f32 %v4317, 0.5
      %v4326 = vmul.f32 %v4318, 0.5
      %v4327 = vmul.f32 %v4311, 0.70710677
      %v4328 = vmul.f32 %v4312, 0.70710677
      %v4329 = vmul.f32 %v4313, 0.70710677
      %v4330 = vmul.f32 %v4314, 0.70710677
      %v4331 = vmul.f32 %v4315, 0.70710677
      %v4332 = vmul.f32 %v4316, 0.70710677
      %v4333 = vmul.f32 %v4317, 0.70710677
      %v4334 = vmul.f32 %v4318, 0.70710677
      %v4335 = verf.f32.pop %v4327
      %v4336 = verf.f32.pop %v4328
      %v4337 = verf.f32.pop %v4329
      %v4338 = verf.f32.pop %v4330
      %v4339 = verf.f32.pop %v4331
      %v4340 = verf.f32.pop %v4332
      %v4341 = verf.f32.pop %v4333
      %v4342 = verf.f32.pop %v4334
      %v4343 = vadd.f32 %v4335, 1.0
      %v4344 = vadd.f32 %v4336, 1.0
      %v4345 = vadd.f32 %v4337, 1.0
      %v4346 = vadd.f32 %v4338, 1.0
      %v4347 = vadd.f32 %v4339, 1.0
      %v4348 = vadd.f32 %v4340, 1.0
      %v4349 = vadd.f32 %v4341, 1.0
      %v4350 = vadd.f32 %v4342, 1.0
      %v4351 = vmul.f32 %v4319, %v4343
      %v4352 = vmul.f32 %v4320, %v4344
      %v4353 = vmul.f32 %v4321, %v4345
      %v4354 = vmul.f32 %v4322, %v4346
      %v4355 = vmul.f32 %v4323, %v4347
      %v4356 = vmul.f32 %v4324, %v4348
      %v4357 = vmul.f32 %v4325, %v4349
      %v4358 = vmul.f32 %v4326, %v4350
      %v4359 = vld [vmem:[%s13] sm:$0xf]
      %v4360 = vld [vmem:[%s13 + $0x4] sm:$0xf]
      %v4361 = vld [vmem:[%s13 + $0x8] sm:$0xf]
      %v4362 = vld [vmem:[%s13 + $0xc] sm:$0xf]
      %v4363 = vld [vmem:[%s14] sm:$0xff]
      %v4364 = vld [vmem:[%s14 + $0x8] sm:$0xff]
      %v4365 = vld [vmem:[%s14 + $0x10] sm:$0xff]
      %v4366 = vld [vmem:[%s14 + $0x18] sm:$0xff]
      %v4367 = vpack.c.bf16 %v4353, %v4351
      %v4368 = vpack.c.bf16 %v4354, %v4352
      %v4369 = vpack.c.bf16 %v4357, %v4355
      %v4370 = vpack.c.bf16 %v4358, %v4356
      %4372 = vset.pattern.permute.xlu0 0
      %4373 = vperm.xlu0 %4372, %v4363
      %v4374 = vpop.permute.xlu0 %4373
      %4377 = vset.pattern.permute.xlu0 0
      %4378 = vperm.xlu0 %4377, %v4364
      %v4379 = vpop.permute.xlu0 %4378
      %4382 = vset.pattern.permute.xlu0 0
      %4383 = vperm.xlu0 %4382, %v4365
      %v4384 = vpop.permute.xlu0 %4383
      %4387 = vset.pattern.permute.xlu0 0
      %4388 = vperm.xlu0 %4387, %v4366
      %v4389 = vpop.permute.xlu0 %4388
      %v4395 = vunpack.c.l.b16 %v4359
      %v4396 = vunpack.c.l.b16 %v4360
      %v4397 = vunpack.c.l.b16 %v4361
      %v4398 = vunpack.c.l.b16 %v4362
      %v4399 = vpack.c.b16 %v4396, %v4395
      %v4400 = vpack.c.b16 %v4398, %v4397
      %vm4401 = vcmask 261120
      %v4403 = vsel %vm4401, %v4399, 0
      %v4406 = vsel %vm4401, %v4400, 0
      %4408 = vmatprep.subr.bf16.mxu0 %v4368
      %4409 = vmatpush1.bf16.msra.mxu0 %v4367
      %4410 = vmatprep.subr.bf16.mxu0 %v4370
      %4411 = vmatpush1.bf16.msra.mxu0 %v4369
      %4412 = vmatprep.subr.bf16.mxu0 0
      %4413 = vmatpush1.bf16.msra.mxu0 0
      %4414 = vmatprep.subr.bf16.mxu0 0
      %4415 = vmatpush1.bf16.msra.mxu0 0
      %4416 = vmatprep.subr.bf16.mxu0 0
      %4417 = vmatpush1.bf16.msra.mxu0 0
      %4418 = vmatprep.subr.bf16.mxu0 0
      %4419 = vmatpush1.bf16.msra.mxu0 0
      %4420 = vmatprep.subr.bf16.mxu0 0
      %4421 = vmatpush1.bf16.msra.mxu0 0
      %4422 = vmatprep.subr.bf16.mxu0 0
      %4423 = vmatpush1.bf16.msra.mxu0 0
      %4424 = vmatprep.subr.bf16.mxu0 0
      %4425 = vmatpush1.bf16.msra.mxu0 0
      %4426 = vmatprep.subr.bf16.mxu0 0
      %4427 = vmatpush1.bf16.msra.mxu0 0
      %4428 = vmatprep.subr.bf16.mxu0 0
      %4429 = vmatpush1.bf16.msra.mxu0 0
      %4430 = vmatprep.subr.bf16.mxu0 0
      %4431 = vmatpush1.bf16.msra.mxu0 0
      %4432 = vmatprep.subr.bf16.mxu0 0
      %4433 = vmatpush1.bf16.msra.mxu0 0
      %4434 = vmatprep.subr.bf16.mxu0 0
      %4435 = vmatpush1.bf16.msra.mxu0 0
      %4436 = vmatprep.subr.bf16.mxu0 0
      %4437 = vmatpush1.bf16.msra.mxu0 0
      %4438 = vmatprep.subr.bf16.mxu0 0
      %4439 = vmatpush1.bf16.msra.mxu0 0
      %4440 = vmatprep.mubr.bf16.mxu0 0
      %4441 = vmatmul.mubr.bf16.gmra.mrb[0].mxu0 %v4403
      %v4442 = vpop.f32.mrb[0].mxu0
      %v4443 = vadd.f32 %v4374, %v4442
      %v4444 = vpop.f32.mrb[0].mxu0
      %v4445 = vadd.f32 %v4374, %v4444
      %v4446 = vpop.f32.mrb[0].mxu0
      %v4447 = vadd.f32 %v4379, %v4446
      %v4448 = vpop.f32.mrb[0].mxu0
      %v4449 = vadd.f32 %v4379, %v4448
      %4450 = vmatprep.mubr.bf16.mxu0 0
      %4451 = vmatmul.mubr.bf16.gmra.mrb[0].mxu0 %v4406
      %v4452 = vpop.f32.mrb[0].mxu0
      %v4453 = vadd.f32 %v4384, %v4452
      %v4454 = vpop.f32.mrb[0].mxu0
      %v4455 = vadd.f32 %v4384, %v4454
      %v4456 = vpop.f32.mrb[0].mxu0
      %v4457 = vadd.f32 %v4389, %v4456
      %v4458 = vpop.f32.mrb[0].mxu0
      %v4459 = vadd.f32 %v4389, %v4458
      %4460 = vdwg.mxu0
      %4461 = vst [vmem:[%s534] sm:$0xff] %v4443
      %4462 = vst [vmem:[%s534 + $0x8] sm:$0xff] %v4445
      %4463 = vst [vmem:[%s534 + $0x10] sm:$0xff] %v4447
      %4464 = vst [vmem:[%s534 + $0x18] sm:$0xff] %v4449
      %4465 = vst [vmem:[%s534 + $0x20] sm:$0xff] %v4453
      %4466 = vst [vmem:[%s534 + $0x28] sm:$0xff] %v4455
      %4467 = vst [vmem:[%s534 + $0x30] sm:$0xff] %v4457
      %4468 = vst [vmem:[%s534 + $0x38] sm:$0xff] %v4459
      %p4469 = scmp.lt.s32.totalorder %s28, 1
      %s4470 = scalar_select %p4469, %s28, 1
      %s4471 = smul.addr %s4470, 16
      %s4472 = smul.addr %s4471, 8
      %s4473 = scalar_lea.vmem %s15, %s4472
      %p4474 = scmp.lt.s32.totalorder %s28, 1
      %s4475 = scalar_select %p4474, %s28, 1
      %s4476 = smul.addr %s4475, 8
      %s4477 = smul.addr %s4476, 8
      %s4478 = scalar_lea.vmem %s16, %s4477
      // Predicated region
      $region81: #{encoder_forward.1} parent=79 // pred_check
        %p4479 = pneg %p366
      $region82: #{encoder_forward.1} parent=79 // pred_check_branch
        %4481 = sbr.rel (%p4479) target = $region84
      $region83: #{encoder_forward.1} parent=79 // pred_region
        _
      $region84: #{encoder_forward.1} parent=79 // pred_fallthru
        _
      // Predicated region
      $region85: #{encoder_forward.1} parent=79 // pred_check
        %p4482 = pneg %p392
      $region86: #{encoder_forward.1} parent=79 // pred_check_branch
        %4484 = sbr.rel (%p4482) target = $region88
      $region87: #{encoder_forward.1} parent=79 // pred_region
        _
      $region88: #{encoder_forward.1} parent=79 // pred_fallthru
        _
    $region80: #{encoder_forward.1} parent=5 // pred_fallthru
      _
    %p4485 = scmp.le.s32.totalorder 2, %s23
    // Predicated region
    $region89: #{encoder_forward.1} parent=5 // pred_check
      %p4486 = pneg %p4485
    $region90: #{encoder_forward.1} parent=5 // pred_check_branch
      %4488 = sbr.rel (%p4486) target = $region92
    $region91: #{encoder_forward.1} parent=5 // pred_region
      %s4489 = ssub.s32 %s23, 2
      // Predicated region
      $region93: #{encoder_forward.1} parent=91 // pred_check
        %p4490 = pneg %p372
      $region94: #{encoder_forward.1} parent=91 // pred_check_branch
        %4492 = sbr.rel (%p4490) target = $region96
      $region95: #{encoder_forward.1} parent=91 // pred_region
        %p4493 = scmp.lt.s32.totalorder %s29, 1
        %s4494 = scalar_select %p4493, %s29, 1
        %s4495 = smul.addr %s4494, 16
        %s4496 = smul.addr %s4495, 8
        %s4497 = scalar_lea.vmem %s15, %s4496
      $region96: #{encoder_forward.1} parent=91 // pred_fallthru
        _
      // Predicated region
      $region97: #{encoder_forward.1} parent=91 // pred_check
        %p4498 = pneg %p398
      $region98: #{encoder_forward.1} parent=91 // pred_check_branch
        %4500 = sbr.rel (%p4498) target = $region100
      $region99: #{encoder_forward.1} parent=91 // pred_region
        %p4501 = scmp.lt.s32.totalorder %s29, 1
        %s4502 = scalar_select %p4501, %s29, 1
        %s4503 = smul.addr %s4502, 8
        %s4504 = smul.addr %s4503, 8
        %s4505 = scalar_lea.vmem %s16, %s4504
      $region100: #{encoder_forward.1} parent=91 // pred_fallthru
        _
    $region92: #{encoder_forward.1} parent=5 // pred_fallthru
      _
  $region6: #{encoder_forward.1} parent=0 // loop_footer
    %s27 = sadd.s32 1, %s23
  $region7: #{encoder_forward.1} parent=0 // loop_footer_branch
    %22 = sbr.rel target = $region3
  $region8: #{encoder_forward.1} parent=0 // loop_exit
    _

// kernel: encoder_forward.1
$region0: #{encoder_forward.1}
  #allocation0 [shape = 'u32[]', space=smem, size = 0x4, offset = 0x4, fixed_abs, tag = 'smem constant byte address 0x4 - core index']
  #allocation1 [shape = 'u32[144,128]{1,0:T(1,128)}', space=vmem, size = 0x12000, scoped, tag = 'internal scratch']
  %s0 = inlined_call_operand.vmem [shape: f32[2,16,256], index: 0, kind: input, shape index: {}]
  %s1 = inlined_call_operand.vmem [shape: bf16[256,16], index: 1, kind: input, shape index: {}]
  %s2 = inlined_call_operand.vmem [shape: f32[256,1], index: 2, kind: input, shape index: {}]
  %s3 = inlined_call_operand.vmem [shape: bf16[128,256], index: 3, kind: input, shape index: {}]
  %s4 = inlined_call_operand.vmem [shape: f32[128,1], index: 4, kind: input, shape index: {}]
  %s5 = inlined_call_operand.vmem [shape: bf16[128,128], index: 5, kind: input, shape index: {}]
  %s6 = inlined_call_operand.vmem [shape: f32[128,1], index: 6, kind: input, shape index: {}]
  %s7 = inlined_call_operand.vmem [shape: bf16[64,128], index: 7, kind: input, shape index: {}]
  %s8 = inlined_call_operand.vmem [shape: f32[64,1], index: 8, kind: input, shape index: {}]
  %s9 = inlined_call_operand.vmem [shape: bf16[64,64], index: 9, kind: input, shape index: {}]
  %s10 = inlined_call_operand.vmem [shape: f32[64,1], index: 10, kind: input, shape index: {}]
  %s11 = inlined_call_operand.vmem [shape: bf16[32,64], index: 11, kind: input, shape index: {}]
  %s12 = inlined_call_operand.vmem [shape: f32[32,1], index: 12, kind: input, shape index: {}]
  %s13 = inlined_call_operand.vmem [shape: bf16[32,32], index: 13, kind: input, shape index: {}]
  %s14 = inlined_call_operand.vmem [shape: f32[32,1], index: 14, kind: input, shape index: {}]
  %s15 = inlined_call_operand.vmem [shape: f32[2,64,256], index: 15, kind: output, shape index: {0}]
  %s16 = inlined_call_operand.vmem [shape: f32[2,32,256], index: 16, kind: output, shape index: {1}]
  %17 = xla_tuple %s15, %s16
  %s18 = sld [smem:[#allocation0]]
  $region101: #{encoder_forward.1} parent=0
    _
  %s20 = ssub.s32 1, %s18
  %s21 = scalar_select 0, %s20, %s18
  loop: start=0, step=1, limit=4
  $region2: #{encoder_forward.1} parent=0 // loop_pre_header
    _
  $region3: #{encoder_forward.1} parent=0 // loop_header
    %s23 = sphi 0, %s27
    %p24 = scmp.ge.s32.totalorder %s23, 4
    %s33 = sphi 0, %s35
    %s36 = sphi 0, %s33
    %s37 = sphi 0, %s36
    %s53 = sphi 0, %s37
    %s57 = sphi 0, %s57
    %s59 = sphi 0, %s57
    %s60 = sphi 0, %s59
    %s74 = sphi 0, %s60
    %s78 = sphi 0, %s78
    %s80 = sphi 0, %s78
    %s81 = sphi 0, %s80
    %s95 = sphi 0, %s81
    %s99 = sphi 0, %s99
    %s101 = sphi 0, %s99
    %s102 = sphi 0, %s101
    %s116 = sphi 0, %s102
    %s120 = sphi 0, %s120
    %s122 = sphi 0, %s120
    %s123 = sphi 0, %s122
    %s137 = sphi 0, %s123
    %s141 = sphi 0, %s141
    %s143 = sphi 0, %s141
    %s144 = sphi 0, %s143
    %s158 = sphi 0, %s144
    %s162 = sphi 0, %s162
    %s164 = sphi 0, %s162
    %s165 = sphi 0, %s164
    %s179 = sphi 0, %s165
    %s183 = sphi 0, %s183
    %s185 = sphi 0, %s183
    %s186 = sphi 0, %s185
    %s200 = sphi 0, %s186
    %s204 = sphi 0, %s204
    %s206 = sphi 0, %s204
    %s207 = sphi 0, %s206
    %s221 = sphi 0, %s207
    %s225 = sphi 0, %s225
    %s227 = sphi 0, %s225
    %s228 = sphi 0, %s227
    %s242 = sphi 0, %s228
    %s246 = sphi 0, %s246
    %s248 = sphi 0, %s246
    %s249 = sphi 0, %s248
    %s263 = sphi 0, %s249
    %s267 = sphi 0, %s267
    %s269 = sphi 0, %s267
    %s270 = sphi 0, %s269
    %s284 = sphi 0, %s270
    %s288 = sphi 0, %s288
    %s290 = sphi 0, %s288
    %s291 = sphi 0, %s290
    %s305 = sphi 0, %s291
    %s309 = sphi 0, %s309
    %s311 = sphi 0, %s309
    %s312 = sphi 0, %s311
    %s326 = sphi 0, %s312
    %s330 = sphi 0, %s330
    %s332 = sphi 0, %s330
    %s333 = sphi 0, %s332
    %s347 = sphi 0, %s333
    %s353 = sphi 0, %s355
    %s356 = sphi 0, %s353
    %s357 = sphi 0, %s356
    %s373 = sphi 0, %s357
    %s379 = sphi 0, %s381
    %s382 = sphi 0, %s379
    %s383 = sphi 0, %s382
    %s399 = sphi 0, %s383
  $region4: #{encoder_forward.1} parent=0 // loop_header_branch
    %26 = sbr.rel (%p24) target = $region8
  $region5: #{encoder_forward.1} parent=0 // loop_body
    %s28 = ssub.s32 %s23, 1
    %s29 = ssub.s32 %s23, 2
    %s30 = sadd.s32 %s23, 1
    %s31 = ssub.s32 %s23, %s30
    %p32 = scmp.eq.s32.totalorder %s31, 0
    %s34 = sadd.s32 %s33, 1
    %s35 = scalar_select %p32, %s33, %s34
    %p38 = pneg %p32
    %p39 = scmp.eq.s32.totalorder %s23, 1
    %p40 = por %p38, %p39
    %p41 = scmp.ne.s32.totalorder %s33, %s36
    %p42 = scmp.eq.s32.totalorder %s23, 0
    %p43 = por %p41, %p42
    %p44 = scmp.ne.s32.totalorder %s33, %s36
    %p45 = scmp.eq.s32.totalorder %s28, 1
    %p46 = por %p44, %p45
    %p47 = scmp.ne.s32.totalorder %s36, %s37
    %p48 = scmp.eq.s32.totalorder %s28, 0
    %p49 = por %p47, %p48
    %p50 = scmp.ne.s32.totalorder %s36, %s37
    %p51 = scmp.eq.s32.totalorder %s29, 1
    %p52 = por %p50, %p51
    %p54 = scmp.ne.s32.totalorder %s37, %s53
    %p55 = scmp.eq.s32.totalorder %s29, 0
    %p56 = por %p54, %p55
    %s58 = sadd.s32 %s57, 1
    %p61 = scmp.eq.s32.totalorder %s23, 1
    %p62 = scmp.ne.s32.totalorder %s57, %s59
    %p63 = scmp.eq.s32.totalorder %s23, 0
    %p64 = por %p62, %p63
    %p65 = scmp.ne.s32.totalorder %s57, %s59
    %p66 = scmp.eq.s32.totalorder %s28, 1
    %p67 = por %p65, %p66
    %p68 = scmp.ne.s32.totalorder %s59, %s60
    %p69 = scmp.eq.s32.totalorder %s28, 0
    %p70 = por %p68, %p69
    %p71 = scmp.ne.s32.totalorder %s59, %s60
    %p72 = scmp.eq.s32.totalorder %s29, 1
    %p73 = por %p71, %p72
    %p75 = scmp.ne.s32.totalorder %s60, %s74
    %p76 = scmp.eq.s32.totalorder %s29, 0
    %p77 = por %p75, %p76
    %s79 = sadd.s32 %s78, 1
    %p82 = scmp.eq.s32.totalorder %s23, 1
    %p83 = scmp.ne.s32.totalorder %s78, %s80
    %p84 = scmp.eq.s32.totalorder %s23, 0
    %p85 = por %p83, %p84
    %p86 = scmp.ne.s32.totalorder %s78, %s80
    %p87 = scmp.eq.s32.totalorder %s28, 1
    %p88 = por %p86, %p87
    %p89 = scmp.ne.s32.totalorder %s80, %s81
    %p90 = scmp.eq.s32.totalorder %s28, 0
    %p91 = por %p89, %p90
    %p92 = scmp.ne.s32.totalorder %s80, %s81
    %p93 = scmp.eq.s32.totalorder %s29, 1
    %p94 = por %p92, %p93
    %p96 = scmp.ne.s32.totalorder %s81, %s95
    %p97 = scmp.eq.s32.totalorder %s29, 0
    %p98 = por %p96, %p97
    %s100 = sadd.s32 %s99, 1
    %p103 = scmp.eq.s32.totalorder %s23, 1
    %p104 = scmp.ne.s32.totalorder %s99, %s101
    %p105 = scmp.eq.s32.totalorder %s23, 0
    %p106 = por %p104, %p105
    %p107 = scmp.ne.s32.totalorder %s99, %s101
    %p108 = scmp.eq.s32.totalorder %s28, 1
    %p109 = por %p107, %p108
    %p110 = scmp.ne.s32.totalorder %s101, %s102
    %p111 = scmp.eq.s32.totalorder %s28, 0
    %p112 = por %p110, %p111
    %p113 = scmp.ne.s32.totalorder %s101, %s102
    %p114 = scmp.eq.s32.totalorder %s29, 1
    %p115 = por %p113, %p114
    %p117 = scmp.ne.s32.totalorder %s102, %s116
    %p118 = scmp.eq.s32.totalorder %s29, 0
    %p119 = por %p117, %p118
    %s121 = sadd.s32 %s120, 1
    %p124 = scmp.eq.s32.totalorder %s23, 1
    %p125 = scmp.ne.s32.totalorder %s120, %s122
    %p126 = scmp.eq.s32.totalorder %s23, 0
    %p127 = por %p125, %p126
    %p128 = scmp.ne.s32.totalorder %s120, %s122
    %p129 = scmp.eq.s32.totalorder %s28, 1
    %p130 = por %p128, %p129
    %p131 = scmp.ne.s32.totalorder %s122, %s123
    %p132 = scmp.eq.s32.totalorder %s28, 0
    %p133 = por %p131, %p132
    %p134 = scmp.ne.s32.totalorder %s122, %s123
    %p135 = scmp.eq.s32.totalorder %s29, 1
    %p136 = por %p134, %p135
    %p138 = scmp.ne.s32.totalorder %s123, %s137
    %p139 = scmp.eq.s32.totalorder %s29, 0
    %p140 = por %p138, %p139
    %s142 = sadd.s32 %s141, 1
    %p145 = scmp.eq.s32.totalorder %s23, 1
    %p146 = scmp.ne.s32.totalorder %s141, %s143
    %p147 = scmp.eq.s32.totalorder %s23, 0
    %p148 = por %p146, %p147
    %p149 = scmp.ne.s32.totalorder %s141, %s143
    %p150 = scmp.eq.s32.totalorder %s28, 1
    %p151 = por %p149, %p150
    %p152 = scmp.ne.s32.totalorder %s143, %s144
    %p153 = scmp.eq.s32.totalorder %s28, 0
    %p154 = por %p152, %p153
    %p155 = scmp.ne.s32.totalorder %s143, %s144
    %p156 = scmp.eq.s32.totalorder %s29, 1
    %p157 = por %p155, %p156
    %p159 = scmp.ne.s32.totalorder %s144, %s158
    %p160 = scmp.eq.s32.totalorder %s29, 0
    %p161 = por %p159, %p160
    %s163 = sadd.s32 %s162, 1
    %p166 = scmp.eq.s32.totalorder %s23, 1
    %p167 = scmp.ne.s32.totalorder %s162, %s164
    %p168 = scmp.eq.s32.totalorder %s23, 0
    %p169 = por %p167, %p168
    %p170 = scmp.ne.s32.totalorder %s162, %s164
    %p171 = scmp.eq.s32.totalorder %s28, 1
    %p172 = por %p170, %p171
    %p173 = scmp.ne.s32.totalorder %s164, %s165
    %p174 = scmp.eq.s32.totalorder %s28, 0
    %p175 = por %p173, %p174
    %p176 = scmp.ne.s32.totalorder %s164, %s165
    %p177 = scmp.eq.s32.totalorder %s29, 1
    %p178 = por %p176, %p177
    %p180 = scmp.ne.s32.totalorder %s165, %s179
    %p181 = scmp.eq.s32.totalorder %s29, 0
    %p182 = por %p180, %p181
    %s184 = sadd.s32 %s183, 1
    %p187 = scmp.eq.s32.totalorder %s23, 1
    %p188 = scmp.ne.s32.totalorder %s183, %s185
    %p189 = scmp.eq.s32.totalorder %s23, 0
    %p190 = por %p188, %p189
    %p191 = scmp.ne.s32.totalorder %s183, %s185
    %p192 = scmp.eq.s32.totalorder %s28, 1
    %p193 = por %p191, %p192
    %p194 = scmp.ne.s32.totalorder %s185, %s186
    %p195 = scmp.eq.s32.totalorder %s28, 0
    %p196 = por %p194, %p195
    %p197 = scmp.ne.s32.totalorder %s185, %s186
    %p198 = scmp.eq.s32.totalorder %s29, 1
    %p199 = por %p197, %p198
    %p201 = scmp.ne.s32.totalorder %s186, %s200
    %p202 = scmp.eq.s32.totalorder %s29, 0
    %p203 = por %p201, %p202
    %s205 = sadd.s32 %s204, 1
    %p208 = scmp.eq.s32.totalorder %s23, 1
    %p209 = scmp.ne.s32.totalorder %s204, %s206
    %p210 = scmp.eq.s32.totalorder %s23, 0
    %p211 = por %p209, %p210
    %p212 = scmp.ne.s32.totalorder %s204, %s206
    %p213 = scmp.eq.s32.totalorder %s28, 1
    %p214 = por %p212, %p213
    %p215 = scmp.ne.s32.totalorder %s206, %s207
    %p216 = scmp.eq.s32.totalorder %s28, 0
    %p217 = por %p215, %p216
    %p218 = scmp.ne.s32.totalorder %s206, %s207
    %p219 = scmp.eq.s32.totalorder %s29, 1
    %p220 = por %p218, %p219
    %p222 = scmp.ne.s32.totalorder %s207, %s221
    %p223 = scmp.eq.s32.totalorder %s29, 0
    %p224 = por %p222, %p223
    %s226 = sadd.s32 %s225, 1
    %p229 = scmp.eq.s32.totalorder %s23, 1
    %p230 = scmp.ne.s32.totalorder %s225, %s227
    %p231 = scmp.eq.s32.totalorder %s23, 0
    %p232 = por %p230, %p231
    %p233 = scmp.ne.s32.totalorder %s225, %s227
    %p234 = scmp.eq.s32.totalorder %s28, 1
    %p235 = por %p233, %p234
    %p236 = scmp.ne.s32.totalorder %s227, %s228
    %p237 = scmp.eq.s32.totalorder %s28, 0
    %p238 = por %p236, %p237
    %p239 = scmp.ne.s32.totalorder %s227, %s228
    %p240 = scmp.eq.s32.totalorder %s29, 1
    %p241 = por %p239, %p240
    %p243 = scmp.ne.s32.totalorder %s228, %s242
    %p244 = scmp.eq.s32.totalorder %s29, 0
    %p245 = por %p243, %p244
    %s247 = sadd.s32 %s246, 1
    %p250 = scmp.eq.s32.totalorder %s23, 1
    %p251 = scmp.ne.s32.totalorder %s246, %s248
    %p252 = scmp.eq.s32.totalorder %s23, 0
    %p253 = por %p251, %p252
    %p254 = scmp.ne.s32.totalorder %s246, %s248
    %p255 = scmp.eq.s32.totalorder %s28, 1
    %p256 = por %p254, %p255
    %p257 = scmp.ne.s32.totalorder %s248, %s249
    %p258 = scmp.eq.s32.totalorder %s28, 0
    %p259 = por %p257, %p258
    %p260 = scmp.ne.s32.totalorder %s248, %s249
    %p261 = scmp.eq.s32.totalorder %s29, 1
    %p262 = por %p260, %p261
    %p264 = scmp.ne.s32.totalorder %s249, %s263
    %p265 = scmp.eq.s32.totalorder %s29, 0
    %p266 = por %p264, %p265
    %s268 = sadd.s32 %s267, 1
    %p271 = scmp.eq.s32.totalorder %s23, 1
    %p272 = scmp.ne.s32.totalorder %s267, %s269
    %p273 = scmp.eq.s32.totalorder %s23, 0
    %p274 = por %p272, %p273
    %p275 = scmp.ne.s32.totalorder %s267, %s269
    %p276 = scmp.eq.s32.totalorder %s28, 1
    %p277 = por %p275, %p276
    %p278 = scmp.ne.s32.totalorder %s269, %s270
    %p279 = scmp.eq.s32.totalorder %s28, 0
    %p280 = por %p278, %p279
    %p281 = scmp.ne.s32.totalorder %s269, %s270
    %p282 = scmp.eq.s32.totalorder %s29, 1
    %p283 = por %p281, %p282
    %p285 = scmp.ne.s32.totalorder %s270, %s284
    %p286 = scmp.eq.s32.totalorder %s29, 0
    %p287 = por %p285, %p286
    %s289 = sadd.s32 %s288, 1
    %p292 = scmp.eq.s32.totalorder %s23, 1
    %p293 = scmp.ne.s32.totalorder %s288, %s290
    %p294 = scmp.eq.s32.totalorder %s23, 0
    %p295 = por %p293, %p294
    %p296 = scmp.ne.s32.totalorder %s288, %s290
    %p297 = scmp.eq.s32.totalorder %s28, 1
    %p298 = por %p296, %p297
    %p299 = scmp.ne.s32.totalorder %s290, %s291
    %p300 = scmp.eq.s32.totalorder %s28, 0
    %p301 = por %p299, %p300
    %p302 = scmp.ne.s32.totalorder %s290, %s291
    %p303 = scmp.eq.s32.totalorder %s29, 1
    %p304 = por %p302, %p303
    %p306 = scmp.ne.s32.totalorder %s291, %s305
    %p307 = scmp.eq.s32.totalorder %s29, 0
    %p308 = por %p306, %p307
    %s310 = sadd.s32 %s309, 1
    %p313 = scmp.eq.s32.totalorder %s23, 1
    %p314 = scmp.ne.s32.totalorder %s309, %s311
    %p315 = scmp.eq.s32.totalorder %s23, 0
    %p316 = por %p314, %p315
    %p317 = scmp.ne.s32.totalorder %s309, %s311
    %p318 = scmp.eq.s32.totalorder %s28, 1
    %p319 = por %p317, %p318
    %p320 = scmp.ne.s32.totalorder %s311, %s312
    %p321 = scmp.eq.s32.totalorder %s28, 0
    %p322 = por %p320, %p321
    %p323 = scmp.ne.s32.totalorder %s311, %s312
    %p324 = scmp.eq.s32.totalorder %s29, 1
    %p325 = por %p323, %p324
    %p327 = scmp.ne.s32.totalorder %s312, %s326
    %p328 = scmp.eq.s32.totalorder %s29, 0
    %p329 = por %p327, %p328
    %s331 = sadd.s32 %s330, 1
    %p334 = scmp.eq.s32.totalorder %s23, 1
    %p335 = scmp.ne.s32.totalorder %s330, %s332
    %p336 = scmp.eq.s32.totalorder %s23, 0
    %p337 = por %p335, %p336
    %p338 = scmp.ne.s32.totalorder %s330, %s332
    %p339 = scmp.eq.s32.totalorder %s28, 1
    %p340 = por %p338, %p339
    %p341 = scmp.ne.s32.totalorder %s332, %s333
    %p342 = scmp.eq.s32.totalorder %s28, 0
    %p343 = por %p341, %p342
    %p344 = scmp.ne.s32.totalorder %s332, %s333
    %p345 = scmp.eq.s32.totalorder %s29, 1
    %p346 = por %p344, %p345
    %p348 = scmp.ne.s32.totalorder %s333, %s347
    %p349 = scmp.eq.s32.totalorder %s29, 0
    %p350 = por %p348, %p349
    %s351 = ssub.s32 %s23, %s30
    %p352 = scmp.eq.s32.totalorder %s351, 0
    %s354 = sadd.s32 %s353, 1
    %s355 = scalar_select %p352, %s353, %s354
    %p358 = pneg %p352
    %p359 = scmp.eq.s32.totalorder %s23, 1
    %p360 = por %p358, %p359
    %p361 = scmp.ne.s32.totalorder %s353, %s356
    %p362 = scmp.eq.s32.totalorder %s23, 0
    %p363 = por %p361, %p362
    %p364 = scmp.ne.s32.totalorder %s353, %s356
    %p365 = scmp.eq.s32.totalorder %s28, 1
    %p366 = por %p364, %p365
    %p367 = scmp.ne.s32.totalorder %s356, %s357
    %p368 = scmp.eq.s32.totalorder %s28, 0
    %p369 = por %p367, %p368
    %p370 = scmp.ne.s32.totalorder %s356, %s357
    %p371 = scmp.eq.s32.totalorder %s29, 1
    %p372 = por %p370, %p371
    %p374 = scmp.ne.s32.totalorder %s357, %s373
    %p375 = scmp.eq.s32.totalorder %s29, 0
    %p376 = por %p374, %p375
    %s377 = ssub.s32 %s23, %s30
    %p378 = scmp.eq.s32.totalorder %s377, 0
    %s380 = sadd.s32 %s379, 1
    %s381 = scalar_select %p378, %s379, %s380
    %p384 = pneg %p378
    %p385 = scmp.eq.s32.totalorder %s23, 1
    %p386 = por %p384, %p385
    %p387 = scmp.ne.s32.totalorder %s379, %s382
    %p388 = scmp.eq.s32.totalorder %s23, 0
    %p389 = por %p387, %p388
    %p390 = scmp.ne.s32.totalorder %s379, %s382
    %p391 = scmp.eq.s32.totalorder %s28, 1
    %p392 = por %p390, %p391
    %p393 = scmp.ne.s32.totalorder %s382, %s383
    %p394 = scmp.eq.s32.totalorder %s28, 0
    %p395 = por %p393, %p394
    %p396 = scmp.ne.s32.totalorder %s382, %s383
    %p397 = scmp.eq.s32.totalorder %s29, 1
    %p398 = por %p396, %p397
    %p400 = scmp.ne.s32.totalorder %s383, %s399
    %p401 = scmp.eq.s32.totalorder %s29, 0
    %p402 = por %p400, %p401
    %p403 = scmp.le.s32.totalorder 1, %s23
    %p404 = scmp.lt.s32.totalorder %s23, 3
    %p405 = pnand %p403, %p404
    %p406 = pneg %p405
    // Predicated region
    $region9: #{encoder_forward.1} parent=5 // pred_check
      _
    $region10: #{encoder_forward.1} parent=5 // pred_check_branch
      %408 = sbr.rel (%p405) target = $region12
    $region11: #{encoder_forward.1} parent=5 // pred_region
      %s409 = ssub.s32 %s23, 1
      // Predicated region
      $region13: #{encoder_forward.1} parent=11 // pred_check
        %p410 = pneg %p70
      $region14: #{encoder_forward.1} parent=11 // pred_check_branch
        %412 = sbr.rel (%p410) target = $region16
      $region15: #{encoder_forward.1} parent=11 // pred_region
        _
      $region16: #{encoder_forward.1} parent=11 // pred_fallthru
        _
      // Predicated region
      $region17: #{encoder_forward.1} parent=11 // pred_check
        %p413 = pneg %p91
      $region18: #{encoder_forward.1} parent=11 // pred_check_branch
        %415 = sbr.rel (%p413) target = $region20
      $region19: #{encoder_forward.1} parent=11 // pred_region
        _
      $region20: #{encoder_forward.1} parent=11 // pred_fallthru
        _
      // Predicated region
      $region21: #{encoder_forward.1} parent=11 // pred_check
        %p416 = pneg %p112
      $region22: #{encoder_forward.1} parent=11 // pred_check_branch
        %418 = sbr.rel (%p416) target = $region24
      $region23: #{encoder_forward.1} parent=11 // pred_region
        _
      $region24: #{encoder_forward.1} parent=11 // pred_fallthru
        _
      // Predicated region
      $region25: #{encoder_forward.1} parent=11 // pred_check
        %p419 = pneg %p133
      $region26: #{encoder_forward.1} parent=11 // pred_check_branch
        %421 = sbr.rel (%p419) target = $region28
      $region27: #{encoder_forward.1} parent=11 // pred_region
        _
      $region28: #{encoder_forward.1} parent=11 // pred_fallthru
        _
      // Predicated region
      $region29: #{encoder_forward.1} parent=11 // pred_check
        %p422 = pneg %p154
      $region30: #{encoder_forward.1} parent=11 // pred_check_branch
        %424 = sbr.rel (%p422) target = $region32
      $region31: #{encoder_forward.1} parent=11 // pred_region
        _
      $region32: #{encoder_forward.1} parent=11 // pred_fallthru
        _
      // Predicated region
      $region33: #{encoder_forward.1} parent=11 // pred_check
        %p425 = pneg %p175
      $region34: #{encoder_forward.1} parent=11 // pred_check_branch
        %427 = sbr.rel (%p425) target = $region36
      $region35: #{encoder_forward.1} parent=11 // pred_region
        _
      $region36: #{encoder_forward.1} parent=11 // pred_fallthru
        _
      // Predicated region
      $region37: #{encoder_forward.1} parent=11 // pred_check
        %p428 = pneg %p196
      $region38: #{encoder_forward.1} parent=11 // pred_check_branch
        %430 = sbr.rel (%p428) target = $region40
      $region39: #{encoder_forward.1} parent=11 // pred_region
        _
      $region40: #{encoder_forward.1} parent=11 // pred_fallthru
        _
      // Predicated region
      $region41: #{encoder_forward.1} parent=11 // pred_check
        %p431 = pneg %p217
      $region42: #{encoder_forward.1} parent=11 // pred_check_branch
        %433 = sbr.rel (%p431) target = $region44
      $region43: #{encoder_forward.1} parent=11 // pred_region
        _
      $region44: #{encoder_forward.1} parent=11 // pred_fallthru
        _
      // Predicated region
      $region45: #{encoder_forward.1} parent=11 // pred_check
        %p434 = pneg %p238
      $region46: #{encoder_forward.1} parent=11 // pred_check_branch
        %436 = sbr.rel (%p434) target = $region48
      $region47: #{encoder_forward.1} parent=11 // pred_region
        _
      $region48: #{encoder_forward.1} parent=11 // pred_fallthru
        _
      // Predicated region
      $region49: #{encoder_forward.1} parent=11 // pred_check
        %p437 = pneg %p259
      $region50: #{encoder_forward.1} parent=11 // pred_check_branch
        %439 = sbr.rel (%p437) target = $region52
      $region51: #{encoder_forward.1} parent=11 // pred_region
        _
      $region52: #{encoder_forward.1} parent=11 // pred_fallthru
        _
      // Predicated region
      $region53: #{encoder_forward.1} parent=11 // pred_check
        %p440 = pneg %p280
      $region54: #{encoder_forward.1} parent=11 // pred_check_branch
        %442 = sbr.rel (%p440) target = $region56
      $region55: #{encoder_forward.1} parent=11 // pred_region
        _
      $region56: #{encoder_forward.1} parent=11 // pred_fallthru
        _
      // Predicated region
      $region57: #{encoder_forward.1} parent=11 // pred_check
        %p443 = pneg %p301
      $region58: #{encoder_forward.1} parent=11 // pred_check_branch
        %445 = sbr.rel (%p443) target = $region60
      $region59: #{encoder_forward.1} parent=11 // pred_region
        _
      $region60: #{encoder_forward.1} parent=11 // pred_fallthru
        _
      // Predicated region
      $region61: #{encoder_forward.1} parent=11 // pred_check
        %p446 = pneg %p322
      $region62: #{encoder_forward.1} parent=11 // pred_check_branch
        %448 = sbr.rel (%p446) target = $region64
      $region63: #{encoder_forward.1} parent=11 // pred_region
        _
      $region64: #{encoder_forward.1} parent=11 // pred_fallthru
        _
      // Predicated region
      $region65: #{encoder_forward.1} parent=11 // pred_check
        %p449 = pneg %p343
      $region66: #{encoder_forward.1} parent=11 // pred_check_branch
        %451 = sbr.rel (%p449) target = $region68
      $region67: #{encoder_forward.1} parent=11 // pred_region
        _
      $region68: #{encoder_forward.1} parent=11 // pred_fallthru
        _
    $region12: #{encoder_forward.1} parent=5 // pred_fallthru
      _
    %p452 = scmp.lt.s32.totalorder %s23, 2
    // Predicated region
    $region69: #{encoder_forward.1} parent=5 // pred_check
      %p453 = pneg %p452
    $region70: #{encoder_forward.1} parent=5 // pred_check_branch
      %455 = sbr.rel (%p453) target = $region72
    $region71: #{encoder_forward.1} parent=5 // pred_region
      // Predicated region
      $region73: #{encoder_forward.1} parent=71 // pred_check
        %p456 = pneg %p43
      $region74: #{encoder_forward.1} parent=71 // pred_check_branch
        %458 = sbr.rel (%p456) target = $region76
      $region75: #{encoder_forward.1} parent=71 // pred_region
        %p459 = scmp.lt.s32.totalorder %s23, 1
        %s460 = scalar_select %p459, %s23, 1
        %s461 = smul.addr %s460, 4
        %s462 = smul.addr %s461, 8
        %s463 = scalar_lea.vmem %s0, %s462
      $region76: #{encoder_forward.1} parent=71 // pred_fallthru
        _
    $region72: #{encoder_forward.1} parent=5 // pred_fallthru
      _
    %p464 = scmp.le.s32.totalorder 1, %s23
    %p465 = scmp.lt.s32.totalorder %s23, 3
    %p466 = pnand %p464, %p465
    %p467 = pneg %p466
    // Predicated region
    $region77: #{encoder_forward.1} parent=5 // pred_check
      _
    $region78: #{encoder_forward.1} parent=5 // pred_check_branch
      %469 = sbr.rel (%p466) target = $region80
    $region79: #{encoder_forward.1} parent=5 // pred_region
      %s470 = ssub.s32 %s23, 1
      %p471 = scmp.lt.s32.totalorder %s28, 1
      %s472 = scalar_select %p471, %s28, 1
      %s473 = smul.addr %s472, 4
      %s474 = smul.addr %s473, 8
      %s475 = scalar_lea.vmem %s0, %s474
      %p476 = pneg %p49
      %p477 = pneg %p46
      %p478 = pneg %p70
      %p479 = pneg %p67
      %p480 = pneg %p91
      %p481 = pneg %p88
      %p482 = pneg %p112
      %p483 = pneg %p109
      %p484 = pneg %p133
      %p485 = pneg %p130
      %p486 = pneg %p154
      %p487 = pneg %p151
      %p488 = pneg %p175
      %p489 = pneg %p172
      %p490 = pneg %p196
      %p491 = pneg %p193
      %p492 = pneg %p217
      %p493 = pneg %p214
      %p494 = pneg %p238
      %p495 = pneg %p235
      %p496 = pneg %p259
      %p497 = pneg %p256
      %p498 = pneg %p280
      %p499 = pneg %p277
      %p500 = pneg %p301
      %p501 = pneg %p298
      %p502 = pneg %p322
      %p503 = pneg %p319
      %p504 = pneg %p343
      %p505 = pneg %p340
      %p506 = pneg %p369
      %p507 = pneg %p366
      %p508 = scmp.lt.s32.totalorder %s28, 1
      %s509 = scalar_select %p508, %s28, 1
      %s510 = smul.addr %s509, 16
      %s511 = smul.addr %s510, 8
      %s512 = scalar_lea.vmem %s15, %s511
      %p513 = pneg %p395
      %p514 = pneg %p392
      %p515 = scmp.lt.s32.totalorder %s28, 1
      %s516 = scalar_select %p515, %s28, 1
      %s517 = smul.addr %s516, 8
      %s518 = smul.addr %s517, 8
      %s519 = scalar_lea.vmem %s16, %s518
      %p520 = scmp.lt.s32.totalorder %s28, 1
      %s521 = scalar_select %p520, %s28, 1
      %s522 = smul.addr %s521, 4
      %s523 = smul.addr %s522, 8
      %s524 = scalar_lea.vmem %s0, %s523
      %p525 = scmp.lt.s32.totalorder %s28, 1
      %s526 = scalar_select %p525, %s28, 1
      %s527 = smul.addr %s526, 16
      %s528 = smul.addr %s527, 8
      %s529 = scalar_lea.vmem %s15, %s528
      %p530 = scmp.lt.s32.totalorder %s28, 1
      %s531 = scalar_select %p530, %s28, 1
      %s532 = smul.addr %s531, 8
      %s533 = smul.addr %s532, 8
      %s534 = scalar_lea.vmem %s16, %s533
      %v536 = vld [vmem:[%s524] sm:$0xff]
      %v537 = vld [vmem:[%s524 + $0x8] sm:$0xff]
      %v538 = vld [vmem:[%s524 + $0x10] sm:$0xff]
      %v539 = vld [vmem:[%s524 + $0x18] sm:$0xff]
      %v540 = vld [vmem:[%s1] sm:$0xf]
      %v541 = vld [vmem:[%s1 + $0x4] sm:$0xf]
      %v542 = vld [vmem:[%s1 + $0x8] sm:$0xf]
      %v543 = vld [vmem:[%s1 + $0xc] sm:$0xf]
      %v544 = vld [vmem:[%s1 + $0x10] sm:$0xf]
      %v545 = vld [vmem:[%s1 + $0x14] sm:$0xf]
      %v546 = vld [vmem:[%s1 + $0x18] sm:$0xf]
      %v547 = vld [vmem:[%s1 + $0x1c] sm:$0xf]
      %v548 = vld [vmem:[%s1 + $0x20] sm:$0xf]
      %v549 = vld [vmem:[%s1 + $0x24] sm:$0xf]
      %v550 = vld [vmem:[%s1 + $0x28] sm:$0xf]
      %v551 = vld [vmem:[%s1 + $0x2c] sm:$0xf]
      %v552 = vld [vmem:[%s1 + $0x30] sm:$0xf]
      %v553 = vld [vmem:[%s1 + $0x34] sm:$0xf]
      %v554 = vld [vmem:[%s1 + $0x38] sm:$0xf]
      %v555 = vld [vmem:[%s1 + $0x3c] sm:$0xf]
      %v556 = vld [vmem:[%s1 + $0x40] sm:$0xf]
      %v557 = vld [vmem:[%s1 + $0x44] sm:$0xf]
      %v558 = vld [vmem:[%s1 + $0x48] sm:$0xf]
      %v559 = vld [vmem:[%s1 + $0x4c] sm:$0xf]
      %v560 = vld [vmem:[%s1 + $0x50] sm:$0xf]
      %v561 = vld [vmem:[%s1 + $0x54] sm:$0xf]
      %v562 = vld [vmem:[%s1 + $0x58] sm:$0xf]
      %v563 = vld [vmem:[%s1 + $0x5c] sm:$0xf]
      %v564 = vld [vmem:[%s1 + $0x60] sm:$0xf]
      %v565 = vld [vmem:[%s1 + $0x64] sm:$0xf]
      %v566 = vld [vmem:[%s1 + $0x68] sm:$0xf]
      %v567 = vld [vmem:[%s1 + $0x6c] sm:$0xf]
      %v568 = vld [vmem:[%s1 + $0x70] sm:$0xf]
      %v569 = vld [vmem:[%s1 + $0x74] sm:$0xf]
      %v570 = vld [vmem:[%s1 + $0x78] sm:$0xf]
      %v571 = vld [vmem:[%s1 + $0x7c] sm:$0xf]
      %v572 = vld [vmem:[%s2] sm:$0xff]
      %v573 = vld [vmem:[%s2 + $0x8] sm:$0xff]
      %v574 = vld [vmem:[%s2 + $0x10] sm:$0xff]
      %v575 = vld [vmem:[%s2 + $0x18] sm:$0xff]
      %v576 = vld [vmem:[%s2 + $0x20] sm:$0xff]
      %v577 = vld [vmem:[%s2 + $0x28] sm:$0xff]
      %v578 = vld [vmem:[%s2 + $0x30] sm:$0xff]
      %v579 = vld [vmem:[%s2 + $0x38] sm:$0xff]
      %v580 = vld [vmem:[%s2 + $0x40] sm:$0xff]
      %v581 = vld [vmem:[%s2 + $0x48] sm:$0xff]
      %v582 = vld [vmem:[%s2 + $0x50] sm:$0xff]
      %v583 = vld [vmem:[%s2 + $0x58] sm:$0xff]
      %v584 = vld [vmem:[%s2 + $0x60] sm:$0xff]
      %v585 = vld [vmem:[%s2 + $0x68] sm:$0xff]
      %v586 = vld [vmem:[%s2 + $0x70] sm:$0xff]
      %v587 = vld [vmem:[%s2 + $0x78] sm:$0xff]
      %v588 = vld [vmem:[%s2 + $0x80] sm:$0xff]
      %v589 = vld [vmem:[%s2 + $0x88] sm:$0xff]
      %v590 = vld [vmem:[%s2 + $0x90] sm:$0xff]
      %v591 = vld [vmem:[%s2 + $0x98] sm:$0xff]
      %v592 = vld [vmem:[%s2 + $0xa0] sm:$0xff]
      %v593 = vld [vmem:[%s2 + $0xa8] sm:$0xff]
      %v594 = vld [vmem:[%s2 + $0xb0] sm:$0xff]
      %v595 = vld [vmem:[%s2 + $0xb8] sm:$0xff]
      %v596 = vld [vmem:[%s2 + $0xc0] sm:$0xff]
      %v597 = vld [vmem:[%s2 + $0xc8] sm:$0xff]
      %v598 = vld [vmem:[%s2 + $0xd0] sm:$0xff]
      %v599 = vld [vmem:[%s2 + $0xd8] sm:$0xff]
      %v600 = vld [vmem:[%s2 + $0xe0] sm:$0xff]
      %v601 = vld [vmem:[%s2 + $0xe8] sm:$0xff]
      %v602 = vld [vmem:[%s2 + $0xf0] sm:$0xff]
      %v603 = vld [vmem:[%s2 + $0xf8] sm:$0xff]
      %v604 = vpack.c.bf16 %v538, %v536
      %v605 = vpack.c.bf16 %v539, %v537
      %607 = vset.pattern.permute.xlu0 0
      %608 = vperm.xlu0 %607, %v572
      %v609 = vpop.permute.xlu0 %608
      %612 = vset.pattern.permute.xlu0 0
      %613 = vperm.xlu0 %612, %v573
      %v614 = vpop.permute.xlu0 %613
      %617 = vset.pattern.permute.xlu0 0
      %618 = vperm.xlu0 %617, %v574
      %v619 = vpop.permute.xlu0 %618
      %622 = vset.pattern.permute.xlu0 0
      %623 = vperm.xlu0 %622, %v575
      %v624 = vpop.permute.xlu0 %623
      %627 = vset.pattern.permute.xlu0 0
      %628 = vperm.xlu0 %627, %v576
      %v629 = vpop.permute.xlu0 %628
      %632 = vset.pattern.permute.xlu0 0
      %633 = vperm.xlu0 %632, %v577
      %v634 = vpop.permute.xlu0 %633
      %637 = vset.pattern.permute.xlu0 0
      %638 = vperm.xlu0 %637, %v578
      %v639 = vpop.permute.xlu0 %638
      %642 = vset.pattern.permute.xlu0 0
      %643 = vperm.xlu0 %642, %v579
      %v644 = vpop.permute.xlu0 %643
      %647 = vset.pattern.permute.xlu0 0
      %648 = vperm.xlu0 %647, %v580
      %v649 = vpop.permute.xlu0 %648
      %652 = vset.pattern.permute.xlu0 0
      %653 = vperm.xlu0 %652, %v581
      %v654 = vpop.permute.xlu0 %653
      %657 = vset.pattern.permute.xlu0 0
      %658 = vperm.xlu0 %657, %v582
      %v659 = vpop.permute.xlu0 %658
      %662 = vset.pattern.permute.xlu0 0
      %663 = vperm.xlu0 %662, %v583
      %v664 = vpop.permute.xlu0 %663
      %667 = vset.pattern.permute.xlu0 0
      %668 = vperm.xlu0 %667, %v584
      %v669 = vpop.permute.xlu0 %668
      %672 = vset.pattern.permute.xlu0 0
      %673 = vperm.xlu0 %672, %v585
      %v674 = vpop.permute.xlu0 %673
      %677 = vset.pattern.permute.xlu0 0
      %678 = vperm.xlu0 %677, %v586
      %v679 = vpop.permute.xlu0 %678
      %682 = vset.pattern.permute.xlu0 0
      %683 = vperm.xlu0 %682, %v587
      %v684 = vpop.permute.xlu0 %683
      %687 = vset.pattern.permute.xlu0 0
      %688 = vperm.xlu0 %687, %v588
      %v689 = vpop.permute.xlu0 %688
      %692 = vset.pattern.permute.xlu0 0
      %693 = vperm.xlu0 %692, %v589
      %v694 = vpop.permute.xlu0 %693
      %697 = vset.pattern.permute.xlu0 0
      %698 = vperm.xlu0 %697, %v590
      %v699 = vpop.permute.xlu0 %698
      %702 = vset.pattern.permute.xlu0 0
      %703 = vperm.xlu0 %702, %v591
      %v704 = vpop.permute.xlu0 %703
      %707 = vset.pattern.permute.xlu0 0
      %708 = vperm.xlu0 %707, %v592
      %v709 = vpop.permute.xlu0 %708
      %712 = vset.pattern.permute.xlu0 0
      %713 = vperm.xlu0 %712, %v593
      %v714 = vpop.permute.xlu0 %713
      %717 = vset.pattern.permute.xlu0 0
      %718 = vperm.xlu0 %717, %v594
      %v719 = vpop.permute.xlu0 %718
      %722 = vset.pattern.permute.xlu0 0
      %723 = vperm.xlu0 %722, %v595
      %v724 = vpop.permute.xlu0 %723
      %727 = vset.pattern.permute.xlu0 0
      %728 = vperm.xlu0 %727, %v596
      %v729 = vpop.permute.xlu0 %728
      %732 = vset.pattern.permute.xlu0 0
      %733 = vperm.xlu0 %732, %v597
      %v734 = vpop.permute.xlu0 %733
      %737 = vset.pattern.permute.xlu0 0
      %738 = vperm.xlu0 %737, %v598
      %v739 = vpop.permute.xlu0 %738
      %742 = vset.pattern.permute.xlu0 0
      %743 = vperm.xlu0 %742, %v599
      %v744 = vpop.permute.xlu0 %743
      %747 = vset.pattern.permute.xlu0 0
      %748 = vperm.xlu0 %747, %v600
      %v749 = vpop.permute.xlu0 %748
      %752 = vset.pattern.permute.xlu0 0
      %753 = vperm.xlu0 %752, %v601
      %v754 = vpop.permute.xlu0 %753
      %757 = vset.pattern.permute.xlu0 0
      %758 = vperm.xlu0 %757, %v602
      %v759 = vpop.permute.xlu0 %758
      %762 = vset.pattern.permute.xlu0 0
      %763 = vperm.xlu0 %762, %v603
      %v764 = vpop.permute.xlu0 %763
      %v798 = vunpack.c.l.b16 %v540
      %v799 = vunpack.c.l.b16 %v541
      %v800 = vunpack.c.l.b16 %v542
      %v801 = vunpack.c.l.b16 %v543
      %v802 = vunpack.c.l.b16 %v544
      %v803 = vunpack.c.l.b16 %v545
      %v804 = vunpack.c.l.b16 %v546
      %v805 = vunpack.c.l.b16 %v547
      %v806 = vunpack.c.l.b16 %v548
      %v807 = vunpack.c.l.b16 %v549
      %v808 = vunpack.c.l.b16 %v550
      %v809 = vunpack.c.l.b16 %v551
      %v810 = vunpack.c.l.b16 %v552
      %v811 = vunpack.c.l.b16 %v553
      %v812 = vunpack.c.l.b16 %v554
      %v813 = vunpack.c.l.b16 %v555
      %v814 = vunpack.c.l.b16 %v556
      %v815 = vunpack.c.l.b16 %v557
      %v816 = vunpack.c.l.b16 %v558
      %v817 = vunpack.c.l.b16 %v559
      %v818 = vunpack.c.l.b16 %v560
      %v819 = vunpack.c.l.b16 %v561
      %v820 = vunpack.c.l.b16 %v562
      %v821 = vunpack.c.l.b16 %v563
      %v822 = vunpack.c.l.b16 %v564
      %v823 = vunpack.c.l.b16 %v565
      %v824 = vunpack.c.l.b16 %v566
      %v825 = vunpack.c.l.b16 %v567
      %v826 = vunpack.c.l.b16 %v568
      %v827 = vunpack.c.l.b16 %v569
      %v828 = vunpack.c.l.b16 %v570
      %v829 = vunpack.c.l.b16 %v571
      %v830 = vpack.c.b16 %v799, %v798
      %v831 = vpack.c.b16 %v801, %v800
      %v832 = vpack.c.b16 %v803, %v802
      %v833 = vpack.c.b16 %v805, %v804
      %v834 = vpack.c.b16 %v807, %v806
      %v835 = vpack.c.b16 %v809, %v808
      %v836 = vpack.c.b16 %v811, %v810
      %v837 = vpack.c.b16 %v813, %v812
      %v838 = vpack.c.b16 %v815, %v814
      %v839 = vpack.c.b16 %v817, %v816
      %v840 = vpack.c.b16 %v819, %v818
      %v841 = vpack.c.b16 %v821, %v820
      %v842 = vpack.c.b16 %v823, %v822
      %v843 = vpack.c.b16 %v825, %v824
      %v844 = vpack.c.b16 %v827, %v826
      %v845 = vpack.c.b16 %v829, %v828
      %vm846 = vcmask 130048
      %v848 = vsel %vm846, %v830, 0
      %v851 = vsel %vm846, %v831, 0
      %v854 = vsel %vm846, %v832, 0
      %v857 = vsel %vm846, %v833, 0
      %v860 = vsel %vm846, %v834, 0
      %v863 = vsel %vm846, %v835, 0
      %v866 = vsel %vm846, %v836, 0
      %v869 = vsel %vm846, %v837, 0
      %v872 = vsel %vm846, %v838, 0
      %v875 = vsel %vm846, %v839, 0
      %v878 = vsel %vm846, %v840, 0
      %v881 = vsel %vm846, %v841, 0
      %v884 = vsel %vm846, %v842, 0
      %v887 = vsel %vm846, %v843, 0
      %v890 = vsel %vm846, %v844, 0
      %v893 = vsel %vm846, %v845, 0
      %895 = vmatprep.subr.bf16.mxu0 %v605
      %896 = vmatpush1.bf16.msra.mxu0 %v604
      %897 = vmatprep.subr.bf16.mxu0 0
      %898 = vmatpush1.bf16.msra.mxu0 0
      %899 = vmatprep.subr.bf16.mxu0 0
      %900 = vmatpush1.bf16.msra.mxu0 0
      %901 = vmatprep.subr.bf16.mxu0 0
      %902 = vmatpush1.bf16.msra.mxu0 0
      %903 = vmatprep.subr.bf16.mxu0 0
      %904 = vmatpush1.bf16.msra.mxu0 0
      %905 = vmatprep.subr.bf16.mxu0 0
      %906 = vmatpush1.bf16.msra.mxu0 0
      %907 = vmatprep.subr.bf16.mxu0 0
      %908 = vmatpush1.bf16.msra.mxu0 0
      %909 = vmatprep.subr.bf16.mxu0 0
      %910 = vmatpush1.bf16.msra.mxu0 0
      %911 = vmatprep.subr.bf16.mxu0 0
      %912 = vmatpush1.bf16.msra.mxu0 0
      %913 = vmatprep.subr.bf16.mxu0 0
      %914 = vmatpush1.bf16.msra.mxu0 0
      %915 = vmatprep.subr.bf16.mxu0 0
      %916 = vmatpush1.bf16.msra.mxu0 0
      %917 = vmatprep.subr.bf16.mxu0 0
      %918 = vmatpush1.bf16.msra.mxu0 0
      %919 = vmatprep.subr.bf16.mxu0 0
      %920 = vmatpush1.bf16.msra.mxu0 0
      %921 = vmatprep.subr.bf16.mxu0 0
      %922 = vmatpush1.bf16.msra.mxu0 0
      %923 = vmatprep.subr.bf16.mxu0 0
      %924 = vmatpush1.bf16.msra.mxu0 0
      %925 = vmatprep.subr.bf16.mxu0 0
      %926 = vmatpush1.bf16.msra.mxu0 0
      %927 = vmatprep.mubr.bf16.mxu0 0
      %928 = vmatmul.mubr.bf16.gmra.mrb[0].mxu0 %v848
      %v929 = vpop.f32.mrb[0].mxu0
      %v930 = vadd.f32 %v609, %v929
      %v931 = vpop.f32.mrb[0].mxu0
      %v932 = vadd.f32 %v609, %v931
      %v933 = vpop.f32.mrb[0].mxu0
      %v934 = vadd.f32 %v614, %v933
      %v935 = vpop.f32.mrb[0].mxu0
      %v936 = vadd.f32 %v614, %v935
      %937 = vmatprep.mubr.bf16.mxu0 0
      %938 = vmatmul.mubr.bf16.gmra.mrb[0].mxu0 %v851
      %v939 = vpop.f32.mrb[0].mxu0
      %v940 = vadd.f32 %v619, %v939
      %v941 = vpop.f32.mrb[0].mxu0
      %v942 = vadd.f32 %v619, %v941
      %v943 = vpop.f32.mrb[0].mxu0
      %v944 = vadd.f32 %v624, %v943
      %v945 = vpop.f32.mrb[0].mxu0
      %v946 = vadd.f32 %v624, %v945
      %947 = vmatprep.mubr.bf16.mxu0 0
      %948 = vmatmul.mubr.bf16.gmra.mrb[0].mxu0 %v854
      %v949 = vpop.f32.mrb[0].mxu0
      %v950 = vadd.f32 %v629, %v949
      %v951 = vpop.f32.mrb[0].mxu0
      %v952 = vadd.f32 %v629, %v951
      %v953 = vpop.f32.mrb[0].mxu0
      %v954 = vadd.f32 %v634, %v953
      %v955 = vpop.f32.mrb[0].mxu0
      %v956 = vadd.f32 %v634, %v955
      %957 = vmatprep.mubr.bf16.mxu0 0
      %958 = vmatmul.mubr.bf16.gmra.mrb[0].mxu0 %v857
      %v959 = vpop.f32.mrb[0].mxu0
      %v960 = vadd.f32 %v639, %v959
      %v961 = vpop.f32.mrb[0].mxu0
      %v962 = vadd.f32 %v639, %v961
      %v963 = vpop.f32.mrb[0].mxu0
      %v964 = vadd.f32 %v644, %v963
      %v965 = vpop.f32.mrb[0].mxu0
      %v966 = vadd.f32 %v644, %v965
      %967 = vmatprep.mubr.bf16.mxu0 0
      %968 = vmatmul.mubr.bf16.gmra.mrb[0].mxu0 %v860
      %v969 = vpop.f32.mrb[0].mxu0
      %v970 = vadd.f32 %v649, %v969
      %v971 = vpop.f32.mrb[0].mxu0
      %v972 = vadd.f32 %v649, %v971
      %v973 = vpop.f32.mrb[0].mxu0
      %v974 = vadd.f32 %v654, %v973
      %v975 = vpop.f32.mrb[0].mxu0
      %v976 = vadd.f32 %v654, %v975
      %977 = vmatprep.mubr.bf16.mxu0 0
      %978 = vmatmul.mubr.bf16.gmra.mrb[0].mxu0 %v863
      %v979 = vpop.f32.mrb[0].mxu0
      %v980 = vadd.f32 %v659, %v979
      %v981 = vpop.f32.mrb[0].mxu0
      %v982 = vadd.f32 %v659, %v981
      %v983 = vpop.f32.mrb[0].mxu0
      %v984 = vadd.f32 %v664, %v983
      %v985 = vpop.f32.mrb[0].mxu0
      %v986 = vadd.f32 %v664, %v985
      %987 = vmatprep.mubr.bf16.mxu0 0
      %988 = vmatmul.mubr.bf16.gmra.mrb[0].mxu0 %v866
      %v989 = vpop.f32.mrb[0].mxu0
      %v990 = vadd.f32 %v669, %v989
      %v991 = vpop.f32.mrb[0].mxu0
      %v992 = vadd.f32 %v669, %v991
      %v993 = vpop.f32.mrb[0].mxu0
      %v994 = vadd.f32 %v674, %v993
      %v995 = vpop.f32.mrb[0].mxu0
      %v996 = vadd.f32 %v674, %v995
      %997 = vmatprep.mubr.bf16.mxu0 0
      %998 = vmatmul.mubr.bf16.gmra.mrb[0].mxu0 %v869
      %v999 = vpop.f32.mrb[0].mxu0
      %v1000 = vadd.f32 %v679, %v999
      %v1001 = vpop.f32.mrb[0].mxu0
      %v1002 = vadd.f32 %v679, %v1001
      %v1003 = vpop.f32.mrb[0].mxu0
      %v1004 = vadd.f32 %v684, %v1003
      %v1005 = vpop.f32.mrb[0].mxu0
      %v1006 = vadd.f32 %v684, %v1005
      %1007 = vmatprep.mubr.bf16.mxu0 0
      %1008 = vmatmul.mubr.bf16.gmra.mrb[0].mxu0 %v872
      %v1009 = vpop.f32.mrb[0].mxu0
      %v1010 = vadd.f32 %v689, %v1009
      %v1011 = vpop.f32.mrb[0].mxu0
      %v1012 = vadd.f32 %v689, %v1011
      %v1013 = vpop.f32.mrb[0].mxu0
      %v1014 = vadd.f32 %v694, %v1013
      %v1015 = vpop.f32.mrb[0].mxu0
      %v1016 = vadd.f32 %v694, %v1015
      %1017 = vmatprep.mubr.bf16.mxu0 0
      %1018 = vmatmul.mubr.bf16.gmra.mrb[0].mxu0 %v875
      %v1019 = vpop.f32.mrb[0].mxu0
      %v1020 = vadd.f32 %v699, %v1019
      %v1021 = vpop.f32.mrb[0].mxu0
      %v1022 = vadd.f32 %v699, %v1021
      %v1023 = vpop.f32.mrb[0].mxu0
      %v1024 = vadd.f32 %v704, %v1023
      %v1025 = vpop.f32.mrb[0].mxu0
      %v1026 = vadd.f32 %v704, %v1025
      %1027 = vmatprep.mubr.bf16.mxu0 0
      %1028 = vmatmul.mubr.bf16.gmra.mrb[0].mxu0 %v878
      %v1029 = vpop.f32.mrb[0].mxu0
      %v1030 = vadd.f32 %v709, %v1029
      %v1031 = vpop.f32.mrb[0].mxu0
      %v1032 = vadd.f32 %v709, %v1031
      %v1033 = vpop.f32.mrb[0].mxu0
      %v1034 = vadd.f32 %v714, %v1033
      %v1035 = vpop.f32.mrb[0].mxu0
      %v1036 = vadd.f32 %v714, %v1035
      %1037 = vmatprep.mubr.bf16.mxu0 0
      %1038 = vmatmul.mubr.bf16.gmra.mrb[0].mxu0 %v881
      %v1039 = vpop.f32.mrb[0].mxu0
      %v1040 = vadd.f32 %v719, %v1039
      %v1041 = vpop.f32.mrb[0].mxu0
      %v1042 = vadd.f32 %v719, %v1041
      %v1043 = vpop.f32.mrb[0].mxu0
      %v1044 = vadd.f32 %v724, %v1043
      %v1045 = vpop.f32.mrb[0].mxu0
      %v1046 = vadd.f32 %v724, %v1045
      %1047 = vmatprep.mubr.bf16.mxu0 0
      %1048 = vmatmul.mubr.bf16.gmra.mrb[0].mxu0 %v884
      %v1049 = vpop.f32.mrb[0].mxu0
      %v1050 = vadd.f32 %v729, %v1049
      %v1051 = vpop.f32.mrb[0].mxu0
      %v1052 = vadd.f32 %v729, %v1051
      %v1053 = vpop.f32.mrb[0].mxu0
      %v1054 = vadd.f32 %v734, %v1053
      %v1055 = vpop.f32.mrb[0].mxu0
      %v1056 = vadd.f32 %v734, %v1055
      %1057 = vmatprep.mubr.bf16.mxu0 0
      %1058 = vmatmul.mubr.bf16.gmra.mrb[0].mxu0 %v887
      %v1059 = vpop.f32.mrb[0].mxu0
      %v1060 = vadd.f32 %v739, %v1059
      %v1061 = vpop.f32.mrb[0].mxu0
      %v1062 = vadd.f32 %v739, %v1061
      %v1063 = vpop.f32.mrb[0].mxu0
      %v1064 = vadd.f32 %v744, %v1063
      %v1065 = vpop.f32.mrb[0].mxu0
      %v1066 = vadd.f32 %v744, %v1065
      %1067 = vmatprep.mubr.bf16.mxu0 0
      %1068 = vmatmul.mubr.bf16.gmra.mrb[0].mxu0 %v890
      %v1069 = vpop.f32.mrb[0].mxu0
      %v1070 = vadd.f32 %v749, %v1069
      %v1071 = vpop.f32.mrb[0].mxu0
      %v1072 = vadd.f32 %v749, %v1071
      %v1073 = vpop.f32.mrb[0].mxu0
      %v1074 = vadd.f32 %v754, %v1073
      %v1075 = vpop.f32.mrb[0].mxu0
      %v1076 = vadd.f32 %v754, %v1075
      %1077 = vmatprep.mubr.bf16.mxu0 0
      %1078 = vmatmul.mubr.bf16.gmra.mrb[0].mxu0 %v893
      %v1079 = vpop.f32.mrb[0].mxu0
      %v1080 = vadd.f32 %v759, %v1079
      %v1081 = vpop.f32.mrb[0].mxu0
      %v1082 = vadd.f32 %v759, %v1081
      %v1083 = vpop.f32.mrb[0].mxu0
      %v1084 = vadd.f32 %v764, %v1083
      %v1085 = vpop.f32.mrb[0].mxu0
      %v1086 = vadd.f32 %v764, %v1085
      %1087 = vdwg.mxu0
      %v1088 = vadd.f32 %v930, %v932
      %1089 = vadd.xlane.f32.xlu0 %v1088
      %v1090 = vpop.xlane.xlu0 %1089
      %v1091 = vadd.f32 %v934, %v936
      %1092 = vadd.xlane.f32.xlu0 %v1091
      %v1093 = vpop.xlane.xlu0 %1092
      %v1094 = vadd.f32 %v940, %v942
      %1095 = vadd.xlane.f32.xlu0 %v1094
      %v1096 = vpop.xlane.xlu0 %1095
      %v1097 = vadd.f32 %v944, %v946
      %1098 = vadd.xlane.f32.xlu0 %v1097
      %v1099 = vpop.xlane.xlu0 %1098
      %v1100 = vadd.f32 %v950, %v952
      %1101 = vadd.xlane.f32.xlu0 %v1100
      %v1102 = vpop.xlane.xlu0 %1101
      %v1103 = vadd.f32 %v954, %v956
      %1104 = vadd.xlane.f32.xlu0 %v1103
      %v1105 = vpop.xlane.xlu0 %1104
      %v1106 = vadd.f32 %v960, %v962
      %1107 = vadd.xlane.f32.xlu0 %v1106
      %v1108 = vpop.xlane.xlu0 %1107
      %v1109 = vadd.f32 %v964, %v966
      %1110 = vadd.xlane.f32.xlu0 %v1109
      %v1111 = vpop.xlane.xlu0 %1110
      %v1112 = vadd.f32 %v970, %v972
      %1113 = vadd.xlane.f32.xlu0 %v1112
      %v1114 = vpop.xlane.xlu0 %1113
      %v1115 = vadd.f32 %v974, %v976
      %1116 = vadd.xlane.f32.xlu0 %v1115
      %v1117 = vpop.xlane.xlu0 %1116
      %v1118 = vadd.f32 %v980, %v982
      %1119 = vadd.xlane.f32.xlu0 %v1118
      %v1120 = vpop.xlane.xlu0 %1119
      %v1121 = vadd.f32 %v984, %v986
      %1122 = vadd.xlane.f32.xlu0 %v1121
      %v1123 = vpop.xlane.xlu0 %1122
      %v1124 = vadd.f32 %v990, %v992
      %1125 = vadd.xlane.f32.xlu0 %v1124
      %v1126 = vpop.xlane.xlu0 %1125
      %v1127 = vadd.f32 %v994, %v996
      %1128 = vadd.xlane.f32.xlu0 %v1127
      %v1129 = vpop.xlane.xlu0 %1128
      %v1130 = vadd.f32 %v1000, %v1002
      %1131 = vadd.xlane.f32.xlu0 %v1130
      %v1132 = vpop.xlane.xlu0 %1131
      %v1133 = vadd.f32 %v1004, %v1006
      %1134 = vadd.xlane.f32.xlu0 %v1133
      %v1135 = vpop.xlane.xlu0 %1134
      %v1136 = vadd.f32 %v1010, %v1012
      %1137 = vadd.xlane.f32.xlu0 %v1136
      %v1138 = vpop.xlane.xlu0 %1137
      %v1139 = vadd.f32 %v1014, %v1016
      %1140 = vadd.xlane.f32.xlu0 %v1139
      %v1141 = vpop.xlane.xlu0 %1140
      %v1142 = vadd.f32 %v1020, %v1022
      %1143 = vadd.xlane.f32.xlu0 %v1142
      %v1144 = vpop.xlane.xlu0 %1143
      %v1145 = vadd.f32 %v1024, %v1026
      %1146 = vadd.xlane.f32.xlu0 %v1145
      %v1147 = vpop.xlane.xlu0 %1146
      %v1148 = vadd.f32 %v1030, %v1032
      %1149 = vadd.xlane.f32.xlu0 %v1148
      %v1150 = vpop.xlane.xlu0 %1149
      %v1151 = vadd.f32 %v1034, %v1036
      %1152 = vadd.xlane.f32.xlu0 %v1151
      %v1153 = vpop.xlane.xlu0 %1152
      %v1154 = vadd.f32 %v1040, %v1042
      %1155 = vadd.xlane.f32.xlu0 %v1154
      %v1156 = vpop.xlane.xlu0 %1155
      %v1157 = vadd.f32 %v1044, %v1046
      %1158 = vadd.xlane.f32.xlu0 %v1157
      %v1159 = vpop.xlane.xlu0 %1158
      %v1160 = vadd.f32 %v1050, %v1052
      %1161 = vadd.xlane.f32.xlu0 %v1160
      %v1162 = vpop.xlane.xlu0 %1161
      %v1163 = vadd.f32 %v1054, %v1056
      %1164 = vadd.xlane.f32.xlu0 %v1163
      %v1165 = vpop.xlane.xlu0 %1164
      %v1166 = vadd.f32 %v1060, %v1062
      %1167 = vadd.xlane.f32.xlu0 %v1166
      %v1168 = vpop.xlane.xlu0 %1167
      %v1169 = vadd.f32 %v1064, %v1066
      %1170 = vadd.xlane.f32.xlu0 %v1169
      %v1171 = vpop.xlane.xlu0 %1170
      %v1172 = vadd.f32 %v1070, %v1072
      %1173 = vadd.xlane.f32.xlu0 %v1172
      %v1174 = vpop.xlane.xlu0 %1173
      %v1175 = vadd.f32 %v1074, %v1076
      %1176 = vadd.xlane.f32.xlu0 %v1175
      %v1177 = vpop.xlane.xlu0 %1176
      %v1178 = vadd.f32 %v1080, %v1082
      %1179 = vadd.xlane.f32.xlu0 %v1178
      %v1180 = vpop.xlane.xlu0 %1179
      %v1181 = vadd.f32 %v1084, %v1086
      %1182 = vadd.xlane.f32.xlu0 %v1181
      %v1183 = vpop.xlane.xlu0 %1182
      %v1184 = vrcp.pop 256.0
      %v1185 = vmul.f32 %v1090, %v1184
      %v1186 = vmul.f32 %v1093, %v1184
      %v1187 = vmul.f32 %v1096, %v1184
      %v1188 = vmul.f32 %v1099, %v1184
      %v1189 = vmul.f32 %v1102, %v1184
      %v1190 = vmul.f32 %v1105, %v1184
      %v1191 = vmul.f32 %v1108, %v1184
      %v1192 = vmul.f32 %v1111, %v1184
      %v1193 = vmul.f32 %v1114, %v1184
      %v1194 = vmul.f32 %v1117, %v1184
      %v1195 = vmul.f32 %v1120, %v1184
      %v1196 = vmul.f32 %v1123, %v1184
      %v1197 = vmul.f32 %v1126, %v1184
      %v1198 = vmul.f32 %v1129, %v1184
      %v1199 = vmul.f32 %v1132, %v1184
      %v1200 = vmul.f32 %v1135, %v1184
      %v1201 = vmul.f32 %v1138, %v1184
      %v1202 = vmul.f32 %v1141, %v1184
      %v1203 = vmul.f32 %v1144, %v1184
      %v1204 = vmul.f32 %v1147, %v1184
      %v1205 = vmul.f32 %v1150, %v1184
      %v1206 = vmul.f32 %v1153, %v1184
      %v1207 = vmul.f32 %v1156, %v1184
      %v1208 = vmul.f32 %v1159, %v1184
      %v1209 = vmul.f32 %v1162, %v1184
      %v1210 = vmul.f32 %v1165, %v1184
      %v1211 = vmul.f32 %v1168, %v1184
      %v1212 = vmul.f32 %v1171, %v1184
      %v1213 = vmul.f32 %v1174, %v1184
      %v1214 = vmul.f32 %v1177, %v1184
      %v1215 = vmul.f32 %v1180, %v1184
      %v1216 = vmul.f32 %v1183, %v1184
      %v1217 = vsub.f32 %v930, %v1185
      %v1218 = vsub.f32 %v932, %v1185
      %v1219 = vsub.f32 %v934, %v1186
      %v1220 = vsub.f32 %v936, %v1186
      %v1221 = vsub.f32 %v940, %v1187
      %v1222 = vsub.f32 %v942, %v1187
      %v1223 = vsub.f32 %v944, %v1188
      %v1224 = vsub.f32 %v946, %v1188
      %v1225 = vsub.f32 %v950, %v1189
      %v1226 = vsub.f32 %v952, %v1189
      %v1227 = vsub.f32 %v954, %v1190
      %v1228 = vsub.f32 %v956, %v1190
      %v1229 = vsub.f32 %v960, %v1191
      %v1230 = vsub.f32 %v962, %v1191
      %v1231 = vsub.f32 %v964, %v1192
      %v1232 = vsub.f32 %v966, %v1192
      %v1233 = vsub.f32 %v970, %v1193
      %v1234 = vsub.f32 %v972, %v1193
      %v1235 = vsub.f32 %v974, %v1194
      %v1236 = vsub.f32 %v976, %v1194
      %v1237 = vsub.f32 %v980, %v1195
      %v1238 = vsub.f32 %v982, %v1195
      %v1239 = vsub.f32 %v984, %v1196
      %v1240 = vsub.f32 %v986, %v1196
      %v1241 = vsub.f32 %v990, %v1197
      %v1242 = vsub.f32 %v992, %v1197
      %v1243 = vsub.f32 %v994, %v1198
      %v1244 = vsub.f32 %v996, %v1198
      %v1245 = vsub.f32 %v1000, %v1199
      %v1246 = vsub.f32 %v1002, %v1199
      %v1247 = vsub.f32 %v1004, %v1200
      %v1248 = vsub.f32 %v1006, %v1200
      %v1249 = vsub.f32 %v1010, %v1201
      %v1250 = vsub.f32 %v1012, %v1201
      %v1251 = vsub.f32 %v1014, %v1202
      %v1252 = vsub.f32 %v1016, %v1202
      %v1253 = vsub.f32 %v1020, %v1203
      %v1254 = vsub.f32 %v1022, %v1203
      %v1255 = vsub.f32 %v1024, %v1204
      %v1256 = vsub.f32 %v1026, %v1204
      %v1257 = vsub.f32 %v1030, %v1205
      %v1258 = vsub.f32 %v1032, %v1205
      %v1259 = vsub.f32 %v1034, %v1206
      %v1260 = vsub.f32 %v1036, %v1206
      %v1261 = vsub.f32 %v1040, %v1207
      %v1262 = vsub.f32 %v1042, %v1207
      %v1263 = vsub.f32 %v1044, %v1208
      %v1264 = vsub.f32 %v1046, %v1208
      %v1265 = vsub.f32 %v1050, %v1209
      %v1266 = vsub.f32 %v1052, %v1209
      %v1267 = vsub.f32 %v1054, %v1210
      %v1268 = vsub.f32 %v1056, %v1210
      %v1269 = vsub.f32 %v1060, %v1211
      %v1270 = vsub.f32 %v1062, %v1211
      %v1271 = vsub.f32 %v1064, %v1212
      %v1272 = vsub.f32 %v1066, %v1212
      %v1273 = vsub.f32 %v1070, %v1213
      %v1274 = vsub.f32 %v1072, %v1213
      %v1275 = vsub.f32 %v1074, %v1214
      %v1276 = vsub.f32 %v1076, %v1214
      %v1277 = vsub.f32 %v1080, %v1215
      %v1278 = vsub.f32 %v1082, %v1215
      %v1279 = vsub.f32 %v1084, %v1216
      %v1280 = vsub.f32 %v1086, %v1216
      %v1281 = vmul.f32 %v1217, %v1217
      %v1282 = vmul.f32 %v1218, %v1218
      %v1283 = vmul.f32 %v1219, %v1219
      %v1284 = vmul.f32 %v1220, %v1220
      %v1285 = vmul.f32 %v1221, %v1221
      %v1286 = vmul.f32 %v1222, %v1222
      %v1287 = vmul.f32 %v1223, %v1223
      %v1288 = vmul.f32 %v1224, %v1224
      %v1289 = vmul.f32 %v1225, %v1225
      %v1290 = vmul.f32 %v1226, %v1226
      %v1291 = vmul.f32 %v1227, %v1227
      %v1292 = vmul.f32 %v1228, %v1228
      %v1293 = vmul.f32 %v1229, %v1229
      %v1294 = vmul.f32 %v1230, %v1230
      %v1295 = vmul.f32 %v1231, %v1231
      %v1296 = vmul.f32 %v1232, %v1232
      %v1297 = vmul.f32 %v1233, %v1233
      %v1298 = vmul.f32 %v1234, %v1234
      %v1299 = vmul.f32 %v1235, %v1235
      %v1300 = vmul.f32 %v1236, %v1236
      %v1301 = vmul.f32 %v1237, %v1237
      %v1302 = vmul.f32 %v1238, %v1238
      %v1303 = vmul.f32 %v1239, %v1239
      %v1304 = vmul.f32 %v1240, %v1240
      %v1305 = vmul.f32 %v1241, %v1241
      %v1306 = vmul.f32 %v1242, %v1242
      %v1307 = vmul.f32 %v1243, %v1243
      %v1308 = vmul.f32 %v1244, %v1244
      %v1309 = vmul.f32 %v1245, %v1245
      %v1310 = vmul.f32 %v1246, %v1246
      %v1311 = vmul.f32 %v1247, %v1247
      %v1312 = vmul.f32 %v1248, %v1248
      %v1313 = vmul.f32 %v1249, %v1249
      %v1314 = vmul.f32 %v1250, %v1250
      %v1315 = vmul.f32 %v1251, %v1251
      %v1316 = vmul.f32 %v1252, %v1252
      %v1317 = vmul.f32 %v1253, %v1253
      %v1318 = vmul.f32 %v1254, %v1254
      %v1319 = vmul.f32 %v1255, %v1255
      %v1320 = vmul.f32 %v1256, %v1256
      %v1321 = vmul.f32 %v1257, %v1257
      %v1322 = vmul.f32 %v1258, %v1258
      %v1323 = vmul.f32 %v1259, %v1259
      %v1324 = vmul.f32 %v1260, %v1260
      %v1325 = vmul.f32 %v1261, %v1261
      %v1326 = vmul.f32 %v1262, %v1262
      %v1327 = vmul.f32 %v1263, %v1263
      %v1328 = vmul.f32 %v1264, %v1264
      %v1329 = vmul.f32 %v1265, %v1265
      %v1330 = vmul.f32 %v1266, %v1266
      %v1331 = vmul.f32 %v1267, %v1267
      %v1332 = vmul.f32 %v1268, %v1268
      %v1333 = vmul.f32 %v1269, %v1269
      %v1334 = vmul.f32 %v1270, %v1270
      %v1335 = vmul.f32 %v1271, %v1271
      %v1336 = vmul.f32 %v1272, %v1272
      %v1337 = vmul.f32 %v1273, %v1273
      %v1338 = vmul.f32 %v1274, %v1274
      %v1339 = vmul.f32 %v1275, %v1275
      %v1340 = vmul.f32 %v1276, %v1276
      %v1341 = vmul.f32 %v1277, %v1277
      %v1342 = vmul.f32 %v1278, %v1278
      %v1343 = vmul.f32 %v1279, %v1279
      %v1344 = vmul.f32 %v1280, %v1280
      %v1345 = vadd.f32 %v1281, %v1282
      %1346 = vadd.xlane.f32.xlu0 %v1345
      %v1347 = vpop.xlane.xlu0 %1346
      %v1348 = vadd.f32 %v1283, %v1284
      %1349 = vadd.xlane.f32.xlu0 %v1348
      %v1350 = vpop.xlane.xlu0 %1349
      %v1351 = vadd.f32 %v1285, %v1286
      %1352 = vadd.xlane.f32.xlu0 %v1351
      %v1353 = vpop.xlane.xlu0 %1352
      %v1354 = vadd.f32 %v1287, %v1288
      %1355 = vadd.xlane.f32.xlu0 %v1354
      %v1356 = vpop.xlane.xlu0 %1355
      %v1357 = vadd.f32 %v1289, %v1290
      %1358 = vadd.xlane.f32.xlu0 %v1357
      %v1359 = vpop.xlane.xlu0 %1358
      %v1360 = vadd.f32 %v1291, %v1292
      %1361 = vadd.xlane.f32.xlu0 %v1360
      %v1362 = vpop.xlane.xlu0 %1361
      %v1363 = vadd.f32 %v1293, %v1294
      %1364 = vadd.xlane.f32.xlu0 %v1363
      %v1365 = vpop.xlane.xlu0 %1364
      %v1366 = vadd.f32 %v1295, %v1296
      %1367 = vadd.xlane.f32.xlu0 %v1366
      %v1368 = vpop.xlane.xlu0 %1367
      %v1369 = vadd.f32 %v1297, %v1298
      %1370 = vadd.xlane.f32.xlu0 %v1369
      %v1371 = vpop.xlane.xlu0 %1370
      %v1372 = vadd.f32 %v1299, %v1300
      %1373 = vadd.xlane.f32.xlu0 %v1372
      %v1374 = vpop.xlane.xlu0 %1373
      %v1375 = vadd.f32 %v1301, %v1302
      %1376 = vadd.xlane.f32.xlu0 %v1375
      %v1377 = vpop.xlane.xlu0 %1376
      %v1378 = vadd.f32 %v1303, %v1304
      %1379 = vadd.xlane.f32.xlu0 %v1378
      %v1380 = vpop.xlane.xlu0 %1379
      %v1381 = vadd.f32 %v1305, %v1306
      %1382 = vadd.xlane.f32.xlu0 %v1381
      %v1383 = vpop.xlane.xlu0 %1382
      %v1384 = vadd.f32 %v1307, %v1308
      %1385 = vadd.xlane.f32.xlu0 %v1384
      %v1386 = vpop.xlane.xlu0 %1385
      %v1387 = vadd.f32 %v1309, %v1310
      %1388 = vadd.xlane.f32.xlu0 %v1387
      %v1389 = vpop.xlane.xlu0 %1388
      %v1390 = vadd.f32 %v1311, %v1312
      %1391 = vadd.xlane.f32.xlu0 %v1390
      %v1392 = vpop.xlane.xlu0 %1391
      %v1393 = vadd.f32 %v1313, %v1314
      %1394 = vadd.xlane.f32.xlu0 %v1393
      %v1395 = vpop.xlane.xlu0 %1394
      %v1396 = vadd.f32 %v1315, %v1316
      %1397 = vadd.xlane.f32.xlu0 %v1396
      %v1398 = vpop.xlane.xlu0 %1397
      %v1399 = vadd.f32 %v1317, %v1318
      %1400 = vadd.xlane.f32.xlu0 %v1399
      %v1401 = vpop.xlane.xlu0 %1400
      %v1402 = vadd.f32 %v1319, %v1320
      %1403 = vadd.xlane.f32.xlu0 %v1402
      %v1404 = vpop.xlane.xlu0 %1403
      %v1405 = vadd.f32 %v1321, %v1322
      %1406 = vadd.xlane.f32.xlu0 %v1405
      %v1407 = vpop.xlane.xlu0 %1406
      %v1408 = vadd.f32 %v1323, %v1324
      %1409 = vadd.xlane.f32.xlu0 %v1408
      %v1410 = vpop.xlane.xlu0 %1409
      %v1411 = vadd.f32 %v1325, %v1326
      %1412 = vadd.xlane.f32.xlu0 %v1411
      %v1413 = vpop.xlane.xlu0 %1412
      %v1414 = vadd.f32 %v1327, %v1328
      %1415 = vadd.xlane.f32.xlu0 %v1414
      %v1416 = vpop.xlane.xlu0 %1415
      %v1417 = vadd.f32 %v1329, %v1330
      %1418 = vadd.xlane.f32.xlu0 %v1417
      %v1419 = vpop.xlane.xlu0 %1418
      %v1420 = vadd.f32 %v1331, %v1332
      %1421 = vadd.xlane.f32.xlu0 %v1420
      %v1422 = vpop.xlane.xlu0 %1421
      %v1423 = vadd.f32 %v1333, %v1334
      %1424 = vadd.xlane.f32.xlu0 %v1423
      %v1425 = vpop.xlane.xlu0 %1424
      %v1426 = vadd.f32 %v1335, %v1336
      %1427 = vadd.xlane.f32.xlu0 %v1426
      %v1428 = vpop.xlane.xlu0 %1427
      %v1429 = vadd.f32 %v1337, %v1338
      %1430 = vadd.xlane.f32.xlu0 %v1429
      %v1431 = vpop.xlane.xlu0 %1430
      %v1432 = vadd.f32 %v1339, %v1340
      %1433 = vadd.xlane.f32.xlu0 %v1432
      %v1434 = vpop.xlane.xlu0 %1433
      %v1435 = vadd.f32 %v1341, %v1342
      %1436 = vadd.xlane.f32.xlu0 %v1435
      %v1437 = vpop.xlane.xlu0 %1436
      %v1438 = vadd.f32 %v1343, %v1344
      %1439 = vadd.xlane.f32.xlu0 %v1438
      %v1440 = vpop.xlane.xlu0 %1439
      %v1441 = vmul.f32 %v1347, %v1184
      %v1442 = vmul.f32 %v1350, %v1184
      %v1443 = vmul.f32 %v1353, %v1184
      %v1444 = vmul.f32 %v1356, %v1184
      %v1445 = vmul.f32 %v1359, %v1184
      %v1446 = vmul.f32 %v1362, %v1184
      %v1447 = vmul.f32 %v1365, %v1184
      %v1448 = vmul.f32 %v1368, %v1184
      %v1449 = vmul.f32 %v1371, %v1184
      %v1450 = vmul.f32 %v1374, %v1184
      %v1451 = vmul.f32 %v1377, %v1184
      %v1452 = vmul.f32 %v1380, %v1184
      %v1453 = vmul.f32 %v1383, %v1184
      %v1454 = vmul.f32 %v1386, %v1184
      %v1455 = vmul.f32 %v1389, %v1184
      %v1456 = vmul.f32 %v1392, %v1184
      %v1457 = vmul.f32 %v1395, %v1184
      %v1458 = vmul.f32 %v1398, %v1184
      %v1459 = vmul.f32 %v1401, %v1184
      %v1460 = vmul.f32 %v1404, %v1184
      %v1461 = vmul.f32 %v1407, %v1184
      %v1462 = vmul.f32 %v1410, %v1184
      %v1463 = vmul.f32 %v1413, %v1184
      %v1464 = vmul.f32 %v1416, %v1184
      %v1465 = vmul.f32 %v1419, %v1184
      %v1466 = vmul.f32 %v1422, %v1184
      %v1467 = vmul.f32 %v1425, %v1184
      %v1468 = vmul.f32 %v1428, %v1184
      %v1469 = vmul.f32 %v1431, %v1184
      %v1470 = vmul.f32 %v1434, %v1184
      %v1471 = vmul.f32 %v1437, %v1184
      %v1472 = vmul.f32 %v1440, %v1184
      %v1473 = vadd.f32 %v1441, 1e-05
      %v1474 = vadd.f32 %v1442, 1e-05
      %v1475 = vadd.f32 %v1443, 1e-05
      %v1476 = vadd.f32 %v1444, 1e-05
      %v1477 = vadd.f32 %v1445, 1e-05
      %v1478 = vadd.f32 %v1446, 1e-05
      %v1479 = vadd.f32 %v1447, 1e-05
      %v1480 = vadd.f32 %v1448, 1e-05
      %v1481 = vadd.f32 %v1449, 1e-05
      %v1482 = vadd.f32 %v1450, 1e-05
      %v1483 = vadd.f32 %v1451, 1e-05
      %v1484 = vadd.f32 %v1452, 1e-05
      %v1485 = vadd.f32 %v1453, 1e-05
      %v1486 = vadd.f32 %v1454, 1e-05
      %v1487 = vadd.f32 %v1455, 1e-05
      %v1488 = vadd.f32 %v1456, 1e-05
      %v1489 = vadd.f32 %v1457, 1e-05
      %v1490 = vadd.f32 %v1458, 1e-05
      %v1491 = vadd.f32 %v1459, 1e-05
      %v1492 = vadd.f32 %v1460, 1e-05
      %v1493 = vadd.f32 %v1461, 1e-05
      %v1494 = vadd.f32 %v1462, 1e-05
      %v1495 = vadd.f32 %v1463, 1e-05
      %v1496 = vadd.f32 %v1464, 1e-05
      %v1497 = vadd.f32 %v1465, 1e-05
      %v1498 = vadd.f32 %v1466, 1e-05
      %v1499 = vadd.f32 %v1467, 1e-05
      %v1500 = vadd.f32 %v1468, 1e-05
      %v1501 = vadd.f32 %v1469, 1e-05
      %v1502 = vadd.f32 %v1470, 1e-05
      %v1503 = vadd.f32 %v1471, 1e-05
      %v1504 = vadd.f32 %v1472, 1e-05
      %v1505 = vrsqrt.pop %v1473
      %v1506 = vrsqrt.pop %v1474
      %v1507 = vrsqrt.pop %v1475
      %v1508 = vrsqrt.pop %v1476
      %v1509 = vrsqrt.pop %v1477
      %v1510 = vrsqrt.pop %v1478
      %v1511 = vrsqrt.pop %v1479
      %v1512 = vrsqrt.pop %v1480
      %v1513 = vrsqrt.pop %v1481
      %v1514 = vrsqrt.pop %v1482
      %v1515 = vrsqrt.pop %v1483
      %v1516 = vrsqrt.pop %v1484
      %v1517 = vrsqrt.pop %v1485
      %v1518 = vrsqrt.pop %v1486
      %v1519 = vrsqrt.pop %v1487
      %v1520 = vrsqrt.pop %v1488
      %v1521 = vrsqrt.pop %v1489
      %v1522 = vrsqrt.pop %v1490
      %v1523 = vrsqrt.pop %v1491
      %v1524 = vrsqrt.pop %v1492
      %v1525 = vrsqrt.pop %v1493
      %v1526 = vrsqrt.pop %v1494
      %v1527 = vrsqrt.pop %v1495
      %v1528 = vrsqrt.pop %v1496
      %v1529 = vrsqrt.pop %v1497
      %v1530 = vrsqrt.pop %v1498
      %v1531 = vrsqrt.pop %v1499
      %v1532 = vrsqrt.pop %v1500
      %v1533 = vrsqrt.pop %v1501
      %v1534 = vrsqrt.pop %v1502
      %v1535 = vrsqrt.pop %v1503
      %v1536 = vrsqrt.pop %v1504
      %v1537 = vmul.f32 %v1217, %v1505
      %v1538 = vmul.f32 %v1218, %v1505
      %v1539 = vmul.f32 %v1219, %v1506
      %v1540 = vmul.f32 %v1220, %v1506
      %v1541 = vmul.f32 %v1221, %v1507
      %v1542 = vmul.f32 %v1222, %v1507
      %v1543 = vmul.f32 %v1223, %v1508
      %v1544 = vmul.f32 %v1224, %v1508
      %v1545 = vmul.f32 %v1225, %v1509
      %v1546 = vmul.f32 %v1226, %v1509
      %v1547 = vmul.f32 %v1227, %v1510
      %v1548 = vmul.f32 %v1228, %v1510
      %v1549 = vmul.f32 %v1229, %v1511
      %v1550 = vmul.f32 %v1230, %v1511
      %v1551 = vmul.f32 %v1231, %v1512
      %v1552 = vmul.f32 %v1232, %v1512
      %v1553 = vmul.f32 %v1233, %v1513
      %v1554 = vmul.f32 %v1234, %v1513
      %v1555 = vmul.f32 %v1235, %v1514
      %v1556 = vmul.f32 %v1236, %v1514
      %v1557 = vmul.f32 %v1237, %v1515
      %v1558 = vmul.f32 %v1238, %v1515
      %v1559 = vmul.f32 %v1239, %v1516
      %v1560 = vmul.f32 %v1240, %v1516
      %v1561 = vmul.f32 %v1241, %v1517
      %v1562 = vmul.f32 %v1242, %v1517
      %v1563 = vmul.f32 %v1243, %v1518
      %v1564 = vmul.f32 %v1244, %v1518
      %v1565 = vmul.f32 %v1245, %v1519
      %v1566 = vmul.f32 %v1246, %v1519
      %v1567 = vmul.f32 %v1247, %v1520
      %v1568 = vmul.f32 %v1248, %v1520
      %v1569 = vmul.f32 %v1249, %v1521
      %v1570 = vmul.f32 %v1250, %v1521
      %v1571 = vmul.f32 %v1251, %v1522
      %v1572 = vmul.f32 %v1252, %v1522
      %v1573 = vmul.f32 %v1253, %v1523
      %v1574 = vmul.f32 %v1254, %v1523
      %v1575 = vmul.f32 %v1255, %v1524
      %v1576 = vmul.f32 %v1256, %v1524
      %v1577 = vmul.f32 %v1257, %v1525
      %v1578 = vmul.f32 %v1258, %v1525
      %v1579 = vmul.f32 %v1259, %v1526
      %v1580 = vmul.f32 %v1260, %v1526
      %v1581 = vmul.f32 %v1261, %v1527
      %v1582 = vmul.f32 %v1262, %v1527
      %v1583 = vmul.f32 %v1263, %v1528
      %v1584 = vmul.f32 %v1264, %v1528
      %v1585 = vmul.f32 %v1265, %v1529
      %v1586 = vmul.f32 %v1266, %v1529
      %v1587 = vmul.f32 %v1267, %v1530
      %v1588 = vmul.f32 %v1268, %v1530
      %v1589 = vmul.f32 %v1269, %v1531
      %v1590 = vmul.f32 %v1270, %v1531
      %v1591 = vmul.f32 %v1271, %v1532
      %v1592 = vmul.f32 %v1272, %v1532
      %v1593 = vmul.f32 %v1273, %v1533
      %v1594 = vmul.f32 %v1274, %v1533
      %v1595 = vmul.f32 %v1275, %v1534
      %v1596 = vmul.f32 %v1276, %v1534
      %v1597 = vmul.f32 %v1277, %v1535
      %v1598 = vmul.f32 %v1278, %v1535
      %v1599 = vmul.f32 %v1279, %v1536
      %v1600 = vmul.f32 %v1280, %v1536
      %v1601 = vmul.f32 %v1537, 0.5
      %v1602 = vmul.f32 %v1538, 0.5
      %v1603 = vmul.f32 %v1539, 0.5
      %v1604 = vmul.f32 %v1540, 0.5
      %v1605 = vmul.f32 %v1541, 0.5
      %v1606 = vmul.f32 %v1542, 0.5
      %v1607 = vmul.f32 %v1543, 0.5
      %v1608 = vmul.f32 %v1544, 0.5
      %v1609 = vmul.f32 %v1545, 0.5
      %v1610 = vmul.f32 %v1546, 0.5
      %v1611 = vmul.f32 %v1547, 0.5
      %v1612 = vmul.f32 %v1548, 0.5
      %v1613 = vmul.f32 %v1549, 0.5
      %v1614 = vmul.f32 %v1550, 0.5
      %v1615 = vmul.f32 %v1551, 0.5
      %v1616 = vmul.f32 %v1552, 0.5
      %v1617 = vmul.f32 %v1553, 0.5
      %v1618 = vmul.f32 %v1554, 0.5
      %v1619 = vmul.f32 %v1555, 0.5
      %v1620 = vmul.f32 %v1556, 0.5
      %v1621 = vmul.f32 %v1557, 0.5
      %v1622 = vmul.f32 %v1558, 0.5
      %v1623 = vmul.f32 %v1559, 0.5
      %v1624 = vmul.f32 %v1560, 0.5
      %v1625 = vmul.f32 %v1561, 0.5
      %v1626 = vmul.f32 %v1562, 0.5
      %v1627 = vmul.f32 %v1563, 0.5
      %v1628 = vmul.f32 %v1564, 0.5
      %v1629 = vmul.f32 %v1565, 0.5
      %v1630 = vmul.f32 %v1566, 0.5
      %v1631 = vmul.f32 %v1567, 0.5
      %v1632 = vmul.f32 %v1568, 0.5
      %v1633 = vmul.f32 %v1569, 0.5
      %v1634 = vmul.f32 %v1570, 0.5
      %v1635 = vmul.f32 %v1571, 0.5
      %v1636 = vmul.f32 %v1572, 0.5
      %v1637 = vmul.f32 %v1573, 0.5
      %v1638 = vmul.f32 %v1574, 0.5
      %v1639 = vmul.f32 %v1575, 0.5
      %v1640 = vmul.f32 %v1576, 0.5
      %v1641 = vmul.f32 %v1577, 0.5
      %v1642 = vmul.f32 %v1578, 0.5
      %v1643 = vmul.f32 %v1579, 0.5
      %v1644 = vmul.f32 %v1580, 0.5
      %v1645 = vmul.f32 %v1581, 0.5
      %v1646 = vmul.f32 %v1582, 0.5
      %v1647 = vmul.f32 %v1583, 0.5
      %v1648 = vmul.f32 %v1584, 0.5
      %v1649 = vmul.f32 %v1585, 0.5
      %v1650 = vmul.f32 %v1586, 0.5
      %v1651 = vmul.f32 %v1587, 0.5
      %v1652 = vmul.f32 %v1588, 0.5
      %v1653 = vmul.f32 %v1589, 0.5
      %v1654 = vmul.f32 %v1590, 0.5
      %v1655 = vmul.f32 %v1591, 0.5
      %v1656 = vmul.f32 %v1592, 0.5
      %v1657 = vmul.f32 %v1593, 0.5
      %v1658 = vmul.f32 %v1594, 0.5
      %v1659 = vmul.f32 %v1595, 0.5
      %v1660 = vmul.f32 %v1596, 0.5
      %v1661 = vmul.f32 %v1597, 0.5
      %v1662 = vmul.f32 %v1598, 0.5
      %v1663 = vmul.f32 %v1599, 0.5
      %v1664 = vmul.f32 %v1600, 0.5
      %v1665 = vmul.f32 %v1537, 0.70710677
      %v1666 = vmul.f32 %v1538, 0.70710677
      %v1667 = vmul.f32 %v1539, 0.70710677
      %v1668 = vmul.f32 %v1540, 0.70710677
      %v1669 = vmul.f32 %v1541, 0.70710677
      %v1670 = vmul.f32 %v1542, 0.70710677
      %v1671 = vmul.f32 %v1543, 0.70710677
      %v1672 = vmul.f32 %v1544, 0.70710677
      %v1673 = vmul.f32 %v1545, 0.70710677
      %v1674 = vmul.f32 %v1546, 0.70710677
      %v1675 = vmul.f32 %v1547, 0.70710677
      %v1676 = vmul.f32 %v1548, 0.70710677
      %v1677 = vmul.f32 %v1549, 0.70710677
      %v1678 = vmul.f32 %v1550, 0.70710677
      %v1679 = vmul.f32 %v1551, 0.70710677
      %v1680 = vmul.f32 %v1552, 0.70710677
      %v1681 = vmul.f32 %v1553, 0.70710677
      %v1682 = vmul.f32 %v1554, 0.70710677
      %v1683 = vmul.f32 %v1555, 0.70710677
      %v1684 = vmul.f32 %v1556, 0.70710677
      %v1685 = vmul.f32 %v1557, 0.70710677
      %v1686 = vmul.f32 %v1558, 0.70710677
      %v1687 = vmul.f32 %v1559, 0.70710677
      %v1688 = vmul.f32 %v1560, 0.70710677
      %v1689 = vmul.f32 %v1561, 0.70710677
      %v1690 = vmul.f32 %v1562, 0.70710677
      %v1691 = vmul.f32 %v1563, 0.70710677
      %v1692 = vmul.f32 %v1564, 0.70710677
      %v1693 = vmul.f32 %v1565, 0.70710677
      %v1694 = vmul.f32 %v1566, 0.70710677
      %v1695 = vmul.f32 %v1567, 0.70710677
      %v1696 = vmul.f32 %v1568, 0.70710677
      %v1697 = vmul.f32 %v1569, 0.70710677
      %v1698 = vmul.f32 %v1570, 0.70710677
      %v1699 = vmul.f32 %v1571, 0.70710677
      %v1700 = vmul.f32 %v1572, 0.70710677
      %v1701 = vmul.f32 %v1573, 0.70710677
      %v1702 = vmul.f32 %v1574, 0.70710677
      %v1703 = vmul.f32 %v1575, 0.70710677
      %v1704 = vmul.f32 %v1576, 0.70710677
      %v1705 = vmul.f32 %v1577, 0.70710677
      %v1706 = vmul.f32 %v1578, 0.70710677
      %v1707 = vmul.f32 %v1579, 0.70710677
      %v1708 = vmul.f32 %v1580, 0.70710677
      %v1709 = vmul.f32 %v1581, 0.70710677
      %v1710 = vmul.f32 %v1582, 0.70710677
      %v1711 = vmul.f32 %v1583, 0.70710677
      %v1712 = vmul.f32 %v1584, 0.70710677
      %v1713 = vmul.f32 %v1585, 0.70710677
      %v1714 = vmul.f32 %v1586, 0.70710677
      %v1715 = vmul.f32 %v1587, 0.70710677
      %v1716 = vmul.f32 %v1588, 0.70710677
      %v1717 = vmul.f32 %v1589, 0.70710677
      %v1718 = vmul.f32 %v1590, 0.70710677
      %v1719 = vmul.f32 %v1591, 0.70710677
      %v1720 = vmul.f32 %v1592, 0.70710677
      %v1721 = vmul.f32 %v1593, 0.70710677
      %v1722 = vmul.f32 %v1594, 0.70710677
      %v1723 = vmul.f32 %v1595, 0.70710677
      %v1724 = vmul.f32 %v1596, 0.70710677
      %v1725 = vmul.f32 %v1597, 0.70710677
      %v1726 = vmul.f32 %v1598, 0.70710677
      %v1727 = vmul.f32 %v1599, 0.70710677
      %v1728 = vmul.f32 %v1600, 0.70710677
      %v1729 = verf.f32.pop %v1665
      %v1730 = verf.f32.pop %v1666
      %v1731 = verf.f32.pop %v1667
      %v1732 = verf.f32.pop %v1668
      %v1733 = verf.f32.pop %v1669
      %v1734 = verf.f32.pop %v1670
      %v1735 = verf.f32.pop %v1671
      %v1736 = verf.f32.pop %v1672
      %v1737 = verf.f32.pop %v1673
      %v1738 = verf.f32.pop %v1674
      %v1739 = verf.f32.pop %v1675
      %v1740 = verf.f32.pop %v1676
      %v1741 = verf.f32.pop %v1677
      %v1742 = verf.f32.pop %v1678
      %v1743 = verf.f32.pop %v1679
      %v1744 = verf.f32.pop %v1680
      %v1745 = verf.f32.pop %v1681
      %v1746 = verf.f32.pop %v1682
      %v1747 = verf.f32.pop %v1683
      %v1748 = verf.f32.pop %v1684
      %v1749 = verf.f32.pop %v1685
      %v1750 = verf.f32.pop %v1686
      %v1751 = verf.f32.pop %v1687
      %v1752 = verf.f32.pop %v1688
      %v1753 = verf.f32.pop %v1689
      %v1754 = verf.f32.pop %v1690
      %v1755 = verf.f32.pop %v1691
      %v1756 = verf.f32.pop %v1692
      %v1757 = verf.f32.pop %v1693
      %v1758 = verf.f32.pop %v1694
      %v1759 = verf.f32.pop %v1695
      %v1760 = verf.f32.pop %v1696
      %v1761 = verf.f32.pop %v1697
      %v1762 = verf.f32.pop %v1698
      %v1763 = verf.f32.pop %v1699
      %v1764 = verf.f32.pop %v1700
      %v1765 = verf.f32.pop %v1701
      %v1766 = verf.f32.pop %v1702
      %v1767 = verf.f32.pop %v1703
      %v1768 = verf.f32.pop %v1704
      %v1769 = verf.f32.pop %v1705
      %v1770 = verf.f32.pop %v1706
      %v1771 = verf.f32.pop %v1707
      %v1772 = verf.f32.pop %v1708
      %v1773 = verf.f32.pop %v1709
      %v1774 = verf.f32.pop %v1710
      %v1775 = verf.f32.pop %v1711
      %v1776 = verf.f32.pop %v1712
      %v1777 = verf.f32.pop %v1713
      %v1778 = verf.f32.pop %v1714
      %v1779 = verf.f32.pop %v1715
      %v1780 = verf.f32.pop %v1716
      %v1781 = verf.f32.pop %v1717
      %v1782 = verf.f32.pop %v1718
      %v1783 = verf.f32.pop %v1719
      %v1784 = verf.f32.pop %v1720
      %v1785 = verf.f32.pop %v1721
      %v1786 = verf.f32.pop %v1722
      %v1787 = verf.f32.pop %v1723
      %v1788 = verf.f32.pop %v1724
      %v1789 = verf.f32.pop %v1725
      %v1790 = verf.f32.pop %v1726
      %v1791 = verf.f32.pop %v1727
      %v1792 = verf.f32.pop %v1728
      %v1793 = vadd.f32 %v1729, 1.0
      %v1794 = vadd.f32 %v1730, 1.0
      %v1795 = vadd.f32 %v1731, 1.0
      %v1796 = vadd.f32 %v1732, 1.0
      %v1797 = vadd.f32 %v1733, 1.0
      %v1798 = vadd.f32 %v1734, 1.0
      %v1799 = vadd.f32 %v1735, 1.0
      %v1800 = vadd.f32 %v1736, 1.0
      %v1801 = vadd.f32 %v1737, 1.0
      %v1802 = vadd.f32 %v1738, 1.0
      %v1803 = vadd.f32 %v1739, 1.0
      %v1804 = vadd.f32 %v1740, 1.0
      %v1805 = vadd.f32 %v1741, 1.0
      %v1806 = vadd.f32 %v1742, 1.0
      %v1807 = vadd.f32 %v1743, 1.0
      %v1808 = vadd.f32 %v1744, 1.0
      %v1809 = vadd.f32 %v1745, 1.0
      %v1810 = vadd.f32 %v1746, 1.0
      %v1811 = vadd.f32 %v1747, 1.0
      %v1812 = vadd.f32 %v1748, 1.0
      %v1813 = vadd.f32 %v1749, 1.0
      %v1814 = vadd.f32 %v1750, 1.0
      %v1815 = vadd.f32 %v1751, 1.0
      %v1816 = vadd.f32 %v1752, 1.0
      %v1817 = vadd.f32 %v1753, 1.0
      %v1818 = vadd.f32 %v1754, 1.0
      %v1819 = vadd.f32 %v1755, 1.0
      %v1820 = vadd.f32 %v1756, 1.0
      %v1821 = vadd.f32 %v1757, 1.0
      %v1822 = vadd.f32 %v1758, 1.0
      %v1823 = vadd.f32 %v1759, 1.0
      %v1824 = vadd.f32 %v1760, 1.0
      %v1825 = vadd.f32 %v1761, 1.0
      %v1826 = vadd.f32 %v1762, 1.0
      %v1827 = vadd.f32 %v1763, 1.0
      %v1828 = vadd.f32 %v1764, 1.0
      %v1829 = vadd.f32 %v1765, 1.0
      %v1830 = vadd.f32 %v1766, 1.0
      %v1831 = vadd.f32 %v1767, 1.0
      %v1832 = vadd.f32 %v1768, 1.0
      %v1833 = vadd.f32 %v1769, 1.0
      %v1834 = vadd.f32 %v1770, 1.0
      %v1835 = vadd.f32 %v1771, 1.0
      %v1836 = vadd.f32 %v1772, 1.0
      %v1837 = vadd.f32 %v1773, 1.0
      %v1838 = vadd.f32 %v1774, 1.0
      %v1839 = vadd.f32 %v1775, 1.0
      %v1840 = vadd.f32 %v1776, 1.0
      %v1841 = vadd.f32 %v1777, 1.0
      %v1842 = vadd.f32 %v1778, 1.0
      %v1843 = vadd.f32 %v1779, 1.0
      %v1844 = vadd.f32 %v1780, 1.0
      %v1845 = vadd.f32 %v1781, 1.0
      %v1846 = vadd.f32 %v1782, 1.0
      %v1847 = vadd.f32 %v1783, 1.0
      %v1848 = vadd.f32 %v1784, 1.0
      %v1849 = vadd.f32 %v1785, 1.0
      %v1850 = vadd.f32 %v1786, 1.0
      %v1851 = vadd.f32 %v1787, 1.0
      %v1852 = vadd.f32 %v1788, 1.0
      %v1853 = vadd.f32 %v1789, 1.0
      %v1854 = vadd.f32 %v1790, 1.0
      %v1855 = vadd.f32 %v1791, 1.0
      %v1856 = vadd.f32 %v1792, 1.0
      %v1857 = vmul.f32 %v1601, %v1793
      %v1858 = vmul.f32 %v1602, %v1794
      %v1859 = vmul.f32 %v1603, %v1795
      %v1860 = vmul.f32 %v1604, %v1796
      %v1861 = vmul.f32 %v1605, %v1797
      %v1862 = vmul.f32 %v1606, %v1798
      %v1863 = vmul.f32 %v1607, %v1799
      %v1864 = vmul.f32 %v1608, %v1800
      %v1865 = vmul.f32 %v1609, %v1801
      %v1866 = vmul.f32 %v1610, %v1802
      %v1867 = vmul.f32 %v1611, %v1803
      %v1868 = vmul.f32 %v1612, %v1804
      %v1869 = vmul.f32 %v1613, %v1805
      %v1870 = vmul.f32 %v1614, %v1806
      %v1871 = vmul.f32 %v1615, %v1807
      %v1872 = vmul.f32 %v1616, %v1808
      %v1873 = vmul.f32 %v1617, %v1809
      %v1874 = vmul.f32 %v1618, %v1810
      %v1875 = vmul.f32 %v1619, %v1811
      %v1876 = vmul.f32 %v1620, %v1812
      %v1877 = vmul.f32 %v1621, %v1813
      %v1878 = vmul.f32 %v1622, %v1814
      %v1879 = vmul.f32 %v1623, %v1815
      %v1880 = vmul.f32 %v1624, %v1816
      %v1881 = vmul.f32 %v1625, %v1817
      %v1882 = vmul.f32 %v1626, %v1818
      %v1883 = vmul.f32 %v1627, %v1819
      %v1884 = vmul.f32 %v1628, %v1820
      %v1885 = vmul.f32 %v1629, %v1821
      %v1886 = vmul.f32 %v1630, %v1822
      %v1887 = vmul.f32 %v1631, %v1823
      %v1888 = vmul.f32 %v1632, %v1824
      %v1889 = vmul.f32 %v1633, %v1825
      %v1890 = vmul.f32 %v1634, %v1826
      %v1891 = vmul.f32 %v1635, %v1827
      %v1892 = vmul.f32 %v1636, %v1828
      %v1893 = vmul.f32 %v1637, %v1829
      %v1894 = vmul.f32 %v1638, %v1830
      %v1895 = vmul.f32 %v1639, %v1831
      %v1896 = vmul.f32 %v1640, %v1832
      %v1897 = vmul.f32 %v1641, %v1833
      %v1898 = vmul.f32 %v1642, %v1834
      %v1899 = vmul.f32 %v1643, %v1835
      %v1900 = vmul.f32 %v1644, %v1836
      %v1901 = vmul.f32 %v1645, %v1837
      %v1902 = vmul.f32 %v1646, %v1838
      %v1903 = vmul.f32 %v1647, %v1839
      %v1904 = vmul.f32 %v1648, %v1840
      %v1905 = vmul.f32 %v1649, %v1841
      %v1906 = vmul.f32 %v1650, %v1842
      %v1907 = vmul.f32 %v1651, %v1843
      %v1908 = vmul.f32 %v1652, %v1844
      %v1909 = vmul.f32 %v1653, %v1845
      %v1910 = vmul.f32 %v1654, %v1846
      %v1911 = vmul.f32 %v1655, %v1847
      %v1912 = vmul.f32 %v1656, %v1848
      %v1913 = vmul.f32 %v1657, %v1849
      %v1914 = vmul.f32 %v1658, %v1850
      %v1915 = vmul.f32 %v1659, %v1851
      %v1916 = vmul.f32 %v1660, %v1852
      %v1917 = vmul.f32 %v1661, %v1853
      %v1918 = vmul.f32 %v1662, %v1854
      %v1919 = vmul.f32 %v1663, %v1855
      %v1920 = vmul.f32 %v1664, %v1856
      %v1921 = vld [vmem:[%s3] sm:$0xff]
      %v1922 = vld [vmem:[%s3 + $0x8] sm:$0xff]
      %v1923 = vld [vmem:[%s3 + $0x10] sm:$0xff]
      %v1924 = vld [vmem:[%s3 + $0x18] sm:$0xff]
      %v1925 = vld [vmem:[%s3 + $0x20] sm:$0xff]
      %v1926 = vld [vmem:[%s3 + $0x28] sm:$0xff]
      %v1927 = vld [vmem:[%s3 + $0x30] sm:$0xff]
      %v1928 = vld [vmem:[%s3 + $0x38] sm:$0xff]
      %v1929 = vld [vmem:[%s3 + $0x40] sm:$0xff]
      %v1930 = vld [vmem:[%s3 + $0x48] sm:$0xff]
      %v1931 = vld [vmem:[%s3 + $0x50] sm:$0xff]
      %v1932 = vld [vmem:[%s3 + $0x58] sm:$0xff]
      %v1933 = vld [vmem:[%s3 + $0x60] sm:$0xff]
      %v1934 = vld [vmem:[%s3 + $0x68] sm:$0xff]
      %v1935 = vld [vmem:[%s3 + $0x70] sm:$0xff]
      %v1936 = vld [vmem:[%s3 + $0x78] sm:$0xff]
      %v1937 = vld [vmem:[%s4] sm:$0xff]
      %v1938 = vld [vmem:[%s4 + $0x8] sm:$0xff]
      %v1939 = vld [vmem:[%s4 + $0x10] sm:$0xff]
      %v1940 = vld [vmem:[%s4 + $0x18] sm:$0xff]
      %v1941 = vld [vmem:[%s4 + $0x20] sm:$0xff]
      %v1942 = vld [vmem:[%s4 + $0x28] sm:$0xff]
      %v1943 = vld [vmem:[%s4 + $0x30] sm:$0xff]
      %v1944 = vld [vmem:[%s4 + $0x38] sm:$0xff]
      %v1945 = vld [vmem:[%s4 + $0x40] sm:$0xff]
      %v1946 = vld [vmem:[%s4 + $0x48] sm:$0xff]
      %v1947 = vld [vmem:[%s4 + $0x50] sm:$0xff]
      %v1948 = vld [vmem:[%s4 + $0x58] sm:$0xff]
      %v1949 = vld [vmem:[%s4 + $0x60] sm:$0xff]
      %v1950 = vld [vmem:[%s4 + $0x68] sm:$0xff]
      %v1951 = vld [vmem:[%s4 + $0x70] sm:$0xff]
      %v1952 = vld [vmem:[%s4 + $0x78] sm:$0xff]
      %v1953 = vpack.c.bf16 %v1859, %v1857
      %v1954 = vpack.c.bf16 %v1860, %v1858
      %v1955 = vpack.c.bf16 %v1863, %v1861
      %v1956 = vpack.c.bf16 %v1864, %v1862
      %v1957 = vpack.c.bf16 %v1867, %v1865
      %v1958 = vpack.c.bf16 %v1868, %v1866
      %v1959 = vpack.c.bf16 %v1871, %v1869
      %v1960 = vpack.c.bf16 %v1872, %v1870
      %v1961 = vpack.c.bf16 %v1875, %v1873
      %v1962 = vpack.c.bf16 %v1876, %v1874
      %v1963 = vpack.c.bf16 %v1879, %v1877
      %v1964 = vpack.c.bf16 %v1880, %v1878
      %v1965 = vpack.c.bf16 %v1883, %v1881
      %v1966 = vpack.c.bf16 %v1884, %v1882
      %v1967 = vpack.c.bf16 %v1887, %v1885
      %v1968 = vpack.c.bf16 %v1888, %v1886
      %v1969 = vpack.c.bf16 %v1891, %v1889
      %v1970 = vpack.c.bf16 %v1892, %v1890
      %v1971 = vpack.c.bf16 %v1895, %v1893
      %v1972 = vpack.c.bf16 %v1896, %v1894
      %v1973 = vpack.c.bf16 %v1899, %v1897
      %v1974 = vpack.c.bf16 %v1900, %v1898
      %v1975 = vpack.c.bf16 %v1903, %v1901
      %v1976 = vpack.c.bf16 %v1904, %v1902
      %v1977 = vpack.c.bf16 %v1907, %v1905
      %v1978 = vpack.c.bf16 %v1908, %v1906
      %v1979 = vpack.c.bf16 %v1911, %v1909
      %v1980 = vpack.c.bf16 %v1912, %v1910
      %v1981 = vpack.c.bf16 %v1915, %v1913
      %v1982 = vpack.c.bf16 %v1916, %v1914
      %v1983 = vpack.c.bf16 %v1919, %v1917
      %v1984 = vpack.c.bf16 %v1920, %v1918
      %1986 = vset.pattern.permute.xlu0 0
      %1987 = vperm.xlu0 %1986, %v1937
      %v1988 = vpop.permute.xlu0 %1987
      %1991 = vset.pattern.permute.xlu0 0
      %1992 = vperm.xlu0 %1991, %v1938
      %v1993 = vpop.permute.xlu0 %1992
      %1996 = vset.pattern.permute.xlu0 0
      %1997 = vperm.xlu0 %1996, %v1939
      %v1998 = vpop.permute.xlu0 %1997
      %2001 = vset.pattern.permute.xlu0 0
      %2002 = vperm.xlu0 %2001, %v1940
      %v2003 = vpop.permute.xlu0 %2002
      %2006 = vset.pattern.permute.xlu0 0
      %2007 = vperm.xlu0 %2006, %v1941
      %v2008 = vpop.permute.xlu0 %2007
      %2011 = vset.pattern.permute.xlu0 0
      %2012 = vperm.xlu0 %2011, %v1942
      %v2013 = vpop.permute.xlu0 %2012
      %2016 = vset.pattern.permute.xlu0 0
      %2017 = vperm.xlu0 %2016, %v1943
      %v2018 = vpop.permute.xlu0 %2017
      %2021 = vset.pattern.permute.xlu0 0
      %2022 = vperm.xlu0 %2021, %v1944
      %v2023 = vpop.permute.xlu0 %2022
      %2026 = vset.pattern.permute.xlu0 0
      %2027 = vperm.xlu0 %2026, %v1945
      %v2028 = vpop.permute.xlu0 %2027
      %2031 = vset.pattern.permute.xlu0 0
      %2032 = vperm.xlu0 %2031, %v1946
      %v2033 = vpop.permute.xlu0 %2032
      %2036 = vset.pattern.permute.xlu0 0
      %2037 = vperm.xlu0 %2036, %v1947
      %v2038 = vpop.permute.xlu0 %2037
      %2041 = vset.pattern.permute.xlu0 0
      %2042 = vperm.xlu0 %2041, %v1948
      %v2043 = vpop.permute.xlu0 %2042
      %2046 = vset.pattern.permute.xlu0 0
      %2047 = vperm.xlu0 %2046, %v1949
      %v2048 = vpop.permute.xlu0 %2047
      %2051 = vset.pattern.permute.xlu0 0
      %2052 = vperm.xlu0 %2051, %v1950
      %v2053 = vpop.permute.xlu0 %2052
      %2056 = vset.pattern.permute.xlu0 0
      %2057 = vperm.xlu0 %2056, %v1951
      %v2058 = vpop.permute.xlu0 %2057
      %2061 = vset.pattern.permute.xlu0 0
      %2062 = vperm.xlu0 %2061, %v1952
      %v2063 = vpop.permute.xlu0 %2062
      %v2081 = vunpack.c.l.b16 %v1921
      %v2082 = vunpack.c.h.b16 %v1921
      %v2083 = vunpack.c.l.b16 %v1922
      %v2084 = vunpack.c.h.b16 %v1922
      %v2085 = vunpack.c.l.b16 %v1923
      %v2086 = vunpack.c.h.b16 %v1923
      %v2087 = vunpack.c.l.b16 %v1924
      %v2088 = vunpack.c.h.b16 %v1924
      %v2089 = vunpack.c.l.b16 %v1925
      %v2090 = vunpack.c.h.b16 %v1925
      %v2091 = vunpack.c.l.b16 %v1926
      %v2092 = vunpack.c.h.b16 %v1926
      %v2093 = vunpack.c.l.b16 %v1927
      %v2094 = vunpack.c.h.b16 %v1927
      %v2095 = vunpack.c.l.b16 %v1928
      %v2096 = vunpack.c.h.b16 %v1928
      %v2097 = vunpack.c.l.b16 %v1929
      %v2098 = vunpack.c.h.b16 %v1929
      %v2099 = vunpack.c.l.b16 %v1930
      %v2100 = vunpack.c.h.b16 %v1930
      %v2101 = vunpack.c.l.b16 %v1931
      %v2102 = vunpack.c.h.b16 %v1931
      %v2103 = vunpack.c.l.b16 %v1932
      %v2104 = vunpack.c.h.b16 %v1932
      %v2105 = vunpack.c.l.b16 %v1933
      %v2106 = vunpack.c.h.b16 %v1933
      %v2107 = vunpack.c.l.b16 %v1934
      %v2108 = vunpack.c.h.b16 %v1934
      %v2109 = vunpack.c.l.b16 %v1935
      %v2110 = vunpack.c.h.b16 %v1935
      %v2111 = vunpack.c.l.b16 %v1936
      %v2112 = vunpack.c.h.b16 %v1936
      %v2113 = vpack.c.b16 %v2083, %v2081
      %v2114 = vpack.c.b16 %v2084, %v2082
      %v2115 = vpack.c.b16 %v2087, %v2085
      %v2116 = vpack.c.b16 %v2088, %v2086
      %v2117 = vpack.c.b16 %v2091, %v2089
      %v2118 = vpack.c.b16 %v2092, %v2090
      %v2119 = vpack.c.b16 %v2095, %v2093
      %v2120 = vpack.c.b16 %v2096, %v2094
      %v2121 = vpack.c.b16 %v2099, %v2097
      %v2122 = vpack.c.b16 %v2100, %v2098
      %v2123 = vpack.c.b16 %v2103, %v2101
      %v2124 = vpack.c.b16 %v2104, %v2102
      %v2125 = vpack.c.b16 %v2107, %v2105
      %v2126 = vpack.c.b16 %v2108, %v2106
      %v2127 = vpack.c.b16 %v2111, %v2109
      %v2128 = vpack.c.b16 %v2112, %v2110
      %2145 = vmatprep.subr.bf16.mxu0 %v1954
      %2146 = vmatpush1.bf16.msra.mxu0 %v1953
      %2147 = vmatprep.subr.bf16.mxu0 %v1956
      %2148 = vmatpush1.bf16.msra.mxu0 %v1955
      %2149 = vmatprep.subr.bf16.mxu0 %v1958
      %2150 = vmatpush1.bf16.msra.mxu0 %v1957
      %2151 = vmatprep.subr.bf16.mxu0 %v1960
      %2152 = vmatpush1.bf16.msra.mxu0 %v1959
      %2153 = vmatprep.subr.bf16.mxu0 %v1962
      %2154 = vmatpush1.bf16.msra.mxu0 %v1961
      %2155 = vmatprep.subr.bf16.mxu0 %v1964
      %2156 = vmatpush1.bf16.msra.mxu0 %v1963
      %2157 = vmatprep.subr.bf16.mxu0 %v1966
      %2158 = vmatpush1.bf16.msra.mxu0 %v1965
      %2159 = vmatprep.subr.bf16.mxu0 %v1968
      %2160 = vmatpush1.bf16.msra.mxu0 %v1967
      %2161 = vmatprep.subr.bf16.mxu0 %v1970
      %2162 = vmatpush1.bf16.msra.mxu0 %v1969
      %2163 = vmatprep.subr.bf16.mxu0 %v1972
      %2164 = vmatpush1.bf16.msra.mxu0 %v1971
      %2165 = vmatprep.subr.bf16.mxu0 %v1974
      %2166 = vmatpush1.bf16.msra.mxu0 %v1973
      %2167 = vmatprep.subr.bf16.mxu0 %v1976
      %2168 = vmatpush1.bf16.msra.mxu0 %v1975
      %2169 = vmatprep.subr.bf16.mxu0 %v1978
      %2170 = vmatpush1.bf16.msra.mxu0 %v1977
      %2171 = vmatprep.subr.bf16.mxu0 %v1980
      %2172 = vmatpush1.bf16.msra.mxu0 %v1979
      %2173 = vmatprep.subr.bf16.mxu0 %v1982
      %2174 = vmatpush1.bf16.msra.mxu0 %v1981
      %2175 = vmatprep.subr.bf16.mxu0 %v1984
      %2176 = vmatpush1.bf16.msra.mxu0 %v1983
      %2177 = vmatprep.mubr.bf16.mxu0 %v2114
      %2178 = vmatmul.mubr.bf16.gmra.mrb[0].mxu0 %v2113
      %v2179 = vpop.f32.mrb[0].mxu0
      %v2180 = vadd.f32 %v1988, %v2179
      %v2181 = vpop.f32.mrb[0].mxu0
      %v2182 = vadd.f32 %v1988, %v2181
      %v2183 = vpop.f32.mrb[0].mxu0
      %v2184 = vadd.f32 %v1993, %v2183
      %v2185 = vpop.f32.mrb[0].mxu0
      %v2186 = vadd.f32 %v1993, %v2185
      %2187 = vmatprep.mubr.bf16.mxu0 %v2116
      %2188 = vmatmul.mubr.bf16.gmra.mrb[0].mxu0 %v2115
      %v2189 = vpop.f32.mrb[0].mxu0
      %v2190 = vadd.f32 %v1998, %v2189
      %v2191 = vpop.f32.mrb[0].mxu0
      %v2192 = vadd.f32 %v1998, %v2191
      %v2193 = vpop.f32.mrb[0].mxu0
      %v2194 = vadd.f32 %v2003, %v2193
      %v2195 = vpop.f32.mrb[0].mxu0
      %v2196 = vadd.f32 %v2003, %v2195
      %2197 = vmatprep.mubr.bf16.mxu0 %v2118
      %2198 = vmatmul.mubr.bf16.gmra.mrb[0].mxu0 %v2117
      %v2199 = vpop.f32.mrb[0].mxu0
      %v2200 = vadd.f32 %v2008, %v2199
      %v2201 = vpop.f32.mrb[0].mxu0
      %v2202 = vadd.f32 %v2008, %v2201
      %v2203 = vpop.f32.mrb[0].mxu0
      %v2204 = vadd.f32 %v2013, %v2203
      %v2205 = vpop.f32.mrb[0].mxu0
      %v2206 = vadd.f32 %v2013, %v2205
      %2207 = vmatprep.mubr.bf16.mxu0 %v2120
      %2208 = vmatmul.mubr.bf16.gmra.mrb[0].mxu0 %v2119
      %v2209 = vpop.f32.mrb[0].mxu0
      %v2210 = vadd.f32 %v2018, %v2209
      %v2211 = vpop.f32.mrb[0].mxu0
      %v2212 = vadd.f32 %v2018, %v2211
      %v2213 = vpop.f32.mrb[0].mxu0
      %v2214 = vadd.f32 %v2023, %v2213
      %v2215 = vpop.f32.mrb[0].mxu0
      %v2216 = vadd.f32 %v2023, %v2215
      %2217 = vmatprep.mubr.bf16.mxu0 %v2122
      %2218 = vmatmul.mubr.bf16.gmra.mrb[0].mxu0 %v2121
      %v2219 = vpop.f32.mrb[0].mxu0
      %v2220 = vadd.f32 %v2028, %v2219
      %v2221 = vpop.f32.mrb[0].mxu0
      %v2222 = vadd.f32 %v2028, %v2221
      %v2223 = vpop.f32.mrb[0].mxu0
      %v2224 = vadd.f32 %v2033, %v2223
      %v2225 = vpop.f32.mrb[0].mxu0
      %v2226 = vadd.f32 %v2033, %v2225
      %2227 = vmatprep.mubr.bf16.mxu0 %v2124
      %2228 = vmatmul.mubr.bf16.gmra.mrb[0].mxu0 %v2123
      %v2229 = vpop.f32.mrb[0].mxu0
      %v2230 = vadd.f32 %v2038, %v2229
      %v2231 = vpop.f32.mrb[0].mxu0
      %v2232 = vadd.f32 %v2038, %v2231
      %v2233 = vpop.f32.mrb[0].mxu0
      %v2234 = vadd.f32 %v2043, %v2233
      %v2235 = vpop.f32.mrb[0].mxu0
      %v2236 = vadd.f32 %v2043, %v2235
      %2237 = vmatprep.mubr.bf16.mxu0 %v2126
      %2238 = vmatmul.mubr.bf16.gmra.mrb[0].mxu0 %v2125
      %v2239 = vpop.f32.mrb[0].mxu0
      %v2240 = vadd.f32 %v2048, %v2239
      %v2241 = vpop.f32.mrb[0].mxu0
      %v2242 = vadd.f32 %v2048, %v2241
      %v2243 = vpop.f32.mrb[0].mxu0
      %v2244 = vadd.f32 %v2053, %v2243
      %v2245 = vpop.f32.mrb[0].mxu0
      %v2246 = vadd.f32 %v2053, %v2245
      %2247 = vmatprep.mubr.bf16.mxu0 %v2128
      %2248 = vmatmul.mubr.bf16.gmra.mrb[0].mxu0 %v2127
      %v2249 = vpop.f32.mrb[0].mxu0
      %v2250 = vadd.f32 %v2058, %v2249
      %v2251 = vpop.f32.mrb[0].mxu0
      %v2252 = vadd.f32 %v2058, %v2251
      %v2253 = vpop.f32.mrb[0].mxu0
      %v2254 = vadd.f32 %v2063, %v2253
      %v2255 = vpop.f32.mrb[0].mxu0
      %v2256 = vadd.f32 %v2063, %v2255
      %2257 = vdwg.mxu0
      %v2258 = vadd.f32 %v2180, %v2182
      %2259 = vadd.xlane.f32.xlu0 %v2258
      %v2260 = vpop.xlane.xlu0 %2259
      %v2261 = vadd.f32 %v2184, %v2186
      %2262 = vadd.xlane.f32.xlu0 %v2261
      %v2263 = vpop.xlane.xlu0 %2262
      %v2264 = vadd.f32 %v2190, %v2192
      %2265 = vadd.xlane.f32.xlu0 %v2264
      %v2266 = vpop.xlane.xlu0 %2265
      %v2267 = vadd.f32 %v2194, %v2196
      %2268 = vadd.xlane.f32.xlu0 %v2267
      %v2269 = vpop.xlane.xlu0 %2268
      %v2270 = vadd.f32 %v2200, %v2202
      %2271 = vadd.xlane.f32.xlu0 %v2270
      %v2272 = vpop.xlane.xlu0 %2271
      %v2273 = vadd.f32 %v2204, %v2206
      %2274 = vadd.xlane.f32.xlu0 %v2273
      %v2275 = vpop.xlane.xlu0 %2274
      %v2276 = vadd.f32 %v2210, %v2212
      %2277 = vadd.xlane.f32.xlu0 %v2276
      %v2278 = vpop.xlane.xlu0 %2277
      %v2279 = vadd.f32 %v2214, %v2216
      %2280 = vadd.xlane.f32.xlu0 %v2279
      %v2281 = vpop.xlane.xlu0 %2280
      %v2282 = vadd.f32 %v2220, %v2222
      %2283 = vadd.xlane.f32.xlu0 %v2282
      %v2284 = vpop.xlane.xlu0 %2283
      %v2285 = vadd.f32 %v2224, %v2226
      %2286 = vadd.xlane.f32.xlu0 %v2285
      %v2287 = vpop.xlane.xlu0 %2286
      %v2288 = vadd.f32 %v2230, %v2232
      %2289 = vadd.xlane.f32.xlu0 %v2288
      %v2290 = vpop.xlane.xlu0 %2289
      %v2291 = vadd.f32 %v2234, %v2236
      %2292 = vadd.xlane.f32.xlu0 %v2291
      %v2293 = vpop.xlane.xlu0 %2292
      %v2294 = vadd.f32 %v2240, %v2242
      %2295 = vadd.xlane.f32.xlu0 %v2294
      %v2296 = vpop.xlane.xlu0 %2295
      %v2297 = vadd.f32 %v2244, %v2246
      %2298 = vadd.xlane.f32.xlu0 %v2297
      %v2299 = vpop.xlane.xlu0 %2298
      %v2300 = vadd.f32 %v2250, %v2252
      %2301 = vadd.xlane.f32.xlu0 %v2300
      %v2302 = vpop.xlane.xlu0 %2301
      %v2303 = vadd.f32 %v2254, %v2256
      %2304 = vadd.xlane.f32.xlu0 %v2303
      %v2305 = vpop.xlane.xlu0 %2304
      %v2306 = vmul.f32 %v2260, %v1184
      %v2307 = vmul.f32 %v2263, %v1184
      %v2308 = vmul.f32 %v2266, %v1184
      %v2309 = vmul.f32 %v2269, %v1184
      %v2310 = vmul.f32 %v2272, %v1184
      %v2311 = vmul.f32 %v2275, %v1184
      %v2312 = vmul.f32 %v2278, %v1184
      %v2313 = vmul.f32 %v2281, %v1184
      %v2314 = vmul.f32 %v2284, %v1184
      %v2315 = vmul.f32 %v2287, %v1184
      %v2316 = vmul.f32 %v2290, %v1184
      %v2317 = vmul.f32 %v2293, %v1184
      %v2318 = vmul.f32 %v2296, %v1184
      %v2319 = vmul.f32 %v2299, %v1184
      %v2320 = vmul.f32 %v2302, %v1184
      %v2321 = vmul.f32 %v2305, %v1184
      %v2322 = vsub.f32 %v2180, %v2306
      %v2323 = vsub.f32 %v2182, %v2306
      %v2324 = vsub.f32 %v2184, %v2307
      %v2325 = vsub.f32 %v2186, %v2307
      %v2326 = vsub.f32 %v2190, %v2308
      %v2327 = vsub.f32 %v2192, %v2308
      %v2328 = vsub.f32 %v2194, %v2309
      %v2329 = vsub.f32 %v2196, %v2309
      %v2330 = vsub.f32 %v2200, %v2310
      %v2331 = vsub.f32 %v2202, %v2310
      %v2332 = vsub.f32 %v2204, %v2311
      %v2333 = vsub.f32 %v2206, %v2311
      %v2334 = vsub.f32 %v2210, %v2312
      %v2335 = vsub.f32 %v2212, %v2312
      %v2336 = vsub.f32 %v2214, %v2313
      %v2337 = vsub.f32 %v2216, %v2313
      %v2338 = vsub.f32 %v2220, %v2314
      %v2339 = vsub.f32 %v2222, %v2314
      %v2340 = vsub.f32 %v2224, %v2315
      %v2341 = vsub.f32 %v2226, %v2315
      %v2342 = vsub.f32 %v2230, %v2316
      %v2343 = vsub.f32 %v2232, %v2316
      %v2344 = vsub.f32 %v2234, %v2317
      %v2345 = vsub.f32 %v2236, %v2317
      %v2346 = vsub.f32 %v2240, %v2318
      %v2347 = vsub.f32 %v2242, %v2318
      %v2348 = vsub.f32 %v2244, %v2319
      %v2349 = vsub.f32 %v2246, %v2319
      %v2350 = vsub.f32 %v2250, %v2320
      %v2351 = vsub.f32 %v2252, %v2320
      %v2352 = vsub.f32 %v2254, %v2321
      %v2353 = vsub.f32 %v2256, %v2321
      %v2354 = vmul.f32 %v2322, %v2322
      %v2355 = vmul.f32 %v2323, %v2323
      %v2356 = vmul.f32 %v2324, %v2324
      %v2357 = vmul.f32 %v2325, %v2325
      %v2358 = vmul.f32 %v2326, %v2326
      %v2359 = vmul.f32 %v2327, %v2327
      %v2360 = vmul.f32 %v2328, %v2328
      %v2361 = vmul.f32 %v2329, %v2329
      %v2362 = vmul.f32 %v2330, %v2330
      %v2363 = vmul.f32 %v2331, %v2331
      %v2364 = vmul.f32 %v2332, %v2332
      %v2365 = vmul.f32 %v2333, %v2333
      %v2366 = vmul.f32 %v2334, %v2334
      %v2367 = vmul.f32 %v2335, %v2335
      %v2368 = vmul.f32 %v2336, %v2336
      %v2369 = vmul.f32 %v2337, %v2337
      %v2370 = vmul.f32 %v2338, %v2338
      %v2371 = vmul.f32 %v2339, %v2339
      %v2372 = vmul.f32 %v2340, %v2340
      %v2373 = vmul.f32 %v2341, %v2341
      %v2374 = vmul.f32 %v2342, %v2342
      %v2375 = vmul.f32 %v2343, %v2343
      %v2376 = vmul.f32 %v2344, %v2344
      %v2377 = vmul.f32 %v2345, %v2345
      %v2378 = vmul.f32 %v2346, %v2346
      %v2379 = vmul.f32 %v2347, %v2347
      %v2380 = vmul.f32 %v2348, %v2348
      %v2381 = vmul.f32 %v2349, %v2349
      %v2382 = vmul.f32 %v2350, %v2350
      %v2383 = vmul.f32 %v2351, %v2351
      %v2384 = vmul.f32 %v2352, %v2352
      %v2385 = vmul.f32 %v2353, %v2353
      %v2386 = vadd.f32 %v2354, %v2355
      %2387 = vadd.xlane.f32.xlu0 %v2386
      %v2388 = vpop.xlane.xlu0 %2387
      %v2389 = vadd.f32 %v2356, %v2357
      %2390 = vadd.xlane.f32.xlu0 %v2389
      %v2391 = vpop.xlane.xlu0 %2390
      %v2392 = vadd.f32 %v2358, %v2359
      %2393 = vadd.xlane.f32.xlu0 %v2392
      %v2394 = vpop.xlane.xlu0 %2393
      %v2395 = vadd.f32 %v2360, %v2361
      %2396 = vadd.xlane.f32.xlu0 %v2395
      %v2397 = vpop.xlane.xlu0 %2396
      %v2398 = vadd.f32 %v2362, %v2363
      %2399 = vadd.xlane.f32.xlu0 %v2398
      %v2400 = vpop.xlane.xlu0 %2399
      %v2401 = vadd.f32 %v2364, %v2365
      %2402 = vadd.xlane.f32.xlu0 %v2401
      %v2403 = vpop.xlane.xlu0 %2402
      %v2404 = vadd.f32 %v2366, %v2367
      %2405 = vadd.xlane.f32.xlu0 %v2404
      %v2406 = vpop.xlane.xlu0 %2405
      %v2407 = vadd.f32 %v2368, %v2369
      %2408 = vadd.xlane.f32.xlu0 %v2407
      %v2409 = vpop.xlane.xlu0 %2408
      %v2410 = vadd.f32 %v2370, %v2371
      %2411 = vadd.xlane.f32.xlu0 %v2410
      %v2412 = vpop.xlane.xlu0 %2411
      %v2413 = vadd.f32 %v2372, %v2373
      %2414 = vadd.xlane.f32.xlu0 %v2413
      %v2415 = vpop.xlane.xlu0 %2414
      %v2416 = vadd.f32 %v2374, %v2375
      %2417 = vadd.xlane.f32.xlu0 %v2416
      %v2418 = vpop.xlane.xlu0 %2417
      %v2419 = vadd.f32 %v2376, %v2377
      %2420 = vadd.xlane.f32.xlu0 %v2419
      %v2421 = vpop.xlane.xlu0 %2420
      %v2422 = vadd.f32 %v2378, %v2379
      %2423 = vadd.xlane.f32.xlu0 %v2422
      %v2424 = vpop.xlane.xlu0 %2423
      %v2425 = vadd.f32 %v2380, %v2381
      %2426 = vadd.xlane.f32.xlu0 %v2425
      %v2427 = vpop.xlane.xlu0 %2426
      %v2428 = vadd.f32 %v2382, %v2383
      %2429 = vadd.xlane.f32.xlu0 %v2428
      %v2430 = vpop.xlane.xlu0 %2429
      %v2431 = vadd.f32 %v2384, %v2385
      %2432 = vadd.xlane.f32.xlu0 %v2431
      %v2433 = vpop.xlane.xlu0 %2432
      %v2434 = vmul.f32 %v2388, %v1184
      %v2435 = vmul.f32 %v2391, %v1184
      %v2436 = vmul.f32 %v2394, %v1184
      %v2437 = vmul.f32 %v2397, %v1184
      %v2438 = vmul.f32 %v2400, %v1184
      %v2439 = vmul.f32 %v2403, %v1184
      %v2440 = vmul.f32 %v2406, %v1184
      %v2441 = vmul.f32 %v2409, %v1184
      %v2442 = vmul.f32 %v2412, %v1184
      %v2443 = vmul.f32 %v2415, %v1184
      %v2444 = vmul.f32 %v2418, %v1184
      %v2445 = vmul.f32 %v2421, %v1184
      %v2446 = vmul.f32 %v2424, %v1184
      %v2447 = vmul.f32 %v2427, %v1184
      %v2448 = vmul.f32 %v2430, %v1184
      %v2449 = vmul.f32 %v2433, %v1184
      %v2450 = vadd.f32 %v2434, 1e-05
      %v2451 = vadd.f32 %v2435, 1e-05
      %v2452 = vadd.f32 %v2436, 1e-05
      %v2453 = vadd.f32 %v2437, 1e-05
      %v2454 = vadd.f32 %v2438, 1e-05
      %v2455 = vadd.f32 %v2439, 1e-05
      %v2456 = vadd.f32 %v2440, 1e-05
      %v2457 = vadd.f32 %v2441, 1e-05
      %v2458 = vadd.f32 %v2442, 1e-05
      %v2459 = vadd.f32 %v2443, 1e-05
      %v2460 = vadd.f32 %v2444, 1e-05
      %v2461 = vadd.f32 %v2445, 1e-05
      %v2462 = vadd.f32 %v2446, 1e-05
      %v2463 = vadd.f32 %v2447, 1e-05
      %v2464 = vadd.f32 %v2448, 1e-05
      %v2465 = vadd.f32 %v2449, 1e-05
      %v2466 = vrsqrt.pop %v2450
      %v2467 = vrsqrt.pop %v2451
      %v2468 = vrsqrt.pop %v2452
      %v2469 = vrsqrt.pop %v2453
      %v2470 = vrsqrt.pop %v2454
      %v2471 = vrsqrt.pop %v2455
      %v2472 = vrsqrt.pop %v2456
      %v2473 = vrsqrt.pop %v2457
      %v2474 = vrsqrt.pop %v2458
      %v2475 = vrsqrt.pop %v2459
      %v2476 = vrsqrt.pop %v2460
      %v2477 = vrsqrt.pop %v2461
      %v2478 = vrsqrt.pop %v2462
      %v2479 = vrsqrt.pop %v2463
      %v2480 = vrsqrt.pop %v2464
      %v2481 = vrsqrt.pop %v2465
      %v2482 = vmul.f32 %v2322, %v2466
      %v2483 = vmul.f32 %v2323, %v2466
      %v2484 = vmul.f32 %v2324, %v2467
      %v2485 = vmul.f32 %v2325, %v2467
      %v2486 = vmul.f32 %v2326, %v2468
      %v2487 = vmul.f32 %v2327, %v2468
      %v2488 = vmul.f32 %v2328, %v2469
      %v2489 = vmul.f32 %v2329, %v2469
      %v2490 = vmul.f32 %v2330, %v2470
      %v2491 = vmul.f32 %v2331, %v2470
      %v2492 = vmul.f32 %v2332, %v2471
      %v2493 = vmul.f32 %v2333, %v2471
      %v2494 = vmul.f32 %v2334, %v2472
      %v2495 = vmul.f32 %v2335, %v2472
      %v2496 = vmul.f32 %v2336, %v2473
      %v2497 = vmul.f32 %v2337, %v2473
      %v2498 = vmul.f32 %v2338, %v2474
      %v2499 = vmul.f32 %v2339, %v2474
      %v2500 = vmul.f32 %v2340, %v2475
      %v2501 = vmul.f32 %v2341, %v2475
      %v2502 = vmul.f32 %v2342, %v2476
      %v2503 = vmul.f32 %v2343, %v2476
      %v2504 = vmul.f32 %v2344, %v2477
      %v2505 = vmul.f32 %v2345, %v2477
      %v2506 = vmul.f32 %v2346, %v2478
      %v2507 = vmul.f32 %v2347, %v2478
      %v2508 = vmul.f32 %v2348, %v2479
      %v2509 = vmul.f32 %v2349, %v2479
      %v2510 = vmul.f32 %v2350, %v2480
      %v2511 = vmul.f32 %v2351, %v2480
      %v2512 = vmul.f32 %v2352, %v2481
      %v2513 = vmul.f32 %v2353, %v2481
      %v2514 = vmul.f32 %v2482, 0.5
      %v2515 = vmul.f32 %v2483, 0.5
      %v2516 = vmul.f32 %v2484, 0.5
      %v2517 = vmul.f32 %v2485, 0.5
      %v2518 = vmul.f32 %v2486, 0.5
      %v2519 = vmul.f32 %v2487, 0.5
      %v2520 = vmul.f32 %v2488, 0.5
      %v2521 = vmul.f32 %v2489, 0.5
      %v2522 = vmul.f32 %v2490, 0.5
      %v2523 = vmul.f32 %v2491, 0.5
      %v2524 = vmul.f32 %v2492, 0.5
      %v2525 = vmul.f32 %v2493, 0.5
      %v2526 = vmul.f32 %v2494, 0.5
      %v2527 = vmul.f32 %v2495, 0.5
      %v2528 = vmul.f32 %v2496, 0.5
      %v2529 = vmul.f32 %v2497, 0.5
      %v2530 = vmul.f32 %v2498, 0.5
      %v2531 = vmul.f32 %v2499, 0.5
      %v2532 = vmul.f32 %v2500, 0.5
      %v2533 = vmul.f32 %v2501, 0.5
      %v2534 = vmul.f32 %v2502, 0.5
      %v2535 = vmul.f32 %v2503, 0.5
      %v2536 = vmul.f32 %v2504, 0.5
      %v2537 = vmul.f32 %v2505, 0.5
      %v2538 = vmul.f32 %v2506, 0.5
      %v2539 = vmul.f32 %v2507, 0.5
      %v2540 = vmul.f32 %v2508, 0.5
      %v2541 = vmul.f32 %v2509, 0.5
      %v2542 = vmul.f32 %v2510, 0.5
      %v2543 = vmul.f32 %v2511, 0.5
      %v2544 = vmul.f32 %v2512, 0.5
      %v2545 = vmul.f32 %v2513, 0.5
      %v2546 = vmul.f32 %v2482, 0.70710677
      %v2547 = vmul.f32 %v2483, 0.70710677
      %v2548 = vmul.f32 %v2484, 0.70710677
      %v2549 = vmul.f32 %v2485, 0.70710677
      %v2550 = vmul.f32 %v2486, 0.70710677
      %v2551 = vmul.f32 %v2487, 0.70710677
      %v2552 = vmul.f32 %v2488, 0.70710677
      %v2553 = vmul.f32 %v2489, 0.70710677
      %v2554 = vmul.f32 %v2490, 0.70710677
      %v2555 = vmul.f32 %v2491, 0.70710677
      %v2556 = vmul.f32 %v2492, 0.70710677
      %v2557 = vmul.f32 %v2493, 0.70710677
      %v2558 = vmul.f32 %v2494, 0.70710677
      %v2559 = vmul.f32 %v2495, 0.70710677
      %v2560 = vmul.f32 %v2496, 0.70710677
      %v2561 = vmul.f32 %v2497, 0.70710677
      %v2562 = vmul.f32 %v2498, 0.70710677
      %v2563 = vmul.f32 %v2499, 0.70710677
      %v2564 = vmul.f32 %v2500, 0.70710677
      %v2565 = vmul.f32 %v2501, 0.70710677
      %v2566 = vmul.f32 %v2502, 0.70710677
      %v2567 = vmul.f32 %v2503, 0.70710677
      %v2568 = vmul.f32 %v2504, 0.70710677
      %v2569 = vmul.f32 %v2505, 0.70710677
      %v2570 = vmul.f32 %v2506, 0.70710677
      %v2571 = vmul.f32 %v2507, 0.70710677
      %v2572 = vmul.f32 %v2508, 0.70710677
      %v2573 = vmul.f32 %v2509, 0.70710677
      %v2574 = vmul.f32 %v2510, 0.70710677
      %v2575 = vmul.f32 %v2511, 0.70710677
      %v2576 = vmul.f32 %v2512, 0.70710677
      %v2577 = vmul.f32 %v2513, 0.70710677
      %v2578 = verf.f32.pop %v2546
      %v2579 = verf.f32.pop %v2547
      %v2580 = verf.f32.pop %v2548
      %v2581 = verf.f32.pop %v2549
      %v2582 = verf.f32.pop %v2550
      %v2583 = verf.f32.pop %v2551
      %v2584 = verf.f32.pop %v2552
      %v2585 = verf.f32.pop %v2553
      %v2586 = verf.f32.pop %v2554
      %v2587 = verf.f32.pop %v2555
      %v2588 = verf.f32.pop %v2556
      %v2589 = verf.f32.pop %v2557
      %v2590 = verf.f32.pop %v2558
      %v2591 = verf.f32.pop %v2559
      %v2592 = verf.f32.pop %v2560
      %v2593 = verf.f32.pop %v2561
      %v2594 = verf.f32.pop %v2562
      %v2595 = verf.f32.pop %v2563
      %v2596 = verf.f32.pop %v2564
      %v2597 = verf.f32.pop %v2565
      %v2598 = verf.f32.pop %v2566
      %v2599 = verf.f32.pop %v2567
      %v2600 = verf.f32.pop %v2568
      %v2601 = verf.f32.pop %v2569
      %v2602 = verf.f32.pop %v2570
      %v2603 = verf.f32.pop %v2571
      %v2604 = verf.f32.pop %v2572
      %v2605 = verf.f32.pop %v2573
      %v2606 = verf.f32.pop %v2574
      %v2607 = verf.f32.pop %v2575
      %v2608 = verf.f32.pop %v2576
      %v2609 = verf.f32.pop %v2577
      %v2610 = vadd.f32 %v2578, 1.0
      %v2611 = vadd.f32 %v2579, 1.0
      %v2612 = vadd.f32 %v2580, 1.0
      %v2613 = vadd.f32 %v2581, 1.0
      %v2614 = vadd.f32 %v2582, 1.0
      %v2615 = vadd.f32 %v2583, 1.0
      %v2616 = vadd.f32 %v2584, 1.0
      %v2617 = vadd.f32 %v2585, 1.0
      %v2618 = vadd.f32 %v2586, 1.0
      %v2619 = vadd.f32 %v2587, 1.0
      %v2620 = vadd.f32 %v2588, 1.0
      %v2621 = vadd.f32 %v2589, 1.0
      %v2622 = vadd.f32 %v2590, 1.0
      %v2623 = vadd.f32 %v2591, 1.0
      %v2624 = vadd.f32 %v2592, 1.0
      %v2625 = vadd.f32 %v2593, 1.0
      %v2626 = vadd.f32 %v2594, 1.0
      %v2627 = vadd.f32 %v2595, 1.0
      %v2628 = vadd.f32 %v2596, 1.0
      %v2629 = vadd.f32 %v2597, 1.0
      %v2630 = vadd.f32 %v2598, 1.0
      %v2631 = vadd.f32 %v2599, 1.0
      %v2632 = vadd.f32 %v2600, 1.0
      %v2633 = vadd.f32 %v2601, 1.0
      %v2634 = vadd.f32 %v2602, 1.0
      %v2635 = vadd.f32 %v2603, 1.0
      %v2636 = vadd.f32 %v2604, 1.0
      %v2637 = vadd.f32 %v2605, 1.0
      %v2638 = vadd.f32 %v2606, 1.0
      %v2639 = vadd.f32 %v2607, 1.0
      %v2640 = vadd.f32 %v2608, 1.0
      %v2641 = vadd.f32 %v2609, 1.0
      %v2642 = vmul.f32 %v2514, %v2610
      %v2643 = vmul.f32 %v2515, %v2611
      %v2644 = vmul.f32 %v2516, %v2612
      %v2645 = vmul.f32 %v2517, %v2613
      %v2646 = vmul.f32 %v2518, %v2614
      %v2647 = vmul.f32 %v2519, %v2615
      %v2648 = vmul.f32 %v2520, %v2616
      %v2649 = vmul.f32 %v2521, %v2617
      %v2650 = vmul.f32 %v2522, %v2618
      %v2651 = vmul.f32 %v2523, %v2619
      %v2652 = vmul.f32 %v2524, %v2620
      %v2653 = vmul.f32 %v2525, %v2621
      %v2654 = vmul.f32 %v2526, %v2622
      %v2655 = vmul.f32 %v2527, %v2623
      %v2656 = vmul.f32 %v2528, %v2624
      %v2657 = vmul.f32 %v2529, %v2625
      %v2658 = vmul.f32 %v2530, %v2626
      %v2659 = vmul.f32 %v2531, %v2627
      %v2660 = vmul.f32 %v2532, %v2628
      %v2661 = vmul.f32 %v2533, %v2629
      %v2662 = vmul.f32 %v2534, %v2630
      %v2663 = vmul.f32 %v2535, %v2631
      %v2664 = vmul.f32 %v2536, %v2632
      %v2665 = vmul.f32 %v2537, %v2633
      %v2666 = vmul.f32 %v2538, %v2634
      %v2667 = vmul.f32 %v2539, %v2635
      %v2668 = vmul.f32 %v2540, %v2636
      %v2669 = vmul.f32 %v2541, %v2637
      %v2670 = vmul.f32 %v2542, %v2638
      %v2671 = vmul.f32 %v2543, %v2639
      %v2672 = vmul.f32 %v2544, %v2640
      %v2673 = vmul.f32 %v2545, %v2641
      %v2674 = vld [vmem:[%s5] sm:$0xf]
      %v2675 = vld [vmem:[%s5 + $0x4] sm:$0xf]
      %v2676 = vld [vmem:[%s5 + $0x8] sm:$0xf]
      %v2677 = vld [vmem:[%s5 + $0xc] sm:$0xf]
      %v2678 = vld [vmem:[%s5 + $0x10] sm:$0xf]
      %v2679 = vld [vmem:[%s5 + $0x14] sm:$0xf]
      %v2680 = vld [vmem:[%s5 + $0x18] sm:$0xf]
      %v2681 = vld [vmem:[%s5 + $0x1c] sm:$0xf]
      %v2682 = vld [vmem:[%s5 + $0x20] sm:$0xf]
      %v2683 = vld [vmem:[%s5 + $0x24] sm:$0xf]
      %v2684 = vld [vmem:[%s5 + $0x28] sm:$0xf]
      %v2685 = vld [vmem:[%s5 + $0x2c] sm:$0xf]
      %v2686 = vld [vmem:[%s5 + $0x30] sm:$0xf]
      %v2687 = vld [vmem:[%s5 + $0x34] sm:$0xf]
      %v2688 = vld [vmem:[%s5 + $0x38] sm:$0xf]
      %v2689 = vld [vmem:[%s5 + $0x3c] sm:$0xf]
      %v2690 = vld [vmem:[%s6] sm:$0xff]
      %v2691 = vld [vmem:[%s6 + $0x8] sm:$0xff]
      %v2692 = vld [vmem:[%s6 + $0x10] sm:$0xff]
      %v2693 = vld [vmem:[%s6 + $0x18] sm:$0xff]
      %v2694 = vld [vmem:[%s6 + $0x20] sm:$0xff]
      %v2695 = vld [vmem:[%s6 + $0x28] sm:$0xff]
      %v2696 = vld [vmem:[%s6 + $0x30] sm:$0xff]
      %v2697 = vld [vmem:[%s6 + $0x38] sm:$0xff]
      %v2698 = vld [vmem:[%s6 + $0x40] sm:$0xff]
      %v2699 = vld [vmem:[%s6 + $0x48] sm:$0xff]
      %v2700 = vld [vmem:[%s6 + $0x50] sm:$0xff]
      %v2701 = vld [vmem:[%s6 + $0x58] sm:$0xff]
      %v2702 = vld [vmem:[%s6 + $0x60] sm:$0xff]
      %v2703 = vld [vmem:[%s6 + $0x68] sm:$0xff]
      %v2704 = vld [vmem:[%s6 + $0x70] sm:$0xff]
      %v2705 = vld [vmem:[%s6 + $0x78] sm:$0xff]
      %v2706 = vpack.c.bf16 %v2644, %v2642
      %v2707 = vpack.c.bf16 %v2645, %v2643
      %v2708 = vpack.c.bf16 %v2648, %v2646
      %v2709 = vpack.c.bf16 %v2649, %v2647
      %v2710 = vpack.c.bf16 %v2652, %v2650
      %v2711 = vpack.c.bf16 %v2653, %v2651
      %v2712 = vpack.c.bf16 %v2656, %v2654
      %v2713 = vpack.c.bf16 %v2657, %v2655
      %v2714 = vpack.c.bf16 %v2660, %v2658
      %v2715 = vpack.c.bf16 %v2661, %v2659
      %v2716 = vpack.c.bf16 %v2664, %v2662
      %v2717 = vpack.c.bf16 %v2665, %v2663
      %v2718 = vpack.c.bf16 %v2668, %v2666
      %v2719 = vpack.c.bf16 %v2669, %v2667
      %v2720 = vpack.c.bf16 %v2672, %v2670
      %v2721 = vpack.c.bf16 %v2673, %v2671
      %2723 = vset.pattern.permute.xlu0 0
      %2724 = vperm.xlu0 %2723, %v2690
      %v2725 = vpop.permute.xlu0 %2724
      %2728 = vset.pattern.permute.xlu0 0
      %2729 = vperm.xlu0 %2728, %v2691
      %v2730 = vpop.permute.xlu0 %2729
      %2733 = vset.pattern.permute.xlu0 0
      %2734 = vperm.xlu0 %2733, %v2692
      %v2735 = vpop.permute.xlu0 %2734
      %2738 = vset.pattern.permute.xlu0 0
      %2739 = vperm.xlu0 %2738, %v2693
      %v2740 = vpop.permute.xlu0 %2739
      %2743 = vset.pattern.permute.xlu0 0
      %2744 = vperm.xlu0 %2743, %v2694
      %v2745 = vpop.permute.xlu0 %2744
      %2748 = vset.pattern.permute.xlu0 0
      %2749 = vperm.xlu0 %2748, %v2695
      %v2750 = vpop.permute.xlu0 %2749
      %2753 = vset.pattern.permute.xlu0 0
      %2754 = vperm.xlu0 %2753, %v2696
      %v2755 = vpop.permute.xlu0 %2754
      %2758 = vset.pattern.permute.xlu0 0
      %2759 = vperm.xlu0 %2758, %v2697
      %v2760 = vpop.permute.xlu0 %2759
      %2763 = vset.pattern.permute.xlu0 0
      %2764 = vperm.xlu0 %2763, %v2698
      %v2765 = vpop.permute.xlu0 %2764
      %2768 = vset.pattern.permute.xlu0 0
      %2769 = vperm.xlu0 %2768, %v2699
      %v2770 = vpop.permute.xlu0 %2769
      %2773 = vset.pattern.permute.xlu0 0
      %2774 = vperm.xlu0 %2773, %v2700
      %v2775 = vpop.permute.xlu0 %2774
      %2778 = vset.pattern.permute.xlu0 0
      %2779 = vperm.xlu0 %2778, %v2701
      %v2780 = vpop.permute.xlu0 %2779
      %2783 = vset.pattern.permute.xlu0 0
      %2784 = vperm.xlu0 %2783, %v2702
      %v2785 = vpop.permute.xlu0 %2784
      %2788 = vset.pattern.permute.xlu0 0
      %2789 = vperm.xlu0 %2788, %v2703
      %v2790 = vpop.permute.xlu0 %2789
      %2793 = vset.pattern.permute.xlu0 0
      %2794 = vperm.xlu0 %2793, %v2704
      %v2795 = vpop.permute.xlu0 %2794
      %2798 = vset.pattern.permute.xlu0 0
      %2799 = vperm.xlu0 %2798, %v2705
      %v2800 = vpop.permute.xlu0 %2799
      %v2818 = vunpack.c.l.b16 %v2674
      %v2819 = vunpack.c.l.b16 %v2675
      %v2820 = vunpack.c.l.b16 %v2676
      %v2821 = vunpack.c.l.b16 %v2677
      %v2822 = vunpack.c.l.b16 %v2678
      %v2823 = vunpack.c.l.b16 %v2679
      %v2824 = vunpack.c.l.b16 %v2680
      %v2825 = vunpack.c.l.b16 %v2681
      %v2826 = vunpack.c.l.b16 %v2682
      %v2827 = vunpack.c.l.b16 %v2683
      %v2828 = vunpack.c.l.b16 %v2684
      %v2829 = vunpack.c.l.b16 %v2685
      %v2830 = vunpack.c.l.b16 %v2686
      %v2831 = vunpack.c.l.b16 %v2687
      %v2832 = vunpack.c.l.b16 %v2688
      %v2833 = vunpack.c.l.b16 %v2689
      %v2834 = vpack.c.b16 %v2819, %v2818
      %v2835 = vpack.c.b16 %v2821, %v2820
      %v2836 = vpack.c.b16 %v2823, %v2822
      %v2837 = vpack.c.b16 %v2825, %v2824
      %v2838 = vpack.c.b16 %v2827, %v2826
      %v2839 = vpack.c.b16 %v2829, %v2828
      %v2840 = vpack.c.b16 %v2831, %v2830
      %v2841 = vpack.c.b16 %v2833, %v2832
      %2850 = vmatprep.subr.bf16.mxu0 %v2707
      %2851 = vmatpush1.bf16.msra.mxu0 %v2706
      %2852 = vmatprep.subr.bf16.mxu0 %v2709
      %2853 = vmatpush1.bf16.msra.mxu0 %v2708
      %2854 = vmatprep.subr.bf16.mxu0 %v2711
      %2855 = vmatpush1.bf16.msra.mxu0 %v2710
      %2856 = vmatprep.subr.bf16.mxu0 %v2713
      %2857 = vmatpush1.bf16.msra.mxu0 %v2712
      %2858 = vmatprep.subr.bf16.mxu0 %v2715
      %2859 = vmatpush1.bf16.msra.mxu0 %v2714
      %2860 = vmatprep.subr.bf16.mxu0 %v2717
      %2861 = vmatpush1.bf16.msra.mxu0 %v2716
      %2862 = vmatprep.subr.bf16.mxu0 %v2719
      %2863 = vmatpush1.bf16.msra.mxu0 %v2718
      %2864 = vmatprep.subr.bf16.mxu0 %v2721
      %2865 = vmatpush1.bf16.msra.mxu0 %v2720
      %2866 = vmatprep.subr.bf16.mxu0 0
      %2867 = vmatpush1.bf16.msra.mxu0 0
      %2868 = vmatprep.subr.bf16.mxu0 0
      %2869 = vmatpush1.bf16.msra.mxu0 0
      %2870 = vmatprep.subr.bf16.mxu0 0
      %2871 = vmatpush1.bf16.msra.mxu0 0
      %2872 = vmatprep.subr.bf16.mxu0 0
      %2873 = vmatpush1.bf16.msra.mxu0 0
      %2874 = vmatprep.subr.bf16.mxu0 0
      %2875 = vmatpush1.bf16.msra.mxu0 0
      %2876 = vmatprep.subr.bf16.mxu0 0
      %2877 = vmatpush1.bf16.msra.mxu0 0
      %2878 = vmatprep.subr.bf16.mxu0 0
      %2879 = vmatpush1.bf16.msra.mxu0 0
      %2880 = vmatprep.subr.bf16.mxu0 0
      %2881 = vmatpush1.bf16.msra.mxu0 0
      %2882 = vmatprep.mubr.bf16.mxu0 0
      %2883 = vmatmul.mubr.bf16.gmra.mrb[0].mxu0 %v2834
      %v2884 = vpop.f32.mrb[0].mxu0
      %v2885 = vadd.f32 %v2725, %v2884
      %v2886 = vpop.f32.mrb[0].mxu0
      %v2887 = vadd.f32 %v2725, %v2886
      %v2888 = vpop.f32.mrb[0].mxu0
      %v2889 = vadd.f32 %v2730, %v2888
      %v2890 = vpop.f32.mrb[0].mxu0
      %v2891 = vadd.f32 %v2730, %v2890
      %2892 = vmatprep.mubr.bf16.mxu0 0
      %2893 = vmatmul.mubr.bf16.gmra.mrb[0].mxu0 %v2835
      %v2894 = vpop.f32.mrb[0].mxu0
      %v2895 = vadd.f32 %v2735, %v2894
      %v2896 = vpop.f32.mrb[0].mxu0
      %v2897 = vadd.f32 %v2735, %v2896
      %v2898 = vpop.f32.mrb[0].mxu0
      %v2899 = vadd.f32 %v2740, %v2898
      %v2900 = vpop.f32.mrb[0].mxu0
      %v2901 = vadd.f32 %v2740, %v2900
      %2902 = vmatprep.mubr.bf16.mxu0 0
      %2903 = vmatmul.mubr.bf16.gmra.mrb[0].mxu0 %v2836
      %v2904 = vpop.f32.mrb[0].mxu0
      %v2905 = vadd.f32 %v2745, %v2904
      %v2906 = vpop.f32.mrb[0].mxu0
      %v2907 = vadd.f32 %v2745, %v2906
      %v2908 = vpop.f32.mrb[0].mxu0
      %v2909 = vadd.f32 %v2750, %v2908
      %v2910 = vpop.f32.mrb[0].mxu0
      %v2911 = vadd.f32 %v2750, %v2910
      %2912 = vmatprep.mubr.bf16.mxu0 0
      %2913 = vmatmul.mubr.bf16.gmra.mrb[0].mxu0 %v2837
      %v2914 = vpop.f32.mrb[0].mxu0
      %v2915 = vadd.f32 %v2755, %v2914
      %v2916 = vpop.f32.mrb[0].mxu0
      %v2917 = vadd.f32 %v2755, %v2916
      %v2918 = vpop.f32.mrb[0].mxu0
      %v2919 = vadd.f32 %v2760, %v2918
      %v2920 = vpop.f32.mrb[0].mxu0
      %v2921 = vadd.f32 %v2760, %v2920
      %2922 = vmatprep.mubr.bf16.mxu0 0
      %2923 = vmatmul.mubr.bf16.gmra.mrb[0].mxu0 %v2838
      %v2924 = vpop.f32.mrb[0].mxu0
      %v2925 = vadd.f32 %v2765, %v2924
      %v2926 = vpop.f32.mrb[0].mxu0
      %v2927 = vadd.f32 %v2765, %v2926
      %v2928 = vpop.f32.mrb[0].mxu0
      %v2929 = vadd.f32 %v2770, %v2928
      %v2930 = vpop.f32.mrb[0].mxu0
      %v2931 = vadd.f32 %v2770, %v2930
      %2932 = vmatprep.mubr.bf16.mxu0 0
      %2933 = vmatmul.mubr.bf16.gmra.mrb[0].mxu0 %v2839
      %v2934 = vpop.f32.mrb[0].mxu0
      %v2935 = vadd.f32 %v2775, %v2934
      %v2936 = vpop.f32.mrb[0].mxu0
      %v2937 = vadd.f32 %v2775, %v2936
      %v2938 = vpop.f32.mrb[0].mxu0
      %v2939 = vadd.f32 %v2780, %v2938
      %v2940 = vpop.f32.mrb[0].mxu0
      %v2941 = vadd.f32 %v2780, %v2940
      %2942 = vmatprep.mubr.bf16.mxu0 0
      %2943 = vmatmul.mubr.bf16.gmra.mrb[0].mxu0 %v2840
      %v2944 = vpop.f32.mrb[0].mxu0
      %v2945 = vadd.f32 %v2785, %v2944
      %v2946 = vpop.f32.mrb[0].mxu0
      %v2947 = vadd.f32 %v2785, %v2946
      %v2948 = vpop.f32.mrb[0].mxu0
      %v2949 = vadd.f32 %v2790, %v2948
      %v2950 = vpop.f32.mrb[0].mxu0
      %v2951 = vadd.f32 %v2790, %v2950
      %2952 = vmatprep.mubr.bf16.mxu0 0
      %2953 = vmatmul.mubr.bf16.gmra.mrb[0].mxu0 %v2841
      %v2954 = vpop.f32.mrb[0].mxu0
      %v2955 = vadd.f32 %v2795, %v2954
      %v2956 = vpop.f32.mrb[0].mxu0
      %v2957 = vadd.f32 %v2795, %v2956
      %v2958 = vpop.f32.mrb[0].mxu0
      %v2959 = vadd.f32 %v2800, %v2958
      %v2960 = vpop.f32.mrb[0].mxu0
      %v2961 = vadd.f32 %v2800, %v2960
      %2962 = vdwg.mxu0
      %v2963 = vadd.f32 %v2885, %v2887
      %2964 = vadd.xlane.f32.xlu0 %v2963
      %v2965 = vpop.xlane.xlu0 %2964
      %v2966 = vadd.f32 %v2889, %v2891
      %2967 = vadd.xlane.f32.xlu0 %v2966
      %v2968 = vpop.xlane.xlu0 %2967
      %v2969 = vadd.f32 %v2895, %v2897
      %2970 = vadd.xlane.f32.xlu0 %v2969
      %v2971 = vpop.xlane.xlu0 %2970
      %v2972 = vadd.f32 %v2899, %v2901
      %2973 = vadd.xlane.f32.xlu0 %v2972
      %v2974 = vpop.xlane.xlu0 %2973
      %v2975 = vadd.f32 %v2905, %v2907
      %2976 = vadd.xlane.f32.xlu0 %v2975
      %v2977 = vpop.xlane.xlu0 %2976
      %v2978 = vadd.f32 %v2909, %v2911
      %2979 = vadd.xlane.f32.xlu0 %v2978
      %v2980 = vpop.xlane.xlu0 %2979
      %v2981 = vadd.f32 %v2915, %v2917
      %2982 = vadd.xlane.f32.xlu0 %v2981
      %v2983 = vpop.xlane.xlu0 %2982
      %v2984 = vadd.f32 %v2919, %v2921
      %2985 = vadd.xlane.f32.xlu0 %v2984
      %v2986 = vpop.xlane.xlu0 %2985
      %v2987 = vadd.f32 %v2925, %v2927
      %2988 = vadd.xlane.f32.xlu0 %v2987
      %v2989 = vpop.xlane.xlu0 %2988
      %v2990 = vadd.f32 %v2929, %v2931
      %2991 = vadd.xlane.f32.xlu0 %v2990
      %v2992 = vpop.xlane.xlu0 %2991
      %v2993 = vadd.f32 %v2935, %v2937
      %2994 = vadd.xlane.f32.xlu0 %v2993
      %v2995 = vpop.xlane.xlu0 %2994
      %v2996 = vadd.f32 %v2939, %v2941
      %2997 = vadd.xlane.f32.xlu0 %v2996
      %v2998 = vpop.xlane.xlu0 %2997
      %v2999 = vadd.f32 %v2945, %v2947
      %3000 = vadd.xlane.f32.xlu0 %v2999
      %v3001 = vpop.xlane.xlu0 %3000
      %v3002 = vadd.f32 %v2949, %v2951
      %3003 = vadd.xlane.f32.xlu0 %v3002
      %v3004 = vpop.xlane.xlu0 %3003
      %v3005 = vadd.f32 %v2955, %v2957
      %3006 = vadd.xlane.f32.xlu0 %v3005
      %v3007 = vpop.xlane.xlu0 %3006
      %v3008 = vadd.f32 %v2959, %v2961
      %3009 = vadd.xlane.f32.xlu0 %v3008
      %v3010 = vpop.xlane.xlu0 %3009
      %v3011 = vmul.f32 %v2965, %v1184
      %v3012 = vmul.f32 %v2968, %v1184
      %v3013 = vmul.f32 %v2971, %v1184
      %v3014 = vmul.f32 %v2974, %v1184
      %v3015 = vmul.f32 %v2977, %v1184
      %v3016 = vmul.f32 %v2980, %v1184
      %v3017 = vmul.f32 %v2983, %v1184
      %v3018 = vmul.f32 %v2986, %v1184
      %v3019 = vmul.f32 %v2989, %v1184
      %v3020 = vmul.f32 %v2992, %v1184
      %v3021 = vmul.f32 %v2995, %v1184
      %v3022 = vmul.f32 %v2998, %v1184
      %v3023 = vmul.f32 %v3001, %v1184
      %v3024 = vmul.f32 %v3004, %v1184
      %v3025 = vmul.f32 %v3007, %v1184
      %v3026 = vmul.f32 %v3010, %v1184
      %v3027 = vsub.f32 %v2885, %v3011
      %v3028 = vsub.f32 %v2887, %v3011
      %v3029 = vsub.f32 %v2889, %v3012
      %v3030 = vsub.f32 %v2891, %v3012
      %v3031 = vsub.f32 %v2895, %v3013
      %v3032 = vsub.f32 %v2897, %v3013
      %v3033 = vsub.f32 %v2899, %v3014
      %v3034 = vsub.f32 %v2901, %v3014
      %v3035 = vsub.f32 %v2905, %v3015
      %v3036 = vsub.f32 %v2907, %v3015
      %v3037 = vsub.f32 %v2909, %v3016
      %v3038 = vsub.f32 %v2911, %v3016
      %v3039 = vsub.f32 %v2915, %v3017
      %v3040 = vsub.f32 %v2917, %v3017
      %v3041 = vsub.f32 %v2919, %v3018
      %v3042 = vsub.f32 %v2921, %v3018
      %v3043 = vsub.f32 %v2925, %v3019
      %v3044 = vsub.f32 %v2927, %v3019
      %v3045 = vsub.f32 %v2929, %v3020
      %v3046 = vsub.f32 %v2931, %v3020
      %v3047 = vsub.f32 %v2935, %v3021
      %v3048 = vsub.f32 %v2937, %v3021
      %v3049 = vsub.f32 %v2939, %v3022
      %v3050 = vsub.f32 %v2941, %v3022
      %v3051 = vsub.f32 %v2945, %v3023
      %v3052 = vsub.f32 %v2947, %v3023
      %v3053 = vsub.f32 %v2949, %v3024
      %v3054 = vsub.f32 %v2951, %v3024
      %v3055 = vsub.f32 %v2955, %v3025
      %v3056 = vsub.f32 %v2957, %v3025
      %v3057 = vsub.f32 %v2959, %v3026
      %v3058 = vsub.f32 %v2961, %v3026
      %v3059 = vmul.f32 %v3027, %v3027
      %v3060 = vmul.f32 %v3028, %v3028
      %v3061 = vmul.f32 %v3029, %v3029
      %v3062 = vmul.f32 %v3030, %v3030
      %v3063 = vmul.f32 %v3031, %v3031
      %v3064 = vmul.f32 %v3032, %v3032
      %v3065 = vmul.f32 %v3033, %v3033
      %v3066 = vmul.f32 %v3034, %v3034
      %v3067 = vmul.f32 %v3035, %v3035
      %v3068 = vmul.f32 %v3036, %v3036
      %v3069 = vmul.f32 %v3037, %v3037
      %v3070 = vmul.f32 %v3038, %v3038
      %v3071 = vmul.f32 %v3039, %v3039
      %v3072 = vmul.f32 %v3040, %v3040
      %v3073 = vmul.f32 %v3041, %v3041
      %v3074 = vmul.f32 %v3042, %v3042
      %v3075 = vmul.f32 %v3043, %v3043
      %v3076 = vmul.f32 %v3044, %v3044
      %v3077 = vmul.f32 %v3045, %v3045
      %v3078 = vmul.f32 %v3046, %v3046
      %v3079 = vmul.f32 %v3047, %v3047
      %v3080 = vmul.f32 %v3048, %v3048
      %v3081 = vmul.f32 %v3049, %v3049
      %v3082 = vmul.f32 %v3050, %v3050
      %v3083 = vmul.f32 %v3051, %v3051
      %v3084 = vmul.f32 %v3052, %v3052
      %v3085 = vmul.f32 %v3053, %v3053
      %v3086 = vmul.f32 %v3054, %v3054
      %v3087 = vmul.f32 %v3055, %v3055
      %v3088 = vmul.f32 %v3056, %v3056
      %v3089 = vmul.f32 %v3057, %v3057
      %v3090 = vmul.f32 %v3058, %v3058
      %v3091 = vadd.f32 %v3059, %v3060
      %3092 = vadd.xlane.f32.xlu0 %v3091
      %v3093 = vpop.xlane.xlu0 %3092
      %v3094 = vadd.f32 %v3061, %v3062
      %3095 = vadd.xlane.f32.xlu0 %v3094
      %v3096 = vpop.xlane.xlu0 %3095
      %v3097 = vadd.f32 %v3063, %v3064
      %3098 = vadd.xlane.f32.xlu0 %v3097
      %v3099 = vpop.xlane.xlu0 %3098
      %v3100 = vadd.f32 %v3065, %v3066
      %3101 = vadd.xlane.f32.xlu0 %v3100
      %v3102 = vpop.xlane.xlu0 %3101
      %v3103 = vadd.f32 %v3067, %v3068
      %3104 = vadd.xlane.f32.xlu0 %v3103
      %v3105 = vpop.xlane.xlu0 %3104
      %v3106 = vadd.f32 %v3069, %v3070
      %3107 = vadd.xlane.f32.xlu0 %v3106
      %v3108 = vpop.xlane.xlu0 %3107
      %v3109 = vadd.f32 %v3071, %v3072
      %3110 = vadd.xlane.f32.xlu0 %v3109
      %v3111 = vpop.xlane.xlu0 %3110
      %v3112 = vadd.f32 %v3073, %v3074
      %3113 = vadd.xlane.f32.xlu0 %v3112
      %v3114 = vpop.xlane.xlu0 %3113
      %v3115 = vadd.f32 %v3075, %v3076
      %3116 = vadd.xlane.f32.xlu0 %v3115
      %v3117 = vpop.xlane.xlu0 %3116
      %v3118 = vadd.f32 %v3077, %v3078
      %3119 = vadd.xlane.f32.xlu0 %v3118
      %v3120 = vpop.xlane.xlu0 %3119
      %v3121 = vadd.f32 %v3079, %v3080
      %3122 = vadd.xlane.f32.xlu0 %v3121
      %v3123 = vpop.xlane.xlu0 %3122
      %v3124 = vadd.f32 %v3081, %v3082
      %3125 = vadd.xlane.f32.xlu0 %v3124
      %v3126 = vpop.xlane.xlu0 %3125
      %v3127 = vadd.f32 %v3083, %v3084
      %3128 = vadd.xlane.f32.xlu0 %v3127
      %v3129 = vpop.xlane.xlu0 %3128
      %v3130 = vadd.f32 %v3085, %v3086
      %3131 = vadd.xlane.f32.xlu0 %v3130
      %v3132 = vpop.xlane.xlu0 %3131
      %v3133 = vadd.f32 %v3087, %v3088
      %3134 = vadd.xlane.f32.xlu0 %v3133
      %v3135 = vpop.xlane.xlu0 %3134
      %v3136 = vadd.f32 %v3089, %v3090
      %3137 = vadd.xlane.f32.xlu0 %v3136
      %v3138 = vpop.xlane.xlu0 %3137
      %v3139 = vmul.f32 %v3093, %v1184
      %v3140 = vmul.f32 %v3096, %v1184
      %v3141 = vmul.f32 %v3099, %v1184
      %v3142 = vmul.f32 %v3102, %v1184
      %v3143 = vmul.f32 %v3105, %v1184
      %v3144 = vmul.f32 %v3108, %v1184
      %v3145 = vmul.f32 %v3111, %v1184
      %v3146 = vmul.f32 %v3114, %v1184
      %v3147 = vmul.f32 %v3117, %v1184
      %v3148 = vmul.f32 %v3120, %v1184
      %v3149 = vmul.f32 %v3123, %v1184
      %v3150 = vmul.f32 %v3126, %v1184
      %v3151 = vmul.f32 %v3129, %v1184
      %v3152 = vmul.f32 %v3132, %v1184
      %v3153 = vmul.f32 %v3135, %v1184
      %v3154 = vmul.f32 %v3138, %v1184
      %v3155 = vadd.f32 %v3139, 1e-05
      %v3156 = vadd.f32 %v3140, 1e-05
      %v3157 = vadd.f32 %v3141, 1e-05
      %v3158 = vadd.f32 %v3142, 1e-05
      %v3159 = vadd.f32 %v3143, 1e-05
      %v3160 = vadd.f32 %v3144, 1e-05
      %v3161 = vadd.f32 %v3145, 1e-05
      %v3162 = vadd.f32 %v3146, 1e-05
      %v3163 = vadd.f32 %v3147, 1e-05
      %v3164 = vadd.f32 %v3148, 1e-05
      %v3165 = vadd.f32 %v3149, 1e-05
      %v3166 = vadd.f32 %v3150, 1e-05
      %v3167 = vadd.f32 %v3151, 1e-05
      %v3168 = vadd.f32 %v3152, 1e-05
      %v3169 = vadd.f32 %v3153, 1e-05
      %v3170 = vadd.f32 %v3154, 1e-05
      %v3171 = vrsqrt.pop %v3155
      %v3172 = vrsqrt.pop %v3156
      %v3173 = vrsqrt.pop %v3157
      %v3174 = vrsqrt.pop %v3158
      %v3175 = vrsqrt.pop %v3159
      %v3176 = vrsqrt.pop %v3160
      %v3177 = vrsqrt.pop %v3161
      %v3178 = vrsqrt.pop %v3162
      %v3179 = vrsqrt.pop %v3163
      %v3180 = vrsqrt.pop %v3164
      %v3181 = vrsqrt.pop %v3165
      %v3182 = vrsqrt.pop %v3166
      %v3183 = vrsqrt.pop %v3167
      %v3184 = vrsqrt.pop %v3168
      %v3185 = vrsqrt.pop %v3169
      %v3186 = vrsqrt.pop %v3170
      %v3187 = vmul.f32 %v3027, %v3171
      %v3188 = vmul.f32 %v3028, %v3171
      %v3189 = vmul.f32 %v3029, %v3172
      %v3190 = vmul.f32 %v3030, %v3172
      %v3191 = vmul.f32 %v3031, %v3173
      %v3192 = vmul.f32 %v3032, %v3173
      %v3193 = vmul.f32 %v3033, %v3174
      %v3194 = vmul.f32 %v3034, %v3174
      %v3195 = vmul.f32 %v3035, %v3175
      %v3196 = vmul.f32 %v3036, %v3175
      %v3197 = vmul.f32 %v3037, %v3176
      %v3198 = vmul.f32 %v3038, %v3176
      %v3199 = vmul.f32 %v3039, %v3177
      %v3200 = vmul.f32 %v3040, %v3177
      %v3201 = vmul.f32 %v3041, %v3178
      %v3202 = vmul.f32 %v3042, %v3178
      %v3203 = vmul.f32 %v3043, %v3179
      %v3204 = vmul.f32 %v3044, %v3179
      %v3205 = vmul.f32 %v3045, %v3180
      %v3206 = vmul.f32 %v3046, %v3180
      %v3207 = vmul.f32 %v3047, %v3181
      %v3208 = vmul.f32 %v3048, %v3181
      %v3209 = vmul.f32 %v3049, %v3182
      %v3210 = vmul.f32 %v3050, %v3182
      %v3211 = vmul.f32 %v3051, %v3183
      %v3212 = vmul.f32 %v3052, %v3183
      %v3213 = vmul.f32 %v3053, %v3184
      %v3214 = vmul.f32 %v3054, %v3184
      %v3215 = vmul.f32 %v3055, %v3185
      %v3216 = vmul.f32 %v3056, %v3185
      %v3217 = vmul.f32 %v3057, %v3186
      %v3218 = vmul.f32 %v3058, %v3186
      %v3219 = vmul.f32 %v3187, 0.5
      %v3220 = vmul.f32 %v3188, 0.5
      %v3221 = vmul.f32 %v3189, 0.5
      %v3222 = vmul.f32 %v3190, 0.5
      %v3223 = vmul.f32 %v3191, 0.5
      %v3224 = vmul.f32 %v3192, 0.5
      %v3225 = vmul.f32 %v3193, 0.5
      %v3226 = vmul.f32 %v3194, 0.5
      %v3227 = vmul.f32 %v3195, 0.5
      %v3228 = vmul.f32 %v3196, 0.5
      %v3229 = vmul.f32 %v3197, 0.5
      %v3230 = vmul.f32 %v3198, 0.5
      %v3231 = vmul.f32 %v3199, 0.5
      %v3232 = vmul.f32 %v3200, 0.5
      %v3233 = vmul.f32 %v3201, 0.5
      %v3234 = vmul.f32 %v3202, 0.5
      %v3235 = vmul.f32 %v3203, 0.5
      %v3236 = vmul.f32 %v3204, 0.5
      %v3237 = vmul.f32 %v3205, 0.5
      %v3238 = vmul.f32 %v3206, 0.5
      %v3239 = vmul.f32 %v3207, 0.5
      %v3240 = vmul.f32 %v3208, 0.5
      %v3241 = vmul.f32 %v3209, 0.5
      %v3242 = vmul.f32 %v3210, 0.5
      %v3243 = vmul.f32 %v3211, 0.5
      %v3244 = vmul.f32 %v3212, 0.5
      %v3245 = vmul.f32 %v3213, 0.5
      %v3246 = vmul.f32 %v3214, 0.5
      %v3247 = vmul.f32 %v3215, 0.5
      %v3248 = vmul.f32 %v3216, 0.5
      %v3249 = vmul.f32 %v3217, 0.5
      %v3250 = vmul.f32 %v3218, 0.5
      %v3251 = vmul.f32 %v3187, 0.70710677
      %v3252 = vmul.f32 %v3188, 0.70710677
      %v3253 = vmul.f32 %v3189, 0.70710677
      %v3254 = vmul.f32 %v3190, 0.70710677
      %v3255 = vmul.f32 %v3191, 0.70710677
      %v3256 = vmul.f32 %v3192, 0.70710677
      %v3257 = vmul.f32 %v3193, 0.70710677
      %v3258 = vmul.f32 %v3194, 0.70710677
      %v3259 = vmul.f32 %v3195, 0.70710677
      %v3260 = vmul.f32 %v3196, 0.70710677
      %v3261 = vmul.f32 %v3197, 0.70710677
      %v3262 = vmul.f32 %v3198, 0.70710677
      %v3263 = vmul.f32 %v3199, 0.70710677
      %v3264 = vmul.f32 %v3200, 0.70710677
      %v3265 = vmul.f32 %v3201, 0.70710677
      %v3266 = vmul.f32 %v3202, 0.70710677
      %v3267 = vmul.f32 %v3203, 0.70710677
      %v3268 = vmul.f32 %v3204, 0.70710677
      %v3269 = vmul.f32 %v3205, 0.70710677
      %v3270 = vmul.f32 %v3206, 0.70710677
      %v3271 = vmul.f32 %v3207, 0.70710677
      %v3272 = vmul.f32 %v3208, 0.70710677
      %v3273 = vmul.f32 %v3209, 0.70710677
      %v3274 = vmul.f32 %v3210, 0.70710677
      %v3275 = vmul.f32 %v3211, 0.70710677
      %v3276 = vmul.f32 %v3212, 0.70710677
      %v3277 = vmul.f32 %v3213, 0.70710677
      %v3278 = vmul.f32 %v3214, 0.70710677
      %v3279 = vmul.f32 %v3215, 0.70710677
      %v3280 = vmul.f32 %v3216, 0.70710677
      %v3281 = vmul.f32 %v3217, 0.70710677
      %v3282 = vmul.f32 %v3218, 0.70710677
      %v3283 = verf.f32.pop %v3251
      %v3284 = verf.f32.pop %v3252
      %v3285 = verf.f32.pop %v3253
      %v3286 = verf.f32.pop %v3254
      %v3287 = verf.f32.pop %v3255
      %v3288 = verf.f32.pop %v3256
      %v3289 = verf.f32.pop %v3257
      %v3290 = verf.f32.pop %v3258
      %v3291 = verf.f32.pop %v3259
      %v3292 = verf.f32.pop %v3260
      %v3293 = verf.f32.pop %v3261
      %v3294 = verf.f32.pop %v3262
      %v3295 = verf.f32.pop %v3263
      %v3296 = verf.f32.pop %v3264
      %v3297 = verf.f32.pop %v3265
      %v3298 = verf.f32.pop %v3266
      %v3299 = verf.f32.pop %v3267
      %v3300 = verf.f32.pop %v3268
      %v3301 = verf.f32.pop %v3269
      %v3302 = verf.f32.pop %v3270
      %v3303 = verf.f32.pop %v3271
      %v3304 = verf.f32.pop %v3272
      %v3305 = verf.f32.pop %v3273
      %v3306 = verf.f32.pop %v3274
      %v3307 = verf.f32.pop %v3275
      %v3308 = verf.f32.pop %v3276
      %v3309 = verf.f32.pop %v3277
      %v3310 = verf.f32.pop %v3278
      %v3311 = verf.f32.pop %v3279
      %v3312 = verf.f32.pop %v3280
      %v3313 = verf.f32.pop %v3281
      %v3314 = verf.f32.pop %v3282
      %v3315 = vadd.f32 %v3283, 1.0
      %v3316 = vadd.f32 %v3284, 1.0
      %v3317 = vadd.f32 %v3285, 1.0
      %v3318 = vadd.f32 %v3286, 1.0
      %v3319 = vadd.f32 %v3287, 1.0
      %v3320 = vadd.f32 %v3288, 1.0
      %v3321 = vadd.f32 %v3289, 1.0
      %v3322 = vadd.f32 %v3290, 1.0
      %v3323 = vadd.f32 %v3291, 1.0
      %v3324 = vadd.f32 %v3292, 1.0
      %v3325 = vadd.f32 %v3293, 1.0
      %v3326 = vadd.f32 %v3294, 1.0
      %v3327 = vadd.f32 %v3295, 1.0
      %v3328 = vadd.f32 %v3296, 1.0
      %v3329 = vadd.f32 %v3297, 1.0
      %v3330 = vadd.f32 %v3298, 1.0
      %v3331 = vadd.f32 %v3299, 1.0
      %v3332 = vadd.f32 %v3300, 1.0
      %v3333 = vadd.f32 %v3301, 1.0
      %v3334 = vadd.f32 %v3302, 1.0
      %v3335 = vadd.f32 %v3303, 1.0
      %v3336 = vadd.f32 %v3304, 1.0
      %v3337 = vadd.f32 %v3305, 1.0
      %v3338 = vadd.f32 %v3306, 1.0
      %v3339 = vadd.f32 %v3307, 1.0
      %v3340 = vadd.f32 %v3308, 1.0
      %v3341 = vadd.f32 %v3309, 1.0
      %v3342 = vadd.f32 %v3310, 1.0
      %v3343 = vadd.f32 %v3311, 1.0
      %v3344 = vadd.f32 %v3312, 1.0
      %v3345 = vadd.f32 %v3313, 1.0
      %v3346 = vadd.f32 %v3314, 1.0
      %v3347 = vmul.f32 %v3219, %v3315
      %v3348 = vmul.f32 %v3220, %v3316
      %v3349 = vmul.f32 %v3221, %v3317
      %v3350 = vmul.f32 %v3222, %v3318
      %v3351 = vmul.f32 %v3223, %v3319
      %v3352 = vmul.f32 %v3224, %v3320
      %v3353 = vmul.f32 %v3225, %v3321
      %v3354 = vmul.f32 %v3226, %v3322
      %v3355 = vmul.f32 %v3227, %v3323
      %v3356 = vmul.f32 %v3228, %v3324
      %v3357 = vmul.f32 %v3229, %v3325
      %v3358 = vmul.f32 %v3230, %v3326
      %v3359 = vmul.f32 %v3231, %v3327
      %v3360 = vmul.f32 %v3232, %v3328
      %v3361 = vmul.f32 %v3233, %v3329
      %v3362 = vmul.f32 %v3234, %v3330
      %v3363 = vmul.f32 %v3235, %v3331
      %v3364 = vmul.f32 %v3236, %v3332
      %v3365 = vmul.f32 %v3237, %v3333
      %v3366 = vmul.f32 %v3238, %v3334
      %v3367 = vmul.f32 %v3239, %v3335
      %v3368 = vmul.f32 %v3240, %v3336
      %v3369 = vmul.f32 %v3241, %v3337
      %v3370 = vmul.f32 %v3242, %v3338
      %v3371 = vmul.f32 %v3243, %v3339
      %v3372 = vmul.f32 %v3244, %v3340
      %v3373 = vmul.f32 %v3245, %v3341
      %v3374 = vmul.f32 %v3246, %v3342
      %v3375 = vmul.f32 %v3247, %v3343
      %v3376 = vmul.f32 %v3248, %v3344
      %v3377 = vmul.f32 %v3249, %v3345
      %v3378 = vmul.f32 %v3250, %v3346
      %v3379 = vld [vmem:[%s7] sm:$0xf]
      %v3380 = vld [vmem:[%s7 + $0x4] sm:$0xf]
      %v3381 = vld [vmem:[%s7 + $0x8] sm:$0xf]
      %v3382 = vld [vmem:[%s7 + $0xc] sm:$0xf]
      %v3383 = vld [vmem:[%s7 + $0x10] sm:$0xf]
      %v3384 = vld [vmem:[%s7 + $0x14] sm:$0xf]
      %v3385 = vld [vmem:[%s7 + $0x18] sm:$0xf]
      %v3386 = vld [vmem:[%s7 + $0x1c] sm:$0xf]
      %v3387 = vld [vmem:[%s8] sm:$0xff]
      %v3388 = vld [vmem:[%s8 + $0x8] sm:$0xff]
      %v3389 = vld [vmem:[%s8 + $0x10] sm:$0xff]
      %v3390 = vld [vmem:[%s8 + $0x18] sm:$0xff]
      %v3391 = vld [vmem:[%s8 + $0x20] sm:$0xff]
      %v3392 = vld [vmem:[%s8 + $0x28] sm:$0xff]
      %v3393 = vld [vmem:[%s8 + $0x30] sm:$0xff]
      %v3394 = vld [vmem:[%s8 + $0x38] sm:$0xff]
      %v3395 = vpack.c.bf16 %v3349, %v3347
      %v3396 = vpack.c.bf16 %v3350, %v3348
      %v3397 = vpack.c.bf16 %v3353, %v3351
      %v3398 = vpack.c.bf16 %v3354, %v3352
      %v3399 = vpack.c.bf16 %v3357, %v3355
      %v3400 = vpack.c.bf16 %v3358, %v3356
      %v3401 = vpack.c.bf16 %v3361, %v3359
      %v3402 = vpack.c.bf16 %v3362, %v3360
      %v3403 = vpack.c.bf16 %v3365, %v3363
      %v3404 = vpack.c.bf16 %v3366, %v3364
      %v3405 = vpack.c.bf16 %v3369, %v3367
      %v3406 = vpack.c.bf16 %v3370, %v3368
      %v3407 = vpack.c.bf16 %v3373, %v3371
      %v3408 = vpack.c.bf16 %v3374, %v3372
      %v3409 = vpack.c.bf16 %v3377, %v3375
      %v3410 = vpack.c.bf16 %v3378, %v3376
      %3412 = vset.pattern.permute.xlu0 0
      %3413 = vperm.xlu0 %3412, %v3387
      %v3414 = vpop.permute.xlu0 %3413
      %3417 = vset.pattern.permute.xlu0 0
      %3418 = vperm.xlu0 %3417, %v3388
      %v3419 = vpop.permute.xlu0 %3418
      %3422 = vset.pattern.permute.xlu0 0
      %3423 = vperm.xlu0 %3422, %v3389
      %v3424 = vpop.permute.xlu0 %3423
      %3427 = vset.pattern.permute.xlu0 0
      %3428 = vperm.xlu0 %3427, %v3390
      %v3429 = vpop.permute.xlu0 %3428
      %3432 = vset.pattern.permute.xlu0 0
      %3433 = vperm.xlu0 %3432, %v3391
      %v3434 = vpop.permute.xlu0 %3433
      %3437 = vset.pattern.permute.xlu0 0
      %3438 = vperm.xlu0 %3437, %v3392
      %v3439 = vpop.permute.xlu0 %3438
      %3442 = vset.pattern.permute.xlu0 0
      %3443 = vperm.xlu0 %3442, %v3393
      %v3444 = vpop.permute.xlu0 %3443
      %3447 = vset.pattern.permute.xlu0 0
      %3448 = vperm.xlu0 %3447, %v3394
      %v3449 = vpop.permute.xlu0 %3448
      %v3459 = vunpack.c.l.b16 %v3379
      %v3460 = vunpack.c.l.b16 %v3380
      %v3461 = vunpack.c.l.b16 %v3381
      %v3462 = vunpack.c.l.b16 %v3382
      %v3463 = vunpack.c.l.b16 %v3383
      %v3464 = vunpack.c.l.b16 %v3384
      %v3465 = vunpack.c.l.b16 %v3385
      %v3466 = vunpack.c.l.b16 %v3386
      %v3467 = vpack.c.b16 %v3460, %v3459
      %v3468 = vpack.c.b16 %v3462, %v3461
      %v3469 = vpack.c.b16 %v3464, %v3463
      %v3470 = vpack.c.b16 %v3466, %v3465
      %3475 = vmatprep.subr.bf16.mxu0 %v3396
      %3476 = vmatpush1.bf16.msra.mxu0 %v3395
      %3477 = vmatprep.subr.bf16.mxu0 %v3398
      %3478 = vmatpush1.bf16.msra.mxu0 %v3397
      %3479 = vmatprep.subr.bf16.mxu0 %v3400
      %3480 = vmatpush1.bf16.msra.mxu0 %v3399
      %3481 = vmatprep.subr.bf16.mxu0 %v3402
      %3482 = vmatpush1.bf16.msra.mxu0 %v3401
      %3483 = vmatprep.subr.bf16.mxu0 %v3404
      %3484 = vmatpush1.bf16.msra.mxu0 %v3403
      %3485 = vmatprep.subr.bf16.mxu0 %v3406
      %3486 = vmatpush1.bf16.msra.mxu0 %v3405
      %3487 = vmatprep.subr.bf16.mxu0 %v3408
      %3488 = vmatpush1.bf16.msra.mxu0 %v3407
      %3489 = vmatprep.subr.bf16.mxu0 %v3410
      %3490 = vmatpush1.bf16.msra.mxu0 %v3409
      %3491 = vmatprep.subr.bf16.mxu0 0
      %3492 = vmatpush1.bf16.msra.mxu0 0
      %3493 = vmatprep.subr.bf16.mxu0 0
      %3494 = vmatpush1.bf16.msra.mxu0 0
      %3495 = vmatprep.subr.bf16.mxu0 0
      %3496 = vmatpush1.bf16.msra.mxu0 0
      %3497 = vmatprep.subr.bf16.mxu0 0
      %3498 = vmatpush1.bf16.msra.mxu0 0
      %3499 = vmatprep.subr.bf16.mxu0 0
      %3500 = vmatpush1.bf16.msra.mxu0 0
      %3501 = vmatprep.subr.bf16.mxu0 0
      %3502 = vmatpush1.bf16.msra.mxu0 0
      %3503 = vmatprep.subr.bf16.mxu0 0
      %3504 = vmatpush1.bf16.msra.mxu0 0
      %3505 = vmatprep.subr.bf16.mxu0 0
      %3506 = vmatpush1.bf16.msra.mxu0 0
      %3507 = vmatprep.mubr.bf16.mxu0 0
      %3508 = vmatmul.mubr.bf16.gmra.mrb[0].mxu0 %v3467
      %v3509 = vpop.f32.mrb[0].mxu0
      %v3510 = vadd.f32 %v3414, %v3509
      %v3511 = vpop.f32.mrb[0].mxu0
      %v3512 = vadd.f32 %v3414, %v3511
      %v3513 = vpop.f32.mrb[0].mxu0
      %v3514 = vadd.f32 %v3419, %v3513
      %v3515 = vpop.f32.mrb[0].mxu0
      %v3516 = vadd.f32 %v3419, %v3515
      %3517 = vmatprep.mubr.bf16.mxu0 0
      %3518 = vmatmul.mubr.bf16.gmra.mrb[0].mxu0 %v3468
      %v3519 = vpop.f32.mrb[0].mxu0
      %v3520 = vadd.f32 %v3424, %v3519
      %v3521 = vpop.f32.mrb[0].mxu0
      %v3522 = vadd.f32 %v3424, %v3521
      %v3523 = vpop.f32.mrb[0].mxu0
      %v3524 = vadd.f32 %v3429, %v3523
      %v3525 = vpop.f32.mrb[0].mxu0
      %v3526 = vadd.f32 %v3429, %v3525
      %3527 = vmatprep.mubr.bf16.mxu0 0
      %3528 = vmatmul.mubr.bf16.gmra.mrb[0].mxu0 %v3469
      %v3529 = vpop.f32.mrb[0].mxu0
      %v3530 = vadd.f32 %v3434, %v3529
      %v3531 = vpop.f32.mrb[0].mxu0
      %v3532 = vadd.f32 %v3434, %v3531
      %v3533 = vpop.f32.mrb[0].mxu0
      %v3534 = vadd.f32 %v3439, %v3533
      %v3535 = vpop.f32.mrb[0].mxu0
      %v3536 = vadd.f32 %v3439, %v3535
      %3537 = vmatprep.mubr.bf16.mxu0 0
      %3538 = vmatmul.mubr.bf16.gmra.mrb[0].mxu0 %v3470
      %v3539 = vpop.f32.mrb[0].mxu0
      %v3540 = vadd.f32 %v3444, %v3539
      %v3541 = vpop.f32.mrb[0].mxu0
      %v3542 = vadd.f32 %v3444, %v3541
      %v3543 = vpop.f32.mrb[0].mxu0
      %v3544 = vadd.f32 %v3449, %v3543
      %v3545 = vpop.f32.mrb[0].mxu0
      %v3546 = vadd.f32 %v3449, %v3545
      %3547 = vdwg.mxu0
      %v3548 = vadd.f32 %v3510, %v3512
      %3549 = vadd.xlane.f32.xlu0 %v3548
      %v3550 = vpop.xlane.xlu0 %3549
      %v3551 = vadd.f32 %v3514, %v3516
      %3552 = vadd.xlane.f32.xlu0 %v3551
      %v3553 = vpop.xlane.xlu0 %3552
      %v3554 = vadd.f32 %v3520, %v3522
      %3555 = vadd.xlane.f32.xlu0 %v3554
      %v3556 = vpop.xlane.xlu0 %3555
      %v3557 = vadd.f32 %v3524, %v3526
      %3558 = vadd.xlane.f32.xlu0 %v3557
      %v3559 = vpop.xlane.xlu0 %3558
      %v3560 = vadd.f32 %v3530, %v3532
      %3561 = vadd.xlane.f32.xlu0 %v3560
      %v3562 = vpop.xlane.xlu0 %3561
      %v3563 = vadd.f32 %v3534, %v3536
      %3564 = vadd.xlane.f32.xlu0 %v3563
      %v3565 = vpop.xlane.xlu0 %3564
      %v3566 = vadd.f32 %v3540, %v3542
      %3567 = vadd.xlane.f32.xlu0 %v3566
      %v3568 = vpop.xlane.xlu0 %3567
      %v3569 = vadd.f32 %v3544, %v3546
      %3570 = vadd.xlane.f32.xlu0 %v3569
      %v3571 = vpop.xlane.xlu0 %3570
      %v3572 = vmul.f32 %v3550, %v1184
      %v3573 = vmul.f32 %v3553, %v1184
      %v3574 = vmul.f32 %v3556, %v1184
      %v3575 = vmul.f32 %v3559, %v1184
      %v3576 = vmul.f32 %v3562, %v1184
      %v3577 = vmul.f32 %v3565, %v1184
      %v3578 = vmul.f32 %v3568, %v1184
      %v3579 = vmul.f32 %v3571, %v1184
      %v3580 = vsub.f32 %v3510, %v3572
      %v3581 = vsub.f32 %v3512, %v3572
      %v3582 = vsub.f32 %v3514, %v3573
      %v3583 = vsub.f32 %v3516, %v3573
      %v3584 = vsub.f32 %v3520, %v3574
      %v3585 = vsub.f32 %v3522, %v3574
      %v3586 = vsub.f32 %v3524, %v3575
      %v3587 = vsub.f32 %v3526, %v3575
      %v3588 = vsub.f32 %v3530, %v3576
      %v3589 = vsub.f32 %v3532, %v3576
      %v3590 = vsub.f32 %v3534, %v3577
      %v3591 = vsub.f32 %v3536, %v3577
      %v3592 = vsub.f32 %v3540, %v3578
      %v3593 = vsub.f32 %v3542, %v3578
      %v3594 = vsub.f32 %v3544, %v3579
      %v3595 = vsub.f32 %v3546, %v3579
      %v3596 = vmul.f32 %v3580, %v3580
      %v3597 = vmul.f32 %v3581, %v3581
      %v3598 = vmul.f32 %v3582, %v3582
      %v3599 = vmul.f32 %v3583, %v3583
      %v3600 = vmul.f32 %v3584, %v3584
      %v3601 = vmul.f32 %v3585, %v3585
      %v3602 = vmul.f32 %v3586, %v3586
      %v3603 = vmul.f32 %v3587, %v3587
      %v3604 = vmul.f32 %v3588, %v3588
      %v3605 = vmul.f32 %v3589, %v3589
      %v3606 = vmul.f32 %v3590, %v3590
      %v3607 = vmul.f32 %v3591, %v3591
      %v3608 = vmul.f32 %v3592, %v3592
      %v3609 = vmul.f32 %v3593, %v3593
      %v3610 = vmul.f32 %v3594, %v3594
      %v3611 = vmul.f32 %v3595, %v3595
      %v3612 = vadd.f32 %v3596, %v3597
      %3613 = vadd.xlane.f32.xlu0 %v3612
      %v3614 = vpop.xlane.xlu0 %3613
      %v3615 = vadd.f32 %v3598, %v3599
      %3616 = vadd.xlane.f32.xlu0 %v3615
      %v3617 = vpop.xlane.xlu0 %3616
      %v3618 = vadd.f32 %v3600, %v3601
      %3619 = vadd.xlane.f32.xlu0 %v3618
      %v3620 = vpop.xlane.xlu0 %3619
      %v3621 = vadd.f32 %v3602, %v3603
      %3622 = vadd.xlane.f32.xlu0 %v3621
      %v3623 = vpop.xlane.xlu0 %3622
      %v3624 = vadd.f32 %v3604, %v3605
      %3625 = vadd.xlane.f32.xlu0 %v3624
      %v3626 = vpop.xlane.xlu0 %3625
      %v3627 = vadd.f32 %v3606, %v3607
      %3628 = vadd.xlane.f32.xlu0 %v3627
      %v3629 = vpop.xlane.xlu0 %3628
      %v3630 = vadd.f32 %v3608, %v3609
      %3631 = vadd.xlane.f32.xlu0 %v3630
      %v3632 = vpop.xlane.xlu0 %3631
      %v3633 = vadd.f32 %v3610, %v3611
      %3634 = vadd.xlane.f32.xlu0 %v3633
      %v3635 = vpop.xlane.xlu0 %3634
      %v3636 = vmul.f32 %v3614, %v1184
      %v3637 = vmul.f32 %v3617, %v1184
      %v3638 = vmul.f32 %v3620, %v1184
      %v3639 = vmul.f32 %v3623, %v1184
      %v3640 = vmul.f32 %v3626, %v1184
      %v3641 = vmul.f32 %v3629, %v1184
      %v3642 = vmul.f32 %v3632, %v1184
      %v3643 = vmul.f32 %v3635, %v1184
      %v3644 = vadd.f32 %v3636, 1e-05
      %v3645 = vadd.f32 %v3637, 1e-05
      %v3646 = vadd.f32 %v3638, 1e-05
      %v3647 = vadd.f32 %v3639, 1e-05
      %v3648 = vadd.f32 %v3640, 1e-05
      %v3649 = vadd.f32 %v3641, 1e-05
      %v3650 = vadd.f32 %v3642, 1e-05
      %v3651 = vadd.f32 %v3643, 1e-05
      %v3652 = vrsqrt.pop %v3644
      %v3653 = vrsqrt.pop %v3645
      %v3654 = vrsqrt.pop %v3646
      %v3655 = vrsqrt.pop %v3647
      %v3656 = vrsqrt.pop %v3648
      %v3657 = vrsqrt.pop %v3649
      %v3658 = vrsqrt.pop %v3650
      %v3659 = vrsqrt.pop %v3651
      %v3660 = vmul.f32 %v3580, %v3652
      %v3661 = vmul.f32 %v3581, %v3652
      %v3662 = vmul.f32 %v3582, %v3653
      %v3663 = vmul.f32 %v3583, %v3653
      %v3664 = vmul.f32 %v3584, %v3654
      %v3665 = vmul.f32 %v3585, %v3654
      %v3666 = vmul.f32 %v3586, %v3655
      %v3667 = vmul.f32 %v3587, %v3655
      %v3668 = vmul.f32 %v3588, %v3656
      %v3669 = vmul.f32 %v3589, %v3656
      %v3670 = vmul.f32 %v3590, %v3657
      %v3671 = vmul.f32 %v3591, %v3657
      %v3672 = vmul.f32 %v3592, %v3658
      %v3673 = vmul.f32 %v3593, %v3658
      %v3674 = vmul.f32 %v3594, %v3659
      %v3675 = vmul.f32 %v3595, %v3659
      %v3676 = vmul.f32 %v3660, 0.5
      %v3677 = vmul.f32 %v3661, 0.5
      %v3678 = vmul.f32 %v3662, 0.5
      %v3679 = vmul.f32 %v3663, 0.5
      %v3680 = vmul.f32 %v3664, 0.5
      %v3681 = vmul.f32 %v3665, 0.5
      %v3682 = vmul.f32 %v3666, 0.5
      %v3683 = vmul.f32 %v3667, 0.5
      %v3684 = vmul.f32 %v3668, 0.5
      %v3685 = vmul.f32 %v3669, 0.5
      %v3686 = vmul.f32 %v3670, 0.5
      %v3687 = vmul.f32 %v3671, 0.5
      %v3688 = vmul.f32 %v3672, 0.5
      %v3689 = vmul.f32 %v3673, 0.5
      %v3690 = vmul.f32 %v3674, 0.5
      %v3691 = vmul.f32 %v3675, 0.5
      %v3692 = vmul.f32 %v3660, 0.70710677
      %v3693 = vmul.f32 %v3661, 0.70710677
      %v3694 = vmul.f32 %v3662, 0.70710677
      %v3695 = vmul.f32 %v3663, 0.70710677
      %v3696 = vmul.f32 %v3664, 0.70710677
      %v3697 = vmul.f32 %v3665, 0.70710677
      %v3698 = vmul.f32 %v3666, 0.70710677
      %v3699 = vmul.f32 %v3667, 0.70710677
      %v3700 = vmul.f32 %v3668, 0.70710677
      %v3701 = vmul.f32 %v3669, 0.70710677
      %v3702 = vmul.f32 %v3670, 0.70710677
      %v3703 = vmul.f32 %v3671, 0.70710677
      %v3704 = vmul.f32 %v3672, 0.70710677
      %v3705 = vmul.f32 %v3673, 0.70710677
      %v3706 = vmul.f32 %v3674, 0.70710677
      %v3707 = vmul.f32 %v3675, 0.70710677
      %v3708 = verf.f32.pop %v3692
      %v3709 = verf.f32.pop %v3693
      %v3710 = verf.f32.pop %v3694
      %v3711 = verf.f32.pop %v3695
      %v3712 = verf.f32.pop %v3696
      %v3713 = verf.f32.pop %v3697
      %v3714 = verf.f32.pop %v3698
      %v3715 = verf.f32.pop %v3699
      %v3716 = verf.f32.pop %v3700
      %v3717 = verf.f32.pop %v3701
      %v3718 = verf.f32.pop %v3702
      %v3719 = verf.f32.pop %v3703
      %v3720 = verf.f32.pop %v3704
      %v3721 = verf.f32.pop %v3705
      %v3722 = verf.f32.pop %v3706
      %v3723 = verf.f32.pop %v3707
      %v3724 = vadd.f32 %v3708, 1.0
      %v3725 = vadd.f32 %v3709, 1.0
      %v3726 = vadd.f32 %v3710, 1.0
      %v3727 = vadd.f32 %v3711, 1.0
      %v3728 = vadd.f32 %v3712, 1.0
      %v3729 = vadd.f32 %v3713, 1.0
      %v3730 = vadd.f32 %v3714, 1.0
      %v3731 = vadd.f32 %v3715, 1.0
      %v3732 = vadd.f32 %v3716, 1.0
      %v3733 = vadd.f32 %v3717, 1.0
      %v3734 = vadd.f32 %v3718, 1.0
      %v3735 = vadd.f32 %v3719, 1.0
      %v3736 = vadd.f32 %v3720, 1.0
      %v3737 = vadd.f32 %v3721, 1.0
      %v3738 = vadd.f32 %v3722, 1.0
      %v3739 = vadd.f32 %v3723, 1.0
      %v3740 = vmul.f32 %v3676, %v3724
      %v3741 = vmul.f32 %v3677, %v3725
      %v3742 = vmul.f32 %v3678, %v3726
      %v3743 = vmul.f32 %v3679, %v3727
      %v3744 = vmul.f32 %v3680, %v3728
      %v3745 = vmul.f32 %v3681, %v3729
      %v3746 = vmul.f32 %v3682, %v3730
      %v3747 = vmul.f32 %v3683, %v3731
      %v3748 = vmul.f32 %v3684, %v3732
      %v3749 = vmul.f32 %v3685, %v3733
      %v3750 = vmul.f32 %v3686, %v3734
      %v3751 = vmul.f32 %v3687, %v3735
      %v3752 = vmul.f32 %v3688, %v3736
      %v3753 = vmul.f32 %v3689, %v3737
      %v3754 = vmul.f32 %v3690, %v3738
      %v3755 = vmul.f32 %v3691, %v3739
      %3756 = vst [vmem:[%s529] sm:$0xff] %v3740
      %3757 = vst [vmem:[%s529 + $0x8] sm:$0xff] %v3741
      %3758 = vst [vmem:[%s529 + $0x10] sm:$0xff] %v3742
      %3759 = vst [vmem:[%s529 + $0x18] sm:$0xff] %v3743
      %3760 = vst [vmem:[%s529 + $0x20] sm:$0xff] %v3744
      %3761 = vst [vmem:[%s529 + $0x28] sm:$0xff] %v3745
      %3762 = vst [vmem:[%s529 + $0x30] sm:$0xff] %v3746
      %3763 = vst [vmem:[%s529 + $0x38] sm:$0xff] %v3747
      %3764 = vst [vmem:[%s529 + $0x40] sm:$0xff] %v3748
      %3765 = vst [vmem:[%s529 + $0x48] sm:$0xff] %v3749
      %3766 = vst [vmem:[%s529 + $0x50] sm:$0xff] %v3750
      %3767 = vst [vmem:[%s529 + $0x58] sm:$0xff] %v3751
      %3768 = vst [vmem:[%s529 + $0x60] sm:$0xff] %v3752
      %3769 = vst [vmem:[%s529 + $0x68] sm:$0xff] %v3753
      %3770 = vst [vmem:[%s529 + $0x70] sm:$0xff] %v3754
      %3771 = vst [vmem:[%s529 + $0x78] sm:$0xff] %v3755
      %v3772 = vld [vmem:[%s9] sm:$0xf]
      %v3773 = vld [vmem:[%s9 + $0x4] sm:$0xf]
      %v3774 = vld [vmem:[%s9 + $0x8] sm:$0xf]
      %v3775 = vld [vmem:[%s9 + $0xc] sm:$0xf]
      %v3776 = vld [vmem:[%s9 + $0x10] sm:$0xf]
      %v3777 = vld [vmem:[%s9 + $0x14] sm:$0xf]
      %v3778 = vld [vmem:[%s9 + $0x18] sm:$0xf]
      %v3779 = vld [vmem:[%s9 + $0x1c] sm:$0xf]
      %v3780 = vld [vmem:[%s10] sm:$0xff]
      %v3781 = vld [vmem:[%s10 + $0x8] sm:$0xff]
      %v3782 = vld [vmem:[%s10 + $0x10] sm:$0xff]
      %v3783 = vld [vmem:[%s10 + $0x18] sm:$0xff]
      %v3784 = vld [vmem:[%s10 + $0x20] sm:$0xff]
      %v3785 = vld [vmem:[%s10 + $0x28] sm:$0xff]
      %v3786 = vld [vmem:[%s10 + $0x30] sm:$0xff]
      %v3787 = vld [vmem:[%s10 + $0x38] sm:$0xff]
      %v3788 = vpack.c.bf16 %v3742, %v3740
      %v3789 = vpack.c.bf16 %v3743, %v3741
      %v3790 = vpack.c.bf16 %v3746, %v3744
      %v3791 = vpack.c.bf16 %v3747, %v3745
      %v3792 = vpack.c.bf16 %v3750, %v3748
      %v3793 = vpack.c.bf16 %v3751, %v3749
      %v3794 = vpack.c.bf16 %v3754, %v3752
      %v3795 = vpack.c.bf16 %v3755, %v3753
      %3797 = vset.pattern.permute.xlu0 0
      %3798 = vperm.xlu0 %3797, %v3780
      %v3799 = vpop.permute.xlu0 %3798
      %3802 = vset.pattern.permute.xlu0 0
      %3803 = vperm.xlu0 %3802, %v3781
      %v3804 = vpop.permute.xlu0 %3803
      %3807 = vset.pattern.permute.xlu0 0
      %3808 = vperm.xlu0 %3807, %v3782
      %v3809 = vpop.permute.xlu0 %3808
      %3812 = vset.pattern.permute.xlu0 0
      %3813 = vperm.xlu0 %3812, %v3783
      %v3814 = vpop.permute.xlu0 %3813
      %3817 = vset.pattern.permute.xlu0 0
      %3818 = vperm.xlu0 %3817, %v3784
      %v3819 = vpop.permute.xlu0 %3818
      %3822 = vset.pattern.permute.xlu0 0
      %3823 = vperm.xlu0 %3822, %v3785
      %v3824 = vpop.permute.xlu0 %3823
      %3827 = vset.pattern.permute.xlu0 0
      %3828 = vperm.xlu0 %3827, %v3786
      %v3829 = vpop.permute.xlu0 %3828
      %3832 = vset.pattern.permute.xlu0 0
      %3833 = vperm.xlu0 %3832, %v3787
      %v3834 = vpop.permute.xlu0 %3833
      %v3844 = vunpack.c.l.b16 %v3772
      %v3845 = vunpack.c.l.b16 %v3773
      %v3846 = vunpack.c.l.b16 %v3774
      %v3847 = vunpack.c.l.b16 %v3775
      %v3848 = vunpack.c.l.b16 %v3776
      %v3849 = vunpack.c.l.b16 %v3777
      %v3850 = vunpack.c.l.b16 %v3778
      %v3851 = vunpack.c.l.b16 %v3779
      %v3852 = vpack.c.b16 %v3845, %v3844
      %v3853 = vpack.c.b16 %v3847, %v3846
      %v3854 = vpack.c.b16 %v3849, %v3848
      %v3855 = vpack.c.b16 %v3851, %v3850
      %vm3856 = vcmask 523264
      %v3858 = vsel %vm3856, %v3852, 0
      %v3861 = vsel %vm3856, %v3853, 0
      %v3864 = vsel %vm3856, %v3854, 0
      %v3867 = vsel %vm3856, %v3855, 0
      %3869 = vmatprep.subr.bf16.mxu0 %v3789
      %3870 = vmatpush1.bf16.msra.mxu0 %v3788
      %3871 = vmatprep.subr.bf16.mxu0 %v3791
      %3872 = vmatpush1.bf16.msra.mxu0 %v3790
      %3873 = vmatprep.subr.bf16.mxu0 %v3793
      %3874 = vmatpush1.bf16.msra.mxu0 %v3792
      %3875 = vmatprep.subr.bf16.mxu0 %v3795
      %3876 = vmatpush1.bf16.msra.mxu0 %v3794
      %3877 = vmatprep.subr.bf16.mxu0 0
      %3878 = vmatpush1.bf16.msra.mxu0 0
      %3879 = vmatprep.subr.bf16.mxu0 0
      %3880 = vmatpush1.bf16.msra.mxu0 0
      %3881 = vmatprep.subr.bf16.mxu0 0
      %3882 = vmatpush1.bf16.msra.mxu0 0
      %3883 = vmatprep.subr.bf16.mxu0 0
      %3884 = vmatpush1.bf16.msra.mxu0 0
      %3885 = vmatprep.subr.bf16.mxu0 0
      %3886 = vmatpush1.bf16.msra.mxu0 0
      %3887 = vmatprep.subr.bf16.mxu0 0
      %3888 = vmatpush1.bf16.msra.mxu0 0
      %3889 = vmatprep.subr.bf16.mxu0 0
      %3890 = vmatpush1.bf16.msra.mxu0 0
      %3891 = vmatprep.subr.bf16.mxu0 0
      %3892 = vmatpush1.bf16.msra.mxu0 0
      %3893 = vmatprep.subr.bf16.mxu0 0
      %3894 = vmatpush1.bf16.msra.mxu0 0
      %3895 = vmatprep.subr.bf16.mxu0 0
      %3896 = vmatpush1.bf16.msra.mxu0 0
      %3897 = vmatprep.subr.bf16.mxu0 0
      %3898 = vmatpush1.bf16.msra.mxu0 0
      %3899 = vmatprep.subr.bf16.mxu0 0
      %3900 = vmatpush1.bf16.msra.mxu0 0
      %3901 = vmatprep.mubr.bf16.mxu0 0
      %3902 = vmatmul.mubr.bf16.gmra.mrb[0].mxu0 %v3858
      %v3903 = vpop.f32.mrb[0].mxu0
      %v3904 = vadd.f32 %v3799, %v3903
      %v3905 = vpop.f32.mrb[0].mxu0
      %v3906 = vadd.f32 %v3799, %v3905
      %v3907 = vpop.f32.mrb[0].mxu0
      %v3908 = vadd.f32 %v3804, %v3907
      %v3909 = vpop.f32.mrb[0].mxu0
      %v3910 = vadd.f32 %v3804, %v3909
      %3911 = vmatprep.mubr.bf16.mxu0 0
      %3912 = vmatmul.mubr.bf16.gmra.mrb[0].mxu0 %v3861
      %v3913 = vpop.f32.mrb[0].mxu0
      %v3914 = vadd.f32 %v3809, %v3913
      %v3915 = vpop.f32.mrb[0].mxu0
      %v3916 = vadd.f32 %v3809, %v3915
      %v3917 = vpop.f32.mrb[0].mxu0
      %v3918 = vadd.f32 %v3814, %v3917
      %v3919 = vpop.f32.mrb[0].mxu0
      %v3920 = vadd.f32 %v3814, %v3919
      %3921 = vmatprep.mubr.bf16.mxu0 0
      %3922 = vmatmul.mubr.bf16.gmra.mrb[0].mxu0 %v3864
      %v3923 = vpop.f32.mrb[0].mxu0
      %v3924 = vadd.f32 %v3819, %v3923
      %v3925 = vpop.f32.mrb[0].mxu0
      %v3926 = vadd.f32 %v3819, %v3925
      %v3927 = vpop.f32.mrb[0].mxu0
      %v3928 = vadd.f32 %v3824, %v3927
      %v3929 = vpop.f32.mrb[0].mxu0
      %v3930 = vadd.f32 %v3824, %v3929
      %3931 = vmatprep.mubr.bf16.mxu0 0
      %3932 = vmatmul.mubr.bf16.gmra.mrb[0].mxu0 %v3867
      %v3933 = vpop.f32.mrb[0].mxu0
      %v3934 = vadd.f32 %v3829, %v3933
      %v3935 = vpop.f32.mrb[0].mxu0
      %v3936 = vadd.f32 %v3829, %v3935
      %v3937 = vpop.f32.mrb[0].mxu0
      %v3938 = vadd.f32 %v3834, %v3937
      %v3939 = vpop.f32.mrb[0].mxu0
      %v3940 = vadd.f32 %v3834, %v3939
      %3941 = vdwg.mxu0
      %v3942 = vadd.f32 %v3904, %v3906
      %3943 = vadd.xlane.f32.xlu0 %v3942
      %v3944 = vpop.xlane.xlu0 %3943
      %v3945 = vadd.f32 %v3908, %v3910
      %3946 = vadd.xlane.f32.xlu0 %v3945
      %v3947 = vpop.xlane.xlu0 %3946
      %v3948 = vadd.f32 %v3914, %v3916
      %3949 = vadd.xlane.f32.xlu0 %v3948
      %v3950 = vpop.xlane.xlu0 %3949
      %v3951 = vadd.f32 %v3918, %v3920
      %3952 = vadd.xlane.f32.xlu0 %v3951
      %v3953 = vpop.xlane.xlu0 %3952
      %v3954 = vadd.f32 %v3924, %v3926
      %3955 = vadd.xlane.f32.xlu0 %v3954
      %v3956 = vpop.xlane.xlu0 %3955
      %v3957 = vadd.f32 %v3928, %v3930
      %3958 = vadd.xlane.f32.xlu0 %v3957
      %v3959 = vpop.xlane.xlu0 %3958
      %v3960 = vadd.f32 %v3934, %v3936
      %3961 = vadd.xlane.f32.xlu0 %v3960
      %v3962 = vpop.xlane.xlu0 %3961
      %v3963 = vadd.f32 %v3938, %v3940
      %3964 = vadd.xlane.f32.xlu0 %v3963
      %v3965 = vpop.xlane.xlu0 %3964
      %v3966 = vmul.f32 %v3944, %v1184
      %v3967 = vmul.f32 %v3947, %v1184
      %v3968 = vmul.f32 %v3950, %v1184
      %v3969 = vmul.f32 %v3953, %v1184
      %v3970 = vmul.f32 %v3956, %v1184
      %v3971 = vmul.f32 %v3959, %v1184
      %v3972 = vmul.f32 %v3962, %v1184
      %v3973 = vmul.f32 %v3965, %v1184
      %v3974 = vsub.f32 %v3904, %v3966
      %v3975 = vsub.f32 %v3906, %v3966
      %v3976 = vsub.f32 %v3908, %v3967
      %v3977 = vsub.f32 %v3910, %v3967
      %v3978 = vsub.f32 %v3914, %v3968
      %v3979 = vsub.f32 %v3916, %v3968
      %v3980 = vsub.f32 %v3918, %v3969
      %v3981 = vsub.f32 %v3920, %v3969
      %v3982 = vsub.f32 %v3924, %v3970
      %v3983 = vsub.f32 %v3926, %v3970
      %v3984 = vsub.f32 %v3928, %v3971
      %v3985 = vsub.f32 %v3930, %v3971
      %v3986 = vsub.f32 %v3934, %v3972
      %v3987 = vsub.f32 %v3936, %v3972
      %v3988 = vsub.f32 %v3938, %v3973
      %v3989 = vsub.f32 %v3940, %v3973
      %v3990 = vmul.f32 %v3974, %v3974
      %v3991 = vmul.f32 %v3975, %v3975
      %v3992 = vmul.f32 %v3976, %v3976
      %v3993 = vmul.f32 %v3977, %v3977
      %v3994 = vmul.f32 %v3978, %v3978
      %v3995 = vmul.f32 %v3979, %v3979
      %v3996 = vmul.f32 %v3980, %v3980
      %v3997 = vmul.f32 %v3981, %v3981
      %v3998 = vmul.f32 %v3982, %v3982
      %v3999 = vmul.f32 %v3983, %v3983
      %v4000 = vmul.f32 %v3984, %v3984
      %v4001 = vmul.f32 %v3985, %v3985
      %v4002 = vmul.f32 %v3986, %v3986
      %v4003 = vmul.f32 %v3987, %v3987
      %v4004 = vmul.f32 %v3988, %v3988
      %v4005 = vmul.f32 %v3989, %v3989
      %v4006 = vadd.f32 %v3990, %v3991
      %4007 = vadd.xlane.f32.xlu0 %v4006
      %v4008 = vpop.xlane.xlu0 %4007
      %v4009 = vadd.f32 %v3992, %v3993
      %4010 = vadd.xlane.f32.xlu0 %v4009
      %v4011 = vpop.xlane.xlu0 %4010
      %v4012 = vadd.f32 %v3994, %v3995
      %4013 = vadd.xlane.f32.xlu0 %v4012
      %v4014 = vpop.xlane.xlu0 %4013
      %v4015 = vadd.f32 %v3996, %v3997
      %4016 = vadd.xlane.f32.xlu0 %v4015
      %v4017 = vpop.xlane.xlu0 %4016
      %v4018 = vadd.f32 %v3998, %v3999
      %4019 = vadd.xlane.f32.xlu0 %v4018
      %v4020 = vpop.xlane.xlu0 %4019
      %v4021 = vadd.f32 %v4000, %v4001
      %4022 = vadd.xlane.f32.xlu0 %v4021
      %v4023 = vpop.xlane.xlu0 %4022
      %v4024 = vadd.f32 %v4002, %v4003
      %4025 = vadd.xlane.f32.xlu0 %v4024
      %v4026 = vpop.xlane.xlu0 %4025
      %v4027 = vadd.f32 %v4004, %v4005
      %4028 = vadd.xlane.f32.xlu0 %v4027
      %v4029 = vpop.xlane.xlu0 %4028
      %v4030 = vmul.f32 %v4008, %v1184
      %v4031 = vmul.f32 %v4011, %v1184
      %v4032 = vmul.f32 %v4014, %v1184
      %v4033 = vmul.f32 %v4017, %v1184
      %v4034 = vmul.f32 %v4020, %v1184
      %v4035 = vmul.f32 %v4023, %v1184
      %v4036 = vmul.f32 %v4026, %v1184
      %v4037 = vmul.f32 %v4029, %v1184
      %v4038 = vadd.f32 %v4030, 1e-05
      %v4039 = vadd.f32 %v4031, 1e-05
      %v4040 = vadd.f32 %v4032, 1e-05
      %v4041 = vadd.f32 %v4033, 1e-05
      %v4042 = vadd.f32 %v4034, 1e-05
      %v4043 = vadd.f32 %v4035, 1e-05
      %v4044 = vadd.f32 %v4036, 1e-05
      %v4045 = vadd.f32 %v4037, 1e-05
      %v4046 = vrsqrt.pop %v4038
      %v4047 = vrsqrt.pop %v4039
      %v4048 = vrsqrt.pop %v4040
      %v4049 = vrsqrt.pop %v4041
      %v4050 = vrsqrt.pop %v4042
      %v4051 = vrsqrt.pop %v4043
      %v4052 = vrsqrt.pop %v4044
      %v4053 = vrsqrt.pop %v4045
      %v4054 = vmul.f32 %v3974, %v4046
      %v4055 = vmul.f32 %v3975, %v4046
      %v4056 = vmul.f32 %v3976, %v4047
      %v4057 = vmul.f32 %v3977, %v4047
      %v4058 = vmul.f32 %v3978, %v4048
      %v4059 = vmul.f32 %v3979, %v4048
      %v4060 = vmul.f32 %v3980, %v4049
      %v4061 = vmul.f32 %v3981, %v4049
      %v4062 = vmul.f32 %v3982, %v4050
      %v4063 = vmul.f32 %v3983, %v4050
      %v4064 = vmul.f32 %v3984, %v4051
      %v4065 = vmul.f32 %v3985, %v4051
      %v4066 = vmul.f32 %v3986, %v4052
      %v4067 = vmul.f32 %v3987, %v4052
      %v4068 = vmul.f32 %v3988, %v4053
      %v4069 = vmul.f32 %v3989, %v4053
      %v4070 = vmul.f32 %v4054, 0.5
      %v4071 = vmul.f32 %v4055, 0.5
      %v4072 = vmul.f32 %v4056, 0.5
      %v4073 = vmul.f32 %v4057, 0.5
      %v4074 = vmul.f32 %v4058, 0.5
      %v4075 = vmul.f32 %v4059, 0.5
      %v4076 = vmul.f32 %v4060, 0.5
      %v4077 = vmul.f32 %v4061, 0.5
      %v4078 = vmul.f32 %v4062, 0.5
      %v4079 = vmul.f32 %v4063, 0.5
      %v4080 = vmul.f32 %v4064, 0.5
      %v4081 = vmul.f32 %v4065, 0.5
      %v4082 = vmul.f32 %v4066, 0.5
      %v4083 = vmul.f32 %v4067, 0.5
      %v4084 = vmul.f32 %v4068, 0.5
      %v4085 = vmul.f32 %v4069, 0.5
      %v4086 = vmul.f32 %v4054, 0.70710677
      %v4087 = vmul.f32 %v4055, 0.70710677
      %v4088 = vmul.f32 %v4056, 0.70710677
      %v4089 = vmul.f32 %v4057, 0.70710677
      %v4090 = vmul.f32 %v4058, 0.70710677
      %v4091 = vmul.f32 %v4059, 0.70710677
      %v4092 = vmul.f32 %v4060, 0.70710677
      %v4093 = vmul.f32 %v4061, 0.70710677
      %v4094 = vmul.f32 %v4062, 0.70710677
      %v4095 = vmul.f32 %v4063, 0.70710677
      %v4096 = vmul.f32 %v4064, 0.70710677
      %v4097 = vmul.f32 %v4065, 0.70710677
      %v4098 = vmul.f32 %v4066, 0.70710677
      %v4099 = vmul.f32 %v4067, 0.70710677
      %v4100 = vmul.f32 %v4068, 0.70710677
      %v4101 = vmul.f32 %v4069, 0.70710677
      %v4102 = verf.f32.pop %v4086
      %v4103 = verf.f32.pop %v4087
      %v4104 = verf.f32.pop %v4088
      %v4105 = verf.f32.pop %v4089
      %v4106 = verf.f32.pop %v4090
      %v4107 = verf.f32.pop %v4091
      %v4108 = verf.f32.pop %v4092
      %v4109 = verf.f32.pop %v4093
      %v4110 = verf.f32.pop %v4094
      %v4111 = verf.f32.pop %v4095
      %v4112 = verf.f32.pop %v4096
      %v4113 = verf.f32.pop %v4097
      %v4114 = verf.f32.pop %v4098
      %v4115 = verf.f32.pop %v4099
      %v4116 = verf.f32.pop %v4100
      %v4117 = verf.f32.pop %v4101
      %v4118 = vadd.f32 %v4102, 1.0
      %v4119 = vadd.f32 %v4103, 1.0
      %v4120 = vadd.f32 %v4104, 1.0
      %v4121 = vadd.f32 %v4105, 1.0
      %v4122 = vadd.f32 %v4106, 1.0
      %v4123 = vadd.f32 %v4107, 1.0
      %v4124 = vadd.f32 %v4108, 1.0
      %v4125 = vadd.f32 %v4109, 1.0
      %v4126 = vadd.f32 %v4110, 1.0
      %v4127 = vadd.f32 %v4111, 1.0
      %v4128 = vadd.f32 %v4112, 1.0
      %v4129 = vadd.f32 %v4113, 1.0
      %v4130 = vadd.f32 %v4114, 1.0
      %v4131 = vadd.f32 %v4115, 1.0
      %v4132 = vadd.f32 %v4116, 1.0
      %v4133 = vadd.f32 %v4117, 1.0
      %v4134 = vmul.f32 %v4070, %v4118
      %v4135 = vmul.f32 %v4071, %v4119
      %v4136 = vmul.f32 %v4072, %v4120
      %v4137 = vmul.f32 %v4073, %v4121
      %v4138 = vmul.f32 %v4074, %v4122
      %v4139 = vmul.f32 %v4075, %v4123
      %v4140 = vmul.f32 %v4076, %v4124
      %v4141 = vmul.f32 %v4077, %v4125
      %v4142 = vmul.f32 %v4078, %v4126
      %v4143 = vmul.f32 %v4079, %v4127
      %v4144 = vmul.f32 %v4080, %v4128
      %v4145 = vmul.f32 %v4081, %v4129
      %v4146 = vmul.f32 %v4082, %v4130
      %v4147 = vmul.f32 %v4083, %v4131
      %v4148 = vmul.f32 %v4084, %v4132
      %v4149 = vmul.f32 %v4085, %v4133
      %v4150 = vld [vmem:[%s11] sm:$0xf]
      %v4151 = vld [vmem:[%s11 + $0x4] sm:$0xf]
      %v4152 = vld [vmem:[%s11 + $0x8] sm:$0xf]
      %v4153 = vld [vmem:[%s11 + $0xc] sm:$0xf]
      %v4154 = vld [vmem:[%s12] sm:$0xff]
      %v4155 = vld [vmem:[%s12 + $0x8] sm:$0xff]
      %v4156 = vld [vmem:[%s12 + $0x10] sm:$0xff]
      %v4157 = vld [vmem:[%s12 + $0x18] sm:$0xff]
      %v4158 = vpack.c.bf16 %v4136, %v4134
      %v4159 = vpack.c.bf16 %v4137, %v4135
      %v4160 = vpack.c.bf16 %v4140, %v4138
      %v4161 = vpack.c.bf16 %v4141, %v4139
      %v4162 = vpack.c.bf16 %v4144, %v4142
      %v4163 = vpack.c.bf16 %v4145, %v4143
      %v4164 = vpack.c.bf16 %v4148, %v4146
      %v4165 = vpack.c.bf16 %v4149, %v4147
      %4167 = vset.pattern.permute.xlu0 0
      %4168 = vperm.xlu0 %4167, %v4154
      %v4169 = vpop.permute.xlu0 %4168
      %4172 = vset.pattern.permute.xlu0 0
      %4173 = vperm.xlu0 %4172, %v4155
      %v4174 = vpop.permute.xlu0 %4173
      %4177 = vset.pattern.permute.xlu0 0
      %4178 = vperm.xlu0 %4177, %v4156
      %v4179 = vpop.permute.xlu0 %4178
      %4182 = vset.pattern.permute.xlu0 0
      %4183 = vperm.xlu0 %4182, %v4157
      %v4184 = vpop.permute.xlu0 %4183
      %v4190 = vunpack.c.l.b16 %v4150
      %v4191 = vunpack.c.l.b16 %v4151
      %v4192 = vunpack.c.l.b16 %v4152
      %v4193 = vunpack.c.l.b16 %v4153
      %v4194 = vpack.c.b16 %v4191, %v4190
      %v4195 = vpack.c.b16 %v4193, %v4192
      %v4197 = vsel %vm3856, %v4194, 0
      %v4200 = vsel %vm3856, %v4195, 0
      %4202 = vmatprep.subr.bf16.mxu0 %v4159
      %4203 = vmatpush1.bf16.msra.mxu0 %v4158
      %4204 = vmatprep.subr.bf16.mxu0 %v4161
      %4205 = vmatpush1.bf16.msra.mxu0 %v4160
      %4206 = vmatprep.subr.bf16.mxu0 %v4163
      %4207 = vmatpush1.bf16.msra.mxu0 %v4162
      %4208 = vmatprep.subr.bf16.mxu0 %v4165
      %4209 = vmatpush1.bf16.msra.mxu0 %v4164
      %4210 = vmatprep.subr.bf16.mxu0 0
      %4211 = vmatpush1.bf16.msra.mxu0 0
      %4212 = vmatprep.subr.bf16.mxu0 0
      %4213 = vmatpush1.bf16.msra.mxu0 0
      %4214 = vmatprep.subr.bf16.mxu0 0
      %4215 = vmatpush1.bf16.msra.mxu0 0
      %4216 = vmatprep.subr.bf16.mxu0 0
      %4217 = vmatpush1.bf16.msra.mxu0 0
      %4218 = vmatprep.subr.bf16.mxu0 0
      %4219 = vmatpush1.bf16.msra.mxu0 0
      %4220 = vmatprep.subr.bf16.mxu0 0
      %4221 = vmatpush1.bf16.msra.mxu0 0
      %4222 = vmatprep.subr.bf16.mxu0 0
      %4223 = vmatpush1.bf16.msra.mxu0 0
      %4224 = vmatprep.subr.bf16.mxu0 0
      %4225 = vmatpush1.bf16.msra.mxu0 0
      %4226 = vmatprep.subr.bf16.mxu0 0
      %4227 = vmatpush1.bf16.msra.mxu0 0
      %4228 = vmatprep.subr.bf16.mxu0 0
      %4229 = vmatpush1.bf16.msra.mxu0 0
      %4230 = vmatprep.subr.bf16.mxu0 0
      %4231 = vmatpush1.bf16.msra.mxu0 0
      %4232 = vmatprep.subr.bf16.mxu0 0
      %4233 = vmatpush1.bf16.msra.mxu0 0
      %4234 = vmatprep.mubr.bf16.mxu0 0
      %4235 = vmatmul.mubr.bf16.gmra.mrb[0].mxu0 %v4197
      %v4236 = vpop.f32.mrb[0].mxu0
      %v4237 = vadd.f32 %v4169, %v4236
      %v4238 = vpop.f32.mrb[0].mxu0
      %v4239 = vadd.f32 %v4169, %v4238
      %v4240 = vpop.f32.mrb[0].mxu0
      %v4241 = vadd.f32 %v4174, %v4240
      %v4242 = vpop.f32.mrb[0].mxu0
      %v4243 = vadd.f32 %v4174, %v4242
      %4244 = vmatprep.mubr.bf16.mxu0 0
      %4245 = vmatmul.mubr.bf16.gmra.mrb[0].mxu0 %v4200
      %v4246 = vpop.f32.mrb[0].mxu0
      %v4247 = vadd.f32 %v4179, %v4246
      %v4248 = vpop.f32.mrb[0].mxu0
      %v4249 = vadd.f32 %v4179, %v4248
      %v4250 = vpop.f32.mrb[0].mxu0
      %v4251 = vadd.f32 %v4184, %v4250
      %v4252 = vpop.f32.mrb[0].mxu0
      %v4253 = vadd.f32 %v4184, %v4252
      %4254 = vdwg.mxu0
      %v4255 = vadd.f32 %v4237, %v4239
      %4256 = vadd.xlane.f32.xlu0 %v4255
      %v4257 = vpop.xlane.xlu0 %4256
      %v4258 = vadd.f32 %v4241, %v4243
      %4259 = vadd.xlane.f32.xlu0 %v4258
      %v4260 = vpop.xlane.xlu0 %4259
      %v4261 = vadd.f32 %v4247, %v4249
      %4262 = vadd.xlane.f32.xlu0 %v4261
      %v4263 = vpop.xlane.xlu0 %4262
      %v4264 = vadd.f32 %v4251, %v4253
      %4265 = vadd.xlane.f32.xlu0 %v4264
      %v4266 = vpop.xlane.xlu0 %4265
      %v4267 = vmul.f32 %v4257, %v1184
      %v4268 = vmul.f32 %v4260, %v1184
      %v4269 = vmul.f32 %v4263, %v1184
      %v4270 = vmul.f32 %v4266, %v1184
      %v4271 = vsub.f32 %v4237, %v4267
      %v4272 = vsub.f32 %v4239, %v4267
      %v4273 = vsub.f32 %v4241, %v4268
      %v4274 = vsub.f32 %v4243, %v4268
      %v4275 = vsub.f32 %v4247, %v4269
      %v4276 = vsub.f32 %v4249, %v4269
      %v4277 = vsub.f32 %v4251, %v4270
      %v4278 = vsub.f32 %v4253, %v4270
      %v4279 = vmul.f32 %v4271, %v4271
      %v4280 = vmul.f32 %v4272, %v4272
      %v4281 = vmul.f32 %v4273, %v4273
      %v4282 = vmul.f32 %v4274, %v4274
      %v4283 = vmul.f32 %v4275, %v4275
      %v4284 = vmul.f32 %v4276, %v4276
      %v4285 = vmul.f32 %v4277, %v4277
      %v4286 = vmul.f32 %v4278, %v4278
      %v4287 = vadd.f32 %v4279, %v4280
      %4288 = vadd.xlane.f32.xlu0 %v4287
      %v4289 = vpop.xlane.xlu0 %4288
      %v4290 = vadd.f32 %v4281, %v4282
      %4291 = vadd.xlane.f32.xlu0 %v4290
      %v4292 = vpop.xlane.xlu0 %4291
      %v4293 = vadd.f32 %v4283, %v4284
      %4294 = vadd.xlane.f32.xlu0 %v4293
      %v4295 = vpop.xlane.xlu0 %4294
      %v4296 = vadd.f32 %v4285, %v4286
      %4297 = vadd.xlane.f32.xlu0 %v4296
      %v4298 = vpop.xlane.xlu0 %4297
      %v4299 = vmul.f32 %v4289, %v1184
      %v4300 = vmul.f32 %v4292, %v1184
      %v4301 = vmul.f32 %v4295, %v1184
      %v4302 = vmul.f32 %v4298, %v1184
      %v4303 = vadd.f32 %v4299, 1e-05
      %v4304 = vadd.f32 %v4300, 1e-05
      %v4305 = vadd.f32 %v4301, 1e-05
      %v4306 = vadd.f32 %v4302, 1e-05
      %v4307 = vrsqrt.pop %v4303
      %v4308 = vrsqrt.pop %v4304
      %v4309 = vrsqrt.pop %v4305
      %v4310 = vrsqrt.pop %v4306
      %v4311 = vmul.f32 %v4271, %v4307
      %v4312 = vmul.f32 %v4272, %v4307
      %v4313 = vmul.f32 %v4273, %v4308
      %v4314 = vmul.f32 %v4274, %v4308
      %v4315 = vmul.f32 %v4275, %v4309
      %v4316 = vmul.f32 %v4276, %v4309
      %v4317 = vmul.f32 %v4277, %v4310
      %v4318 = vmul.f32 %v4278, %v4310
      %v4319 = vmul.f32 %v4311, 0.5
      %v4320 = vmul.f32 %v4312, 0.5
      %v4321 = vmul.f32 %v4313, 0.5
      %v4322 = vmul.f32 %v4314, 0.5
      %v4323 = vmul.f32 %v4315, 0.5
      %v4324 = vmul.f32 %v4316, 0.5
      %v4325 = vmul.f32 %v4317, 0.5
      %v4326 = vmul.f32 %v4318, 0.5
      %v4327 = vmul.f32 %v4311, 0.70710677
      %v4328 = vmul.f32 %v4312, 0.70710677
      %v4329 = vmul.f32 %v4313, 0.70710677
      %v4330 = vmul.f32 %v4314, 0.70710677
      %v4331 = vmul.f32 %v4315, 0.70710677
      %v4332 = vmul.f32 %v4316, 0.70710677
      %v4333 = vmul.f32 %v4317, 0.70710677
      %v4334 = vmul.f32 %v4318, 0.70710677
      %v4335 = verf.f32.pop %v4327
      %v4336 = verf.f32.pop %v4328
      %v4337 = verf.f32.pop %v4329
      %v4338 = verf.f32.pop %v4330
      %v4339 = verf.f32.pop %v4331
      %v4340 = verf.f32.pop %v4332
      %v4341 = verf.f32.pop %v4333
      %v4342 = verf.f32.pop %v4334
      %v4343 = vadd.f32 %v4335, 1.0
      %v4344 = vadd.f32 %v4336, 1.0
      %v4345 = vadd.f32 %v4337, 1.0
      %v4346 = vadd.f32 %v4338, 1.0
      %v4347 = vadd.f32 %v4339, 1.0
      %v4348 = vadd.f32 %v4340, 1.0
      %v4349 = vadd.f32 %v4341, 1.0
      %v4350 = vadd.f32 %v4342, 1.0
      %v4351 = vmul.f32 %v4319, %v4343
      %v4352 = vmul.f32 %v4320, %v4344
      %v4353 = vmul.f32 %v4321, %v4345
      %v4354 = vmul.f32 %v4322, %v4346
      %v4355 = vmul.f32 %v4323, %v4347
      %v4356 = vmul.f32 %v4324, %v4348
      %v4357 = vmul.f32 %v4325, %v4349
      %v4358 = vmul.f32 %v4326, %v4350
      %v4359 = vld [vmem:[%s13] sm:$0xf]
      %v4360 = vld [vmem:[%s13 + $0x4] sm:$0xf]
      %v4361 = vld [vmem:[%s13 + $0x8] sm:$0xf]
      %v4362 = vld [vmem:[%s13 + $0xc] sm:$0xf]
      %v4363 = vld [vmem:[%s14] sm:$0xff]
      %v4364 = vld [vmem:[%s14 + $0x8] sm:$0xff]
      %v4365 = vld [vmem:[%s14 + $0x10] sm:$0xff]
      %v4366 = vld [vmem:[%s14 + $0x18] sm:$0xff]
      %v4367 = vpack.c.bf16 %v4353, %v4351
      %v4368 = vpack.c.bf16 %v4354, %v4352
      %v4369 = vpack.c.bf16 %v4357, %v4355
      %v4370 = vpack.c.bf16 %v4358, %v4356
      %4372 = vset.pattern.permute.xlu0 0
      %4373 = vperm.xlu0 %4372, %v4363
      %v4374 = vpop.permute.xlu0 %4373
      %4377 = vset.pattern.permute.xlu0 0
      %4378 = vperm.xlu0 %4377, %v4364
      %v4379 = vpop.permute.xlu0 %4378
      %4382 = vset.pattern.permute.xlu0 0
      %4383 = vperm.xlu0 %4382, %v4365
      %v4384 = vpop.permute.xlu0 %4383
      %4387 = vset.pattern.permute.xlu0 0
      %4388 = vperm.xlu0 %4387, %v4366
      %v4389 = vpop.permute.xlu0 %4388
      %v4395 = vunpack.c.l.b16 %v4359
      %v4396 = vunpack.c.l.b16 %v4360
      %v4397 = vunpack.c.l.b16 %v4361
      %v4398 = vunpack.c.l.b16 %v4362
      %v4399 = vpack.c.b16 %v4396, %v4395
      %v4400 = vpack.c.b16 %v4398, %v4397
      %vm4401 = vcmask 261120
      %v4403 = vsel %vm4401, %v4399, 0
      %v4406 = vsel %vm4401, %v4400, 0
      %4408 = vmatprep.subr.bf16.mxu0 %v4368
      %4409 = vmatpush1.bf16.msra.mxu0 %v4367
      %4410 = vmatprep.subr.bf16.mxu0 %v4370
      %4411 = vmatpush1.bf16.msra.mxu0 %v4369
      %4412 = vmatprep.subr.bf16.mxu0 0
      %4413 = vmatpush1.bf16.msra.mxu0 0
      %4414 = vmatprep.subr.bf16.mxu0 0
      %4415 = vmatpush1.bf16.msra.mxu0 0
      %4416 = vmatprep.subr.bf16.mxu0 0
      %4417 = vmatpush1.bf16.msra.mxu0 0
      %4418 = vmatprep.subr.bf16.mxu0 0
      %4419 = vmatpush1.bf16.msra.mxu0 0
      %4420 = vmatprep.subr.bf16.mxu0 0
      %4421 = vmatpush1.bf16.msra.mxu0 0
      %4422 = vmatprep.subr.bf16.mxu0 0
      %4423 = vmatpush1.bf16.msra.mxu0 0
      %4424 = vmatprep.subr.bf16.mxu0 0
      %4425 = vmatpush1.bf16.msra.mxu0 0
      %4426 = vmatprep.subr.bf16.mxu0 0
      %4427 = vmatpush1.bf16.msra.mxu0 0
      %4428 = vmatprep.subr.bf16.mxu0 0
      %4429 = vmatpush1.bf16.msra.mxu0 0
      %4430 = vmatprep.subr.bf16.mxu0 0
      %4431 = vmatpush1.bf16.msra.mxu0 0
      %4432 = vmatprep.subr.bf16.mxu0 0
      %4433 = vmatpush1.bf16.msra.mxu0 0
      %4434 = vmatprep.subr.bf16.mxu0 0
      %4435 = vmatpush1.bf16.msra.mxu0 0
      %4436 = vmatprep.subr.bf16.mxu0 0
      %4437 = vmatpush1.bf16.msra.mxu0 0
      %4438 = vmatprep.subr.bf16.mxu0 0
      %4439 = vmatpush1.bf16.msra.mxu0 0
      %4440 = vmatprep.mubr.bf16.mxu0 0
      %4441 = vmatmul.mubr.bf16.gmra.mrb[0].mxu0 %v4403
      %v4442 = vpop.f32.mrb[0].mxu0
      %v4443 = vadd.f32 %v4374, %v4442
      %v4444 = vpop.f32.mrb[0].mxu0
      %v4445 = vadd.f32 %v4374, %v4444
      %v4446 = vpop.f32.mrb[0].mxu0
      %v4447 = vadd.f32 %v4379, %v4446
      %v4448 = vpop.f32.mrb[0].mxu0
      %v4449 = vadd.f32 %v4379, %v4448
      %4450 = vmatprep.mubr.bf16.mxu0 0
      %4451 = vmatmul.mubr.bf16.gmra.mrb[0].mxu0 %v4406
      %v4452 = vpop.f32.mrb[0].mxu0
      %v4453 = vadd.f32 %v4384, %v4452
      %v4454 = vpop.f32.mrb[0].mxu0
      %v4455 = vadd.f32 %v4384, %v4454
      %v4456 = vpop.f32.mrb[0].mxu0
      %v4457 = vadd.f32 %v4389, %v4456
      %v4458 = vpop.f32.mrb[0].mxu0
      %v4459 = vadd.f32 %v4389, %v4458
      %4460 = vdwg.mxu0
      %4461 = vst [vmem:[%s534] sm:$0xff] %v4443
      %4462 = vst [vmem:[%s534 + $0x8] sm:$0xff] %v4445
      %4463 = vst [vmem:[%s534 + $0x10] sm:$0xff] %v4447
      %4464 = vst [vmem:[%s534 + $0x18] sm:$0xff] %v4449
      %4465 = vst [vmem:[%s534 + $0x20] sm:$0xff] %v4453
      %4466 = vst [vmem:[%s534 + $0x28] sm:$0xff] %v4455
      %4467 = vst [vmem:[%s534 + $0x30] sm:$0xff] %v4457
      %4468 = vst [vmem:[%s534 + $0x38] sm:$0xff] %v4459
      %p4469 = scmp.lt.s32.totalorder %s28, 1
      %s4470 = scalar_select %p4469, %s28, 1
      %s4471 = smul.addr %s4470, 16
      %s4472 = smul.addr %s4471, 8
      %s4473 = scalar_lea.vmem %s15, %s4472
      %p4474 = scmp.lt.s32.totalorder %s28, 1
      %s4475 = scalar_select %p4474, %s28, 1
      %s4476 = smul.addr %s4475, 8
      %s4477 = smul.addr %s4476, 8
      %s4478 = scalar_lea.vmem %s16, %s4477
      // Predicated region
      $region81: #{encoder_forward.1} parent=79 // pred_check
        %p4479 = pneg %p366
      $region82: #{encoder_forward.1} parent=79 // pred_check_branch
        %4481 = sbr.rel (%p4479) target = $region84
      $region83: #{encoder_forward.1} parent=79 // pred_region
        _
      $region84: #{encoder_forward.1} parent=79 // pred_fallthru
        _
      // Predicated region
      $region85: #{encoder_forward.1} parent=79 // pred_check
        %p4482 = pneg %p392
      $region86: #{encoder_forward.1} parent=79 // pred_check_branch
        %4484 = sbr.rel (%p4482) target = $region88
      $region87: #{encoder_forward.1} parent=79 // pred_region
        _
      $region88: #{encoder_forward.1} parent=79 // pred_fallthru
        _
    $region80: #{encoder_forward.1} parent=5 // pred_fallthru
      _
    %p4485 = scmp.le.s32.totalorder 2, %s23
    // Predicated region
    $region89: #{encoder_forward.1} parent=5 // pred_check
      %p4486 = pneg %p4485
    $region90: #{encoder_forward.1} parent=5 // pred_check_branch
      %4488 = sbr.rel (%p4486) target = $region92
    $region91: #{encoder_forward.1} parent=5 // pred_region
      %s4489 = ssub.s32 %s23, 2
      // Predicated region
      $region93: #{encoder_forward.1} parent=91 // pred_check
        %p4490 = pneg %p372
      $region94: #{encoder_forward.1} parent=91 // pred_check_branch
        %4492 = sbr.rel (%p4490) target = $region96
      $region95: #{encoder_forward.1} parent=91 // pred_region
        %p4493 = scmp.lt.s32.totalorder %s29, 1
        %s4494 = scalar_select %p4493, %s29, 1
        %s4495 = smul.addr %s4494, 16
        %s4496 = smul.addr %s4495, 8
        %s4497 = scalar_lea.vmem %s15, %s4496
      $region96: #{encoder_forward.1} parent=91 // pred_fallthru
        _
      // Predicated region
      $region97: #{encoder_forward.1} parent=91 // pred_check
        %p4498 = pneg %p398
      $region98: #{encoder_forward.1} parent=91 // pred_check_branch
        %4500 = sbr.rel (%p4498) target = $region100
      $region99: #{encoder_forward.1} parent=91 // pred_region
        %p4501 = scmp.lt.s32.totalorder %s29, 1
        %s4502 = scalar_select %p4501, %s29, 1
        %s4503 = smul.addr %s4502, 8
        %s4504 = smul.addr %s4503, 8
        %s4505 = scalar_lea.vmem %s16, %s4504
      $region100: #{encoder_forward.1} parent=91 // pred_fallthru
        _
    $region92: #{encoder_forward.1} parent=5 // pred_fallthru
      _
  $region6: #{encoder_forward.1} parent=0 // loop_footer
    %s27 = sadd.s32 1, %s23
  $region7: #{encoder_forward.1} parent=0 // loop_footer_branch
    %22 = sbr.rel target = $region3
  $region8: #{encoder_forward.1} parent=0 // loop_exit
    _

</llo_original>
